<compile_context>
chip_gen: v7x
topology: tpu7x:2x2x1
jax: 0.10.0
libtpu: 0.0.40
codegen_flags: <defaults>
</compile_context>

<pallas_src>
import functools
import math

import jax
import jax.numpy as jnp
from jax.experimental import pallas as pl
from jax.experimental.pallas import tpu as pltpu

LN_EPS = 1e-5  # nn.LayerNorm default


def _erf(x):
    # Abramowitz & Stegun 7.1.26 rational approximation (|err| <= 1.5e-7) so the exact
    # (erf-based) nn.GELU semantics lower cleanly on Mosaic.
    a1, a2, a3, a4, a5 = 0.254829592, -0.284496736, 1.421413741, -1.453152027, 1.061405429
    p = 0.3275911
    sgn = jnp.where(x < 0.0, -1.0, 1.0)
    ax = jnp.abs(x)
    t = 1.0 / (1.0 + p * ax)
    poly = ((((a5 * t + a4) * t + a3) * t + a2) * t + a1) * t
    return sgn * (1.0 - poly * jnp.exp(-ax * ax))


def _gelu_exact(x):
    # nn.GELU() default (erf-based, not tanh approximation), computed in f32.
    return 0.5 * x * (1.0 + _erf(x * (1.0 / math.sqrt(2.0))))


def _layernorm(x, gamma, beta):
    mu = jnp.mean(x, axis=-1, keepdims=True)
    var = jnp.mean((x - mu) ** 2, axis=-1, keepdims=True)
    return (x - mu) * jax.lax.rsqrt(var + LN_EPS) * gamma + beta


# ---------------------------------------------------------------------------
# Fused kernel: per tile of R = WB*N tokens (WB consecutive windows)
#   LN1 -> QKV GEMM -> windowed multi-head attention -> proj GEMM -> residual
#   -> LN2 -> chunked MLP (Linear-GELU-Linear) -> residual
# ---------------------------------------------------------------------------
def swin_block_kernel(x_ref, g1_ref, b1n_ref, wqkv_ref, bqkv_ref, wp_ref, bp_ref,
                      g2_ref, b2n_ref, w1_ref, b1_ref, w2_ref, b2_ref, o_ref,
                      *, n_heads, head_dim, dim, win_n, mlp_chunk):
    R, C = x_ref.shape
    WB = R // win_n                                    # windows in this tile

    x2 = x_ref[...]                                    # (R, C) f32 tokens (shifted frame)
    xn = _layernorm(x2, g1_ref[...], b1n_ref[...])     # f32

    # QKV projection: bf16 operands, f32 accumulation (scale pre-folded into Q columns).
    qkv = jnp.dot(xn.astype(jnp.bfloat16), wqkv_ref[...],
                  preferred_element_type=jnp.float32) + bqkv_ref[...]   # (R, 3C) f32
    qkv_b = qkv.astype(jnp.bfloat16)                   # single cast pass for all heads

    # Windowed multi-head attention.  Heads are statically unrolled; each head's two matmuls
    # are window-batched rank-3 einsums contracting the last dims.  Per-head outputs stay in
    # registers and are concatenated once along lanes -> no VMEM scratch, no masked stores,
    # no scratch read-back gating the proj GEMM.
    head_outs = []
    for h in range(n_heads):
        c0 = h * head_dim
        q = qkv_b[:, c0:c0 + head_dim].reshape(WB, win_n, head_dim)
        k = qkv_b[:, dim + c0:dim + c0 + head_dim].reshape(WB, win_n, head_dim)
        v = qkv_b[:, 2 * dim + c0:2 * dim + c0 + head_dim].reshape(WB, win_n, head_dim)

        s = jnp.einsum('wnd,wmd->wnm', q, k,
                       preferred_element_type=jnp.float32)              # (WB, N, N) f32
        s = s - jnp.max(s, axis=-1, keepdims=True)
        p = jnp.exp(s)
        p = p * pl.reciprocal(jnp.sum(p, axis=-1, keepdims=True), approx=True)
        pv = jnp.einsum('wnm,wmd->wnd', p.astype(jnp.bfloat16), v,
                        preferred_element_type=jnp.float32)             # (WB, N, hd) f32
        head_outs.append(pv.reshape(R, head_dim))
    attn_out = head_outs[0] if n_heads == 1 else jnp.concatenate(head_outs, axis=-1)

    proj = jnp.dot(attn_out.astype(jnp.bfloat16), wp_ref[...],
                   preferred_element_type=jnp.float32) + bp_ref[...]    # (R, C) f32

    h_tok = x2 + proj                                  # residual 1 (f32, shifted frame)
    hn = _layernorm(h_tok, g2_ref[...], b2n_ref[...]).astype(jnp.bfloat16)

    # MLP with the hidden dimension chunked: bounds the (R, hidden) live intermediate.
    hidden = w1_ref.shape[1]
    y = jnp.zeros((R, C), jnp.float32)
    for c0 in range(0, hidden, mlp_chunk):
        z = jnp.dot(hn, w1_ref[:, c0:c0 + mlp_chunk],
                    preferred_element_type=jnp.float32) + b1_ref[:, c0:c0 + mlp_chunk]
        z = _gelu_exact(z).astype(jnp.bfloat16)        # GELU in f32, bf16 operand for GEMM2
        y = y + jnp.dot(z, w2_ref[c0:c0 + mlp_chunk, :],
                        preferred_element_type=jnp.float32)
    o_ref[...] = h_tok + y + b2_ref[...]               # residual 2 (lane-dense f32 store)


# ---------------------------------------------------------------------------
# Generation-aware sizing helpers
# ---------------------------------------------------------------------------
def _vmem_budget_bytes():
    cap = 128 * 1024 * 1024
    try:
        info = pltpu.get_tpu_info()
        cap = int(getattr(info, "vmem_capacity_bytes", cap)) or cap
    except Exception:
        pass
    # Leave headroom for compiler-internal scratch: ~48 MiB on v7x (64 MiB physical),
    # ~96 MiB on v5e/v6e (128 MiB physical).
    return int(cap * 3 // 4)


def _pick_window_batch(n_windows, win_n, rows_cap):
    """Largest divisor of n_windows with WB*N <= rows_cap and sublane-aligned tile rows,
    preferring >=4 (even) grid steps so the v7x 2-TensorCore split still pipelines."""
    divisors = [d for d in range(1, n_windows + 1) if n_windows % d == 0]
    ok = [d for d in divisors
          if d * win_n <= rows_cap and ((d * win_n) % 8 == 0 or d == n_windows)]
    if not ok:
        aligned = [d for d in divisors if (d * win_n) % 8 == 0] or [n_windows]
        ok = [min(aligned)]

    def steps(d):
        return n_windows // d

    for min_steps in (4, 2, 1):
        cands = [d for d in ok if steps(d) >= min_steps]
        if cands:
            even = [d for d in cands if steps(d) % 2 == 0 or steps(d) == 1]
            return max(even or cands)
    return max(ok)


# ---------------------------------------------------------------------------
# Wrapper
# ---------------------------------------------------------------------------
def swin_block_forward(x, params, *, input_resolution, num_heads, window_size=7,
                       shift_size=0, mlp_ratio=4.0, single_buffer_weights=True):
    B, L, C = x.shape
    H, W, D = input_resolution
    assert L == H * W * D, "input feature has wrong size"
    if min(input_resolution) <= window_size:
        shift_size = 0
        window_size = min(input_resolution)
    ws = window_size
    N = ws ** 3
    head_dim = C // num_heads
    scale = head_dim ** (-0.5)
    hidden = int(C * mlp_ratio)
    mlp_chunk = 512 if (hidden > 512 and hidden % 512 == 0) else hidden

    # bf16 MXU operands (accumulation stays f32 in-kernel); attention scale folded into Q.
    w_qkv = (params["w_qkv"].astype(jnp.float32)
             .at[:, :C].multiply(scale).astype(jnp.bfloat16))
    b_qkv = params["b_qkv"].astype(jnp.float32).at[:, :C].multiply(scale)
    w_proj = params["w_proj"].astype(jnp.bfloat16)
    w1 = params["w1"].astype(jnp.bfloat16)
    w2 = params["w2"].astype(jnp.bfloat16)

    # Whole block is computed in the cyclically shifted frame (per-token ops commute with
    # the roll), so only the rolls live outside the kernel.
    # TODO(synk): fold the inverse roll into the output path (gather-style index_map) to save
    # the extra HBM round trip, which is measurable on v5e-class bandwidth.
    if shift_size > 0:
        xs = jnp.roll(x.reshape(B, H, W, D, C),
                      shift=(-shift_size,) * 3, axis=(1, 2, 3)).reshape(B * L, C)
    else:
        xs = x.reshape(B * L, C)

    T = B * L
    n_windows = T // N

    weight_arrays = (w_qkv, b_qkv, w_proj, params["b_proj"], w1, params["b1"],
                     w2, params["b2"], params["g1"], params["b1n"],
                     params["g2"], params["b2n"])
    weight_bytes = sum(int(a.size) * a.dtype.itemsize for a in weight_arrays)
    weight_bufs = 1 if single_buffer_weights else 2
    vmem_budget = _vmem_budget_bytes()
    # Rough per-token live-bytes model: double-buffered (R,C) f32 in/out tiles, f32
    # intermediates (xn, qkv, attn_out, proj, h, y, z-chunk), bf16 copies, attention rows.
    per_tok = (2 * 2 * 4 * C
               + 4 * (7 * C + mlp_chunk)
               + 2 * (4 * C + mlp_chunk)
               + 2 * 4 * num_heads * N)
    rows_cap = max(N, (vmem_budget - weight_bufs * weight_bytes) // per_tok)
    WB = _pick_window_batch(n_windows, N, rows_cap)
    R = WB * N                                        # tokens per grid step
    grid = (T // R,)
    # TODO(synk): if N = ws^3 is not a multiple of 8 (e.g. ws=7 -> N=343), pad each window to
    # the next multiple of 8 with -inf-masked keys so the per-window reshapes stay on aligned
    # (8,128) tiles instead of producing relayout copies.

    flops = (2 * T * C * 3 * C                         # QKV
             + 4 * n_windows * num_heads * N * N * head_dim   # QK^T + PV
             + 2 * T * C * C                           # proj
             + 4 * T * C * hidden)                     # MLP
    bytes_accessed = (4 * 2 * T * C                    # x in + out (f32)
                      + 2 * (C * 3 * C + C * C + 2 * C * hidden)   # bf16 weights
                      + 4 * (3 * C + 4 * C + hidden))  # biases / LN params (f32)
    transcendentals = n_windows * num_heads * N * N + T * hidden

    kernel = functools.partial(swin_block_kernel, n_heads=num_heads, head_dim=head_dim,
                               dim=C, win_n=N, mlp_chunk=mlp_chunk)

    def build(single_buffer):
        def wspec(shape):
            if single_buffer:
                # Grid-invariant weights: one resident buffer instead of the default two.
                return pl.BlockSpec(shape, lambda i: (0, 0), pipeline_mode=pl.Buffered(1))
            return pl.BlockSpec(shape, lambda i: (0, 0))

        return pl.pallas_call(
            kernel,
            out_shape=jax.ShapeDtypeStruct((T, C), jnp.float32),
            grid=grid,
            in_specs=[
                pl.BlockSpec((R, C), lambda i: (i, 0)),       # x tokens (shifted frame)
                wspec((1, C)), wspec((1, C)),                 # LN1 gamma / beta
                wspec((C, 3 * C)), wspec((1, 3 * C)),         # w_qkv (bf16, scale folded) / b_qkv
                wspec((C, C)), wspec((1, C)),                 # w_proj (bf16) / b_proj
                wspec((1, C)), wspec((1, C)),                 # LN2 gamma / beta
                wspec((C, hidden)), wspec((1, hidden)),       # MLP w1 (bf16) / b1
                wspec((hidden, C)), wspec((1, C)),            # MLP w2 (bf16) / b2
            ],
            out_specs=pl.BlockSpec((R, C), lambda i: (i, 0)),
            compiler_params=pltpu.CompilerParams(
                dimension_semantics=("parallel",),
                vmem_limit_bytes=int(vmem_budget)),
            cost_estimate=pl.CostEstimate(flops=flops, transcendentals=transcendentals,
                                          bytes_accessed=bytes_accessed),
        )

    args = (xs, params["g1"], params["b1n"], w_qkv, b_qkv, w_proj, params["b_proj"],
            params["g2"], params["b2n"], w1, params["b1"], w2, params["b2"])
    try:
        out = build(single_buffer_weights)(*args)
    except Exception:
        # pipeline_mode=pl.Buffered(1) not supported on this JAX/Mosaic build:
        # fall back to default double-buffered weight specs (identical numerics).
        out = build(False)(*args)

    if shift_size > 0:
        out = jnp.roll(out.reshape(B, H, W, D, C),
                       shift=(shift_size,) * 3, axis=(1, 2, 3)).reshape(B, L, C)
    else:
        out = out.reshape(B, L, C)
    return out


# ---------------------------------------------------------------------------
# Pure-JAX f32 reference (mirrors the PyTorch forward) for correctness checking
# ---------------------------------------------------------------------------
def reference_forward(x, params, *, input_resolution, num_heads, window_size,
                      shift_size, mlp_ratio):
    B, L, C = x.shape
    H, W, D = input_resolution
    if min(input_resolution) <= window_size:
        shift_size = 0
        window_size = min(input_resolution)
    N = window_size ** 3
    hd = C // num_heads
    scale = hd ** (-0.5)

    def ln(v, g, b):
        mu = v.mean(-1, keepdims=True)
        var = ((v - mu) ** 2).mean(-1, keepdims=True)
        return (v - mu) / jnp.sqrt(var + LN_EPS) * g + b

    shortcut = x
    xn = ln(x, params["g1"], params["b1n"])
    x5 = xn.reshape(B, H, W, D, C)
    if shift_size > 0:
        x5 = jnp.roll(x5, (-shift_size,) * 3, axis=(1, 2, 3))
    xw = x5.reshape(-1, N, C)                          # PyTorch uses a plain contiguous .view
    nW = xw.shape[0]
    qkv = (xw @ params["w_qkv"] + params["b_qkv"]).reshape(nW, N, 3, num_heads, hd)
    qkv = qkv.transpose(2, 0, 3, 1, 4)
    q, k, v = qkv[0] * scale, qkv[1], qkv[2]
    attn = jax.nn.softmax(jnp.einsum("whnd,whmd->whnm", q, k), axis=-1)
    o = jnp.einsum("whnm,whmd->whnd", attn, v).transpose(0, 2, 1, 3).reshape(nW, N, C)
    o = o @ params["w_proj"] + params["b_proj"]
    o5 = o.reshape(B, H, W, D, C)
    if shift_size > 0:
        o5 = jnp.roll(o5, (shift_size,) * 3, axis=(1, 2, 3))
    h = shortcut + o5.reshape(B, L, C)
    hn = ln(h, params["g2"], params["b2n"])
    z = hn @ params["w1"] + params["b1"]
    z = 0.5 * z * (1.0 + jax.scipy.special.erf(z / jnp.sqrt(2.0)))
    y = z @ params["w2"] + params["b2"]
    return h + y


if __name__ == "__main__":
    # Small, consistent shapes: dim=128 (lane-dense), heads=4, input_resolution=(4,4,4) -> L=64
    B, C = 2, 128
    input_resolution = (4, 4, 4)
    num_heads = 4
    window_size = 2
    mlp_ratio = 4.0
    L = input_resolution[0] * input_resolution[1] * input_resolution[2]
    hidden = int(C * mlp_ratio)

    key = jax.random.PRNGKey(0)
    kx, *kp = jax.random.split(key, 13)

    def w(k, shape, s=0.1):
        return (s * jax.random.normal(k, shape)).astype(jnp.float32)

    params = {
        "g1": (1.0 + w(kp[0], (1, C), 0.05)).astype(jnp.float32),
        "b1n": w(kp[1], (1, C), 0.05),
        "w_qkv": w(kp[2], (C, 3 * C)),
        "b_qkv": w(kp[3], (1, 3 * C), 0.05),
        "w_proj": w(kp[4], (C, C)),
        "b_proj": w(kp[5], (1, C), 0.05),
        "g2": (1.0 + w(kp[6], (1, C), 0.05)).astype(jnp.float32),
        "b2n": w(kp[7], (1, C), 0.05),
        "w1": w(kp[8], (C, hidden)),
        "b1": w(kp[9], (1, hidden), 0.05),
        "w2": w(kp[10], (hidden, C)),
        "b2": w(kp[11], (1, C), 0.05),
    }
    x = jax.random.normal(kx, (B, L, C), dtype=jnp.float32)

    for shift in (0, 1):  # exercise both the un-shifted and cyclic-shift paths
        out = swin_block_forward(x, params, input_resolution=input_resolution,
                                 num_heads=num_heads, window_size=window_size,
                                 shift_size=shift, mlp_ratio=mlp_ratio)
        out = jax.block_until_ready(out)
        ref = reference_forward(x, params, input_resolution=input_resolution,
                                num_heads=num_heads, window_size=window_size,
                                shift_size=shift, mlp_ratio=mlp_ratio)
        assert out.shape == (B, L, C)
        # bf16 MXU operands (f32 accumulation) vs. a pure-f32 reference -> tolerance is set
        # for bf16-level drift, which still catches any structural/indexing bug by a wide margin.
        err = float(jnp.max(jnp.abs(out - ref)))
        rel = float(jnp.linalg.norm(out - ref) / jnp.linalg.norm(ref))
        assert err < 1e-1 and rel < 1.5e-2, (err, rel)

    print("KERNEL_OK")
</pallas_src>

<mosaic_0001>
module attributes {stable_mosaic.version = 11 : i64} {
  func.func @swin_block_kernel(%arg0: i32, %arg1: memref<32x128xf32, #tpu.memory_space<vmem>>, %arg2: memref<1x128xf32, #tpu.memory_space<vmem>>, %arg3: memref<1x128xf32, #tpu.memory_space<vmem>>, %arg4: memref<128x384xbf16, #tpu.memory_space<vmem>>, %arg5: memref<1x384xf32, #tpu.memory_space<vmem>>, %arg6: memref<128x128xbf16, #tpu.memory_space<vmem>>, %arg7: memref<1x128xf32, #tpu.memory_space<vmem>>, %arg8: memref<1x128xf32, #tpu.memory_space<vmem>>, %arg9: memref<1x128xf32, #tpu.memory_space<vmem>>, %arg10: memref<128x512xbf16, #tpu.memory_space<vmem>>, %arg11: memref<1x512xf32, #tpu.memory_space<vmem>>, %arg12: memref<512x128xbf16, #tpu.memory_space<vmem>>, %arg13: memref<1x128xf32, #tpu.memory_space<vmem>>, %arg14: memref<32x128xf32, #tpu.memory_space<vmem>>) attributes {dimension_semantics = [#tpu.dimension_semantics<parallel>], iteration_bounds = array<i64: 4>, scalar_prefetch = 0 : i64, scratch_operands = 0 : i64, tpu.core_type = #tpu.core_type<tc>, window_params = [{transform_indices = @transform_0, window_bounds = array<i64: 32, 128>}, {pipeline_mode = #tpu.pipeline_mode<synchronous>, transform_indices = @transform_1, window_bounds = array<i64: 1, 128>}, {pipeline_mode = #tpu.pipeline_mode<synchronous>, transform_indices = @transform_2, window_bounds = array<i64: 1, 128>}, {pipeline_mode = #tpu.pipeline_mode<synchronous>, transform_indices = @transform_3, window_bounds = array<i64: 128, 384>}, {pipeline_mode = #tpu.pipeline_mode<synchronous>, transform_indices = @transform_4, window_bounds = array<i64: 1, 384>}, {pipeline_mode = #tpu.pipeline_mode<synchronous>, transform_indices = @transform_5, window_bounds = array<i64: 128, 128>}, {pipeline_mode = #tpu.pipeline_mode<synchronous>, transform_indices = @transform_6, window_bounds = array<i64: 1, 128>}, {pipeline_mode = #tpu.pipeline_mode<synchronous>, transform_indices = @transform_7, window_bounds = array<i64: 1, 128>}, {pipeline_mode = #tpu.pipeline_mode<synchronous>, transform_indices = @transform_8, window_bounds = array<i64: 1, 128>}, {pipeline_mode = #tpu.pipeline_mode<synchronous>, transform_indices = @transform_9, window_bounds = array<i64: 128, 512>}, {pipeline_mode = #tpu.pipeline_mode<synchronous>, transform_indices = @transform_10, window_bounds = array<i64: 1, 512>}, {pipeline_mode = #tpu.pipeline_mode<synchronous>, transform_indices = @transform_11, window_bounds = array<i64: 512, 128>}, {pipeline_mode = #tpu.pipeline_mode<synchronous>, transform_indices = @transform_12, window_bounds = array<i64: 1, 128>}, {transform_indices = @transform_13, window_bounds = array<i64: 32, 128>}]} {
    %c0 = arith.constant 0 : index
    %c0_0 = arith.constant 0 : index
    %0 = vector.load %arg1[%c0, %c0_0] : memref<32x128xf32, #tpu.memory_space<vmem>>, vector<32x128xf32>
    %c0_1 = arith.constant 0 : index
    %c0_2 = arith.constant 0 : index
    %1 = vector.load %arg2[%c0_1, %c0_2] : memref<1x128xf32, #tpu.memory_space<vmem>>, vector<1x128xf32>
    %c0_3 = arith.constant 0 : index
    %c0_4 = arith.constant 0 : index
    %2 = vector.load %arg3[%c0_3, %c0_4] : memref<1x128xf32, #tpu.memory_space<vmem>>, vector<1x128xf32>
    %cst = arith.constant dense<0.000000e+00> : vector<32xf32>
    %3 = vector.multi_reduction <add>, %0, %cst [1] : vector<32x128xf32> to vector<32xf32>
    %4 = vector.shape_cast %3 : vector<32xf32> to vector<32x1xf32>
    %cst_5 = arith.constant 1.280000e+02 : f32
    %5 = vector.broadcast %cst_5 : f32 to vector<32x1xf32>
    %6 = arith.divf %4, %5 : vector<32x1xf32>
    %7 = vector.broadcast %6 : vector<32x1xf32> to vector<32x128xf32>
    %8 = arith.subf %0, %7 : vector<32x128xf32>
    %9 = arith.mulf %8, %8 : vector<32x128xf32>
    %cst_6 = arith.constant dense<0.000000e+00> : vector<32xf32>
    %10 = vector.multi_reduction <add>, %9, %cst_6 [1] : vector<32x128xf32> to vector<32xf32>
    %11 = vector.shape_cast %10 : vector<32xf32> to vector<32x1xf32>
    %cst_7 = arith.constant 1.280000e+02 : f32
    %12 = vector.broadcast %cst_7 : f32 to vector<32x1xf32>
    %13 = arith.divf %11, %12 : vector<32x1xf32>
    %14 = vector.broadcast %6 : vector<32x1xf32> to vector<32x128xf32>
    %15 = arith.subf %0, %14 : vector<32x128xf32>
    %cst_8 = arith.constant 9.99999974E-6 : f32
    %16 = vector.broadcast %cst_8 : f32 to vector<32x1xf32>
    %17 = arith.addf %13, %16 : vector<32x1xf32>
    %18 = math.rsqrt %17 : vector<32x1xf32>
    %19 = vector.broadcast %18 : vector<32x1xf32> to vector<32x128xf32>
    %20 = arith.mulf %15, %19 : vector<32x128xf32>
    %21 = vector.broadcast %1 : vector<1x128xf32> to vector<32x128xf32>
    %22 = arith.mulf %20, %21 : vector<32x128xf32>
    %23 = vector.broadcast %2 : vector<1x128xf32> to vector<32x128xf32>
    %24 = arith.addf %22, %23 : vector<32x128xf32>
    %25 = arith.truncf %24 : vector<32x128xf32> to vector<32x128xbf16>
    %c0_9 = arith.constant 0 : index
    %c0_10 = arith.constant 0 : index
    %26 = vector.load %arg4[%c0_9, %c0_10] : memref<128x384xbf16, #tpu.memory_space<vmem>>, vector<128x384xbf16>
    %cst_11 = arith.constant dense<0.000000e+00> : vector<32x384xf32>
    %27 = tpu.matmul %25, %26, %cst_11 {dimension_numbers = #tpu.dot_dimension_numbers<[1], [0], [0], [1], [0, 0, 1, 1], [], []>} : vector<32x128xbf16>, vector<128x384xbf16>, vector<32x384xf32> -> vector<32x384xf32>
    %c0_12 = arith.constant 0 : index
    %c0_13 = arith.constant 0 : index
    %28 = vector.load %arg5[%c0_12, %c0_13] : memref<1x384xf32, #tpu.memory_space<vmem>>, vector<1x384xf32>
    %29 = vector.broadcast %28 : vector<1x384xf32> to vector<32x384xf32>
    %30 = arith.addf %27, %29 : vector<32x384xf32>
    %31 = arith.truncf %30 : vector<32x384xf32> to vector<32x384xbf16>
    %32 = vector.extract_strided_slice %31 {offsets = [0, 0], sizes = [32, 32], strides = [1, 1]} : vector<32x384xbf16> to vector<32x32xbf16>
    %33 = vector.shape_cast %32 : vector<32x32xbf16> to vector<4x8x32xbf16>
    %34 = vector.extract_strided_slice %31 {offsets = [0, 128], sizes = [32, 32], strides = [1, 1]} : vector<32x384xbf16> to vector<32x32xbf16>
    %35 = vector.shape_cast %34 : vector<32x32xbf16> to vector<4x8x32xbf16>
    %36 = vector.extract_strided_slice %31 {offsets = [0, 256], sizes = [32, 32], strides = [1, 1]} : vector<32x384xbf16> to vector<32x32xbf16>
    %37 = vector.shape_cast %36 : vector<32x32xbf16> to vector<4x8x32xbf16>
    "tpu.trace_start"() <{level = 10 : i32, message = "wnd,wmd->wnm"}> : () -> ()
    %cst_14 = arith.constant dense<0.000000e+00> : vector<4x8x8xf32>
    %38 = tpu.matmul %33, %35, %cst_14 {dimension_numbers = #tpu.dot_dimension_numbers<[2], [2], [1], [1], [0, 0, 0, 1, 1, 1], [0], [0]>} : vector<4x8x32xbf16>, vector<4x8x32xbf16>, vector<4x8x8xf32> -> vector<4x8x8xf32>
    "tpu.trace_stop"() : () -> ()
    %cst_15 = arith.constant dense<0xFF800000> : vector<4x8xf32>
    %39 = vector.multi_reduction <maximumf>, %38, %cst_15 [2] : vector<4x8x8xf32> to vector<4x8xf32>
    %40 = vector.shape_cast %39 : vector<4x8xf32> to vector<4x8x1xf32>
    %41 = vector.broadcast %40 : vector<4x8x1xf32> to vector<4x8x8xf32>
    %42 = arith.subf %38, %41 : vector<4x8x8xf32>
    %43 = math.exp %42 : vector<4x8x8xf32>
    %cst_16 = arith.constant dense<0.000000e+00> : vector<4x8xf32>
    %44 = vector.multi_reduction <add>, %43, %cst_16 [2] : vector<4x8x8xf32> to vector<4x8xf32>
    %45 = vector.shape_cast %44 : vector<4x8xf32> to vector<4x8x1xf32>
    %46 = tpu.reciprocal %45 {approx = true} : vector<4x8x1xf32> -> vector<4x8x1xf32>
    %47 = vector.broadcast %46 : vector<4x8x1xf32> to vector<4x8x8xf32>
    %48 = arith.mulf %43, %47 : vector<4x8x8xf32>
    %49 = arith.truncf %48 : vector<4x8x8xf32> to vector<4x8x8xbf16>
    "tpu.trace_start"() <{level = 10 : i32, message = "wnm,wmd->wnd"}> : () -> ()
    %cst_17 = arith.constant dense<0.000000e+00> : vector<4x8x32xf32>
    %50 = tpu.matmul %49, %37, %cst_17 {dimension_numbers = #tpu.dot_dimension_numbers<[2], [1], [1], [2], [0, 0, 0, 1, 1, 2], [0], [0]>} : vector<4x8x8xbf16>, vector<4x8x32xbf16>, vector<4x8x32xf32> -> vector<4x8x32xf32>
    "tpu.trace_stop"() : () -> ()
    %51 = vector.shape_cast %50 : vector<4x8x32xf32> to vector<32x32xf32>
    %52 = vector.extract_strided_slice %31 {offsets = [0, 32], sizes = [32, 32], strides = [1, 1]} : vector<32x384xbf16> to vector<32x32xbf16>
    %53 = vector.shape_cast %52 : vector<32x32xbf16> to vector<4x8x32xbf16>
    %54 = vector.extract_strided_slice %31 {offsets = [0, 160], sizes = [32, 32], strides = [1, 1]} : vector<32x384xbf16> to vector<32x32xbf16>
    %55 = vector.shape_cast %54 : vector<32x32xbf16> to vector<4x8x32xbf16>
    %56 = vector.extract_strided_slice %31 {offsets = [0, 288], sizes = [32, 32], strides = [1, 1]} : vector<32x384xbf16> to vector<32x32xbf16>
    %57 = vector.shape_cast %56 : vector<32x32xbf16> to vector<4x8x32xbf16>
    "tpu.trace_start"() <{level = 10 : i32, message = "wnd,wmd->wnm"}> : () -> ()
    %cst_18 = arith.constant dense<0.000000e+00> : vector<4x8x8xf32>
    %58 = tpu.matmul %53, %55, %cst_18 {dimension_numbers = #tpu.dot_dimension_numbers<[2], [2], [1], [1], [0, 0, 0, 1, 1, 1], [0], [0]>} : vector<4x8x32xbf16>, vector<4x8x32xbf16>, vector<4x8x8xf32> -> vector<4x8x8xf32>
    "tpu.trace_stop"() : () -> ()
    %cst_19 = arith.constant dense<0xFF800000> : vector<4x8xf32>
    %59 = vector.multi_reduction <maximumf>, %58, %cst_19 [2] : vector<4x8x8xf32> to vector<4x8xf32>
    %60 = vector.shape_cast %59 : vector<4x8xf32> to vector<4x8x1xf32>
    %61 = vector.broadcast %60 : vector<4x8x1xf32> to vector<4x8x8xf32>
    %62 = arith.subf %58, %61 : vector<4x8x8xf32>
    %63 = math.exp %62 : vector<4x8x8xf32>
    %cst_20 = arith.constant dense<0.000000e+00> : vector<4x8xf32>
    %64 = vector.multi_reduction <add>, %63, %cst_20 [2] : vector<4x8x8xf32> to vector<4x8xf32>
    %65 = vector.shape_cast %64 : vector<4x8xf32> to vector<4x8x1xf32>
    %66 = tpu.reciprocal %65 {approx = true} : vector<4x8x1xf32> -> vector<4x8x1xf32>
    %67 = vector.broadcast %66 : vector<4x8x1xf32> to vector<4x8x8xf32>
    %68 = arith.mulf %63, %67 : vector<4x8x8xf32>
    %69 = arith.truncf %68 : vector<4x8x8xf32> to vector<4x8x8xbf16>
    "tpu.trace_start"() <{level = 10 : i32, message = "wnm,wmd->wnd"}> : () -> ()
    %cst_21 = arith.constant dense<0.000000e+00> : vector<4x8x32xf32>
    %70 = tpu.matmul %69, %57, %cst_21 {dimension_numbers = #tpu.dot_dimension_numbers<[2], [1], [1], [2], [0, 0, 0, 1, 1, 2], [0], [0]>} : vector<4x8x8xbf16>, vector<4x8x32xbf16>, vector<4x8x32xf32> -> vector<4x8x32xf32>
    "tpu.trace_stop"() : () -> ()
    %71 = vector.shape_cast %70 : vector<4x8x32xf32> to vector<32x32xf32>
    %72 = vector.extract_strided_slice %31 {offsets = [0, 64], sizes = [32, 32], strides = [1, 1]} : vector<32x384xbf16> to vector<32x32xbf16>
    %73 = vector.shape_cast %72 : vector<32x32xbf16> to vector<4x8x32xbf16>
    %74 = vector.extract_strided_slice %31 {offsets = [0, 192], sizes = [32, 32], strides = [1, 1]} : vector<32x384xbf16> to vector<32x32xbf16>
    %75 = vector.shape_cast %74 : vector<32x32xbf16> to vector<4x8x32xbf16>
    %76 = vector.extract_strided_slice %31 {offsets = [0, 320], sizes = [32, 32], strides = [1, 1]} : vector<32x384xbf16> to vector<32x32xbf16>
    %77 = vector.shape_cast %76 : vector<32x32xbf16> to vector<4x8x32xbf16>
    "tpu.trace_start"() <{level = 10 : i32, message = "wnd,wmd->wnm"}> : () -> ()
    %cst_22 = arith.constant dense<0.000000e+00> : vector<4x8x8xf32>
    %78 = tpu.matmul %73, %75, %cst_22 {dimension_numbers = #tpu.dot_dimension_numbers<[2], [2], [1], [1], [0, 0, 0, 1, 1, 1], [0], [0]>} : vector<4x8x32xbf16>, vector<4x8x32xbf16>, vector<4x8x8xf32> -> vector<4x8x8xf32>
    "tpu.trace_stop"() : () -> ()
    %cst_23 = arith.constant dense<0xFF800000> : vector<4x8xf32>
    %79 = vector.multi_reduction <maximumf>, %78, %cst_23 [2] : vector<4x8x8xf32> to vector<4x8xf32>
    %80 = vector.shape_cast %79 : vector<4x8xf32> to vector<4x8x1xf32>
    %81 = vector.broadcast %80 : vector<4x8x1xf32> to vector<4x8x8xf32>
    %82 = arith.subf %78, %81 : vector<4x8x8xf32>
    %83 = math.exp %82 : vector<4x8x8xf32>
    %cst_24 = arith.constant dense<0.000000e+00> : vector<4x8xf32>
    %84 = vector.multi_reduction <add>, %83, %cst_24 [2] : vector<4x8x8xf32> to vector<4x8xf32>
    %85 = vector.shape_cast %84 : vector<4x8xf32> to vector<4x8x1xf32>
    %86 = tpu.reciprocal %85 {approx = true} : vector<4x8x1xf32> -> vector<4x8x1xf32>
    %87 = vector.broadcast %86 : vector<4x8x1xf32> to vector<4x8x8xf32>
    %88 = arith.mulf %83, %87 : vector<4x8x8xf32>
    %89 = arith.truncf %88 : vector<4x8x8xf32> to vector<4x8x8xbf16>
    "tpu.trace_start"() <{level = 10 : i32, message = "wnm,wmd->wnd"}> : () -> ()
    %cst_25 = arith.constant dense<0.000000e+00> : vector<4x8x32xf32>
    %90 = tpu.matmul %89, %77, %cst_25 {dimension_numbers = #tpu.dot_dimension_numbers<[2], [1], [1], [2], [0, 0, 0, 1, 1, 2], [0], [0]>} : vector<4x8x8xbf16>, vector<4x8x32xbf16>, vector<4x8x32xf32> -> vector<4x8x32xf32>
    "tpu.trace_stop"() : () -> ()
    %91 = vector.shape_cast %90 : vector<4x8x32xf32> to vector<32x32xf32>
    %92 = vector.extract_strided_slice %31 {offsets = [0, 96], sizes = [32, 32], strides = [1, 1]} : vector<32x384xbf16> to vector<32x32xbf16>
    %93 = vector.shape_cast %92 : vector<32x32xbf16> to vector<4x8x32xbf16>
    %94 = vector.extract_strided_slice %31 {offsets = [0, 224], sizes = [32, 32], strides = [1, 1]} : vector<32x384xbf16> to vector<32x32xbf16>
    %95 = vector.shape_cast %94 : vector<32x32xbf16> to vector<4x8x32xbf16>
    %96 = vector.extract_strided_slice %31 {offsets = [0, 352], sizes = [32, 32], strides = [1, 1]} : vector<32x384xbf16> to vector<32x32xbf16>
    %97 = vector.shape_cast %96 : vector<32x32xbf16> to vector<4x8x32xbf16>
    "tpu.trace_start"() <{level = 10 : i32, message = "wnd,wmd->wnm"}> : () -> ()
    %cst_26 = arith.constant dense<0.000000e+00> : vector<4x8x8xf32>
    %98 = tpu.matmul %93, %95, %cst_26 {dimension_numbers = #tpu.dot_dimension_numbers<[2], [2], [1], [1], [0, 0, 0, 1, 1, 1], [0], [0]>} : vector<4x8x32xbf16>, vector<4x8x32xbf16>, vector<4x8x8xf32> -> vector<4x8x8xf32>
    "tpu.trace_stop"() : () -> ()
    %cst_27 = arith.constant dense<0xFF800000> : vector<4x8xf32>
    %99 = vector.multi_reduction <maximumf>, %98, %cst_27 [2] : vector<4x8x8xf32> to vector<4x8xf32>
    %100 = vector.shape_cast %99 : vector<4x8xf32> to vector<4x8x1xf32>
    %101 = vector.broadcast %100 : vector<4x8x1xf32> to vector<4x8x8xf32>
    %102 = arith.subf %98, %101 : vector<4x8x8xf32>
    %103 = math.exp %102 : vector<4x8x8xf32>
    %cst_28 = arith.constant dense<0.000000e+00> : vector<4x8xf32>
    %104 = vector.multi_reduction <add>, %103, %cst_28 [2] : vector<4x8x8xf32> to vector<4x8xf32>
    %105 = vector.shape_cast %104 : vector<4x8xf32> to vector<4x8x1xf32>
    %106 = tpu.reciprocal %105 {approx = true} : vector<4x8x1xf32> -> vector<4x8x1xf32>
    %107 = vector.broadcast %106 : vector<4x8x1xf32> to vector<4x8x8xf32>
    %108 = arith.mulf %103, %107 : vector<4x8x8xf32>
    %109 = arith.truncf %108 : vector<4x8x8xf32> to vector<4x8x8xbf16>
    "tpu.trace_start"() <{level = 10 : i32, message = "wnm,wmd->wnd"}> : () -> ()
    %cst_29 = arith.constant dense<0.000000e+00> : vector<4x8x32xf32>
    %110 = tpu.matmul %109, %97, %cst_29 {dimension_numbers = #tpu.dot_dimension_numbers<[2], [1], [1], [2], [0, 0, 0, 1, 1, 2], [0], [0]>} : vector<4x8x8xbf16>, vector<4x8x32xbf16>, vector<4x8x32xf32> -> vector<4x8x32xf32>
    "tpu.trace_stop"() : () -> ()
    %111 = vector.shape_cast %110 : vector<4x8x32xf32> to vector<32x32xf32>
    %112 = tpu.concatenate %51, %71, %91, %111 in 1 : vector<32x32xf32>, vector<32x32xf32>, vector<32x32xf32>, vector<32x32xf32> -> vector<32x128xf32>
    %113 = arith.truncf %112 : vector<32x128xf32> to vector<32x128xbf16>
    %c0_30 = arith.constant 0 : index
    %c0_31 = arith.constant 0 : index
    %114 = vector.load %arg6[%c0_30, %c0_31] : memref<128x128xbf16, #tpu.memory_space<vmem>>, vector<128x128xbf16>
    %cst_32 = arith.constant dense<0.000000e+00> : vector<32x128xf32>
    %115 = tpu.matmul %113, %114, %cst_32 {dimension_numbers = #tpu.dot_dimension_numbers<[1], [0], [0], [1], [0, 0, 1, 1], [], []>} : vector<32x128xbf16>, vector<128x128xbf16>, vector<32x128xf32> -> vector<32x128xf32>
    %c0_33 = arith.constant 0 : index
    %c0_34 = arith.constant 0 : index
    %116 = vector.load %arg7[%c0_33, %c0_34] : memref<1x128xf32, #tpu.memory_space<vmem>>, vector<1x128xf32>
    %117 = vector.broadcast %116 : vector<1x128xf32> to vector<32x128xf32>
    %118 = arith.addf %115, %117 : vector<32x128xf32>
    %119 = arith.addf %0, %118 : vector<32x128xf32>
    %c0_35 = arith.constant 0 : index
    %c0_36 = arith.constant 0 : index
    %120 = vector.load %arg8[%c0_35, %c0_36] : memref<1x128xf32, #tpu.memory_space<vmem>>, vector<1x128xf32>
    %c0_37 = arith.constant 0 : index
    %c0_38 = arith.constant 0 : index
    %121 = vector.load %arg9[%c0_37, %c0_38] : memref<1x128xf32, #tpu.memory_space<vmem>>, vector<1x128xf32>
    %cst_39 = arith.constant dense<0.000000e+00> : vector<32xf32>
    %122 = vector.multi_reduction <add>, %119, %cst_39 [1] : vector<32x128xf32> to vector<32xf32>
    %123 = vector.shape_cast %122 : vector<32xf32> to vector<32x1xf32>
    %cst_40 = arith.constant 1.280000e+02 : f32
    %124 = vector.broadcast %cst_40 : f32 to vector<32x1xf32>
    %125 = arith.divf %123, %124 : vector<32x1xf32>
    %126 = vector.broadcast %125 : vector<32x1xf32> to vector<32x128xf32>
    %127 = arith.subf %119, %126 : vector<32x128xf32>
    %128 = arith.mulf %127, %127 : vector<32x128xf32>
    %cst_41 = arith.constant dense<0.000000e+00> : vector<32xf32>
    %129 = vector.multi_reduction <add>, %128, %cst_41 [1] : vector<32x128xf32> to vector<32xf32>
    %130 = vector.shape_cast %129 : vector<32xf32> to vector<32x1xf32>
    %cst_42 = arith.constant 1.280000e+02 : f32
    %131 = vector.broadcast %cst_42 : f32 to vector<32x1xf32>
    %132 = arith.divf %130, %131 : vector<32x1xf32>
    %133 = vector.broadcast %125 : vector<32x1xf32> to vector<32x128xf32>
    %134 = arith.subf %119, %133 : vector<32x128xf32>
    %cst_43 = arith.constant 9.99999974E-6 : f32
    %135 = vector.broadcast %cst_43 : f32 to vector<32x1xf32>
    %136 = arith.addf %132, %135 : vector<32x1xf32>
    %137 = math.rsqrt %136 : vector<32x1xf32>
    %138 = vector.broadcast %137 : vector<32x1xf32> to vector<32x128xf32>
    %139 = arith.mulf %134, %138 : vector<32x128xf32>
    %140 = vector.broadcast %120 : vector<1x128xf32> to vector<32x128xf32>
    %141 = arith.mulf %139, %140 : vector<32x128xf32>
    %142 = vector.broadcast %121 : vector<1x128xf32> to vector<32x128xf32>
    %143 = arith.addf %141, %142 : vector<32x128xf32>
    %144 = arith.truncf %143 : vector<32x128xf32> to vector<32x128xbf16>
    %cst_44 = arith.constant 0.000000e+00 : f32
    %145 = vector.broadcast %cst_44 : f32 to vector<32x128xf32>
    %c0_45 = arith.constant 0 : index
    %c0_46 = arith.constant 0 : index
    %146 = vector.load %arg10[%c0_45, %c0_46] : memref<128x512xbf16, #tpu.memory_space<vmem>>, vector<128x512xbf16>
    %cst_47 = arith.constant dense<0.000000e+00> : vector<32x512xf32>
    %147 = tpu.matmul %144, %146, %cst_47 {dimension_numbers = #tpu.dot_dimension_numbers<[1], [0], [0], [1], [0, 0, 1, 1], [], []>} : vector<32x128xbf16>, vector<128x512xbf16>, vector<32x512xf32> -> vector<32x512xf32>
    %c0_48 = arith.constant 0 : index
    %c0_49 = arith.constant 0 : index
    %148 = vector.load %arg11[%c0_48, %c0_49] : memref<1x512xf32, #tpu.memory_space<vmem>>, vector<1x512xf32>
    %149 = vector.broadcast %148 : vector<1x512xf32> to vector<32x512xf32>
    %150 = arith.addf %147, %149 : vector<32x512xf32>
    %cst_50 = arith.constant 5.000000e-01 : f32
    %151 = vector.broadcast %cst_50 : f32 to vector<32x512xf32>
    %152 = arith.mulf %151, %150 : vector<32x512xf32>
    %cst_51 = arith.constant 0.707106769 : f32
    %153 = vector.broadcast %cst_51 : f32 to vector<32x512xf32>
    %154 = arith.mulf %150, %153 : vector<32x512xf32>
    %cst_52 = arith.constant 0.000000e+00 : f32
    %155 = vector.broadcast %cst_52 : f32 to vector<32x512xf32>
    %156 = arith.cmpf olt, %154, %155 : vector<32x512xf32>
    %cst_53 = arith.constant -1.000000e+00 : f32
    %cst_54 = arith.constant 1.000000e+00 : f32
    %157 = vector.broadcast %cst_53 : f32 to vector<32x512xf32>
    %158 = vector.broadcast %cst_54 : f32 to vector<32x512xf32>
    %159 = arith.select %156, %157, %158 : vector<32x512xi1>, vector<32x512xf32>
    %160 = math.absf %154 : vector<32x512xf32>
    %cst_55 = arith.constant 0.327591091 : f32
    %161 = vector.broadcast %cst_55 : f32 to vector<32x512xf32>
    %162 = arith.mulf %161, %160 : vector<32x512xf32>
    %cst_56 = arith.constant 1.000000e+00 : f32
    %163 = vector.broadcast %cst_56 : f32 to vector<32x512xf32>
    %164 = arith.addf %163, %162 : vector<32x512xf32>
    %cst_57 = arith.constant 1.000000e+00 : f32
    %165 = vector.broadcast %cst_57 : f32 to vector<32x512xf32>
    %166 = arith.divf %165, %164 : vector<32x512xf32>
    %cst_58 = arith.constant 1.06140542 : f32
    %167 = vector.broadcast %cst_58 : f32 to vector<32x512xf32>
    %168 = arith.mulf %167, %166 : vector<32x512xf32>
    %cst_59 = arith.constant -1.45315206 : f32
    %169 = vector.broadcast %cst_59 : f32 to vector<32x512xf32>
    %170 = arith.addf %168, %169 : vector<32x512xf32>
    %171 = arith.mulf %170, %166 : vector<32x512xf32>
    %cst_60 = arith.constant 1.42141378 : f32
    %172 = vector.broadcast %cst_60 : f32 to vector<32x512xf32>
    %173 = arith.addf %171, %172 : vector<32x512xf32>
    %174 = arith.mulf %173, %166 : vector<32x512xf32>
    %cst_61 = arith.constant -0.284496725 : f32
    %175 = vector.broadcast %cst_61 : f32 to vector<32x512xf32>
    %176 = arith.addf %174, %175 : vector<32x512xf32>
    %177 = arith.mulf %176, %166 : vector<32x512xf32>
    %cst_62 = arith.constant 0.254829586 : f32
    %178 = vector.broadcast %cst_62 : f32 to vector<32x512xf32>
    %179 = arith.addf %177, %178 : vector<32x512xf32>
    %180 = arith.mulf %179, %166 : vector<32x512xf32>
    %cst_63 = arith.constant 0.000000e+00 : f32
    %181 = vector.broadcast %cst_63 : f32 to vector<32x512xf32>
    %182 = arith.subf %181, %160 : vector<32x512xf32>
    %183 = arith.mulf %182, %160 : vector<32x512xf32>
    %184 = math.exp %183 : vector<32x512xf32>
    %185 = arith.mulf %180, %184 : vector<32x512xf32>
    %cst_64 = arith.constant 1.000000e+00 : f32
    %186 = vector.broadcast %cst_64 : f32 to vector<32x512xf32>
    %187 = arith.subf %186, %185 : vector<32x512xf32>
    %188 = arith.mulf %159, %187 : vector<32x512xf32>
    %cst_65 = arith.constant 1.000000e+00 : f32
    %189 = vector.broadcast %cst_65 : f32 to vector<32x512xf32>
    %190 = arith.addf %189, %188 : vector<32x512xf32>
    %191 = arith.mulf %152, %190 : vector<32x512xf32>
    %192 = arith.truncf %191 : vector<32x512xf32> to vector<32x512xbf16>
    %c0_66 = arith.constant 0 : index
    %c0_67 = arith.constant 0 : index
    %193 = vector.load %arg12[%c0_66, %c0_67] : memref<512x128xbf16, #tpu.memory_space<vmem>>, vector<512x128xbf16>
    %cst_68 = arith.constant dense<0.000000e+00> : vector<32x128xf32>
    %194 = tpu.matmul %192, %193, %cst_68 {dimension_numbers = #tpu.dot_dimension_numbers<[1], [0], [0], [1], [0, 0, 1, 1], [], []>} : vector<32x512xbf16>, vector<512x128xbf16>, vector<32x128xf32> -> vector<32x128xf32>
    %195 = arith.addf %145, %194 : vector<32x128xf32>
    %196 = arith.addf %119, %195 : vector<32x128xf32>
    %c0_69 = arith.constant 0 : index
    %c0_70 = arith.constant 0 : index
    %197 = vector.load %arg13[%c0_69, %c0_70] : memref<1x128xf32, #tpu.memory_space<vmem>>, vector<1x128xf32>
    %198 = vector.broadcast %197 : vector<1x128xf32> to vector<32x128xf32>
    %199 = arith.addf %196, %198 : vector<32x128xf32>
    %c0_71 = arith.constant 0 : index
    %c0_72 = arith.constant 0 : index
    %200 = vector.load %arg14[%c0_71, %c0_72] : memref<32x128xf32, #tpu.memory_space<vmem>>, vector<32x128xf32>
    tpu.vector_store %arg14[%c0_71, %c0_72], %199 {strides = array<i32>} : memref<32x128xf32, #tpu.memory_space<vmem>>, vector<32x128xf32>,
    return
  }
  func.func @transform_0(%arg0: i32) -> (i32, i32) {
    %c0_i32 = arith.constant 0 : i32
    %c0_i32_0 = arith.constant 0 : i32
    return %arg0, %c0_i32 : i32, i32
  }
  func.func @transform_1(%arg0: i32) -> (i32, i32) {
    %c0_i32 = arith.constant 0 : i32
    %c0_i32_0 = arith.constant 0 : i32
    %c0_i32_1 = arith.constant 0 : i32
    return %c0_i32, %c0_i32_0 : i32, i32
  }
  func.func @transform_2(%arg0: i32) -> (i32, i32) {
    %c0_i32 = arith.constant 0 : i32
    %c0_i32_0 = arith.constant 0 : i32
    %c0_i32_1 = arith.constant 0 : i32
    return %c0_i32, %c0_i32_0 : i32, i32
  }
  func.func @transform_3(%arg0: i32) -> (i32, i32) {
    %c0_i32 = arith.constant 0 : i32
    %c0_i32_0 = arith.constant 0 : i32
    %c0_i32_1 = arith.constant 0 : i32
    return %c0_i32, %c0_i32_0 : i32, i32
  }
  func.func @transform_4(%arg0: i32) -> (i32, i32) {
    %c0_i32 = arith.constant 0 : i32
    %c0_i32_0 = arith.constant 0 : i32
    %c0_i32_1 = arith.constant 0 : i32
    return %c0_i32, %c0_i32_0 : i32, i32
  }
  func.func @transform_5(%arg0: i32) -> (i32, i32) {
    %c0_i32 = arith.constant 0 : i32
    %c0_i32_0 = arith.constant 0 : i32
    %c0_i32_1 = arith.constant 0 : i32
    return %c0_i32, %c0_i32_0 : i32, i32
  }
  func.func @transform_6(%arg0: i32) -> (i32, i32) {
    %c0_i32 = arith.constant 0 : i32
    %c0_i32_0 = arith.constant 0 : i32
    %c0_i32_1 = arith.constant 0 : i32
    return %c0_i32, %c0_i32_0 : i32, i32
  }
  func.func @transform_7(%arg0: i32) -> (i32, i32) {
    %c0_i32 = arith.constant 0 : i32
    %c0_i32_0 = arith.constant 0 : i32
    %c0_i32_1 = arith.constant 0 : i32
    return %c0_i32, %c0_i32_0 : i32, i32
  }
  func.func @transform_8(%arg0: i32) -> (i32, i32) {
    %c0_i32 = arith.constant 0 : i32
    %c0_i32_0 = arith.constant 0 : i32
    %c0_i32_1 = arith.constant 0 : i32
    return %c0_i32, %c0_i32_0 : i32, i32
  }
  func.func @transform_9(%arg0: i32) -> (i32, i32) {
    %c0_i32 = arith.constant 0 : i32
    %c0_i32_0 = arith.constant 0 : i32
    %c0_i32_1 = arith.constant 0 : i32
    return %c0_i32, %c0_i32_0 : i32, i32
  }
  func.func @transform_10(%arg0: i32) -> (i32, i32) {
    %c0_i32 = arith.constant 0 : i32
    %c0_i32_0 = arith.constant 0 : i32
    %c0_i32_1 = arith.constant 0 : i32
    return %c0_i32, %c0_i32_0 : i32, i32
  }
  func.func @transform_11(%arg0: i32) -> (i32, i32) {
    %c0_i32 = arith.constant 0 : i32
    %c0_i32_0 = arith.constant 0 : i32
    %c0_i32_1 = arith.constant 0 : i32
    return %c0_i32, %c0_i32_0 : i32, i32
  }
  func.func @transform_12(%arg0: i32) -> (i32, i32) {
    %c0_i32 = arith.constant 0 : i32
    %c0_i32_0 = arith.constant 0 : i32
    %c0_i32_1 = arith.constant 0 : i32
    return %c0_i32, %c0_i32_0 : i32, i32
  }
  func.func @transform_13(%arg0: i32) -> (i32, i32) {
    %c0_i32 = arith.constant 0 : i32
    %c0_i32_0 = arith.constant 0 : i32
    return %arg0, %c0_i32 : i32, i32
  }
}

module attributes {stable_mosaic.version = 11 : i64} {
  func.func @swin_block_kernel(%arg0: i32, %arg1: memref<32x128xf32, #tpu.memory_space<vmem>>, %arg2: memref<1x128xf32, #tpu.memory_space<vmem>>, %arg3: memref<1x128xf32, #tpu.memory_space<vmem>>, %arg4: memref<128x384xbf16, #tpu.memory_space<vmem>>, %arg5: memref<1x384xf32, #tpu.memory_space<vmem>>, %arg6: memref<128x128xbf16, #tpu.memory_space<vmem>>, %arg7: memref<1x128xf32, #tpu.memory_space<vmem>>, %arg8: memref<1x128xf32, #tpu.memory_space<vmem>>, %arg9: memref<1x128xf32, #tpu.memory_space<vmem>>, %arg10: memref<128x512xbf16, #tpu.memory_space<vmem>>, %arg11: memref<1x512xf32, #tpu.memory_space<vmem>>, %arg12: memref<512x128xbf16, #tpu.memory_space<vmem>>, %arg13: memref<1x128xf32, #tpu.memory_space<vmem>>, %arg14: memref<32x128xf32, #tpu.memory_space<vmem>>) attributes {dimension_semantics = [#tpu.dimension_semantics<parallel>], iteration_bounds = array<i64: 4>, scalar_prefetch = 0 : i64, scratch_operands = 0 : i64, tpu.core_type = #tpu.core_type<tc>, window_params = [{transform_indices = @transform_0, window_bounds = array<i64: 32, 128>}, {pipeline_mode = #tpu.pipeline_mode<synchronous>, transform_indices = @transform_1, window_bounds = array<i64: 1, 128>}, {pipeline_mode = #tpu.pipeline_mode<synchronous>, transform_indices = @transform_2, window_bounds = array<i64: 1, 128>}, {pipeline_mode = #tpu.pipeline_mode<synchronous>, transform_indices = @transform_3, window_bounds = array<i64: 128, 384>}, {pipeline_mode = #tpu.pipeline_mode<synchronous>, transform_indices = @transform_4, window_bounds = array<i64: 1, 384>}, {pipeline_mode = #tpu.pipeline_mode<synchronous>, transform_indices = @transform_5, window_bounds = array<i64: 128, 128>}, {pipeline_mode = #tpu.pipeline_mode<synchronous>, transform_indices = @transform_6, window_bounds = array<i64: 1, 128>}, {pipeline_mode = #tpu.pipeline_mode<synchronous>, transform_indices = @transform_7, window_bounds = array<i64: 1, 128>}, {pipeline_mode = #tpu.pipeline_mode<synchronous>, transform_indices = @transform_8, window_bounds = array<i64: 1, 128>}, {pipeline_mode = #tpu.pipeline_mode<synchronous>, transform_indices = @transform_9, window_bounds = array<i64: 128, 512>}, {pipeline_mode = #tpu.pipeline_mode<synchronous>, transform_indices = @transform_10, window_bounds = array<i64: 1, 512>}, {pipeline_mode = #tpu.pipeline_mode<synchronous>, transform_indices = @transform_11, window_bounds = array<i64: 512, 128>}, {pipeline_mode = #tpu.pipeline_mode<synchronous>, transform_indices = @transform_12, window_bounds = array<i64: 1, 128>}, {transform_indices = @transform_13, window_bounds = array<i64: 32, 128>}]} {
    %c0 = arith.constant 0 : index
    %c0_0 = arith.constant 0 : index
    %0 = vector.load %arg1[%c0, %c0_0] : memref<32x128xf32, #tpu.memory_space<vmem>>, vector<32x128xf32>
    %c0_1 = arith.constant 0 : index
    %c0_2 = arith.constant 0 : index
    %1 = vector.load %arg2[%c0_1, %c0_2] : memref<1x128xf32, #tpu.memory_space<vmem>>, vector<1x128xf32>
    %c0_3 = arith.constant 0 : index
    %c0_4 = arith.constant 0 : index
    %2 = vector.load %arg3[%c0_3, %c0_4] : memref<1x128xf32, #tpu.memory_space<vmem>>, vector<1x128xf32>
    %cst = arith.constant dense<0.000000e+00> : vector<32xf32>
    %3 = vector.multi_reduction <add>, %0, %cst [1] : vector<32x128xf32> to vector<32xf32>
    %4 = vector.shape_cast %3 : vector<32xf32> to vector<32x1xf32>
    %cst_5 = arith.constant 1.280000e+02 : f32
    %5 = vector.broadcast %cst_5 : f32 to vector<32x1xf32>
    %6 = arith.divf %4, %5 : vector<32x1xf32>
    %7 = vector.broadcast %6 : vector<32x1xf32> to vector<32x128xf32>
    %8 = arith.subf %0, %7 : vector<32x128xf32>
    %9 = arith.mulf %8, %8 : vector<32x128xf32>
    %cst_6 = arith.constant dense<0.000000e+00> : vector<32xf32>
    %10 = vector.multi_reduction <add>, %9, %cst_6 [1] : vector<32x128xf32> to vector<32xf32>
    %11 = vector.shape_cast %10 : vector<32xf32> to vector<32x1xf32>
    %cst_7 = arith.constant 1.280000e+02 : f32
    %12 = vector.broadcast %cst_7 : f32 to vector<32x1xf32>
    %13 = arith.divf %11, %12 : vector<32x1xf32>
    %14 = vector.broadcast %6 : vector<32x1xf32> to vector<32x128xf32>
    %15 = arith.subf %0, %14 : vector<32x128xf32>
    %cst_8 = arith.constant 9.99999974E-6 : f32
    %16 = vector.broadcast %cst_8 : f32 to vector<32x1xf32>
    %17 = arith.addf %13, %16 : vector<32x1xf32>
    %18 = math.rsqrt %17 : vector<32x1xf32>
    %19 = vector.broadcast %18 : vector<32x1xf32> to vector<32x128xf32>
    %20 = arith.mulf %15, %19 : vector<32x128xf32>
    %21 = vector.broadcast %1 : vector<1x128xf32> to vector<32x128xf32>
    %22 = arith.mulf %20, %21 : vector<32x128xf32>
    %23 = vector.broadcast %2 : vector<1x128xf32> to vector<32x128xf32>
    %24 = arith.addf %22, %23 : vector<32x128xf32>
    %25 = arith.truncf %24 : vector<32x128xf32> to vector<32x128xbf16>
    %c0_9 = arith.constant 0 : index
    %c0_10 = arith.constant 0 : index
    %26 = vector.load %arg4[%c0_9, %c0_10] : memref<128x384xbf16, #tpu.memory_space<vmem>>, vector<128x384xbf16>
    %cst_11 = arith.constant dense<0.000000e+00> : vector<32x384xf32>
    %27 = tpu.matmul %25, %26, %cst_11 {dimension_numbers = #tpu.dot_dimension_numbers<[1], [0], [0], [1], [0, 0, 1, 1], [], []>} : vector<32x128xbf16>, vector<128x384xbf16>, vector<32x384xf32> -> vector<32x384xf32>
    %c0_12 = arith.constant 0 : index
    %c0_13 = arith.constant 0 : index
    %28 = vector.load %arg5[%c0_12, %c0_13] : memref<1x384xf32, #tpu.memory_space<vmem>>, vector<1x384xf32>
    %29 = vector.broadcast %28 : vector<1x384xf32> to vector<32x384xf32>
    %30 = arith.addf %27, %29 : vector<32x384xf32>
    %31 = arith.truncf %30 : vector<32x384xf32> to vector<32x384xbf16>
    %32 = vector.extract_strided_slice %31 {offsets = [0, 0], sizes = [32, 32], strides = [1, 1]} : vector<32x384xbf16> to vector<32x32xbf16>
    %33 = vector.shape_cast %32 : vector<32x32xbf16> to vector<4x8x32xbf16>
    %34 = vector.extract_strided_slice %31 {offsets = [0, 128], sizes = [32, 32], strides = [1, 1]} : vector<32x384xbf16> to vector<32x32xbf16>
    %35 = vector.shape_cast %34 : vector<32x32xbf16> to vector<4x8x32xbf16>
    %36 = vector.extract_strided_slice %31 {offsets = [0, 256], sizes = [32, 32], strides = [1, 1]} : vector<32x384xbf16> to vector<32x32xbf16>
    %37 = vector.shape_cast %36 : vector<32x32xbf16> to vector<4x8x32xbf16>
    "tpu.trace_start"() <{level = 10 : i32, message = "wnd,wmd->wnm"}> : () -> ()
    %cst_14 = arith.constant dense<0.000000e+00> : vector<4x8x8xf32>
    %38 = tpu.matmul %33, %35, %cst_14 {dimension_numbers = #tpu.dot_dimension_numbers<[2], [2], [1], [1], [0, 0, 0, 1, 1, 1], [0], [0]>} : vector<4x8x32xbf16>, vector<4x8x32xbf16>, vector<4x8x8xf32> -> vector<4x8x8xf32>
    "tpu.trace_stop"() : () -> ()
    %cst_15 = arith.constant dense<0xFF800000> : vector<4x8xf32>
    %39 = vector.multi_reduction <maximumf>, %38, %cst_15 [2] : vector<4x8x8xf32> to vector<4x8xf32>
    %40 = vector.shape_cast %39 : vector<4x8xf32> to vector<4x8x1xf32>
    %41 = vector.broadcast %40 : vector<4x8x1xf32> to vector<4x8x8xf32>
    %42 = arith.subf %38, %41 : vector<4x8x8xf32>
    %43 = math.exp %42 : vector<4x8x8xf32>
    %cst_16 = arith.constant dense<0.000000e+00> : vector<4x8xf32>
    %44 = vector.multi_reduction <add>, %43, %cst_16 [2] : vector<4x8x8xf32> to vector<4x8xf32>
    %45 = vector.shape_cast %44 : vector<4x8xf32> to vector<4x8x1xf32>
    %46 = tpu.reciprocal %45 {approx = true} : vector<4x8x1xf32> -> vector<4x8x1xf32>
    %47 = vector.broadcast %46 : vector<4x8x1xf32> to vector<4x8x8xf32>
    %48 = arith.mulf %43, %47 : vector<4x8x8xf32>
    %49 = arith.truncf %48 : vector<4x8x8xf32> to vector<4x8x8xbf16>
    "tpu.trace_start"() <{level = 10 : i32, message = "wnm,wmd->wnd"}> : () -> ()
    %cst_17 = arith.constant dense<0.000000e+00> : vector<4x8x32xf32>
    %50 = tpu.matmul %49, %37, %cst_17 {dimension_numbers = #tpu.dot_dimension_numbers<[2], [1], [1], [2], [0, 0, 0, 1, 1, 2], [0], [0]>} : vector<4x8x8xbf16>, vector<4x8x32xbf16>, vector<4x8x32xf32> -> vector<4x8x32xf32>
    "tpu.trace_stop"() : () -> ()
    %51 = vector.shape_cast %50 : vector<4x8x32xf32> to vector<32x32xf32>
    %52 = vector.extract_strided_slice %31 {offsets = [0, 32], sizes = [32, 32], strides = [1, 1]} : vector<32x384xbf16> to vector<32x32xbf16>
    %53 = vector.shape_cast %52 : vector<32x32xbf16> to vector<4x8x32xbf16>
    %54 = vector.extract_strided_slice %31 {offsets = [0, 160], sizes = [32, 32], strides = [1, 1]} : vector<32x384xbf16> to vector<32x32xbf16>
    %55 = vector.shape_cast %54 : vector<32x32xbf16> to vector<4x8x32xbf16>
    %56 = vector.extract_strided_slice %31 {offsets = [0, 288], sizes = [32, 32], strides = [1, 1]} : vector<32x384xbf16> to vector<32x32xbf16>
    %57 = vector.shape_cast %56 : vector<32x32xbf16> to vector<4x8x32xbf16>
    "tpu.trace_start"() <{level = 10 : i32, message = "wnd,wmd->wnm"}> : () -> ()
    %cst_18 = arith.constant dense<0.000000e+00> : vector<4x8x8xf32>
    %58 = tpu.matmul %53, %55, %cst_18 {dimension_numbers = #tpu.dot_dimension_numbers<[2], [2], [1], [1], [0, 0, 0, 1, 1, 1], [0], [0]>} : vector<4x8x32xbf16>, vector<4x8x32xbf16>, vector<4x8x8xf32> -> vector<4x8x8xf32>
    "tpu.trace_stop"() : () -> ()
    %cst_19 = arith.constant dense<0xFF800000> : vector<4x8xf32>
    %59 = vector.multi_reduction <maximumf>, %58, %cst_19 [2] : vector<4x8x8xf32> to vector<4x8xf32>
    %60 = vector.shape_cast %59 : vector<4x8xf32> to vector<4x8x1xf32>
    %61 = vector.broadcast %60 : vector<4x8x1xf32> to vector<4x8x8xf32>
    %62 = arith.subf %58, %61 : vector<4x8x8xf32>
    %63 = math.exp %62 : vector<4x8x8xf32>
    %cst_20 = arith.constant dense<0.000000e+00> : vector<4x8xf32>
    %64 = vector.multi_reduction <add>, %63, %cst_20 [2] : vector<4x8x8xf32> to vector<4x8xf32>
    %65 = vector.shape_cast %64 : vector<4x8xf32> to vector<4x8x1xf32>
    %66 = tpu.reciprocal %65 {approx = true} : vector<4x8x1xf32> -> vector<4x8x1xf32>
    %67 = vector.broadcast %66 : vector<4x8x1xf32> to vector<4x8x8xf32>
    %68 = arith.mulf %63, %67 : vector<4x8x8xf32>
    %69 = arith.truncf %68 : vector<4x8x8xf32> to vector<4x8x8xbf16>
    "tpu.trace_start"() <{level = 10 : i32, message = "wnm,wmd->wnd"}> : () -> ()
    %cst_21 = arith.constant dense<0.000000e+00> : vector<4x8x32xf32>
    %70 = tpu.matmul %69, %57, %cst_21 {dimension_numbers = #tpu.dot_dimension_numbers<[2], [1], [1], [2], [0, 0, 0, 1, 1, 2], [0], [0]>} : vector<4x8x8xbf16>, vector<4x8x32xbf16>, vector<4x8x32xf32> -> vector<4x8x32xf32>
    "tpu.trace_stop"() : () -> ()
    %71 = vector.shape_cast %70 : vector<4x8x32xf32> to vector<32x32xf32>
    %72 = vector.extract_strided_slice %31 {offsets = [0, 64], sizes = [32, 32], strides = [1, 1]} : vector<32x384xbf16> to vector<32x32xbf16>
    %73 = vector.shape_cast %72 : vector<32x32xbf16> to vector<4x8x32xbf16>
    %74 = vector.extract_strided_slice %31 {offsets = [0, 192], sizes = [32, 32], strides = [1, 1]} : vector<32x384xbf16> to vector<32x32xbf16>
    %75 = vector.shape_cast %74 : vector<32x32xbf16> to vector<4x8x32xbf16>
    %76 = vector.extract_strided_slice %31 {offsets = [0, 320], sizes = [32, 32], strides = [1, 1]} : vector<32x384xbf16> to vector<32x32xbf16>
    %77 = vector.shape_cast %76 : vector<32x32xbf16> to vector<4x8x32xbf16>
    "tpu.trace_start"() <{level = 10 : i32, message = "wnd,wmd->wnm"}> : () -> ()
    %cst_22 = arith.constant dense<0.000000e+00> : vector<4x8x8xf32>
    %78 = tpu.matmul %73, %75, %cst_22 {dimension_numbers = #tpu.dot_dimension_numbers<[2], [2], [1], [1], [0, 0, 0, 1, 1, 1], [0], [0]>} : vector<4x8x32xbf16>, vector<4x8x32xbf16>, vector<4x8x8xf32> -> vector<4x8x8xf32>
    "tpu.trace_stop"() : () -> ()
    %cst_23 = arith.constant dense<0xFF800000> : vector<4x8xf32>
    %79 = vector.multi_reduction <maximumf>, %78, %cst_23 [2] : vector<4x8x8xf32> to vector<4x8xf32>
    %80 = vector.shape_cast %79 : vector<4x8xf32> to vector<4x8x1xf32>
    %81 = vector.broadcast %80 : vector<4x8x1xf32> to vector<4x8x8xf32>
    %82 = arith.subf %78, %81 : vector<4x8x8xf32>
    %83 = math.exp %82 : vector<4x8x8xf32>
    %cst_24 = arith.constant dense<0.000000e+00> : vector<4x8xf32>
    %84 = vector.multi_reduction <add>, %83, %cst_24 [2] : vector<4x8x8xf32> to vector<4x8xf32>
    %85 = vector.shape_cast %84 : vector<4x8xf32> to vector<4x8x1xf32>
    %86 = tpu.reciprocal %85 {approx = true} : vector<4x8x1xf32> -> vector<4x8x1xf32>
    %87 = vector.broadcast %86 : vector<4x8x1xf32> to vector<4x8x8xf32>
    %88 = arith.mulf %83, %87 : vector<4x8x8xf32>
    %89 = arith.truncf %88 : vector<4x8x8xf32> to vector<4x8x8xbf16>
    "tpu.trace_start"() <{level = 10 : i32, message = "wnm,wmd->wnd"}> : () -> ()
    %cst_25 = arith.constant dense<0.000000e+00> : vector<4x8x32xf32>
    %90 = tpu.matmul %89, %77, %cst_25 {dimension_numbers = #tpu.dot_dimension_numbers<[2], [1], [1], [2], [0, 0, 0, 1, 1, 2], [0], [0]>} : vector<4x8x8xbf16>, vector<4x8x32xbf16>, vector<4x8x32xf32> -> vector<4x8x32xf32>
    "tpu.trace_stop"() : () -> ()
    %91 = vector.shape_cast %90 : vector<4x8x32xf32> to vector<32x32xf32>
    %92 = vector.extract_strided_slice %31 {offsets = [0, 96], sizes = [32, 32], strides = [1, 1]} : vector<32x384xbf16> to vector<32x32xbf16>
    %93 = vector.shape_cast %92 : vector<32x32xbf16> to vector<4x8x32xbf16>
    %94 = vector.extract_strided_slice %31 {offsets = [0, 224], sizes = [32, 32], strides = [1, 1]} : vector<32x384xbf16> to vector<32x32xbf16>
    %95 = vector.shape_cast %94 : vector<32x32xbf16> to vector<4x8x32xbf16>
    %96 = vector.extract_strided_slice %31 {offsets = [0, 352], sizes = [32, 32], strides = [1, 1]} : vector<32x384xbf16> to vector<32x32xbf16>
    %97 = vector.shape_cast %96 : vector<32x32xbf16> to vector<4x8x32xbf16>
    "tpu.trace_start"() <{level = 10 : i32, message = "wnd,wmd->wnm"}> : () -> ()
    %cst_26 = arith.constant dense<0.000000e+00> : vector<4x8x8xf32>
    %98 = tpu.matmul %93, %95, %cst_26 {dimension_numbers = #tpu.dot_dimension_numbers<[2], [2], [1], [1], [0, 0, 0, 1, 1, 1], [0], [0]>} : vector<4x8x32xbf16>, vector<4x8x32xbf16>, vector<4x8x8xf32> -> vector<4x8x8xf32>
    "tpu.trace_stop"() : () -> ()
    %cst_27 = arith.constant dense<0xFF800000> : vector<4x8xf32>
    %99 = vector.multi_reduction <maximumf>, %98, %cst_27 [2] : vector<4x8x8xf32> to vector<4x8xf32>
    %100 = vector.shape_cast %99 : vector<4x8xf32> to vector<4x8x1xf32>
    %101 = vector.broadcast %100 : vector<4x8x1xf32> to vector<4x8x8xf32>
    %102 = arith.subf %98, %101 : vector<4x8x8xf32>
    %103 = math.exp %102 : vector<4x8x8xf32>
    %cst_28 = arith.constant dense<0.000000e+00> : vector<4x8xf32>
    %104 = vector.multi_reduction <add>, %103, %cst_28 [2] : vector<4x8x8xf32> to vector<4x8xf32>
    %105 = vector.shape_cast %104 : vector<4x8xf32> to vector<4x8x1xf32>
    %106 = tpu.reciprocal %105 {approx = true} : vector<4x8x1xf32> -> vector<4x8x1xf32>
    %107 = vector.broadcast %106 : vector<4x8x1xf32> to vector<4x8x8xf32>
    %108 = arith.mulf %103, %107 : vector<4x8x8xf32>
    %109 = arith.truncf %108 : vector<4x8x8xf32> to vector<4x8x8xbf16>
    "tpu.trace_start"() <{level = 10 : i32, message = "wnm,wmd->wnd"}> : () -> ()
    %cst_29 = arith.constant dense<0.000000e+00> : vector<4x8x32xf32>
    %110 = tpu.matmul %109, %97, %cst_29 {dimension_numbers = #tpu.dot_dimension_numbers<[2], [1], [1], [2], [0, 0, 0, 1, 1, 2], [0], [0]>} : vector<4x8x8xbf16>, vector<4x8x32xbf16>, vector<4x8x32xf32> -> vector<4x8x32xf32>
    "tpu.trace_stop"() : () -> ()
    %111 = vector.shape_cast %110 : vector<4x8x32xf32> to vector<32x32xf32>
    %112 = tpu.concatenate %51, %71, %91, %111 in 1 : vector<32x32xf32>, vector<32x32xf32>, vector<32x32xf32>, vector<32x32xf32> -> vector<32x128xf32>
    %113 = arith.truncf %112 : vector<32x128xf32> to vector<32x128xbf16>
    %c0_30 = arith.constant 0 : index
    %c0_31 = arith.constant 0 : index
    %114 = vector.load %arg6[%c0_30, %c0_31] : memref<128x128xbf16, #tpu.memory_space<vmem>>, vector<128x128xbf16>
    %cst_32 = arith.constant dense<0.000000e+00> : vector<32x128xf32>
    %115 = tpu.matmul %113, %114, %cst_32 {dimension_numbers = #tpu.dot_dimension_numbers<[1], [0], [0], [1], [0, 0, 1, 1], [], []>} : vector<32x128xbf16>, vector<128x128xbf16>, vector<32x128xf32> -> vector<32x128xf32>
    %c0_33 = arith.constant 0 : index
    %c0_34 = arith.constant 0 : index
    %116 = vector.load %arg7[%c0_33, %c0_34] : memref<1x128xf32, #tpu.memory_space<vmem>>, vector<1x128xf32>
    %117 = vector.broadcast %116 : vector<1x128xf32> to vector<32x128xf32>
    %118 = arith.addf %115, %117 : vector<32x128xf32>
    %119 = arith.addf %0, %118 : vector<32x128xf32>
    %c0_35 = arith.constant 0 : index
    %c0_36 = arith.constant 0 : index
    %120 = vector.load %arg8[%c0_35, %c0_36] : memref<1x128xf32, #tpu.memory_space<vmem>>, vector<1x128xf32>
    %c0_37 = arith.constant 0 : index
    %c0_38 = arith.constant 0 : index
    %121 = vector.load %arg9[%c0_37, %c0_38] : memref<1x128xf32, #tpu.memory_space<vmem>>, vector<1x128xf32>
    %cst_39 = arith.constant dense<0.000000e+00> : vector<32xf32>
    %122 = vector.multi_reduction <add>, %119, %cst_39 [1] : vector<32x128xf32> to vector<32xf32>
    %123 = vector.shape_cast %122 : vector<32xf32> to vector<32x1xf32>
    %cst_40 = arith.constant 1.280000e+02 : f32
    %124 = vector.broadcast %cst_40 : f32 to vector<32x1xf32>
    %125 = arith.divf %123, %124 : vector<32x1xf32>
    %126 = vector.broadcast %125 : vector<32x1xf32> to vector<32x128xf32>
    %127 = arith.subf %119, %126 : vector<32x128xf32>
    %128 = arith.mulf %127, %127 : vector<32x128xf32>
    %cst_41 = arith.constant dense<0.000000e+00> : vector<32xf32>
    %129 = vector.multi_reduction <add>, %128, %cst_41 [1] : vector<32x128xf32> to vector<32xf32>
    %130 = vector.shape_cast %129 : vector<32xf32> to vector<32x1xf32>
    %cst_42 = arith.constant 1.280000e+02 : f32
    %131 = vector.broadcast %cst_42 : f32 to vector<32x1xf32>
    %132 = arith.divf %130, %131 : vector<32x1xf32>
    %133 = vector.broadcast %125 : vector<32x1xf32> to vector<32x128xf32>
    %134 = arith.subf %119, %133 : vector<32x128xf32>
    %cst_43 = arith.constant 9.99999974E-6 : f32
    %135 = vector.broadcast %cst_43 : f32 to vector<32x1xf32>
    %136 = arith.addf %132, %135 : vector<32x1xf32>
    %137 = math.rsqrt %136 : vector<32x1xf32>
    %138 = vector.broadcast %137 : vector<32x1xf32> to vector<32x128xf32>
    %139 = arith.mulf %134, %138 : vector<32x128xf32>
    %140 = vector.broadcast %120 : vector<1x128xf32> to vector<32x128xf32>
    %141 = arith.mulf %139, %140 : vector<32x128xf32>
    %142 = vector.broadcast %121 : vector<1x128xf32> to vector<32x128xf32>
    %143 = arith.addf %141, %142 : vector<32x128xf32>
    %144 = arith.truncf %143 : vector<32x128xf32> to vector<32x128xbf16>
    %cst_44 = arith.constant 0.000000e+00 : f32
    %145 = vector.broadcast %cst_44 : f32 to vector<32x128xf32>
    %c0_45 = arith.constant 0 : index
    %c0_46 = arith.constant 0 : index
    %146 = vector.load %arg10[%c0_45, %c0_46] : memref<128x512xbf16, #tpu.memory_space<vmem>>, vector<128x512xbf16>
    %cst_47 = arith.constant dense<0.000000e+00> : vector<32x512xf32>
    %147 = tpu.matmul %144, %146, %cst_47 {dimension_numbers = #tpu.dot_dimension_numbers<[1], [0], [0], [1], [0, 0, 1, 1], [], []>} : vector<32x128xbf16>, vector<128x512xbf16>, vector<32x512xf32> -> vector<32x512xf32>
    %c0_48 = arith.constant 0 : index
    %c0_49 = arith.constant 0 : index
    %148 = vector.load %arg11[%c0_48, %c0_49] : memref<1x512xf32, #tpu.memory_space<vmem>>, vector<1x512xf32>
    %149 = vector.broadcast %148 : vector<1x512xf32> to vector<32x512xf32>
    %150 = arith.addf %147, %149 : vector<32x512xf32>
    %cst_50 = arith.constant 5.000000e-01 : f32
    %151 = vector.broadcast %cst_50 : f32 to vector<32x512xf32>
    %152 = arith.mulf %151, %150 : vector<32x512xf32>
    %cst_51 = arith.constant 0.707106769 : f32
    %153 = vector.broadcast %cst_51 : f32 to vector<32x512xf32>
    %154 = arith.mulf %150, %153 : vector<32x512xf32>
    %cst_52 = arith.constant 0.000000e+00 : f32
    %155 = vector.broadcast %cst_52 : f32 to vector<32x512xf32>
    %156 = arith.cmpf olt, %154, %155 : vector<32x512xf32>
    %cst_53 = arith.constant -1.000000e+00 : f32
    %cst_54 = arith.constant 1.000000e+00 : f32
    %157 = vector.broadcast %cst_53 : f32 to vector<32x512xf32>
    %158 = vector.broadcast %cst_54 : f32 to vector<32x512xf32>
    %159 = arith.select %156, %157, %158 : vector<32x512xi1>, vector<32x512xf32>
    %160 = math.absf %154 : vector<32x512xf32>
    %cst_55 = arith.constant 0.327591091 : f32
    %161 = vector.broadcast %cst_55 : f32 to vector<32x512xf32>
    %162 = arith.mulf %161, %160 : vector<32x512xf32>
    %cst_56 = arith.constant 1.000000e+00 : f32
    %163 = vector.broadcast %cst_56 : f32 to vector<32x512xf32>
    %164 = arith.addf %163, %162 : vector<32x512xf32>
    %cst_57 = arith.constant 1.000000e+00 : f32
    %165 = vector.broadcast %cst_57 : f32 to vector<32x512xf32>
    %166 = arith.divf %165, %164 : vector<32x512xf32>
    %cst_58 = arith.constant 1.06140542 : f32
    %167 = vector.broadcast %cst_58 : f32 to vector<32x512xf32>
    %168 = arith.mulf %167, %166 : vector<32x512xf32>
    %cst_59 = arith.constant -1.45315206 : f32
    %169 = vector.broadcast %cst_59 : f32 to vector<32x512xf32>
    %170 = arith.addf %168, %169 : vector<32x512xf32>
    %171 = arith.mulf %170, %166 : vector<32x512xf32>
    %cst_60 = arith.constant 1.42141378 : f32
    %172 = vector.broadcast %cst_60 : f32 to vector<32x512xf32>
    %173 = arith.addf %171, %172 : vector<32x512xf32>
    %174 = arith.mulf %173, %166 : vector<32x512xf32>
    %cst_61 = arith.constant -0.284496725 : f32
    %175 = vector.broadcast %cst_61 : f32 to vector<32x512xf32>
    %176 = arith.addf %174, %175 : vector<32x512xf32>
    %177 = arith.mulf %176, %166 : vector<32x512xf32>
    %cst_62 = arith.constant 0.254829586 : f32
    %178 = vector.broadcast %cst_62 : f32 to vector<32x512xf32>
    %179 = arith.addf %177, %178 : vector<32x512xf32>
    %180 = arith.mulf %179, %166 : vector<32x512xf32>
    %cst_63 = arith.constant 0.000000e+00 : f32
    %181 = vector.broadcast %cst_63 : f32 to vector<32x512xf32>
    %182 = arith.subf %181, %160 : vector<32x512xf32>
    %183 = arith.mulf %182, %160 : vector<32x512xf32>
    %184 = math.exp %183 : vector<32x512xf32>
    %185 = arith.mulf %180, %184 : vector<32x512xf32>
    %cst_64 = arith.constant 1.000000e+00 : f32
    %186 = vector.broadcast %cst_64 : f32 to vector<32x512xf32>
    %187 = arith.subf %186, %185 : vector<32x512xf32>
    %188 = arith.mulf %159, %187 : vector<32x512xf32>
    %cst_65 = arith.constant 1.000000e+00 : f32
    %189 = vector.broadcast %cst_65 : f32 to vector<32x512xf32>
    %190 = arith.addf %189, %188 : vector<32x512xf32>
    %191 = arith.mulf %152, %190 : vector<32x512xf32>
    %192 = arith.truncf %191 : vector<32x512xf32> to vector<32x512xbf16>
    %c0_66 = arith.constant 0 : index
    %c0_67 = arith.constant 0 : index
    %193 = vector.load %arg12[%c0_66, %c0_67] : memref<512x128xbf16, #tpu.memory_space<vmem>>, vector<512x128xbf16>
    %cst_68 = arith.constant dense<0.000000e+00> : vector<32x128xf32>
    %194 = tpu.matmul %192, %193, %cst_68 {dimension_numbers = #tpu.dot_dimension_numbers<[1], [0], [0], [1], [0, 0, 1, 1], [], []>} : vector<32x512xbf16>, vector<512x128xbf16>, vector<32x128xf32> -> vector<32x128xf32>
    %195 = arith.addf %145, %194 : vector<32x128xf32>
    %196 = arith.addf %119, %195 : vector<32x128xf32>
    %c0_69 = arith.constant 0 : index
    %c0_70 = arith.constant 0 : index
    %197 = vector.load %arg13[%c0_69, %c0_70] : memref<1x128xf32, #tpu.memory_space<vmem>>, vector<1x128xf32>
    %198 = vector.broadcast %197 : vector<1x128xf32> to vector<32x128xf32>
    %199 = arith.addf %196, %198 : vector<32x128xf32>
    %c0_71 = arith.constant 0 : index
    %c0_72 = arith.constant 0 : index
    %200 = vector.load %arg14[%c0_71, %c0_72] : memref<32x128xf32, #tpu.memory_space<vmem>>, vector<32x128xf32>
    tpu.vector_store %arg14[%c0_71, %c0_72], %199 {strides = array<i32>} : memref<32x128xf32, #tpu.memory_space<vmem>>, vector<32x128xf32>,
    return
  }
  func.func @transform_0(%arg0: i32) -> (i32, i32) {
    %c0_i32 = arith.constant 0 : i32
    %c0_i32_0 = arith.constant 0 : i32
    return %arg0, %c0_i32 : i32, i32
  }
  func.func @transform_1(%arg0: i32) -> (i32, i32) {
    %c0_i32 = arith.constant 0 : i32
    %c0_i32_0 = arith.constant 0 : i32
    %c0_i32_1 = arith.constant 0 : i32
    return %c0_i32, %c0_i32_0 : i32, i32
  }
  func.func @transform_2(%arg0: i32) -> (i32, i32) {
    %c0_i32 = arith.constant 0 : i32
    %c0_i32_0 = arith.constant 0 : i32
    %c0_i32_1 = arith.constant 0 : i32
    return %c0_i32, %c0_i32_0 : i32, i32
  }
  func.func @transform_3(%arg0: i32) -> (i32, i32) {
    %c0_i32 = arith.constant 0 : i32
    %c0_i32_0 = arith.constant 0 : i32
    %c0_i32_1 = arith.constant 0 : i32
    return %c0_i32, %c0_i32_0 : i32, i32
  }
  func.func @transform_4(%arg0: i32) -> (i32, i32) {
    %c0_i32 = arith.constant 0 : i32
    %c0_i32_0 = arith.constant 0 : i32
    %c0_i32_1 = arith.constant 0 : i32
    return %c0_i32, %c0_i32_0 : i32, i32
  }
  func.func @transform_5(%arg0: i32) -> (i32, i32) {
    %c0_i32 = arith.constant 0 : i32
    %c0_i32_0 = arith.constant 0 : i32
    %c0_i32_1 = arith.constant 0 : i32
    return %c0_i32, %c0_i32_0 : i32, i32
  }
  func.func @transform_6(%arg0: i32) -> (i32, i32) {
    %c0_i32 = arith.constant 0 : i32
    %c0_i32_0 = arith.constant 0 : i32
    %c0_i32_1 = arith.constant 0 : i32
    return %c0_i32, %c0_i32_0 : i32, i32
  }
  func.func @transform_7(%arg0: i32) -> (i32, i32) {
    %c0_i32 = arith.constant 0 : i32
    %c0_i32_0 = arith.constant 0 : i32
    %c0_i32_1 = arith.constant 0 : i32
    return %c0_i32, %c0_i32_0 : i32, i32
  }
  func.func @transform_8(%arg0: i32) -> (i32, i32) {
    %c0_i32 = arith.constant 0 : i32
    %c0_i32_0 = arith.constant 0 : i32
    %c0_i32_1 = arith.constant 0 : i32
    return %c0_i32, %c0_i32_0 : i32, i32
  }
  func.func @transform_9(%arg0: i32) -> (i32, i32) {
    %c0_i32 = arith.constant 0 : i32
    %c0_i32_0 = arith.constant 0 : i32
    %c0_i32_1 = arith.constant 0 : i32
    return %c0_i32, %c0_i32_0 : i32, i32
  }
  func.func @transform_10(%arg0: i32) -> (i32, i32) {
    %c0_i32 = arith.constant 0 : i32
    %c0_i32_0 = arith.constant 0 : i32
    %c0_i32_1 = arith.constant 0 : i32
    return %c0_i32, %c0_i32_0 : i32, i32
  }
  func.func @transform_11(%arg0: i32) -> (i32, i32) {
    %c0_i32 = arith.constant 0 : i32
    %c0_i32_0 = arith.constant 0 : i32
    %c0_i32_1 = arith.constant 0 : i32
    return %c0_i32, %c0_i32_0 : i32, i32
  }
  func.func @transform_12(%arg0: i32) -> (i32, i32) {
    %c0_i32 = arith.constant 0 : i32
    %c0_i32_0 = arith.constant 0 : i32
    %c0_i32_1 = arith.constant 0 : i32
    return %c0_i32, %c0_i32_0 : i32, i32
  }
  func.func @transform_13(%arg0: i32) -> (i32, i32) {
    %c0_i32 = arith.constant 0 : i32
    %c0_i32_0 = arith.constant 0 : i32
    return %arg0, %c0_i32 : i32, i32
  }
}

</mosaic_0001>

<llo_original>
// kernel: tpu_custom_call.1
$region0: #{tpu_custom_call.1}
  #allocation0 [shape = 'u32[]', space=smem, size = 0x4, offset = 0x4, fixed_abs, tag = 'smem constant byte address 0x4 - core index']
  #allocation1 [shape = 'u32[144,128]{1,0:T(1,128)}', space=vmem, size = 0x12000, scoped, tag = 'internal scratch']
  %s0 = inlined_call_operand.hbm [shape: f32[128,128], index: 0, kind: input, shape index: {}]
  %s1 = inlined_call_operand.hbm [shape: f32[1,128], index: 1, kind: input, shape index: {}]
  %s2 = inlined_call_operand.hbm [shape: f32[1,128], index: 2, kind: input, shape index: {}]
  %s3 = inlined_call_operand.hbm [shape: bf16[128,384], index: 3, kind: input, shape index: {}]
  %s4 = inlined_call_operand.hbm [shape: f32[1,384], index: 4, kind: input, shape index: {}]
  %s5 = inlined_call_operand.hbm [shape: bf16[128,128], index: 5, kind: input, shape index: {}]
  %s6 = inlined_call_operand.hbm [shape: f32[1,128], index: 6, kind: input, shape index: {}]
  %s7 = inlined_call_operand.hbm [shape: f32[1,128], index: 7, kind: input, shape index: {}]
  %s8 = inlined_call_operand.hbm [shape: f32[1,128], index: 8, kind: input, shape index: {}]
  %s9 = inlined_call_operand.hbm [shape: bf16[128,512], index: 9, kind: input, shape index: {}]
  %s10 = inlined_call_operand.hbm [shape: f32[1,512], index: 10, kind: input, shape index: {}]
  %s11 = inlined_call_operand.hbm [shape: bf16[512,128], index: 11, kind: input, shape index: {}]
  %s12 = inlined_call_operand.hbm [shape: f32[1,128], index: 12, kind: input, shape index: {}]
  %s13 = inlined_call_operand.hbm [shape: f32[128,128], index: 13, kind: output, shape index: {}]
  %s14 = sld [smem:[#allocation0]]
  $region137: #{tpu_custom_call.1} parent=0
    _
  %s16 = ssub.s32 1, %s14
  %s17 = scalar_select 0, %s16, %s14
  $region1: #{tpu_custom_call.1} parent=0
    #allocation2 [shape = 'u8[32768]{0}', space=vmem, size = 0x8000, scoped, tag = 'input window, operand 0']
    #allocation3 [shape = 's32[2]{0}', space=sflag, size = 0x8, scoped, tag = 'scoped memory for tpu_custom_call.1']
    #allocation4 [shape = 's32[2]{0}', space=sflag, size = 0x8, scoped, tag = 'scoped memory for tpu_custom_call.1']
    #allocation5 [shape = 'u8[512]{0}', space=vmem, size = 0x400, scoped, tag = 'input window, operand 1, single buffered']
    #allocation6 [shape = 's32[1]{0}', space=sflag, size = 0x4, scoped, tag = 'scoped memory for tpu_custom_call.1']
    #allocation7 [shape = 'u8[512]{0}', space=vmem, size = 0x400, scoped, tag = 'input window, operand 2, single buffered']
    #allocation8 [shape = 'u8[98304]{0}', space=vmem, size = 0x18000, scoped, tag = 'input window, operand 3, single buffered']
    #allocation9 [shape = 's32[1]{0}', space=sflag, size = 0x4, scoped, tag = 'scoped memory for tpu_custom_call.1']
    #allocation10 [shape = 'u8[1536]{0}', space=vmem, size = 0x800, scoped, tag = 'input window, operand 4, single buffered']
    #allocation11 [shape = 'u8[32768]{0}', space=vmem, size = 0x8000, scoped, tag = 'input window, operand 5, single buffered']
    #allocation12 [shape = 's32[1]{0}', space=sflag, size = 0x4, scoped, tag = 'scoped memory for tpu_custom_call.1']
    #allocation13 [shape = 'u8[512]{0}', space=vmem, size = 0x400, scoped, tag = 'input window, operand 6, single buffered']
    #allocation14 [shape = 'u8[512]{0}', space=vmem, size = 0x400, scoped, tag = 'input window, operand 7, single buffered']
    #allocation15 [shape = 's32[1]{0}', space=sflag, size = 0x4, scoped, tag = 'scoped memory for tpu_custom_call.1']
    #allocation16 [shape = 'u8[512]{0}', space=vmem, size = 0x400, scoped, tag = 'input window, operand 8, single buffered']
    #allocation17 [shape = 'u8[131072]{0}', space=vmem, size = 0x20000, scoped, tag = 'input window, operand 9, single buffered']
    #allocation18 [shape = 's32[1]{0}', space=sflag, size = 0x4, scoped, tag = 'scoped memory for tpu_custom_call.1']
    #allocation19 [shape = 'u8[2048]{0}', space=vmem, size = 0x800, scoped, tag = 'input window, operand 10, single buffered']
    #allocation20 [shape = 'u8[131072]{0}', space=vmem, size = 0x20000, scoped, tag = 'input window, operand 11, single buffered']
    #allocation21 [shape = 's32[1]{0}', space=sflag, size = 0x4, scoped, tag = 'scoped memory for tpu_custom_call.1']
    #allocation22 [shape = 'u8[512]{0}', space=vmem, size = 0x400, scoped, tag = 'input window, operand 12, single buffered']
    #allocation23 [shape = 'u8[32768]{0}', space=vmem, size = 0x8000, scoped, tag = 'output window, operand 0']
    %18 = vsyncpa [#allocation3], 0
    %s19 = scalar_lea.sflag [#allocation3], 1
    %20 = vsyncpa %s19, 0
    %21 = vsyncpa [#allocation6], 0
    %22 = vsyncpa [#allocation9], 0
    %23 = vsyncpa [#allocation12], 0
    %24 = vsyncpa [#allocation15], 0
    %25 = vsyncpa [#allocation18], 0
    %26 = vsyncpa [#allocation21], 0
    %27 = vsyncpa [#allocation4], 0
    %s28 = scalar_lea.sflag [#allocation4], 1
    %29 = vsyncpa %s28, 0
    loop: start=0, step=1, limit=6
    $region2: #{tpu_custom_call.1} parent=1 // loop_pre_header
      _
    $region3: #{tpu_custom_call.1} parent=1 // loop_header
      %s31 = sphi 0, %s35
      %p32 = scmp.ge.s32.totalorder %s31, 6
      %s41 = sphi 0, %s43
      %s44 = sphi 0, %s41
      %s45 = sphi 0, %s44
      %s61 = sphi 0, %s45
      %s65 = sphi 0, %s65
      %s67 = sphi 0, %s65
      %s68 = sphi 0, %s67
      %s82 = sphi 0, %s68
      %s86 = sphi 0, %s86
      %s88 = sphi 0, %s86
      %s89 = sphi 0, %s88
      %s103 = sphi 0, %s89
      %s107 = sphi 0, %s107
      %s109 = sphi 0, %s107
      %s110 = sphi 0, %s109
      %s124 = sphi 0, %s110
      %s128 = sphi 0, %s128
      %s130 = sphi 0, %s128
      %s131 = sphi 0, %s130
      %s145 = sphi 0, %s131
      %s149 = sphi 0, %s149
      %s151 = sphi 0, %s149
      %s152 = sphi 0, %s151
      %s166 = sphi 0, %s152
      %s170 = sphi 0, %s170
      %s172 = sphi 0, %s170
      %s173 = sphi 0, %s172
      %s187 = sphi 0, %s173
      %s191 = sphi 0, %s191
      %s193 = sphi 0, %s191
      %s194 = sphi 0, %s193
      %s208 = sphi 0, %s194
      %s212 = sphi 0, %s212
      %s214 = sphi 0, %s212
      %s215 = sphi 0, %s214
      %s229 = sphi 0, %s215
      %s233 = sphi 0, %s233
      %s235 = sphi 0, %s233
      %s236 = sphi 0, %s235
      %s250 = sphi 0, %s236
      %s254 = sphi 0, %s254
      %s256 = sphi 0, %s254
      %s257 = sphi 0, %s256
      %s271 = sphi 0, %s257
      %s275 = sphi 0, %s275
      %s277 = sphi 0, %s275
      %s278 = sphi 0, %s277
      %s292 = sphi 0, %s278
      %s296 = sphi 0, %s296
      %s298 = sphi 0, %s296
      %s299 = sphi 0, %s298
      %s313 = sphi 0, %s299
      %s319 = sphi 0, %s321
      %s322 = sphi 0, %s319
      %s323 = sphi 0, %s322
      %s339 = sphi 0, %s323
    $region4: #{tpu_custom_call.1} parent=1 // loop_header_branch
      %34 = sbr.rel (%p32) target = $region8
    $region5: #{tpu_custom_call.1} parent=1 // loop_body
      %s36 = ssub.s32 %s31, 1
      %s37 = ssub.s32 %s31, 2
      %s38 = sadd.s32 %s31, 1
      %s39 = ssub.s32 %s31, %s38
      %p40 = scmp.eq.s32.totalorder %s39, 0
      %s42 = sadd.s32 %s41, 1
      %s43 = scalar_select %p40, %s41, %s42
      %p46 = pneg %p40
      %p47 = scmp.eq.s32.totalorder %s31, 3
      %p48 = por %p46, %p47
      %p49 = scmp.ne.s32.totalorder %s41, %s44
      %p50 = scmp.eq.s32.totalorder %s31, 0
      %p51 = por %p49, %p50
      %p52 = scmp.ne.s32.totalorder %s41, %s44
      %p53 = scmp.eq.s32.totalorder %s36, 3
      %p54 = por %p52, %p53
      %p55 = scmp.ne.s32.totalorder %s44, %s45
      %p56 = scmp.eq.s32.totalorder %s36, 0
      %p57 = por %p55, %p56
      %p58 = scmp.ne.s32.totalorder %s44, %s45
      %p59 = scmp.eq.s32.totalorder %s37, 3
      %p60 = por %p58, %p59
      %p62 = scmp.ne.s32.totalorder %s45, %s61
      %p63 = scmp.eq.s32.totalorder %s37, 0
      %p64 = por %p62, %p63
      %s66 = sadd.s32 %s65, 1
      %p69 = scmp.eq.s32.totalorder %s31, 3
      %p70 = scmp.ne.s32.totalorder %s65, %s67
      %p71 = scmp.eq.s32.totalorder %s31, 0
      %p72 = por %p70, %p71
      %p73 = scmp.ne.s32.totalorder %s65, %s67
      %p74 = scmp.eq.s32.totalorder %s36, 3
      %p75 = por %p73, %p74
      %p76 = scmp.ne.s32.totalorder %s67, %s68
      %p77 = scmp.eq.s32.totalorder %s36, 0
      %p78 = por %p76, %p77
      %p79 = scmp.ne.s32.totalorder %s67, %s68
      %p80 = scmp.eq.s32.totalorder %s37, 3
      %p81 = por %p79, %p80
      %p83 = scmp.ne.s32.totalorder %s68, %s82
      %p84 = scmp.eq.s32.totalorder %s37, 0
      %p85 = por %p83, %p84
      %s87 = sadd.s32 %s86, 1
      %p90 = scmp.eq.s32.totalorder %s31, 3
      %p91 = scmp.ne.s32.totalorder %s86, %s88
      %p92 = scmp.eq.s32.totalorder %s31, 0
      %p93 = por %p91, %p92
      %p94 = scmp.ne.s32.totalorder %s86, %s88
      %p95 = scmp.eq.s32.totalorder %s36, 3
      %p96 = por %p94, %p95
      %p97 = scmp.ne.s32.totalorder %s88, %s89
      %p98 = scmp.eq.s32.totalorder %s36, 0
      %p99 = por %p97, %p98
      %p100 = scmp.ne.s32.totalorder %s88, %s89
      %p101 = scmp.eq.s32.totalorder %s37, 3
      %p102 = por %p100, %p101
      %p104 = scmp.ne.s32.totalorder %s89, %s103
      %p105 = scmp.eq.s32.totalorder %s37, 0
      %p106 = por %p104, %p105
      %s108 = sadd.s32 %s107, 1
      %p111 = scmp.eq.s32.totalorder %s31, 3
      %p112 = scmp.ne.s32.totalorder %s107, %s109
      %p113 = scmp.eq.s32.totalorder %s31, 0
      %p114 = por %p112, %p113
      %p115 = scmp.ne.s32.totalorder %s107, %s109
      %p116 = scmp.eq.s32.totalorder %s36, 3
      %p117 = por %p115, %p116
      %p118 = scmp.ne.s32.totalorder %s109, %s110
      %p119 = scmp.eq.s32.totalorder %s36, 0
      %p120 = por %p118, %p119
      %p121 = scmp.ne.s32.totalorder %s109, %s110
      %p122 = scmp.eq.s32.totalorder %s37, 3
      %p123 = por %p121, %p122
      %p125 = scmp.ne.s32.totalorder %s110, %s124
      %p126 = scmp.eq.s32.totalorder %s37, 0
      %p127 = por %p125, %p126
      %s129 = sadd.s32 %s128, 1
      %p132 = scmp.eq.s32.totalorder %s31, 3
      %p133 = scmp.ne.s32.totalorder %s128, %s130
      %p134 = scmp.eq.s32.totalorder %s31, 0
      %p135 = por %p133, %p134
      %p136 = scmp.ne.s32.totalorder %s128, %s130
      %p137 = scmp.eq.s32.totalorder %s36, 3
      %p138 = por %p136, %p137
      %p139 = scmp.ne.s32.totalorder %s130, %s131
      %p140 = scmp.eq.s32.totalorder %s36, 0
      %p141 = por %p139, %p140
      %p142 = scmp.ne.s32.totalorder %s130, %s131
      %p143 = scmp.eq.s32.totalorder %s37, 3
      %p144 = por %p142, %p143
      %p146 = scmp.ne.s32.totalorder %s131, %s145
      %p147 = scmp.eq.s32.totalorder %s37, 0
      %p148 = por %p146, %p147
      %s150 = sadd.s32 %s149, 1
      %p153 = scmp.eq.s32.totalorder %s31, 3
      %p154 = scmp.ne.s32.totalorder %s149, %s151
      %p155 = scmp.eq.s32.totalorder %s31, 0
      %p156 = por %p154, %p155
      %p157 = scmp.ne.s32.totalorder %s149, %s151
      %p158 = scmp.eq.s32.totalorder %s36, 3
      %p159 = por %p157, %p158
      %p160 = scmp.ne.s32.totalorder %s151, %s152
      %p161 = scmp.eq.s32.totalorder %s36, 0
      %p162 = por %p160, %p161
      %p163 = scmp.ne.s32.totalorder %s151, %s152
      %p164 = scmp.eq.s32.totalorder %s37, 3
      %p165 = por %p163, %p164
      %p167 = scmp.ne.s32.totalorder %s152, %s166
      %p168 = scmp.eq.s32.totalorder %s37, 0
      %p169 = por %p167, %p168
      %s171 = sadd.s32 %s170, 1
      %p174 = scmp.eq.s32.totalorder %s31, 3
      %p175 = scmp.ne.s32.totalorder %s170, %s172
      %p176 = scmp.eq.s32.totalorder %s31, 0
      %p177 = por %p175, %p176
      %p178 = scmp.ne.s32.totalorder %s170, %s172
      %p179 = scmp.eq.s32.totalorder %s36, 3
      %p180 = por %p178, %p179
      %p181 = scmp.ne.s32.totalorder %s172, %s173
      %p182 = scmp.eq.s32.totalorder %s36, 0
      %p183 = por %p181, %p182
      %p184 = scmp.ne.s32.totalorder %s172, %s173
      %p185 = scmp.eq.s32.totalorder %s37, 3
      %p186 = por %p184, %p185
      %p188 = scmp.ne.s32.totalorder %s173, %s187
      %p189 = scmp.eq.s32.totalorder %s37, 0
      %p190 = por %p188, %p189
      %s192 = sadd.s32 %s191, 1
      %p195 = scmp.eq.s32.totalorder %s31, 3
      %p196 = scmp.ne.s32.totalorder %s191, %s193
      %p197 = scmp.eq.s32.totalorder %s31, 0
      %p198 = por %p196, %p197
      %p199 = scmp.ne.s32.totalorder %s191, %s193
      %p200 = scmp.eq.s32.totalorder %s36, 3
      %p201 = por %p199, %p200
      %p202 = scmp.ne.s32.totalorder %s193, %s194
      %p203 = scmp.eq.s32.totalorder %s36, 0
      %p204 = por %p202, %p203
      %p205 = scmp.ne.s32.totalorder %s193, %s194
      %p206 = scmp.eq.s32.totalorder %s37, 3
      %p207 = por %p205, %p206
      %p209 = scmp.ne.s32.totalorder %s194, %s208
      %p210 = scmp.eq.s32.totalorder %s37, 0
      %p211 = por %p209, %p210
      %s213 = sadd.s32 %s212, 1
      %p216 = scmp.eq.s32.totalorder %s31, 3
      %p217 = scmp.ne.s32.totalorder %s212, %s214
      %p218 = scmp.eq.s32.totalorder %s31, 0
      %p219 = por %p217, %p218
      %p220 = scmp.ne.s32.totalorder %s212, %s214
      %p221 = scmp.eq.s32.totalorder %s36, 3
      %p222 = por %p220, %p221
      %p223 = scmp.ne.s32.totalorder %s214, %s215
      %p224 = scmp.eq.s32.totalorder %s36, 0
      %p225 = por %p223, %p224
      %p226 = scmp.ne.s32.totalorder %s214, %s215
      %p227 = scmp.eq.s32.totalorder %s37, 3
      %p228 = por %p226, %p227
      %p230 = scmp.ne.s32.totalorder %s215, %s229
      %p231 = scmp.eq.s32.totalorder %s37, 0
      %p232 = por %p230, %p231
      %s234 = sadd.s32 %s233, 1
      %p237 = scmp.eq.s32.totalorder %s31, 3
      %p238 = scmp.ne.s32.totalorder %s233, %s235
      %p239 = scmp.eq.s32.totalorder %s31, 0
      %p240 = por %p238, %p239
      %p241 = scmp.ne.s32.totalorder %s233, %s235
      %p242 = scmp.eq.s32.totalorder %s36, 3
      %p243 = por %p241, %p242
      %p244 = scmp.ne.s32.totalorder %s235, %s236
      %p245 = scmp.eq.s32.totalorder %s36, 0
      %p246 = por %p244, %p245
      %p247 = scmp.ne.s32.totalorder %s235, %s236
      %p248 = scmp.eq.s32.totalorder %s37, 3
      %p249 = por %p247, %p248
      %p251 = scmp.ne.s32.totalorder %s236, %s250
      %p252 = scmp.eq.s32.totalorder %s37, 0
      %p253 = por %p251, %p252
      %s255 = sadd.s32 %s254, 1
      %p258 = scmp.eq.s32.totalorder %s31, 3
      %p259 = scmp.ne.s32.totalorder %s254, %s256
      %p260 = scmp.eq.s32.totalorder %s31, 0
      %p261 = por %p259, %p260
      %p262 = scmp.ne.s32.totalorder %s254, %s256
      %p263 = scmp.eq.s32.totalorder %s36, 3
      %p264 = por %p262, %p263
      %p265 = scmp.ne.s32.totalorder %s256, %s257
      %p266 = scmp.eq.s32.totalorder %s36, 0
      %p267 = por %p265, %p266
      %p268 = scmp.ne.s32.totalorder %s256, %s257
      %p269 = scmp.eq.s32.totalorder %s37, 3
      %p270 = por %p268, %p269
      %p272 = scmp.ne.s32.totalorder %s257, %s271
      %p273 = scmp.eq.s32.totalorder %s37, 0
      %p274 = por %p272, %p273
      %s276 = sadd.s32 %s275, 1
      %p279 = scmp.eq.s32.totalorder %s31, 3
      %p280 = scmp.ne.s32.totalorder %s275, %s277
      %p281 = scmp.eq.s32.totalorder %s31, 0
      %p282 = por %p280, %p281
      %p283 = scmp.ne.s32.totalorder %s275, %s277
      %p284 = scmp.eq.s32.totalorder %s36, 3
      %p285 = por %p283, %p284
      %p286 = scmp.ne.s32.totalorder %s277, %s278
      %p287 = scmp.eq.s32.totalorder %s36, 0
      %p288 = por %p286, %p287
      %p289 = scmp.ne.s32.totalorder %s277, %s278
      %p290 = scmp.eq.s32.totalorder %s37, 3
      %p291 = por %p289, %p290
      %p293 = scmp.ne.s32.totalorder %s278, %s292
      %p294 = scmp.eq.s32.totalorder %s37, 0
      %p295 = por %p293, %p294
      %s297 = sadd.s32 %s296, 1
      %p300 = scmp.eq.s32.totalorder %s31, 3
      %p301 = scmp.ne.s32.totalorder %s296, %s298
      %p302 = scmp.eq.s32.totalorder %s31, 0
      %p303 = por %p301, %p302
      %p304 = scmp.ne.s32.totalorder %s296, %s298
      %p305 = scmp.eq.s32.totalorder %s36, 3
      %p306 = por %p304, %p305
      %p307 = scmp.ne.s32.totalorder %s298, %s299
      %p308 = scmp.eq.s32.totalorder %s36, 0
      %p309 = por %p307, %p308
      %p310 = scmp.ne.s32.totalorder %s298, %s299
      %p311 = scmp.eq.s32.totalorder %s37, 3
      %p312 = por %p310, %p311
      %p314 = scmp.ne.s32.totalorder %s299, %s313
      %p315 = scmp.eq.s32.totalorder %s37, 0
      %p316 = por %p314, %p315
      %s317 = ssub.s32 %s31, %s38
      %p318 = scmp.eq.s32.totalorder %s317, 0
      %s320 = sadd.s32 %s319, 1
      %s321 = scalar_select %p318, %s319, %s320
      %p324 = pneg %p318
      %p325 = scmp.eq.s32.totalorder %s31, 3
      %p326 = por %p324, %p325
      %p327 = scmp.ne.s32.totalorder %s319, %s322
      %p328 = scmp.eq.s32.totalorder %s31, 0
      %p329 = por %p327, %p328
      %p330 = scmp.ne.s32.totalorder %s319, %s322
      %p331 = scmp.eq.s32.totalorder %s36, 3
      %p332 = por %p330, %p331
      %p333 = scmp.ne.s32.totalorder %s322, %s323
      %p334 = scmp.eq.s32.totalorder %s36, 0
      %p335 = por %p333, %p334
      %p336 = scmp.ne.s32.totalorder %s322, %s323
      %p337 = scmp.eq.s32.totalorder %s37, 3
      %p338 = por %p336, %p337
      %p340 = scmp.ne.s32.totalorder %s323, %s339
      %p341 = scmp.eq.s32.totalorder %s37, 0
      %p342 = por %p340, %p341
      %p343 = scmp.le.s32.totalorder 1, %s31
      %p344 = scmp.lt.s32.totalorder %s31, 5
      %p345 = pnand %p343, %p344
      %p346 = pneg %p345
      // Predicated region
      $region9: #{tpu_custom_call.1} parent=5 // pred_check
        _
      $region10: #{tpu_custom_call.1} parent=5 // pred_check_branch
        %348 = sbr.rel (%p345) target = $region12
      $region11: #{tpu_custom_call.1} parent=5 // pred_region
        %s349 = ssub.s32 %s31, 1
        // Predicated region
        $region13: #{tpu_custom_call.1} parent=11 // pred_check
          %p350 = pneg %p78
        $region14: #{tpu_custom_call.1} parent=11 // pred_check_branch
          %352 = sbr.rel (%p350) target = $region16
        $region15: #{tpu_custom_call.1} parent=11 // pred_region
          %s354 = ssub.s32 16, 16
          %355 = vsyncadd [#allocation6], %s354
          %s357 = sshll.u32 [#allocation5], 4
          %s358 = int_to_ptr.vmem [resolvable:$true] %s357
          %360 = dma.hbm_to_vmem [thread:$0]  %s1, 16, %s358, [#allocation6]
        $region16: #{tpu_custom_call.1} parent=11 // pred_fallthru
          _
        // Predicated region
        $region17: #{tpu_custom_call.1} parent=11 // pred_check
          %p361 = pneg %p99
        $region18: #{tpu_custom_call.1} parent=11 // pred_check_branch
          %363 = sbr.rel (%p361) target = $region20
        $region19: #{tpu_custom_call.1} parent=11 // pred_region
          %s365 = ssub.s32 16, 16
          %366 = vsyncadd [#allocation6], %s365
          %s368 = sshll.u32 [#allocation7], 4
          %s369 = int_to_ptr.vmem [resolvable:$true] %s368
          %371 = dma.hbm_to_vmem [thread:$0]  %s2, 16, %s369, [#allocation6]
        $region20: #{tpu_custom_call.1} parent=11 // pred_fallthru
          _
        // Predicated region
        $region21: #{tpu_custom_call.1} parent=11 // pred_check
          %p372 = pneg %p120
        $region22: #{tpu_custom_call.1} parent=11 // pred_check_branch
          %374 = sbr.rel (%p372) target = $region24
        $region23: #{tpu_custom_call.1} parent=11 // pred_region
          %s376 = ssub.s32 3072, 3072
          %377 = vsyncadd [#allocation9], %s376
          %s378 = sshll.u32 [#allocation8], 4
          %s379 = int_to_ptr.vmem [resolvable:$true] %s378
          %384 = dma.hbm_to_vmem [thread:$0]  %s3, 3072, %s379, [#allocation9], 192, 192, 12
        $region24: #{tpu_custom_call.1} parent=11 // pred_fallthru
          _
        // Predicated region
        $region25: #{tpu_custom_call.1} parent=11 // pred_check
          %p385 = pneg %p141
        $region26: #{tpu_custom_call.1} parent=11 // pred_check_branch
          %387 = sbr.rel (%p385) target = $region28
        $region27: #{tpu_custom_call.1} parent=11 // pred_region
          %s389 = ssub.s32 48, 48
          %390 = vsyncadd [#allocation9], %s389
          %s392 = sshll.u32 [#allocation10], 4
          %s393 = int_to_ptr.vmem [resolvable:$true] %s392
          %395 = dma.hbm_to_vmem [thread:$0]  %s4, 48, %s393, [#allocation9]
        $region28: #{tpu_custom_call.1} parent=11 // pred_fallthru
          _
        // Predicated region
        $region29: #{tpu_custom_call.1} parent=11 // pred_check
          %p396 = pneg %p162
        $region30: #{tpu_custom_call.1} parent=11 // pred_check_branch
          %398 = sbr.rel (%p396) target = $region32
        $region31: #{tpu_custom_call.1} parent=11 // pred_region
          %s400 = ssub.s32 1024, 1024
          %401 = vsyncadd [#allocation12], %s400
          %s402 = sshll.u32 [#allocation11], 4
          %s403 = int_to_ptr.vmem [resolvable:$true] %s402
          %408 = dma.hbm_to_vmem [thread:$0]  %s5, 1024, %s403, [#allocation12], 64, 64, 4
        $region32: #{tpu_custom_call.1} parent=11 // pred_fallthru
          _
        // Predicated region
        $region33: #{tpu_custom_call.1} parent=11 // pred_check
          %p409 = pneg %p183
        $region34: #{tpu_custom_call.1} parent=11 // pred_check_branch
          %411 = sbr.rel (%p409) target = $region36
        $region35: #{tpu_custom_call.1} parent=11 // pred_region
          %s413 = ssub.s32 16, 16
          %414 = vsyncadd [#allocation12], %s413
          %s416 = sshll.u32 [#allocation13], 4
          %s417 = int_to_ptr.vmem [resolvable:$true] %s416
          %419 = dma.hbm_to_vmem [thread:$0]  %s6, 16, %s417, [#allocation12]
        $region36: #{tpu_custom_call.1} parent=11 // pred_fallthru
          _
        // Predicated region
        $region37: #{tpu_custom_call.1} parent=11 // pred_check
          %p420 = pneg %p204
        $region38: #{tpu_custom_call.1} parent=11 // pred_check_branch
          %422 = sbr.rel (%p420) target = $region40
        $region39: #{tpu_custom_call.1} parent=11 // pred_region
          %s424 = ssub.s32 16, 16
          %425 = vsyncadd [#allocation15], %s424
          %s427 = sshll.u32 [#allocation14], 4
          %s428 = int_to_ptr.vmem [resolvable:$true] %s427
          %430 = dma.hbm_to_vmem [thread:$0]  %s7, 16, %s428, [#allocation15]
        $region40: #{tpu_custom_call.1} parent=11 // pred_fallthru
          _
        // Predicated region
        $region41: #{tpu_custom_call.1} parent=11 // pred_check
          %p431 = pneg %p225
        $region42: #{tpu_custom_call.1} parent=11 // pred_check_branch
          %433 = sbr.rel (%p431) target = $region44
        $region43: #{tpu_custom_call.1} parent=11 // pred_region
          %s435 = ssub.s32 16, 16
          %436 = vsyncadd [#allocation15], %s435
          %s438 = sshll.u32 [#allocation16], 4
          %s439 = int_to_ptr.vmem [resolvable:$true] %s438
          %441 = dma.hbm_to_vmem [thread:$0]  %s8, 16, %s439, [#allocation15]
        $region44: #{tpu_custom_call.1} parent=11 // pred_fallthru
          _
        // Predicated region
        $region45: #{tpu_custom_call.1} parent=11 // pred_check
          %p442 = pneg %p246
        $region46: #{tpu_custom_call.1} parent=11 // pred_check_branch
          %444 = sbr.rel (%p442) target = $region48
        $region47: #{tpu_custom_call.1} parent=11 // pred_region
          %s446 = ssub.s32 4096, 4096
          %447 = vsyncadd [#allocation18], %s446
          %s448 = sshll.u32 [#allocation17], 4
          %s449 = int_to_ptr.vmem [resolvable:$true] %s448
          %454 = dma.hbm_to_vmem [thread:$0]  %s9, 4096, %s449, [#allocation18], 256, 256, 16
        $region48: #{tpu_custom_call.1} parent=11 // pred_fallthru
          _
        // Predicated region
        $region49: #{tpu_custom_call.1} parent=11 // pred_check
          %p455 = pneg %p267
        $region50: #{tpu_custom_call.1} parent=11 // pred_check_branch
          %457 = sbr.rel (%p455) target = $region52
        $region51: #{tpu_custom_call.1} parent=11 // pred_region
          %s459 = ssub.s32 64, 64
          %460 = vsyncadd [#allocation18], %s459
          %s462 = sshll.u32 [#allocation19], 4
          %s463 = int_to_ptr.vmem [resolvable:$true] %s462
          %465 = dma.hbm_to_vmem [thread:$0]  %s10, 64, %s463, [#allocation18]
        $region52: #{tpu_custom_call.1} parent=11 // pred_fallthru
          _
        // Predicated region
        $region53: #{tpu_custom_call.1} parent=11 // pred_check
          %p466 = pneg %p288
        $region54: #{tpu_custom_call.1} parent=11 // pred_check_branch
          %468 = sbr.rel (%p466) target = $region56
        $region55: #{tpu_custom_call.1} parent=11 // pred_region
          %s470 = ssub.s32 4096, 4096
          %471 = vsyncadd [#allocation21], %s470
          %s472 = sshll.u32 [#allocation20], 4
          %s473 = int_to_ptr.vmem [resolvable:$true] %s472
          %478 = dma.hbm_to_vmem [thread:$0]  %s11, 4096, %s473, [#allocation21], 64, 64, 4
        $region56: #{tpu_custom_call.1} parent=11 // pred_fallthru
          _
        // Predicated region
        $region57: #{tpu_custom_call.1} parent=11 // pred_check
          %p479 = pneg %p309
        $region58: #{tpu_custom_call.1} parent=11 // pred_check_branch
          %481 = sbr.rel (%p479) target = $region60
        $region59: #{tpu_custom_call.1} parent=11 // pred_region
          %s483 = ssub.s32 16, 16
          %484 = vsyncadd [#allocation21], %s483
          %s486 = sshll.u32 [#allocation22], 4
          %s487 = int_to_ptr.vmem [resolvable:$true] %s486
          %489 = dma.hbm_to_vmem [thread:$0]  %s12, 16, %s487, [#allocation21]
        $region60: #{tpu_custom_call.1} parent=11 // pred_fallthru
          _
      $region12: #{tpu_custom_call.1} parent=5 // pred_fallthru
        _
      %p490 = scmp.lt.s32.totalorder %s31, 4
      // Predicated region
      $region61: #{tpu_custom_call.1} parent=5 // pred_check
        %p491 = pneg %p490
      $region62: #{tpu_custom_call.1} parent=5 // pred_check_branch
        %493 = sbr.rel (%p491) target = $region64
      $region63: #{tpu_custom_call.1} parent=5 // pred_region
        // Predicated region
        $region65: #{tpu_custom_call.1} parent=63 // pred_check
          %p494 = pneg %p51
        $region66: #{tpu_custom_call.1} parent=63 // pred_check_branch
          %496 = sbr.rel (%p494) target = $region68
        $region67: #{tpu_custom_call.1} parent=63 // pred_region
          %s497 = sand.u32 %s41, 1
          %s498 = scalar_lea.sflag [#allocation3], %s497
          %s499 = sand.u32 %s41, 1
          %s500 = smul.addr %s499, 32
          %s501 = scalar_lea.vmem [#allocation2], %s500
          %s502 = smul.u32 4, %s31
          %s504 = ssub.s32 512, 512
          %505 = vsyncadd %s498, %s504
          %s506 = smul.addr %s502, 128
          %s507 = scalar_lea.hbm %s0, %s506
          %s508 = sshll.u32 %s501, 4
          %s509 = int_to_ptr.vmem [resolvable:$true] %s508
          %514 = dma.hbm_to_vmem [thread:$0]  %s507, 512, %s509, %s498, 128, 128, 8
        $region68: #{tpu_custom_call.1} parent=63 // pred_fallthru
          _
      $region64: #{tpu_custom_call.1} parent=5 // pred_fallthru
        _
      %p515 = scmp.le.s32.totalorder 1, %s31
      %p516 = scmp.lt.s32.totalorder %s31, 5
      %p517 = pnand %p515, %p516
      %p518 = pneg %p517
      // Predicated region
      $region69: #{tpu_custom_call.1} parent=5 // pred_check
        _
      $region70: #{tpu_custom_call.1} parent=5 // pred_check_branch
        %520 = sbr.rel (%p517) target = $region72
      $region71: #{tpu_custom_call.1} parent=5 // pred_region
        %s521 = ssub.s32 %s31, 1
        %s522 = sand.u32 %s44, 1
        %s523 = scalar_lea.sflag [#allocation3], %s522
        %s524 = sand.u32 %s44, 1
        %s525 = smul.addr %s524, 32
        %s526 = scalar_lea.vmem [#allocation2], %s525
        // Predicated region
        $region73: #{tpu_custom_call.1} parent=71 // pred_check
          %p527 = pneg %p57
        $region74: #{tpu_custom_call.1} parent=71 // pred_check_branch
          %529 = sbr.rel (%p527) target = $region76
        $region75: #{tpu_custom_call.1} parent=71 // pred_region
          %530 = dma.done %s523, 512
        $region76: #{tpu_custom_call.1} parent=71 // pred_fallthru
          _
        // Predicated region
        $region77: #{tpu_custom_call.1} parent=71 // pred_check
          %p531 = pneg %p78
        $region78: #{tpu_custom_call.1} parent=71 // pred_check_branch
          %533 = sbr.rel (%p531) target = $region80
        $region79: #{tpu_custom_call.1} parent=71 // pred_region
          %534 = dma.done [#allocation6], 16
        $region80: #{tpu_custom_call.1} parent=71 // pred_fallthru
          _
        // Predicated region
        $region81: #{tpu_custom_call.1} parent=71 // pred_check
          %p535 = pneg %p99
        $region82: #{tpu_custom_call.1} parent=71 // pred_check_branch
          %537 = sbr.rel (%p535) target = $region84
        $region83: #{tpu_custom_call.1} parent=71 // pred_region
          %538 = dma.done [#allocation6], 16
        $region84: #{tpu_custom_call.1} parent=71 // pred_fallthru
          _
        // Predicated region
        $region85: #{tpu_custom_call.1} parent=71 // pred_check
          %p539 = pneg %p120
        $region86: #{tpu_custom_call.1} parent=71 // pred_check_branch
          %541 = sbr.rel (%p539) target = $region88
        $region87: #{tpu_custom_call.1} parent=71 // pred_region
          %542 = dma.done [#allocation9], 3072
        $region88: #{tpu_custom_call.1} parent=71 // pred_fallthru
          _
        // Predicated region
        $region89: #{tpu_custom_call.1} parent=71 // pred_check
          %p543 = pneg %p141
        $region90: #{tpu_custom_call.1} parent=71 // pred_check_branch
          %545 = sbr.rel (%p543) target = $region92
        $region91: #{tpu_custom_call.1} parent=71 // pred_region
          %546 = dma.done [#allocation9], 48
        $region92: #{tpu_custom_call.1} parent=71 // pred_fallthru
          _
        // Predicated region
        $region93: #{tpu_custom_call.1} parent=71 // pred_check
          %p547 = pneg %p162
        $region94: #{tpu_custom_call.1} parent=71 // pred_check_branch
          %549 = sbr.rel (%p547) target = $region96
        $region95: #{tpu_custom_call.1} parent=71 // pred_region
          %550 = dma.done [#allocation12], 1024
        $region96: #{tpu_custom_call.1} parent=71 // pred_fallthru
          _
        // Predicated region
        $region97: #{tpu_custom_call.1} parent=71 // pred_check
          %p551 = pneg %p183
        $region98: #{tpu_custom_call.1} parent=71 // pred_check_branch
          %553 = sbr.rel (%p551) target = $region100
        $region99: #{tpu_custom_call.1} parent=71 // pred_region
          %554 = dma.done [#allocation12], 16
        $region100: #{tpu_custom_call.1} parent=71 // pred_fallthru
          _
        // Predicated region
        $region101: #{tpu_custom_call.1} parent=71 // pred_check
          %p555 = pneg %p204
        $region102: #{tpu_custom_call.1} parent=71 // pred_check_branch
          %557 = sbr.rel (%p555) target = $region104
        $region103: #{tpu_custom_call.1} parent=71 // pred_region
          %558 = dma.done [#allocation15], 16
        $region104: #{tpu_custom_call.1} parent=71 // pred_fallthru
          _
        // Predicated region
        $region105: #{tpu_custom_call.1} parent=71 // pred_check
          %p559 = pneg %p225
        $region106: #{tpu_custom_call.1} parent=71 // pred_check_branch
          %561 = sbr.rel (%p559) target = $region108
        $region107: #{tpu_custom_call.1} parent=71 // pred_region
          %562 = dma.done [#allocation15], 16
        $region108: #{tpu_custom_call.1} parent=71 // pred_fallthru
          _
        // Predicated region
        $region109: #{tpu_custom_call.1} parent=71 // pred_check
          %p563 = pneg %p246
        $region110: #{tpu_custom_call.1} parent=71 // pred_check_branch
          %565 = sbr.rel (%p563) target = $region112
        $region111: #{tpu_custom_call.1} parent=71 // pred_region
          %566 = dma.done [#allocation18], 4096
        $region112: #{tpu_custom_call.1} parent=71 // pred_fallthru
          _
        // Predicated region
        $region113: #{tpu_custom_call.1} parent=71 // pred_check
          %p567 = pneg %p267
        $region114: #{tpu_custom_call.1} parent=71 // pred_check_branch
          %569 = sbr.rel (%p567) target = $region116
        $region115: #{tpu_custom_call.1} parent=71 // pred_region
          %570 = dma.done [#allocation18], 64
        $region116: #{tpu_custom_call.1} parent=71 // pred_fallthru
          _
        // Predicated region
        $region117: #{tpu_custom_call.1} parent=71 // pred_check
          %p571 = pneg %p288
        $region118: #{tpu_custom_call.1} parent=71 // pred_check_branch
          %573 = sbr.rel (%p571) target = $region120
        $region119: #{tpu_custom_call.1} parent=71 // pred_region
          %574 = dma.done [#allocation21], 4096
        $region120: #{tpu_custom_call.1} parent=71 // pred_fallthru
          _
        // Predicated region
        $region121: #{tpu_custom_call.1} parent=71 // pred_check
          %p575 = pneg %p309
        $region122: #{tpu_custom_call.1} parent=71 // pred_check_branch
          %577 = sbr.rel (%p575) target = $region124
        $region123: #{tpu_custom_call.1} parent=71 // pred_region
          %578 = dma.done [#allocation21], 16
        $region124: #{tpu_custom_call.1} parent=71 // pred_fallthru
          _
        %s579 = sand.u32 %s44, 1
        %s580 = scalar_lea.sflag [#allocation3], %s579
        %s581 = sand.u32 %s44, 1
        %s582 = smul.addr %s581, 32
        %s583 = scalar_lea.vmem [#allocation2], %s582
        %p584 = pneg %p57
        %p585 = pneg %p54
        %p586 = pneg %p78
        %p587 = pneg %p75
        %p588 = pneg %p99
        %p589 = pneg %p96
        %p590 = pneg %p120
        %p591 = pneg %p117
        %p592 = pneg %p141
        %p593 = pneg %p138
        %p594 = pneg %p162
        %p595 = pneg %p159
        %p596 = pneg %p183
        %p597 = pneg %p180
        %p598 = pneg %p204
        %p599 = pneg %p201
        %p600 = pneg %p225
        %p601 = pneg %p222
        %p602 = pneg %p246
        %p603 = pneg %p243
        %p604 = pneg %p267
        %p605 = pneg %p264
        %p606 = pneg %p288
        %p607 = pneg %p285
        %p608 = pneg %p309
        %p609 = pneg %p306
        %p610 = pneg %p335
        %p611 = pneg %p332
        %s612 = sand.u32 %s322, 1
        %s613 = scalar_lea.sflag [#allocation4], %s612
        %s614 = sand.u32 %s322, 1
        %s615 = smul.addr %s614, 32
        %s616 = scalar_lea.vmem [#allocation23], %s615
        %s617 = smul.u32 4, %s36
        %s618 = smul.u32 4, %s36
        %v620 = vld [vmem:[%s526] sm:$0xff]
        %v621 = vld [vmem:[%s526 + $0x8] sm:$0xff]
        %v622 = vld [vmem:[%s526 + $0x10] sm:$0xff]
        %v623 = vld [vmem:[%s526 + $0x18] sm:$0xff]
        %v624 = vld [vmem:[#allocation5] sm:$0x1]
        %v625 = vld [vmem:[#allocation7] sm:$0x1]
        %626 = vadd.xlane.f32.xlu0 %v620
        %v627 = vpop.xlane.xlu0 %626
        %628 = vadd.xlane.f32.xlu0 %v621
        %v629 = vpop.xlane.xlu0 %628
        %630 = vadd.xlane.f32.xlu0 %v622
        %v631 = vpop.xlane.xlu0 %630
        %632 = vadd.xlane.f32.xlu0 %v623
        %v633 = vpop.xlane.xlu0 %632
        %v634 = vrcp.pop 128.0
        %v635 = vmul.f32 %v627, %v634
        %v636 = vmul.f32 %v629, %v634
        %v637 = vmul.f32 %v631, %v634
        %v638 = vmul.f32 %v633, %v634
        %v639 = vsub.f32 %v620, %v635
        %v640 = vsub.f32 %v621, %v636
        %v641 = vsub.f32 %v622, %v637
        %v642 = vsub.f32 %v623, %v638
        %v643 = vmul.f32 %v639, %v639
        %v644 = vmul.f32 %v640, %v640
        %v645 = vmul.f32 %v641, %v641
        %v646 = vmul.f32 %v642, %v642
        %647 = vadd.xlane.f32.xlu0 %v643
        %v648 = vpop.xlane.xlu0 %647
        %649 = vadd.xlane.f32.xlu0 %v644
        %v650 = vpop.xlane.xlu0 %649
        %651 = vadd.xlane.f32.xlu0 %v645
        %v652 = vpop.xlane.xlu0 %651
        %653 = vadd.xlane.f32.xlu0 %v646
        %v654 = vpop.xlane.xlu0 %653
        %v655 = vmul.f32 %v648, %v634
        %v656 = vmul.f32 %v650, %v634
        %v657 = vmul.f32 %v652, %v634
        %v658 = vmul.f32 %v654, %v634
        %v659 = vadd.f32 %v655, 1e-05
        %v660 = vadd.f32 %v656, 1e-05
        %v661 = vadd.f32 %v657, 1e-05
        %v662 = vadd.f32 %v658, 1e-05
        %v663 = vrsqrt.pop %v659
        %v664 = vrsqrt.pop %v660
        %v665 = vrsqrt.pop %v661
        %v666 = vrsqrt.pop %v662
        %v667 = vmul.f32 %v639, %v663
        %v668 = vmul.f32 %v640, %v664
        %v669 = vmul.f32 %v641, %v665
        %v670 = vmul.f32 %v642, %v666
        %v672 = vlaneseq
        %v673 = vshrl.u32 %v672, 7
        %v674 = vsub.s32 0, %v673
        %v675 = vrot.slane %v624, %v674
        %v677 = vmul.f32 %v667, %v675
        %v678 = vmul.f32 %v668, %v675
        %v679 = vmul.f32 %v669, %v675
        %v680 = vmul.f32 %v670, %v675
        %v682 = vlaneseq
        %v683 = vshrl.u32 %v682, 7
        %v684 = vsub.s32 0, %v683
        %v685 = vrot.slane %v625, %v684
        %v687 = vadd.f32 %v677, %v685
        %v688 = vadd.f32 %v678, %v685
        %v689 = vadd.f32 %v679, %v685
        %v690 = vadd.f32 %v680, %v685
        %v691 = vpack.c.bf16 %v688, %v687
        %v692 = vpack.c.bf16 %v690, %v689
        %v693 = vld [vmem:[#allocation8] sm:$0xff]
        %v694 = vld [vmem:[#allocation8 + $0x8] sm:$0xf]
        %v695 = vld [vmem:[#allocation8 + $0xc] sm:$0xff]
        %v696 = vld [vmem:[#allocation8 + $0x14] sm:$0xf]
        %v697 = vld [vmem:[#allocation8 + $0x18] sm:$0xff]
        %v698 = vld [vmem:[#allocation8 + $0x20] sm:$0xf]
        %v699 = vld [vmem:[#allocation8 + $0x24] sm:$0xff]
        %v700 = vld [vmem:[#allocation8 + $0x2c] sm:$0xf]
        %v701 = vld [vmem:[#allocation8 + $0x30] sm:$0xff]
        %v702 = vld [vmem:[#allocation8 + $0x38] sm:$0xf]
        %v703 = vld [vmem:[#allocation8 + $0x3c] sm:$0xff]
        %v704 = vld [vmem:[#allocation8 + $0x44] sm:$0xf]
        %v705 = vld [vmem:[#allocation8 + $0x48] sm:$0xff]
        %v706 = vld [vmem:[#allocation8 + $0x50] sm:$0xf]
        %v707 = vld [vmem:[#allocation8 + $0x54] sm:$0xff]
        %v708 = vld [vmem:[#allocation8 + $0x5c] sm:$0xf]
        %v709 = vld [vmem:[#allocation8 + $0x60] sm:$0xff]
        %v710 = vld [vmem:[#allocation8 + $0x68] sm:$0xf]
        %v711 = vld [vmem:[#allocation8 + $0x6c] sm:$0xff]
        %v712 = vld [vmem:[#allocation8 + $0x74] sm:$0xf]
        %v713 = vld [vmem:[#allocation8 + $0x78] sm:$0xff]
        %v714 = vld [vmem:[#allocation8 + $0x80] sm:$0xf]
        %v715 = vld [vmem:[#allocation8 + $0x84] sm:$0xff]
        %v716 = vld [vmem:[#allocation8 + $0x8c] sm:$0xf]
        %v717 = vld [vmem:[#allocation8 + $0x90] sm:$0xff]
        %v718 = vld [vmem:[#allocation8 + $0x98] sm:$0xf]
        %v719 = vld [vmem:[#allocation8 + $0x9c] sm:$0xff]
        %v720 = vld [vmem:[#allocation8 + $0xa4] sm:$0xf]
        %v721 = vld [vmem:[#allocation8 + $0xa8] sm:$0xff]
        %v722 = vld [vmem:[#allocation8 + $0xb0] sm:$0xf]
        %v723 = vld [vmem:[#allocation8 + $0xb4] sm:$0xff]
        %v724 = vld [vmem:[#allocation8 + $0xbc] sm:$0xf]
        %v725 = vld [vmem:[#allocation10] sm:$0x7]
        %v727 = vlaneseq
        %v728 = vshrl.u32 %v727, 7
        %v729 = vsub.s32 0, %v728
        %v730 = vrot.slane %v725, %v729
        %v731 = vlaneseq
        %v732 = vshrl.u32 %v731, 7
        %v733 = vsub.s32 1, %v732
        %v734 = vrot.slane %v725, %v733
        %v735 = vlaneseq
        %v736 = vshrl.u32 %v735, 7
        %v737 = vsub.s32 2, %v736
        %v738 = vrot.slane %v725, %v737
        %v774 = vunpack.c.l.b16 %v693
        %v775 = vunpack.c.h.b16 %v693
        %v776 = vunpack.c.l.b16 %v694
        %v777 = vunpack.c.l.b16 %v695
        %v778 = vunpack.c.h.b16 %v695
        %v779 = vunpack.c.l.b16 %v696
        %v780 = vunpack.c.l.b16 %v697
        %v781 = vunpack.c.h.b16 %v697
        %v782 = vunpack.c.l.b16 %v698
        %v783 = vunpack.c.l.b16 %v699
        %v784 = vunpack.c.h.b16 %v699
        %v785 = vunpack.c.l.b16 %v700
        %v786 = vunpack.c.l.b16 %v701
        %v787 = vunpack.c.h.b16 %v701
        %v788 = vunpack.c.l.b16 %v702
        %v789 = vunpack.c.l.b16 %v703
        %v790 = vunpack.c.h.b16 %v703
        %v791 = vunpack.c.l.b16 %v704
        %v792 = vunpack.c.l.b16 %v705
        %v793 = vunpack.c.h.b16 %v705
        %v794 = vunpack.c.l.b16 %v706
        %v795 = vunpack.c.l.b16 %v707
        %v796 = vunpack.c.h.b16 %v707
        %v797 = vunpack.c.l.b16 %v708
        %v798 = vunpack.c.l.b16 %v709
        %v799 = vunpack.c.h.b16 %v709
        %v800 = vunpack.c.l.b16 %v710
        %v801 = vunpack.c.l.b16 %v711
        %v802 = vunpack.c.h.b16 %v711
        %v803 = vunpack.c.l.b16 %v712
        %v804 = vunpack.c.l.b16 %v713
        %v805 = vunpack.c.h.b16 %v713
        %v806 = vunpack.c.l.b16 %v714
        %v807 = vunpack.c.l.b16 %v715
        %v808 = vunpack.c.h.b16 %v715
        %v809 = vunpack.c.l.b16 %v716
        %v810 = vunpack.c.l.b16 %v717
        %v811 = vunpack.c.h.b16 %v717
        %v812 = vunpack.c.l.b16 %v718
        %v813 = vunpack.c.l.b16 %v719
        %v814 = vunpack.c.h.b16 %v719
        %v815 = vunpack.c.l.b16 %v720
        %v816 = vunpack.c.l.b16 %v721
        %v817 = vunpack.c.h.b16 %v721
        %v818 = vunpack.c.l.b16 %v722
        %v819 = vunpack.c.l.b16 %v723
        %v820 = vunpack.c.h.b16 %v723
        %v821 = vunpack.c.l.b16 %v724
        %v822 = vpack.c.b16 %v777, %v774
        %v823 = vpack.c.b16 %v778, %v775
        %v824 = vpack.c.b16 %v779, %v776
        %v825 = vpack.c.b16 %v783, %v780
        %v826 = vpack.c.b16 %v784, %v781
        %v827 = vpack.c.b16 %v785, %v782
        %v828 = vpack.c.b16 %v789, %v786
        %v829 = vpack.c.b16 %v790, %v787
        %v830 = vpack.c.b16 %v791, %v788
        %v831 = vpack.c.b16 %v795, %v792
        %v832 = vpack.c.b16 %v796, %v793
        %v833 = vpack.c.b16 %v797, %v794
        %v834 = vpack.c.b16 %v801, %v798
        %v835 = vpack.c.b16 %v802, %v799
        %v836 = vpack.c.b16 %v803, %v800
        %v837 = vpack.c.b16 %v807, %v804
        %v838 = vpack.c.b16 %v808, %v805
        %v839 = vpack.c.b16 %v809, %v806
        %v840 = vpack.c.b16 %v813, %v810
        %v841 = vpack.c.b16 %v814, %v811
        %v842 = vpack.c.b16 %v815, %v812
        %v843 = vpack.c.b16 %v819, %v816
        %v844 = vpack.c.b16 %v820, %v817
        %v845 = vpack.c.b16 %v821, %v818
        %870 = vmatprep.subr.bf16.mxu0 %v823
        %871 = vmatpush1.bf16.msra.mxu0 %v822
        %872 = vmatprep.subr.bf16.mxu0 %v826
        %873 = vmatpush1.bf16.msra.mxu0 %v825
        %874 = vmatprep.subr.bf16.mxu0 %v829
        %875 = vmatpush1.bf16.msra.mxu0 %v828
        %876 = vmatprep.subr.bf16.mxu0 %v832
        %877 = vmatpush1.bf16.msra.mxu0 %v831
        %878 = vmatprep.subr.bf16.mxu0 %v835
        %879 = vmatpush1.bf16.msra.mxu0 %v834
        %880 = vmatprep.subr.bf16.mxu0 %v838
        %881 = vmatpush1.bf16.msra.mxu0 %v837
        %882 = vmatprep.subr.bf16.mxu0 %v841
        %883 = vmatpush1.bf16.msra.mxu0 %v840
        %884 = vmatprep.subr.bf16.mxu0 %v844
        %885 = vmatpush1.bf16.msra.mxu0 %v843
        %886 = vmatprep.subr.bf16.mxu0 0
        %887 = vmatpush1.bf16.msra.mxu0 0
        %888 = vmatprep.subr.bf16.mxu0 0
        %889 = vmatpush1.bf16.msra.mxu0 0
        %890 = vmatprep.subr.bf16.mxu0 0
        %891 = vmatpush1.bf16.msra.mxu0 0
        %892 = vmatprep.subr.bf16.mxu0 0
        %893 = vmatpush1.bf16.msra.mxu0 0
        %894 = vmatprep.subr.bf16.mxu0 0
        %895 = vmatpush1.bf16.msra.mxu0 0
        %896 = vmatprep.subr.bf16.mxu0 0
        %897 = vmatpush1.bf16.msra.mxu0 0
        %898 = vmatprep.subr.bf16.mxu0 0
        %899 = vmatpush1.bf16.msra.mxu0 0
        %900 = vmatprep.subr.bf16.mxu0 0
        %901 = vmatpush1.bf16.msra.mxu0 0
        %902 = vmatprep.mubr.bf16.mxu0 0
        %903 = vmatmul.mubr.bf16.gmra.mrb[0].mxu0 %v691
        %v904 = vpop.f32.mrb[0].mxu0
        %v905 = vadd.f32 %v730, %v904
        %v906 = vpop.f32.mrb[0].mxu0
        %v907 = vadd.f32 %v734, %v906
        %v908 = vpop.f32.mrb[0].mxu0
        %v909 = vadd.f32 %v730, %v908
        %v910 = vpop.f32.mrb[0].mxu0
        %v911 = vadd.f32 %v734, %v910
        %912 = vmatprep.mubr.bf16.mxu0 0
        %913 = vmatmul.mubr.bf16.gmra.mrb[0].mxu0 %v692
        %v914 = vpop.f32.mrb[0].mxu0
        %v915 = vadd.f32 %v730, %v914
        %v916 = vpop.f32.mrb[0].mxu0
        %v917 = vadd.f32 %v734, %v916
        %v918 = vpop.f32.mrb[0].mxu0
        %v919 = vadd.f32 %v730, %v918
        %v920 = vpop.f32.mrb[0].mxu0
        %v921 = vadd.f32 %v734, %v920
        %922 = vdwg.mxu0
        %923 = vmatprep.subr.bf16.mxu0 0
        %924 = vmatpush1.bf16.msra.mxu0 %v824
        %925 = vmatprep.subr.bf16.mxu0 0
        %926 = vmatpush1.bf16.msra.mxu0 %v827
        %927 = vmatprep.subr.bf16.mxu0 0
        %928 = vmatpush1.bf16.msra.mxu0 %v830
        %929 = vmatprep.subr.bf16.mxu0 0
        %930 = vmatpush1.bf16.msra.mxu0 %v833
        %931 = vmatprep.subr.bf16.mxu0 0
        %932 = vmatpush1.bf16.msra.mxu0 %v836
        %933 = vmatprep.subr.bf16.mxu0 0
        %934 = vmatpush1.bf16.msra.mxu0 %v839
        %935 = vmatprep.subr.bf16.mxu0 0
        %936 = vmatpush1.bf16.msra.mxu0 %v842
        %937 = vmatprep.subr.bf16.mxu0 0
        %938 = vmatpush1.bf16.msra.mxu0 %v845
        %939 = vmatprep.subr.bf16.mxu0 0
        %940 = vmatpush1.bf16.msra.mxu0 0
        %941 = vmatprep.subr.bf16.mxu0 0
        %942 = vmatpush1.bf16.msra.mxu0 0
        %943 = vmatprep.subr.bf16.mxu0 0
        %944 = vmatpush1.bf16.msra.mxu0 0
        %945 = vmatprep.subr.bf16.mxu0 0
        %946 = vmatpush1.bf16.msra.mxu0 0
        %947 = vmatprep.subr.bf16.mxu0 0
        %948 = vmatpush1.bf16.msra.mxu0 0
        %949 = vmatprep.subr.bf16.mxu0 0
        %950 = vmatpush1.bf16.msra.mxu0 0
        %951 = vmatprep.subr.bf16.mxu0 0
        %952 = vmatpush1.bf16.msra.mxu0 0
        %953 = vmatprep.subr.bf16.mxu0 0
        %954 = vmatpush1.bf16.msra.mxu0 0
        %955 = vmatprep.mubr.bf16.mxu0 0
        %956 = vmatmul.mubr.bf16.gmra.mrb[0].mxu0 %v691
        %v957 = vpop.f32.mrb[0].mxu0
        %v958 = vadd.f32 %v738, %v957
        %v959 = vpop.f32.mrb[0].mxu0
        %v960 = vpop.f32.mrb[0].mxu0
        %v961 = vadd.f32 %v738, %v960
        %v962 = vpop.f32.mrb[0].mxu0
        %963 = vmatprep.mubr.bf16.mxu0 0
        %964 = vmatmul.mubr.bf16.gmra.mrb[0].mxu0 %v692
        %v965 = vpop.f32.mrb[0].mxu0
        %v966 = vadd.f32 %v738, %v965
        %v967 = vpop.f32.mrb[0].mxu0
        %v968 = vpop.f32.mrb[0].mxu0
        %v969 = vadd.f32 %v738, %v968
        %v970 = vpop.f32.mrb[0].mxu0
        %971 = vdwg.mxu0
        %v972 = vpack.c.bf16 %v909, %v905
        %v973 = vpack.c.bf16 %v911, %v907
        %v974 = vpack.c.bf16 %v961, %v958
        %v975 = vpack.c.bf16 %v919, %v915
        %v976 = vpack.c.bf16 %v921, %v917
        %v977 = vpack.c.bf16 %v969, %v966
        %v980 = vunpack.c.l.b16 %v972
        %v981 = vunpack.c.h.b16 %v972
        %v982 = vunpack.c.l.b16 %v975
        %v983 = vunpack.c.h.b16 %v975
        %v984 = vpack.c.b16 %v980, %v980
        %v985 = vpack.c.b16 %v981, %v981
        %v986 = vpack.c.b16 %v982, %v982
        %v987 = vpack.c.b16 %v983, %v983
        %v990 = vunpack.c.l.b16 %v973
        %v991 = vunpack.c.h.b16 %v973
        %v992 = vunpack.c.l.b16 %v976
        %v993 = vunpack.c.h.b16 %v976
        %v994 = vpack.c.b16 %v990, %v990
        %v995 = vpack.c.b16 %v991, %v991
        %v996 = vpack.c.b16 %v992, %v992
        %v997 = vpack.c.b16 %v993, %v993
        %v1000 = vunpack.c.l.b16 %v974
        %v1001 = vunpack.c.h.b16 %v974
        %v1002 = vunpack.c.l.b16 %v977
        %v1003 = vunpack.c.h.b16 %v977
        %v1004 = vpack.c.b16 %v1000, %v1000
        %v1005 = vpack.c.b16 %v1001, %v1001
        %v1006 = vpack.c.b16 %v1002, %v1002
        %v1007 = vpack.c.b16 %v1003, %v1003
        %vm1008 = vcmask 261120
        %v1010 = vsel %vm1008, %v984, 0
        %v1013 = vsel %vm1008, %v994, 0
        %1015 = vmatprep.subr.bf16.mxu0 0
        %1016 = vmatpush1.bf16.xpose.msra.mxu0 %v1013
        %1017 = vmatprep.subr.bf16.mxu0 0
        %1018 = vmatpush1.bf16.xpose.msra.mxu0 0
        %1019 = vmatprep.subr.bf16.mxu0 0
        %1020 = vmatpush1.bf16.xpose.msra.mxu0 0
        %1021 = vmatprep.subr.bf16.mxu0 0
        %1022 = vmatpush1.bf16.xpose.msra.mxu0 0
        %1023 = vmatprep.subr.bf16.mxu0 0
        %1024 = vmatpush1.bf16.xpose.msra.mxu0 0
        %1025 = vmatprep.subr.bf16.mxu0 0
        %1026 = vmatpush1.bf16.xpose.msra.mxu0 0
        %1027 = vmatprep.subr.bf16.mxu0 0
        %1028 = vmatpush1.bf16.xpose.msra.mxu0 0
        %1029 = vmatprep.subr.bf16.mxu0 0
        %1030 = vmatpush1.bf16.xpose.msra.mxu0 0
        %1031 = vmatprep.subr.bf16.mxu0 0
        %1032 = vmatpush1.bf16.xpose.msra.mxu0 0
        %1033 = vmatprep.subr.bf16.mxu0 0
        %1034 = vmatpush1.bf16.xpose.msra.mxu0 0
        %1035 = vmatprep.subr.bf16.mxu0 0
        %1036 = vmatpush1.bf16.xpose.msra.mxu0 0
        %1037 = vmatprep.subr.bf16.mxu0 0
        %1038 = vmatpush1.bf16.xpose.msra.mxu0 0
        %1039 = vmatprep.subr.bf16.mxu0 0
        %1040 = vmatpush1.bf16.xpose.msra.mxu0 0
        %1041 = vmatprep.subr.bf16.mxu0 0
        %1042 = vmatpush1.bf16.xpose.msra.mxu0 0
        %1043 = vmatprep.subr.bf16.mxu0 0
        %1044 = vmatpush1.bf16.xpose.msra.mxu0 0
        %1045 = vmatprep.subr.bf16.mxu0 0
        %1046 = vmatpush1.bf16.xpose.msra.mxu0 0
        %1047 = vmatprep.mubr.bf16.mxu0 0
        %1048 = vmatmul.mubr.bf16.gmra.mrb[0].mxu0 %v1010
        %v1049 = vpop.f32.mrb[0].mxu0
        %v1050 = vadd.f32 0.0, %v1049
        %v1051 = vpop.f32.mrb[0].mxu0
        %v1052 = vpop.f32.mrb[0].mxu0
        %v1053 = vpop.f32.mrb[0].mxu0
        %1054 = vdwg.mxu0
        %v1056 = vsel %vm1008, %v985, 0
        %v1059 = vsel %vm1008, %v995, 0
        %1061 = vmatprep.subr.bf16.mxu0 0
        %1062 = vmatpush1.bf16.xpose.msra.mxu0 %v1059
        %1063 = vmatprep.subr.bf16.mxu0 0
        %1064 = vmatpush1.bf16.xpose.msra.mxu0 0
        %1065 = vmatprep.subr.bf16.mxu0 0
        %1066 = vmatpush1.bf16.xpose.msra.mxu0 0
        %1067 = vmatprep.subr.bf16.mxu0 0
        %1068 = vmatpush1.bf16.xpose.msra.mxu0 0
        %1069 = vmatprep.subr.bf16.mxu0 0
        %1070 = vmatpush1.bf16.xpose.msra.mxu0 0
        %1071 = vmatprep.subr.bf16.mxu0 0
        %1072 = vmatpush1.bf16.xpose.msra.mxu0 0
        %1073 = vmatprep.subr.bf16.mxu0 0
        %1074 = vmatpush1.bf16.xpose.msra.mxu0 0
        %1075 = vmatprep.subr.bf16.mxu0 0
        %1076 = vmatpush1.bf16.xpose.msra.mxu0 0
        %1077 = vmatprep.subr.bf16.mxu0 0
        %1078 = vmatpush1.bf16.xpose.msra.mxu0 0
        %1079 = vmatprep.subr.bf16.mxu0 0
        %1080 = vmatpush1.bf16.xpose.msra.mxu0 0
        %1081 = vmatprep.subr.bf16.mxu0 0
        %1082 = vmatpush1.bf16.xpose.msra.mxu0 0
        %1083 = vmatprep.subr.bf16.mxu0 0
        %1084 = vmatpush1.bf16.xpose.msra.mxu0 0
        %1085 = vmatprep.subr.bf16.mxu0 0
        %1086 = vmatpush1.bf16.xpose.msra.mxu0 0
        %1087 = vmatprep.subr.bf16.mxu0 0
        %1088 = vmatpush1.bf16.xpose.msra.mxu0 0
        %1089 = vmatprep.subr.bf16.mxu0 0
        %1090 = vmatpush1.bf16.xpose.msra.mxu0 0
        %1091 = vmatprep.subr.bf16.mxu0 0
        %1092 = vmatpush1.bf16.xpose.msra.mxu0 0
        %1093 = vmatprep.mubr.bf16.mxu0 0
        %1094 = vmatmul.mubr.bf16.gmra.mrb[0].mxu0 %v1056
        %v1095 = vpop.f32.mrb[0].mxu0
        %v1096 = vadd.f32 0.0, %v1095
        %v1097 = vpop.f32.mrb[0].mxu0
        %v1098 = vpop.f32.mrb[0].mxu0
        %v1099 = vpop.f32.mrb[0].mxu0
        %1100 = vdwg.mxu0
        %v1102 = vsel %vm1008, %v986, 0
        %v1105 = vsel %vm1008, %v996, 0
        %1107 = vmatprep.subr.bf16.mxu0 0
        %1108 = vmatpush1.bf16.xpose.msra.mxu0 %v1105
        %1109 = vmatprep.subr.bf16.mxu0 0
        %1110 = vmatpush1.bf16.xpose.msra.mxu0 0
        %1111 = vmatprep.subr.bf16.mxu0 0
        %1112 = vmatpush1.bf16.xpose.msra.mxu0 0
        %1113 = vmatprep.subr.bf16.mxu0 0
        %1114 = vmatpush1.bf16.xpose.msra.mxu0 0
        %1115 = vmatprep.subr.bf16.mxu0 0
        %1116 = vmatpush1.bf16.xpose.msra.mxu0 0
        %1117 = vmatprep.subr.bf16.mxu0 0
        %1118 = vmatpush1.bf16.xpose.msra.mxu0 0
        %1119 = vmatprep.subr.bf16.mxu0 0
        %1120 = vmatpush1.bf16.xpose.msra.mxu0 0
        %1121 = vmatprep.subr.bf16.mxu0 0
        %1122 = vmatpush1.bf16.xpose.msra.mxu0 0
        %1123 = vmatprep.subr.bf16.mxu0 0
        %1124 = vmatpush1.bf16.xpose.msra.mxu0 0
        %1125 = vmatprep.subr.bf16.mxu0 0
        %1126 = vmatpush1.bf16.xpose.msra.mxu0 0
        %1127 = vmatprep.subr.bf16.mxu0 0
        %1128 = vmatpush1.bf16.xpose.msra.mxu0 0
        %1129 = vmatprep.subr.bf16.mxu0 0
        %1130 = vmatpush1.bf16.xpose.msra.mxu0 0
        %1131 = vmatprep.subr.bf16.mxu0 0
        %1132 = vmatpush1.bf16.xpose.msra.mxu0 0
        %1133 = vmatprep.subr.bf16.mxu0 0
        %1134 = vmatpush1.bf16.xpose.msra.mxu0 0
        %1135 = vmatprep.subr.bf16.mxu0 0
        %1136 = vmatpush1.bf16.xpose.msra.mxu0 0
        %1137 = vmatprep.subr.bf16.mxu0 0
        %1138 = vmatpush1.bf16.xpose.msra.mxu0 0
        %1139 = vmatprep.mubr.bf16.mxu0 0
        %1140 = vmatmul.mubr.bf16.gmra.mrb[0].mxu0 %v1102
        %v1141 = vpop.f32.mrb[0].mxu0
        %v1142 = vadd.f32 0.0, %v1141
        %v1143 = vpop.f32.mrb[0].mxu0
        %v1144 = vpop.f32.mrb[0].mxu0
        %v1145 = vpop.f32.mrb[0].mxu0
        %1146 = vdwg.mxu0
        %v1148 = vsel %vm1008, %v987, 0
        %v1151 = vsel %vm1008, %v997, 0
        %1153 = vmatprep.subr.bf16.mxu0 0
        %1154 = vmatpush1.bf16.xpose.msra.mxu0 %v1151
        %1155 = vmatprep.subr.bf16.mxu0 0
        %1156 = vmatpush1.bf16.xpose.msra.mxu0 0
        %1157 = vmatprep.subr.bf16.mxu0 0
        %1158 = vmatpush1.bf16.xpose.msra.mxu0 0
        %1159 = vmatprep.subr.bf16.mxu0 0
        %1160 = vmatpush1.bf16.xpose.msra.mxu0 0
        %1161 = vmatprep.subr.bf16.mxu0 0
        %1162 = vmatpush1.bf16.xpose.msra.mxu0 0
        %1163 = vmatprep.subr.bf16.mxu0 0
        %1164 = vmatpush1.bf16.xpose.msra.mxu0 0
        %1165 = vmatprep.subr.bf16.mxu0 0
        %1166 = vmatpush1.bf16.xpose.msra.mxu0 0
        %1167 = vmatprep.subr.bf16.mxu0 0
        %1168 = vmatpush1.bf16.xpose.msra.mxu0 0
        %1169 = vmatprep.subr.bf16.mxu0 0
        %1170 = vmatpush1.bf16.xpose.msra.mxu0 0
        %1171 = vmatprep.subr.bf16.mxu0 0
        %1172 = vmatpush1.bf16.xpose.msra.mxu0 0
        %1173 = vmatprep.subr.bf16.mxu0 0
        %1174 = vmatpush1.bf16.xpose.msra.mxu0 0
        %1175 = vmatprep.subr.bf16.mxu0 0
        %1176 = vmatpush1.bf16.xpose.msra.mxu0 0
        %1177 = vmatprep.subr.bf16.mxu0 0
        %1178 = vmatpush1.bf16.xpose.msra.mxu0 0
        %1179 = vmatprep.subr.bf16.mxu0 0
        %1180 = vmatpush1.bf16.xpose.msra.mxu0 0
        %1181 = vmatprep.subr.bf16.mxu0 0
        %1182 = vmatpush1.bf16.xpose.msra.mxu0 0
        %1183 = vmatprep.subr.bf16.mxu0 0
        %1184 = vmatpush1.bf16.xpose.msra.mxu0 0
        %1185 = vmatprep.mubr.bf16.mxu0 0
        %1186 = vmatmul.mubr.bf16.gmra.mrb[0].mxu0 %v1148
        %v1187 = vpop.f32.mrb[0].mxu0
        %v1188 = vadd.f32 0.0, %v1187
        %v1189 = vpop.f32.mrb[0].mxu0
        %v1190 = vpop.f32.mrb[0].mxu0
        %v1191 = vpop.f32.mrb[0].mxu0
        %1192 = vdwg.mxu0
        %vm1193 = vcmask 64512
        %v1194 = vsel %vm1193, %v1050, -inf
        %1195 = vmax.xlane.f32.xlu0 %v1194
        %v1196 = vpop.xlane.xlu0 %1195
        %v1197 = vsel %vm1193, %v1096, -inf
        %1198 = vmax.xlane.f32.xlu0 %v1197
        %v1199 = vpop.xlane.xlu0 %1198
        %v1200 = vsel %vm1193, %v1142, -inf
        %1201 = vmax.xlane.f32.xlu0 %v1200
        %v1202 = vpop.xlane.xlu0 %1201
        %v1203 = vsel %vm1193, %v1188, -inf
        %1204 = vmax.xlane.f32.xlu0 %v1203
        %v1205 = vpop.xlane.xlu0 %1204
        %v1206 = vsub.f32 %v1050, %v1196
        %v1207 = vsub.f32 %v1096, %v1199
        %v1208 = vsub.f32 %v1142, %v1202
        %v1209 = vsub.f32 %v1188, %v1205
        %v1210 = vmul.f32 %v1206, 1.442695
        %v1211 = vpow.pop %v1210
        %v1212 = vmul.f32 %v1207, 1.442695
        %v1213 = vpow.pop %v1212
        %v1214 = vmul.f32 %v1208, 1.442695
        %v1215 = vpow.pop %v1214
        %v1216 = vmul.f32 %v1209, 1.442695
        %v1217 = vpow.pop %v1216
        %v1218 = vsel %vm1193, %v1211, 0.0
        %1219 = vadd.xlane.f32.xlu0 %v1218
        %v1220 = vpop.xlane.xlu0 %1219
        %v1221 = vsel %vm1193, %v1213, 0.0
        %1222 = vadd.xlane.f32.xlu0 %v1221
        %v1223 = vpop.xlane.xlu0 %1222
        %v1224 = vsel %vm1193, %v1215, 0.0
        %1225 = vadd.xlane.f32.xlu0 %v1224
        %v1226 = vpop.xlane.xlu0 %1225
        %v1227 = vsel %vm1193, %v1217, 0.0
        %1228 = vadd.xlane.f32.xlu0 %v1227
        %v1229 = vpop.xlane.xlu0 %1228
        %v1230 = vrcp.pop %v1220
        %v1231 = vrcp.pop %v1223
        %v1232 = vrcp.pop %v1226
        %v1233 = vrcp.pop %v1229
        %v1234 = vmul.f32 %v1211, %v1230
        %v1235 = vmul.f32 %v1213, %v1231
        %v1236 = vmul.f32 %v1215, %v1232
        %v1237 = vmul.f32 %v1217, %v1233
        %v1238 = vpack.c.bf16 %v1234, %v1234
        %v1239 = vpack.c.bf16 %v1235, %v1235
        %v1240 = vpack.c.bf16 %v1236, %v1236
        %v1241 = vpack.c.bf16 %v1237, %v1237
        %v1243 = vsel %vm1193, %v1238, 0
        %vm1245 = vcmask 1043456
        %v1247 = vsel %vm1245, %v1004, 0
        %1249 = vmatprep.subr.bf16.mxu0 0
        %1250 = vmatpush1.bf16.msra.mxu0 %v1247
        %1251 = vmatprep.subr.bf16.mxu0 0
        %1252 = vmatpush1.bf16.msra.mxu0 0
        %1253 = vmatprep.subr.bf16.mxu0 0
        %1254 = vmatpush1.bf16.msra.mxu0 0
        %1255 = vmatprep.subr.bf16.mxu0 0
        %1256 = vmatpush1.bf16.msra.mxu0 0
        %1257 = vmatprep.subr.bf16.mxu0 0
        %1258 = vmatpush1.bf16.msra.mxu0 0
        %1259 = vmatprep.subr.bf16.mxu0 0
        %1260 = vmatpush1.bf16.msra.mxu0 0
        %1261 = vmatprep.subr.bf16.mxu0 0
        %1262 = vmatpush1.bf16.msra.mxu0 0
        %1263 = vmatprep.subr.bf16.mxu0 0
        %1264 = vmatpush1.bf16.msra.mxu0 0
        %1265 = vmatprep.subr.bf16.mxu0 0
        %1266 = vmatpush1.bf16.msra.mxu0 0
        %1267 = vmatprep.subr.bf16.mxu0 0
        %1268 = vmatpush1.bf16.msra.mxu0 0
        %1269 = vmatprep.subr.bf16.mxu0 0
        %1270 = vmatpush1.bf16.msra.mxu0 0
        %1271 = vmatprep.subr.bf16.mxu0 0
        %1272 = vmatpush1.bf16.msra.mxu0 0
        %1273 = vmatprep.subr.bf16.mxu0 0
        %1274 = vmatpush1.bf16.msra.mxu0 0
        %1275 = vmatprep.subr.bf16.mxu0 0
        %1276 = vmatpush1.bf16.msra.mxu0 0
        %1277 = vmatprep.subr.bf16.mxu0 0
        %1278 = vmatpush1.bf16.msra.mxu0 0
        %1279 = vmatprep.subr.bf16.mxu0 0
        %1280 = vmatpush1.bf16.msra.mxu0 0
        %1281 = vmatprep.mubr.bf16.mxu0 0
        %1282 = vmatmul.mubr.bf16.gmra.mrb[0].mxu0 %v1243
        %v1283 = vpop.f32.mrb[0].mxu0
        %v1284 = vadd.f32 0.0, %v1283
        %v1285 = vpop.f32.mrb[0].mxu0
        %v1286 = vpop.f32.mrb[0].mxu0
        %v1287 = vpop.f32.mrb[0].mxu0
        %1288 = vdwg.mxu0
        %v1290 = vsel %vm1193, %v1239, 0
        %v1293 = vsel %vm1245, %v1005, 0
        %1295 = vmatprep.subr.bf16.mxu0 0
        %1296 = vmatpush1.bf16.msra.mxu0 %v1293
        %1297 = vmatprep.subr.bf16.mxu0 0
        %1298 = vmatpush1.bf16.msra.mxu0 0
        %1299 = vmatprep.subr.bf16.mxu0 0
        %1300 = vmatpush1.bf16.msra.mxu0 0
        %1301 = vmatprep.subr.bf16.mxu0 0
        %1302 = vmatpush1.bf16.msra.mxu0 0
        %1303 = vmatprep.subr.bf16.mxu0 0
        %1304 = vmatpush1.bf16.msra.mxu0 0
        %1305 = vmatprep.subr.bf16.mxu0 0
        %1306 = vmatpush1.bf16.msra.mxu0 0
        %1307 = vmatprep.subr.bf16.mxu0 0
        %1308 = vmatpush1.bf16.msra.mxu0 0
        %1309 = vmatprep.subr.bf16.mxu0 0
        %1310 = vmatpush1.bf16.msra.mxu0 0
        %1311 = vmatprep.subr.bf16.mxu0 0
        %1312 = vmatpush1.bf16.msra.mxu0 0
        %1313 = vmatprep.subr.bf16.mxu0 0
        %1314 = vmatpush1.bf16.msra.mxu0 0
        %1315 = vmatprep.subr.bf16.mxu0 0
        %1316 = vmatpush1.bf16.msra.mxu0 0
        %1317 = vmatprep.subr.bf16.mxu0 0
        %1318 = vmatpush1.bf16.msra.mxu0 0
        %1319 = vmatprep.subr.bf16.mxu0 0
        %1320 = vmatpush1.bf16.msra.mxu0 0
        %1321 = vmatprep.subr.bf16.mxu0 0
        %1322 = vmatpush1.bf16.msra.mxu0 0
        %1323 = vmatprep.subr.bf16.mxu0 0
        %1324 = vmatpush1.bf16.msra.mxu0 0
        %1325 = vmatprep.subr.bf16.mxu0 0
        %1326 = vmatpush1.bf16.msra.mxu0 0
        %1327 = vmatprep.mubr.bf16.mxu0 0
        %1328 = vmatmul.mubr.bf16.gmra.mrb[0].mxu0 %v1290
        %v1329 = vpop.f32.mrb[0].mxu0
        %v1330 = vadd.f32 0.0, %v1329
        %v1331 = vpop.f32.mrb[0].mxu0
        %v1332 = vpop.f32.mrb[0].mxu0
        %v1333 = vpop.f32.mrb[0].mxu0
        %1334 = vdwg.mxu0
        %v1336 = vsel %vm1193, %v1240, 0
        %v1339 = vsel %vm1245, %v1006, 0
        %1341 = vmatprep.subr.bf16.mxu0 0
        %1342 = vmatpush1.bf16.msra.mxu0 %v1339
        %1343 = vmatprep.subr.bf16.mxu0 0
        %1344 = vmatpush1.bf16.msra.mxu0 0
        %1345 = vmatprep.subr.bf16.mxu0 0
        %1346 = vmatpush1.bf16.msra.mxu0 0
        %1347 = vmatprep.subr.bf16.mxu0 0
        %1348 = vmatpush1.bf16.msra.mxu0 0
        %1349 = vmatprep.subr.bf16.mxu0 0
        %1350 = vmatpush1.bf16.msra.mxu0 0
        %1351 = vmatprep.subr.bf16.mxu0 0
        %1352 = vmatpush1.bf16.msra.mxu0 0
        %1353 = vmatprep.subr.bf16.mxu0 0
        %1354 = vmatpush1.bf16.msra.mxu0 0
        %1355 = vmatprep.subr.bf16.mxu0 0
        %1356 = vmatpush1.bf16.msra.mxu0 0
        %1357 = vmatprep.subr.bf16.mxu0 0
        %1358 = vmatpush1.bf16.msra.mxu0 0
        %1359 = vmatprep.subr.bf16.mxu0 0
        %1360 = vmatpush1.bf16.msra.mxu0 0
        %1361 = vmatprep.subr.bf16.mxu0 0
        %1362 = vmatpush1.bf16.msra.mxu0 0
        %1363 = vmatprep.subr.bf16.mxu0 0
        %1364 = vmatpush1.bf16.msra.mxu0 0
        %1365 = vmatprep.subr.bf16.mxu0 0
        %1366 = vmatpush1.bf16.msra.mxu0 0
        %1367 = vmatprep.subr.bf16.mxu0 0
        %1368 = vmatpush1.bf16.msra.mxu0 0
        %1369 = vmatprep.subr.bf16.mxu0 0
        %1370 = vmatpush1.bf16.msra.mxu0 0
        %1371 = vmatprep.subr.bf16.mxu0 0
        %1372 = vmatpush1.bf16.msra.mxu0 0
        %1373 = vmatprep.mubr.bf16.mxu0 0
        %1374 = vmatmul.mubr.bf16.gmra.mrb[0].mxu0 %v1336
        %v1375 = vpop.f32.mrb[0].mxu0
        %v1376 = vadd.f32 0.0, %v1375
        %v1377 = vpop.f32.mrb[0].mxu0
        %v1378 = vpop.f32.mrb[0].mxu0
        %v1379 = vpop.f32.mrb[0].mxu0
        %1380 = vdwg.mxu0
        %v1382 = vsel %vm1193, %v1241, 0
        %v1385 = vsel %vm1245, %v1007, 0
        %1387 = vmatprep.subr.bf16.mxu0 0
        %1388 = vmatpush1.bf16.msra.mxu0 %v1385
        %1389 = vmatprep.subr.bf16.mxu0 0
        %1390 = vmatpush1.bf16.msra.mxu0 0
        %1391 = vmatprep.subr.bf16.mxu0 0
        %1392 = vmatpush1.bf16.msra.mxu0 0
        %1393 = vmatprep.subr.bf16.mxu0 0
        %1394 = vmatpush1.bf16.msra.mxu0 0
        %1395 = vmatprep.subr.bf16.mxu0 0
        %1396 = vmatpush1.bf16.msra.mxu0 0
        %1397 = vmatprep.subr.bf16.mxu0 0
        %1398 = vmatpush1.bf16.msra.mxu0 0
        %1399 = vmatprep.subr.bf16.mxu0 0
        %1400 = vmatpush1.bf16.msra.mxu0 0
        %1401 = vmatprep.subr.bf16.mxu0 0
        %1402 = vmatpush1.bf16.msra.mxu0 0
        %1403 = vmatprep.subr.bf16.mxu0 0
        %1404 = vmatpush1.bf16.msra.mxu0 0
        %1405 = vmatprep.subr.bf16.mxu0 0
        %1406 = vmatpush1.bf16.msra.mxu0 0
        %1407 = vmatprep.subr.bf16.mxu0 0
        %1408 = vmatpush1.bf16.msra.mxu0 0
        %1409 = vmatprep.subr.bf16.mxu0 0
        %1410 = vmatpush1.bf16.msra.mxu0 0
        %1411 = vmatprep.subr.bf16.mxu0 0
        %1412 = vmatpush1.bf16.msra.mxu0 0
        %1413 = vmatprep.subr.bf16.mxu0 0
        %1414 = vmatpush1.bf16.msra.mxu0 0
        %1415 = vmatprep.subr.bf16.mxu0 0
        %1416 = vmatpush1.bf16.msra.mxu0 0
        %1417 = vmatprep.subr.bf16.mxu0 0
        %1418 = vmatpush1.bf16.msra.mxu0 0
        %1419 = vmatprep.mubr.bf16.mxu0 0
        %1420 = vmatmul.mubr.bf16.gmra.mrb[0].mxu0 %v1382
        %v1421 = vpop.f32.mrb[0].mxu0
        %v1422 = vadd.f32 0.0, %v1421
        %v1423 = vpop.f32.mrb[0].mxu0
        %v1424 = vpop.f32.mrb[0].mxu0
        %v1425 = vpop.f32.mrb[0].mxu0
        %1426 = vdwg.mxu0
        %1427 = vrot.lane.b32.xlu0 %v984, 96
        %v1428 = vpop.permute.xlu0 %1427
        %1429 = vrot.lane.b32.xlu0 %v994, 96
        %v1430 = vpop.permute.xlu0 %1429
        %v1432 = vsel %vm1008, %v1428, 0
        %v1435 = vsel %vm1008, %v1430, 0
        %1437 = vmatprep.subr.bf16.mxu0 0
        %1438 = vmatpush1.bf16.xpose.msra.mxu0 %v1435
        %1439 = vmatprep.subr.bf16.mxu0 0
        %1440 = vmatpush1.bf16.xpose.msra.mxu0 0
        %1441 = vmatprep.subr.bf16.mxu0 0
        %1442 = vmatpush1.bf16.xpose.msra.mxu0 0
        %1443 = vmatprep.subr.bf16.mxu0 0
        %1444 = vmatpush1.bf16.xpose.msra.mxu0 0
        %1445 = vmatprep.subr.bf16.mxu0 0
        %1446 = vmatpush1.bf16.xpose.msra.mxu0 0
        %1447 = vmatprep.subr.bf16.mxu0 0
        %1448 = vmatpush1.bf16.xpose.msra.mxu0 0
        %1449 = vmatprep.subr.bf16.mxu0 0
        %1450 = vmatpush1.bf16.xpose.msra.mxu0 0
        %1451 = vmatprep.subr.bf16.mxu0 0
        %1452 = vmatpush1.bf16.xpose.msra.mxu0 0
        %1453 = vmatprep.subr.bf16.mxu0 0
        %1454 = vmatpush1.bf16.xpose.msra.mxu0 0
        %1455 = vmatprep.subr.bf16.mxu0 0
        %1456 = vmatpush1.bf16.xpose.msra.mxu0 0
        %1457 = vmatprep.subr.bf16.mxu0 0
        %1458 = vmatpush1.bf16.xpose.msra.mxu0 0
        %1459 = vmatprep.subr.bf16.mxu0 0
        %1460 = vmatpush1.bf16.xpose.msra.mxu0 0
        %1461 = vmatprep.subr.bf16.mxu0 0
        %1462 = vmatpush1.bf16.xpose.msra.mxu0 0
        %1463 = vmatprep.subr.bf16.mxu0 0
        %1464 = vmatpush1.bf16.xpose.msra.mxu0 0
        %1465 = vmatprep.subr.bf16.mxu0 0
        %1466 = vmatpush1.bf16.xpose.msra.mxu0 0
        %1467 = vmatprep.subr.bf16.mxu0 0
        %1468 = vmatpush1.bf16.xpose.msra.mxu0 0
        %1469 = vmatprep.mubr.bf16.mxu0 0
        %1470 = vmatmul.mubr.bf16.gmra.mrb[0].mxu0 %v1432
        %v1471 = vpop.f32.mrb[0].mxu0
        %v1472 = vadd.f32 0.0, %v1471
        %v1473 = vpop.f32.mrb[0].mxu0
        %v1474 = vpop.f32.mrb[0].mxu0
        %v1475 = vpop.f32.mrb[0].mxu0
        %1476 = vdwg.mxu0
        %1477 = vrot.lane.b32.xlu0 %v985, 96
        %v1478 = vpop.permute.xlu0 %1477
        %1479 = vrot.lane.b32.xlu0 %v995, 96
        %v1480 = vpop.permute.xlu0 %1479
        %v1482 = vsel %vm1008, %v1478, 0
        %v1485 = vsel %vm1008, %v1480, 0
        %1487 = vmatprep.subr.bf16.mxu0 0
        %1488 = vmatpush1.bf16.xpose.msra.mxu0 %v1485
        %1489 = vmatprep.subr.bf16.mxu0 0
        %1490 = vmatpush1.bf16.xpose.msra.mxu0 0
        %1491 = vmatprep.subr.bf16.mxu0 0
        %1492 = vmatpush1.bf16.xpose.msra.mxu0 0
        %1493 = vmatprep.subr.bf16.mxu0 0
        %1494 = vmatpush1.bf16.xpose.msra.mxu0 0
        %1495 = vmatprep.subr.bf16.mxu0 0
        %1496 = vmatpush1.bf16.xpose.msra.mxu0 0
        %1497 = vmatprep.subr.bf16.mxu0 0
        %1498 = vmatpush1.bf16.xpose.msra.mxu0 0
        %1499 = vmatprep.subr.bf16.mxu0 0
        %1500 = vmatpush1.bf16.xpose.msra.mxu0 0
        %1501 = vmatprep.subr.bf16.mxu0 0
        %1502 = vmatpush1.bf16.xpose.msra.mxu0 0
        %1503 = vmatprep.subr.bf16.mxu0 0
        %1504 = vmatpush1.bf16.xpose.msra.mxu0 0
        %1505 = vmatprep.subr.bf16.mxu0 0
        %1506 = vmatpush1.bf16.xpose.msra.mxu0 0
        %1507 = vmatprep.subr.bf16.mxu0 0
        %1508 = vmatpush1.bf16.xpose.msra.mxu0 0
        %1509 = vmatprep.subr.bf16.mxu0 0
        %1510 = vmatpush1.bf16.xpose.msra.mxu0 0
        %1511 = vmatprep.subr.bf16.mxu0 0
        %1512 = vmatpush1.bf16.xpose.msra.mxu0 0
        %1513 = vmatprep.subr.bf16.mxu0 0
        %1514 = vmatpush1.bf16.xpose.msra.mxu0 0
        %1515 = vmatprep.subr.bf16.mxu0 0
        %1516 = vmatpush1.bf16.xpose.msra.mxu0 0
        %1517 = vmatprep.subr.bf16.mxu0 0
        %1518 = vmatpush1.bf16.xpose.msra.mxu0 0
        %1519 = vmatprep.mubr.bf16.mxu0 0
        %1520 = vmatmul.mubr.bf16.gmra.mrb[0].mxu0 %v1482
        %v1521 = vpop.f32.mrb[0].mxu0
        %v1522 = vadd.f32 0.0, %v1521
        %v1523 = vpop.f32.mrb[0].mxu0
        %v1524 = vpop.f32.mrb[0].mxu0
        %v1525 = vpop.f32.mrb[0].mxu0
        %1526 = vdwg.mxu0
        %1527 = vrot.lane.b32.xlu0 %v986, 96
        %v1528 = vpop.permute.xlu0 %1527
        %1529 = vrot.lane.b32.xlu0 %v996, 96
        %v1530 = vpop.permute.xlu0 %1529
        %v1532 = vsel %vm1008, %v1528, 0
        %v1535 = vsel %vm1008, %v1530, 0
        %1537 = vmatprep.subr.bf16.mxu0 0
        %1538 = vmatpush1.bf16.xpose.msra.mxu0 %v1535
        %1539 = vmatprep.subr.bf16.mxu0 0
        %1540 = vmatpush1.bf16.xpose.msra.mxu0 0
        %1541 = vmatprep.subr.bf16.mxu0 0
        %1542 = vmatpush1.bf16.xpose.msra.mxu0 0
        %1543 = vmatprep.subr.bf16.mxu0 0
        %1544 = vmatpush1.bf16.xpose.msra.mxu0 0
        %1545 = vmatprep.subr.bf16.mxu0 0
        %1546 = vmatpush1.bf16.xpose.msra.mxu0 0
        %1547 = vmatprep.subr.bf16.mxu0 0
        %1548 = vmatpush1.bf16.xpose.msra.mxu0 0
        %1549 = vmatprep.subr.bf16.mxu0 0
        %1550 = vmatpush1.bf16.xpose.msra.mxu0 0
        %1551 = vmatprep.subr.bf16.mxu0 0
        %1552 = vmatpush1.bf16.xpose.msra.mxu0 0
        %1553 = vmatprep.subr.bf16.mxu0 0
        %1554 = vmatpush1.bf16.xpose.msra.mxu0 0
        %1555 = vmatprep.subr.bf16.mxu0 0
        %1556 = vmatpush1.bf16.xpose.msra.mxu0 0
        %1557 = vmatprep.subr.bf16.mxu0 0
        %1558 = vmatpush1.bf16.xpose.msra.mxu0 0
        %1559 = vmatprep.subr.bf16.mxu0 0
        %1560 = vmatpush1.bf16.xpose.msra.mxu0 0
        %1561 = vmatprep.subr.bf16.mxu0 0
        %1562 = vmatpush1.bf16.xpose.msra.mxu0 0
        %1563 = vmatprep.subr.bf16.mxu0 0
        %1564 = vmatpush1.bf16.xpose.msra.mxu0 0
        %1565 = vmatprep.subr.bf16.mxu0 0
        %1566 = vmatpush1.bf16.xpose.msra.mxu0 0
        %1567 = vmatprep.subr.bf16.mxu0 0
        %1568 = vmatpush1.bf16.xpose.msra.mxu0 0
        %1569 = vmatprep.mubr.bf16.mxu0 0
        %1570 = vmatmul.mubr.bf16.gmra.mrb[0].mxu0 %v1532
        %v1571 = vpop.f32.mrb[0].mxu0
        %v1572 = vadd.f32 0.0, %v1571
        %v1573 = vpop.f32.mrb[0].mxu0
        %v1574 = vpop.f32.mrb[0].mxu0
        %v1575 = vpop.f32.mrb[0].mxu0
        %1576 = vdwg.mxu0
        %1577 = vrot.lane.b32.xlu0 %v987, 96
        %v1578 = vpop.permute.xlu0 %1577
        %1579 = vrot.lane.b32.xlu0 %v997, 96
        %v1580 = vpop.permute.xlu0 %1579
        %v1582 = vsel %vm1008, %v1578, 0
        %v1585 = vsel %vm1008, %v1580, 0
        %1587 = vmatprep.subr.bf16.mxu0 0
        %1588 = vmatpush1.bf16.xpose.msra.mxu0 %v1585
        %1589 = vmatprep.subr.bf16.mxu0 0
        %1590 = vmatpush1.bf16.xpose.msra.mxu0 0
        %1591 = vmatprep.subr.bf16.mxu0 0
        %1592 = vmatpush1.bf16.xpose.msra.mxu0 0
        %1593 = vmatprep.subr.bf16.mxu0 0
        %1594 = vmatpush1.bf16.xpose.msra.mxu0 0
        %1595 = vmatprep.subr.bf16.mxu0 0
        %1596 = vmatpush1.bf16.xpose.msra.mxu0 0
        %1597 = vmatprep.subr.bf16.mxu0 0
        %1598 = vmatpush1.bf16.xpose.msra.mxu0 0
        %1599 = vmatprep.subr.bf16.mxu0 0
        %1600 = vmatpush1.bf16.xpose.msra.mxu0 0
        %1601 = vmatprep.subr.bf16.mxu0 0
        %1602 = vmatpush1.bf16.xpose.msra.mxu0 0
        %1603 = vmatprep.subr.bf16.mxu0 0
        %1604 = vmatpush1.bf16.xpose.msra.mxu0 0
        %1605 = vmatprep.subr.bf16.mxu0 0
        %1606 = vmatpush1.bf16.xpose.msra.mxu0 0
        %1607 = vmatprep.subr.bf16.mxu0 0
        %1608 = vmatpush1.bf16.xpose.msra.mxu0 0
        %1609 = vmatprep.subr.bf16.mxu0 0
        %1610 = vmatpush1.bf16.xpose.msra.mxu0 0
        %1611 = vmatprep.subr.bf16.mxu0 0
        %1612 = vmatpush1.bf16.xpose.msra.mxu0 0
        %1613 = vmatprep.subr.bf16.mxu0 0
        %1614 = vmatpush1.bf16.xpose.msra.mxu0 0
        %1615 = vmatprep.subr.bf16.mxu0 0
        %1616 = vmatpush1.bf16.xpose.msra.mxu0 0
        %1617 = vmatprep.subr.bf16.mxu0 0
        %1618 = vmatpush1.bf16.xpose.msra.mxu0 0
        %1619 = vmatprep.mubr.bf16.mxu0 0
        %1620 = vmatmul.mubr.bf16.gmra.mrb[0].mxu0 %v1582
        %v1621 = vpop.f32.mrb[0].mxu0
        %v1622 = vadd.f32 0.0, %v1621
        %v1623 = vpop.f32.mrb[0].mxu0
        %v1624 = vpop.f32.mrb[0].mxu0
        %v1625 = vpop.f32.mrb[0].mxu0
        %1626 = vdwg.mxu0
        %v1627 = vsel %vm1193, %v1472, -inf
        %1628 = vmax.xlane.f32.xlu0 %v1627
        %v1629 = vpop.xlane.xlu0 %1628
        %v1630 = vsel %vm1193, %v1522, -inf
        %1631 = vmax.xlane.f32.xlu0 %v1630
        %v1632 = vpop.xlane.xlu0 %1631
        %v1633 = vsel %vm1193, %v1572, -inf
        %1634 = vmax.xlane.f32.xlu0 %v1633
        %v1635 = vpop.xlane.xlu0 %1634
        %v1636 = vsel %vm1193, %v1622, -inf
        %1637 = vmax.xlane.f32.xlu0 %v1636
        %v1638 = vpop.xlane.xlu0 %1637
        %v1639 = vsub.f32 %v1472, %v1629
        %v1640 = vsub.f32 %v1522, %v1632
        %v1641 = vsub.f32 %v1572, %v1635
        %v1642 = vsub.f32 %v1622, %v1638
        %v1643 = vmul.f32 %v1639, 1.442695
        %v1644 = vpow.pop %v1643
        %v1645 = vmul.f32 %v1640, 1.442695
        %v1646 = vpow.pop %v1645
        %v1647 = vmul.f32 %v1641, 1.442695
        %v1648 = vpow.pop %v1647
        %v1649 = vmul.f32 %v1642, 1.442695
        %v1650 = vpow.pop %v1649
        %v1651 = vsel %vm1193, %v1644, 0.0
        %1652 = vadd.xlane.f32.xlu0 %v1651
        %v1653 = vpop.xlane.xlu0 %1652
        %v1654 = vsel %vm1193, %v1646, 0.0
        %1655 = vadd.xlane.f32.xlu0 %v1654
        %v1656 = vpop.xlane.xlu0 %1655
        %v1657 = vsel %vm1193, %v1648, 0.0
        %1658 = vadd.xlane.f32.xlu0 %v1657
        %v1659 = vpop.xlane.xlu0 %1658
        %v1660 = vsel %vm1193, %v1650, 0.0
        %1661 = vadd.xlane.f32.xlu0 %v1660
        %v1662 = vpop.xlane.xlu0 %1661
        %v1663 = vrcp.pop %v1653
        %v1664 = vrcp.pop %v1656
        %v1665 = vrcp.pop %v1659
        %v1666 = vrcp.pop %v1662
        %v1667 = vmul.f32 %v1644, %v1663
        %v1668 = vmul.f32 %v1646, %v1664
        %v1669 = vmul.f32 %v1648, %v1665
        %v1670 = vmul.f32 %v1650, %v1666
        %v1671 = vpack.c.bf16 %v1667, %v1667
        %v1672 = vpack.c.bf16 %v1668, %v1668
        %v1673 = vpack.c.bf16 %v1669, %v1669
        %v1674 = vpack.c.bf16 %v1670, %v1670
        %1675 = vrot.lane.b32.xlu0 %v1004, 96
        %v1676 = vpop.permute.xlu0 %1675
        %v1678 = vsel %vm1193, %v1671, 0
        %v1681 = vsel %vm1245, %v1676, 0
        %1683 = vmatprep.subr.bf16.mxu0 0
        %1684 = vmatpush1.bf16.msra.mxu0 %v1681
        %1685 = vmatprep.subr.bf16.mxu0 0
        %1686 = vmatpush1.bf16.msra.mxu0 0
        %1687 = vmatprep.subr.bf16.mxu0 0
        %1688 = vmatpush1.bf16.msra.mxu0 0
        %1689 = vmatprep.subr.bf16.mxu0 0
        %1690 = vmatpush1.bf16.msra.mxu0 0
        %1691 = vmatprep.subr.bf16.mxu0 0
        %1692 = vmatpush1.bf16.msra.mxu0 0
        %1693 = vmatprep.subr.bf16.mxu0 0
        %1694 = vmatpush1.bf16.msra.mxu0 0
        %1695 = vmatprep.subr.bf16.mxu0 0
        %1696 = vmatpush1.bf16.msra.mxu0 0
        %1697 = vmatprep.subr.bf16.mxu0 0
        %1698 = vmatpush1.bf16.msra.mxu0 0
        %1699 = vmatprep.subr.bf16.mxu0 0
        %1700 = vmatpush1.bf16.msra.mxu0 0
        %1701 = vmatprep.subr.bf16.mxu0 0
        %1702 = vmatpush1.bf16.msra.mxu0 0
        %1703 = vmatprep.subr.bf16.mxu0 0
        %1704 = vmatpush1.bf16.msra.mxu0 0
        %1705 = vmatprep.subr.bf16.mxu0 0
        %1706 = vmatpush1.bf16.msra.mxu0 0
        %1707 = vmatprep.subr.bf16.mxu0 0
        %1708 = vmatpush1.bf16.msra.mxu0 0
        %1709 = vmatprep.subr.bf16.mxu0 0
        %1710 = vmatpush1.bf16.msra.mxu0 0
        %1711 = vmatprep.subr.bf16.mxu0 0
        %1712 = vmatpush1.bf16.msra.mxu0 0
        %1713 = vmatprep.subr.bf16.mxu0 0
        %1714 = vmatpush1.bf16.msra.mxu0 0
        %1715 = vmatprep.mubr.bf16.mxu0 0
        %1716 = vmatmul.mubr.bf16.gmra.mrb[0].mxu0 %v1678
        %v1717 = vpop.f32.mrb[0].mxu0
        %v1718 = vadd.f32 0.0, %v1717
        %v1719 = vpop.f32.mrb[0].mxu0
        %v1720 = vpop.f32.mrb[0].mxu0
        %v1721 = vpop.f32.mrb[0].mxu0
        %1722 = vdwg.mxu0
        %1723 = vrot.lane.b32.xlu0 %v1005, 96
        %v1724 = vpop.permute.xlu0 %1723
        %v1726 = vsel %vm1193, %v1672, 0
        %v1729 = vsel %vm1245, %v1724, 0
        %1731 = vmatprep.subr.bf16.mxu0 0
        %1732 = vmatpush1.bf16.msra.mxu0 %v1729
        %1733 = vmatprep.subr.bf16.mxu0 0
        %1734 = vmatpush1.bf16.msra.mxu0 0
        %1735 = vmatprep.subr.bf16.mxu0 0
        %1736 = vmatpush1.bf16.msra.mxu0 0
        %1737 = vmatprep.subr.bf16.mxu0 0
        %1738 = vmatpush1.bf16.msra.mxu0 0
        %1739 = vmatprep.subr.bf16.mxu0 0
        %1740 = vmatpush1.bf16.msra.mxu0 0
        %1741 = vmatprep.subr.bf16.mxu0 0
        %1742 = vmatpush1.bf16.msra.mxu0 0
        %1743 = vmatprep.subr.bf16.mxu0 0
        %1744 = vmatpush1.bf16.msra.mxu0 0
        %1745 = vmatprep.subr.bf16.mxu0 0
        %1746 = vmatpush1.bf16.msra.mxu0 0
        %1747 = vmatprep.subr.bf16.mxu0 0
        %1748 = vmatpush1.bf16.msra.mxu0 0
        %1749 = vmatprep.subr.bf16.mxu0 0
        %1750 = vmatpush1.bf16.msra.mxu0 0
        %1751 = vmatprep.subr.bf16.mxu0 0
        %1752 = vmatpush1.bf16.msra.mxu0 0
        %1753 = vmatprep.subr.bf16.mxu0 0
        %1754 = vmatpush1.bf16.msra.mxu0 0
        %1755 = vmatprep.subr.bf16.mxu0 0
        %1756 = vmatpush1.bf16.msra.mxu0 0
        %1757 = vmatprep.subr.bf16.mxu0 0
        %1758 = vmatpush1.bf16.msra.mxu0 0
        %1759 = vmatprep.subr.bf16.mxu0 0
        %1760 = vmatpush1.bf16.msra.mxu0 0
        %1761 = vmatprep.subr.bf16.mxu0 0
        %1762 = vmatpush1.bf16.msra.mxu0 0
        %1763 = vmatprep.mubr.bf16.mxu0 0
        %1764 = vmatmul.mubr.bf16.gmra.mrb[0].mxu0 %v1726
        %v1765 = vpop.f32.mrb[0].mxu0
        %v1766 = vadd.f32 0.0, %v1765
        %v1767 = vpop.f32.mrb[0].mxu0
        %v1768 = vpop.f32.mrb[0].mxu0
        %v1769 = vpop.f32.mrb[0].mxu0
        %1770 = vdwg.mxu0
        %1771 = vrot.lane.b32.xlu0 %v1006, 96
        %v1772 = vpop.permute.xlu0 %1771
        %v1774 = vsel %vm1193, %v1673, 0
        %v1777 = vsel %vm1245, %v1772, 0
        %1779 = vmatprep.subr.bf16.mxu0 0
        %1780 = vmatpush1.bf16.msra.mxu0 %v1777
        %1781 = vmatprep.subr.bf16.mxu0 0
        %1782 = vmatpush1.bf16.msra.mxu0 0
        %1783 = vmatprep.subr.bf16.mxu0 0
        %1784 = vmatpush1.bf16.msra.mxu0 0
        %1785 = vmatprep.subr.bf16.mxu0 0
        %1786 = vmatpush1.bf16.msra.mxu0 0
        %1787 = vmatprep.subr.bf16.mxu0 0
        %1788 = vmatpush1.bf16.msra.mxu0 0
        %1789 = vmatprep.subr.bf16.mxu0 0
        %1790 = vmatpush1.bf16.msra.mxu0 0
        %1791 = vmatprep.subr.bf16.mxu0 0
        %1792 = vmatpush1.bf16.msra.mxu0 0
        %1793 = vmatprep.subr.bf16.mxu0 0
        %1794 = vmatpush1.bf16.msra.mxu0 0
        %1795 = vmatprep.subr.bf16.mxu0 0
        %1796 = vmatpush1.bf16.msra.mxu0 0
        %1797 = vmatprep.subr.bf16.mxu0 0
        %1798 = vmatpush1.bf16.msra.mxu0 0
        %1799 = vmatprep.subr.bf16.mxu0 0
        %1800 = vmatpush1.bf16.msra.mxu0 0
        %1801 = vmatprep.subr.bf16.mxu0 0
        %1802 = vmatpush1.bf16.msra.mxu0 0
        %1803 = vmatprep.subr.bf16.mxu0 0
        %1804 = vmatpush1.bf16.msra.mxu0 0
        %1805 = vmatprep.subr.bf16.mxu0 0
        %1806 = vmatpush1.bf16.msra.mxu0 0
        %1807 = vmatprep.subr.bf16.mxu0 0
        %1808 = vmatpush1.bf16.msra.mxu0 0
        %1809 = vmatprep.subr.bf16.mxu0 0
        %1810 = vmatpush1.bf16.msra.mxu0 0
        %1811 = vmatprep.mubr.bf16.mxu0 0
        %1812 = vmatmul.mubr.bf16.gmra.mrb[0].mxu0 %v1774
        %v1813 = vpop.f32.mrb[0].mxu0
        %v1814 = vadd.f32 0.0, %v1813
        %v1815 = vpop.f32.mrb[0].mxu0
        %v1816 = vpop.f32.mrb[0].mxu0
        %v1817 = vpop.f32.mrb[0].mxu0
        %1818 = vdwg.mxu0
        %1819 = vrot.lane.b32.xlu0 %v1007, 96
        %v1820 = vpop.permute.xlu0 %1819
        %v1822 = vsel %vm1193, %v1674, 0
        %v1825 = vsel %vm1245, %v1820, 0
        %1827 = vmatprep.subr.bf16.mxu0 0
        %1828 = vmatpush1.bf16.msra.mxu0 %v1825
        %1829 = vmatprep.subr.bf16.mxu0 0
        %1830 = vmatpush1.bf16.msra.mxu0 0
        %1831 = vmatprep.subr.bf16.mxu0 0
        %1832 = vmatpush1.bf16.msra.mxu0 0
        %1833 = vmatprep.subr.bf16.mxu0 0
        %1834 = vmatpush1.bf16.msra.mxu0 0
        %1835 = vmatprep.subr.bf16.mxu0 0
        %1836 = vmatpush1.bf16.msra.mxu0 0
        %1837 = vmatprep.subr.bf16.mxu0 0
        %1838 = vmatpush1.bf16.msra.mxu0 0
        %1839 = vmatprep.subr.bf16.mxu0 0
        %1840 = vmatpush1.bf16.msra.mxu0 0
        %1841 = vmatprep.subr.bf16.mxu0 0
        %1842 = vmatpush1.bf16.msra.mxu0 0
        %1843 = vmatprep.subr.bf16.mxu0 0
        %1844 = vmatpush1.bf16.msra.mxu0 0
        %1845 = vmatprep.subr.bf16.mxu0 0
        %1846 = vmatpush1.bf16.msra.mxu0 0
        %1847 = vmatprep.subr.bf16.mxu0 0
        %1848 = vmatpush1.bf16.msra.mxu0 0
        %1849 = vmatprep.subr.bf16.mxu0 0
        %1850 = vmatpush1.bf16.msra.mxu0 0
        %1851 = vmatprep.subr.bf16.mxu0 0
        %1852 = vmatpush1.bf16.msra.mxu0 0
        %1853 = vmatprep.subr.bf16.mxu0 0
        %1854 = vmatpush1.bf16.msra.mxu0 0
        %1855 = vmatprep.subr.bf16.mxu0 0
        %1856 = vmatpush1.bf16.msra.mxu0 0
        %1857 = vmatprep.subr.bf16.mxu0 0
        %1858 = vmatpush1.bf16.msra.mxu0 0
        %1859 = vmatprep.mubr.bf16.mxu0 0
        %1860 = vmatmul.mubr.bf16.gmra.mrb[0].mxu0 %v1822
        %v1861 = vpop.f32.mrb[0].mxu0
        %v1862 = vadd.f32 0.0, %v1861
        %v1863 = vpop.f32.mrb[0].mxu0
        %v1864 = vpop.f32.mrb[0].mxu0
        %v1865 = vpop.f32.mrb[0].mxu0
        %1866 = vdwg.mxu0
        %1867 = vrot.lane.b32.xlu0 %v984, 64
        %v1868 = vpop.permute.xlu0 %1867
        %1869 = vrot.lane.b32.xlu0 %v994, 64
        %v1870 = vpop.permute.xlu0 %1869
        %v1872 = vsel %vm1008, %v1868, 0
        %v1875 = vsel %vm1008, %v1870, 0
        %1877 = vmatprep.subr.bf16.mxu0 0
        %1878 = vmatpush1.bf16.xpose.msra.mxu0 %v1875
        %1879 = vmatprep.subr.bf16.mxu0 0
        %1880 = vmatpush1.bf16.xpose.msra.mxu0 0
        %1881 = vmatprep.subr.bf16.mxu0 0
        %1882 = vmatpush1.bf16.xpose.msra.mxu0 0
        %1883 = vmatprep.subr.bf16.mxu0 0
        %1884 = vmatpush1.bf16.xpose.msra.mxu0 0
        %1885 = vmatprep.subr.bf16.mxu0 0
        %1886 = vmatpush1.bf16.xpose.msra.mxu0 0
        %1887 = vmatprep.subr.bf16.mxu0 0
        %1888 = vmatpush1.bf16.xpose.msra.mxu0 0
        %1889 = vmatprep.subr.bf16.mxu0 0
        %1890 = vmatpush1.bf16.xpose.msra.mxu0 0
        %1891 = vmatprep.subr.bf16.mxu0 0
        %1892 = vmatpush1.bf16.xpose.msra.mxu0 0
        %1893 = vmatprep.subr.bf16.mxu0 0
        %1894 = vmatpush1.bf16.xpose.msra.mxu0 0
        %1895 = vmatprep.subr.bf16.mxu0 0
        %1896 = vmatpush1.bf16.xpose.msra.mxu0 0
        %1897 = vmatprep.subr.bf16.mxu0 0
        %1898 = vmatpush1.bf16.xpose.msra.mxu0 0
        %1899 = vmatprep.subr.bf16.mxu0 0
        %1900 = vmatpush1.bf16.xpose.msra.mxu0 0
        %1901 = vmatprep.subr.bf16.mxu0 0
        %1902 = vmatpush1.bf16.xpose.msra.mxu0 0
        %1903 = vmatprep.subr.bf16.mxu0 0
        %1904 = vmatpush1.bf16.xpose.msra.mxu0 0
        %1905 = vmatprep.subr.bf16.mxu0 0
        %1906 = vmatpush1.bf16.xpose.msra.mxu0 0
        %1907 = vmatprep.subr.bf16.mxu0 0
        %1908 = vmatpush1.bf16.xpose.msra.mxu0 0
        %1909 = vmatprep.mubr.bf16.mxu0 0
        %1910 = vmatmul.mubr.bf16.gmra.mrb[0].mxu0 %v1872
        %v1911 = vpop.f32.mrb[0].mxu0
        %v1912 = vadd.f32 0.0, %v1911
        %v1913 = vpop.f32.mrb[0].mxu0
        %v1914 = vpop.f32.mrb[0].mxu0
        %v1915 = vpop.f32.mrb[0].mxu0
        %1916 = vdwg.mxu0
        %1917 = vrot.lane.b32.xlu0 %v985, 64
        %v1918 = vpop.permute.xlu0 %1917
        %1919 = vrot.lane.b32.xlu0 %v995, 64
        %v1920 = vpop.permute.xlu0 %1919
        %v1922 = vsel %vm1008, %v1918, 0
        %v1925 = vsel %vm1008, %v1920, 0
        %1927 = vmatprep.subr.bf16.mxu0 0
        %1928 = vmatpush1.bf16.xpose.msra.mxu0 %v1925
        %1929 = vmatprep.subr.bf16.mxu0 0
        %1930 = vmatpush1.bf16.xpose.msra.mxu0 0
        %1931 = vmatprep.subr.bf16.mxu0 0
        %1932 = vmatpush1.bf16.xpose.msra.mxu0 0
        %1933 = vmatprep.subr.bf16.mxu0 0
        %1934 = vmatpush1.bf16.xpose.msra.mxu0 0
        %1935 = vmatprep.subr.bf16.mxu0 0
        %1936 = vmatpush1.bf16.xpose.msra.mxu0 0
        %1937 = vmatprep.subr.bf16.mxu0 0
        %1938 = vmatpush1.bf16.xpose.msra.mxu0 0
        %1939 = vmatprep.subr.bf16.mxu0 0
        %1940 = vmatpush1.bf16.xpose.msra.mxu0 0
        %1941 = vmatprep.subr.bf16.mxu0 0
        %1942 = vmatpush1.bf16.xpose.msra.mxu0 0
        %1943 = vmatprep.subr.bf16.mxu0 0
        %1944 = vmatpush1.bf16.xpose.msra.mxu0 0
        %1945 = vmatprep.subr.bf16.mxu0 0
        %1946 = vmatpush1.bf16.xpose.msra.mxu0 0
        %1947 = vmatprep.subr.bf16.mxu0 0
        %1948 = vmatpush1.bf16.xpose.msra.mxu0 0
        %1949 = vmatprep.subr.bf16.mxu0 0
        %1950 = vmatpush1.bf16.xpose.msra.mxu0 0
        %1951 = vmatprep.subr.bf16.mxu0 0
        %1952 = vmatpush1.bf16.xpose.msra.mxu0 0
        %1953 = vmatprep.subr.bf16.mxu0 0
        %1954 = vmatpush1.bf16.xpose.msra.mxu0 0
        %1955 = vmatprep.subr.bf16.mxu0 0
        %1956 = vmatpush1.bf16.xpose.msra.mxu0 0
        %1957 = vmatprep.subr.bf16.mxu0 0
        %1958 = vmatpush1.bf16.xpose.msra.mxu0 0
        %1959 = vmatprep.mubr.bf16.mxu0 0
        %1960 = vmatmul.mubr.bf16.gmra.mrb[0].mxu0 %v1922
        %v1961 = vpop.f32.mrb[0].mxu0
        %v1962 = vadd.f32 0.0, %v1961
        %v1963 = vpop.f32.mrb[0].mxu0
        %v1964 = vpop.f32.mrb[0].mxu0
        %v1965 = vpop.f32.mrb[0].mxu0
        %1966 = vdwg.mxu0
        %1967 = vrot.lane.b32.xlu0 %v986, 64
        %v1968 = vpop.permute.xlu0 %1967
        %1969 = vrot.lane.b32.xlu0 %v996, 64
        %v1970 = vpop.permute.xlu0 %1969
        %v1972 = vsel %vm1008, %v1968, 0
        %v1975 = vsel %vm1008, %v1970, 0
        %1977 = vmatprep.subr.bf16.mxu0 0
        %1978 = vmatpush1.bf16.xpose.msra.mxu0 %v1975
        %1979 = vmatprep.subr.bf16.mxu0 0
        %1980 = vmatpush1.bf16.xpose.msra.mxu0 0
        %1981 = vmatprep.subr.bf16.mxu0 0
        %1982 = vmatpush1.bf16.xpose.msra.mxu0 0
        %1983 = vmatprep.subr.bf16.mxu0 0
        %1984 = vmatpush1.bf16.xpose.msra.mxu0 0
        %1985 = vmatprep.subr.bf16.mxu0 0
        %1986 = vmatpush1.bf16.xpose.msra.mxu0 0
        %1987 = vmatprep.subr.bf16.mxu0 0
        %1988 = vmatpush1.bf16.xpose.msra.mxu0 0
        %1989 = vmatprep.subr.bf16.mxu0 0
        %1990 = vmatpush1.bf16.xpose.msra.mxu0 0
        %1991 = vmatprep.subr.bf16.mxu0 0
        %1992 = vmatpush1.bf16.xpose.msra.mxu0 0
        %1993 = vmatprep.subr.bf16.mxu0 0
        %1994 = vmatpush1.bf16.xpose.msra.mxu0 0
        %1995 = vmatprep.subr.bf16.mxu0 0
        %1996 = vmatpush1.bf16.xpose.msra.mxu0 0
        %1997 = vmatprep.subr.bf16.mxu0 0
        %1998 = vmatpush1.bf16.xpose.msra.mxu0 0
        %1999 = vmatprep.subr.bf16.mxu0 0
        %2000 = vmatpush1.bf16.xpose.msra.mxu0 0
        %2001 = vmatprep.subr.bf16.mxu0 0
        %2002 = vmatpush1.bf16.xpose.msra.mxu0 0
        %2003 = vmatprep.subr.bf16.mxu0 0
        %2004 = vmatpush1.bf16.xpose.msra.mxu0 0
        %2005 = vmatprep.subr.bf16.mxu0 0
        %2006 = vmatpush1.bf16.xpose.msra.mxu0 0
        %2007 = vmatprep.subr.bf16.mxu0 0
        %2008 = vmatpush1.bf16.xpose.msra.mxu0 0
        %2009 = vmatprep.mubr.bf16.mxu0 0
        %2010 = vmatmul.mubr.bf16.gmra.mrb[0].mxu0 %v1972
        %v2011 = vpop.f32.mrb[0].mxu0
        %v2012 = vadd.f32 0.0, %v2011
        %v2013 = vpop.f32.mrb[0].mxu0
        %v2014 = vpop.f32.mrb[0].mxu0
        %v2015 = vpop.f32.mrb[0].mxu0
        %2016 = vdwg.mxu0
        %2017 = vrot.lane.b32.xlu0 %v987, 64
        %v2018 = vpop.permute.xlu0 %2017
        %2019 = vrot.lane.b32.xlu0 %v997, 64
        %v2020 = vpop.permute.xlu0 %2019
        %v2022 = vsel %vm1008, %v2018, 0
        %v2025 = vsel %vm1008, %v2020, 0
        %2027 = vmatprep.subr.bf16.mxu0 0
        %2028 = vmatpush1.bf16.xpose.msra.mxu0 %v2025
        %2029 = vmatprep.subr.bf16.mxu0 0
        %2030 = vmatpush1.bf16.xpose.msra.mxu0 0
        %2031 = vmatprep.subr.bf16.mxu0 0
        %2032 = vmatpush1.bf16.xpose.msra.mxu0 0
        %2033 = vmatprep.subr.bf16.mxu0 0
        %2034 = vmatpush1.bf16.xpose.msra.mxu0 0
        %2035 = vmatprep.subr.bf16.mxu0 0
        %2036 = vmatpush1.bf16.xpose.msra.mxu0 0
        %2037 = vmatprep.subr.bf16.mxu0 0
        %2038 = vmatpush1.bf16.xpose.msra.mxu0 0
        %2039 = vmatprep.subr.bf16.mxu0 0
        %2040 = vmatpush1.bf16.xpose.msra.mxu0 0
        %2041 = vmatprep.subr.bf16.mxu0 0
        %2042 = vmatpush1.bf16.xpose.msra.mxu0 0
        %2043 = vmatprep.subr.bf16.mxu0 0
        %2044 = vmatpush1.bf16.xpose.msra.mxu0 0
        %2045 = vmatprep.subr.bf16.mxu0 0
        %2046 = vmatpush1.bf16.xpose.msra.mxu0 0
        %2047 = vmatprep.subr.bf16.mxu0 0
        %2048 = vmatpush1.bf16.xpose.msra.mxu0 0
        %2049 = vmatprep.subr.bf16.mxu0 0
        %2050 = vmatpush1.bf16.xpose.msra.mxu0 0
        %2051 = vmatprep.subr.bf16.mxu0 0
        %2052 = vmatpush1.bf16.xpose.msra.mxu0 0
        %2053 = vmatprep.subr.bf16.mxu0 0
        %2054 = vmatpush1.bf16.xpose.msra.mxu0 0
        %2055 = vmatprep.subr.bf16.mxu0 0
        %2056 = vmatpush1.bf16.xpose.msra.mxu0 0
        %2057 = vmatprep.subr.bf16.mxu0 0
        %2058 = vmatpush1.bf16.xpose.msra.mxu0 0
        %2059 = vmatprep.mubr.bf16.mxu0 0
        %2060 = vmatmul.mubr.bf16.gmra.mrb[0].mxu0 %v2022
        %v2061 = vpop.f32.mrb[0].mxu0
        %v2062 = vadd.f32 0.0, %v2061
        %v2063 = vpop.f32.mrb[0].mxu0
        %v2064 = vpop.f32.mrb[0].mxu0
        %v2065 = vpop.f32.mrb[0].mxu0
        %2066 = vdwg.mxu0
        %v2067 = vsel %vm1193, %v1912, -inf
        %2068 = vmax.xlane.f32.xlu0 %v2067
        %v2069 = vpop.xlane.xlu0 %2068
        %v2070 = vsel %vm1193, %v1962, -inf
        %2071 = vmax.xlane.f32.xlu0 %v2070
        %v2072 = vpop.xlane.xlu0 %2071
        %v2073 = vsel %vm1193, %v2012, -inf
        %2074 = vmax.xlane.f32.xlu0 %v2073
        %v2075 = vpop.xlane.xlu0 %2074
        %v2076 = vsel %vm1193, %v2062, -inf
        %2077 = vmax.xlane.f32.xlu0 %v2076
        %v2078 = vpop.xlane.xlu0 %2077
        %v2079 = vsub.f32 %v1912, %v2069
        %v2080 = vsub.f32 %v1962, %v2072
        %v2081 = vsub.f32 %v2012, %v2075
        %v2082 = vsub.f32 %v2062, %v2078
        %v2083 = vmul.f32 %v2079, 1.442695
        %v2084 = vpow.pop %v2083
        %v2085 = vmul.f32 %v2080, 1.442695
        %v2086 = vpow.pop %v2085
        %v2087 = vmul.f32 %v2081, 1.442695
        %v2088 = vpow.pop %v2087
        %v2089 = vmul.f32 %v2082, 1.442695
        %v2090 = vpow.pop %v2089
        %v2091 = vsel %vm1193, %v2084, 0.0
        %2092 = vadd.xlane.f32.xlu0 %v2091
        %v2093 = vpop.xlane.xlu0 %2092
        %v2094 = vsel %vm1193, %v2086, 0.0
        %2095 = vadd.xlane.f32.xlu0 %v2094
        %v2096 = vpop.xlane.xlu0 %2095
        %v2097 = vsel %vm1193, %v2088, 0.0
        %2098 = vadd.xlane.f32.xlu0 %v2097
        %v2099 = vpop.xlane.xlu0 %2098
        %v2100 = vsel %vm1193, %v2090, 0.0
        %2101 = vadd.xlane.f32.xlu0 %v2100
        %v2102 = vpop.xlane.xlu0 %2101
        %v2103 = vrcp.pop %v2093
        %v2104 = vrcp.pop %v2096
        %v2105 = vrcp.pop %v2099
        %v2106 = vrcp.pop %v2102
        %v2107 = vmul.f32 %v2084, %v2103
        %v2108 = vmul.f32 %v2086, %v2104
        %v2109 = vmul.f32 %v2088, %v2105
        %v2110 = vmul.f32 %v2090, %v2106
        %v2111 = vpack.c.bf16 %v2107, %v2107
        %v2112 = vpack.c.bf16 %v2108, %v2108
        %v2113 = vpack.c.bf16 %v2109, %v2109
        %v2114 = vpack.c.bf16 %v2110, %v2110
        %2115 = vrot.lane.b32.xlu0 %v1004, 64
        %v2116 = vpop.permute.xlu0 %2115
        %v2118 = vsel %vm1193, %v2111, 0
        %v2121 = vsel %vm1245, %v2116, 0
        %2123 = vmatprep.subr.bf16.mxu0 0
        %2124 = vmatpush1.bf16.msra.mxu0 %v2121
        %2125 = vmatprep.subr.bf16.mxu0 0
        %2126 = vmatpush1.bf16.msra.mxu0 0
        %2127 = vmatprep.subr.bf16.mxu0 0
        %2128 = vmatpush1.bf16.msra.mxu0 0
        %2129 = vmatprep.subr.bf16.mxu0 0
        %2130 = vmatpush1.bf16.msra.mxu0 0
        %2131 = vmatprep.subr.bf16.mxu0 0
        %2132 = vmatpush1.bf16.msra.mxu0 0
        %2133 = vmatprep.subr.bf16.mxu0 0
        %2134 = vmatpush1.bf16.msra.mxu0 0
        %2135 = vmatprep.subr.bf16.mxu0 0
        %2136 = vmatpush1.bf16.msra.mxu0 0
        %2137 = vmatprep.subr.bf16.mxu0 0
        %2138 = vmatpush1.bf16.msra.mxu0 0
        %2139 = vmatprep.subr.bf16.mxu0 0
        %2140 = vmatpush1.bf16.msra.mxu0 0
        %2141 = vmatprep.subr.bf16.mxu0 0
        %2142 = vmatpush1.bf16.msra.mxu0 0
        %2143 = vmatprep.subr.bf16.mxu0 0
        %2144 = vmatpush1.bf16.msra.mxu0 0
        %2145 = vmatprep.subr.bf16.mxu0 0
        %2146 = vmatpush1.bf16.msra.mxu0 0
        %2147 = vmatprep.subr.bf16.mxu0 0
        %2148 = vmatpush1.bf16.msra.mxu0 0
        %2149 = vmatprep.subr.bf16.mxu0 0
        %2150 = vmatpush1.bf16.msra.mxu0 0
        %2151 = vmatprep.subr.bf16.mxu0 0
        %2152 = vmatpush1.bf16.msra.mxu0 0
        %2153 = vmatprep.subr.bf16.mxu0 0
        %2154 = vmatpush1.bf16.msra.mxu0 0
        %2155 = vmatprep.mubr.bf16.mxu0 0
        %2156 = vmatmul.mubr.bf16.gmra.mrb[0].mxu0 %v2118
        %v2157 = vpop.f32.mrb[0].mxu0
        %v2158 = vadd.f32 0.0, %v2157
        %v2159 = vpop.f32.mrb[0].mxu0
        %v2160 = vpop.f32.mrb[0].mxu0
        %v2161 = vpop.f32.mrb[0].mxu0
        %2162 = vdwg.mxu0
        %2163 = vrot.lane.b32.xlu0 %v1005, 64
        %v2164 = vpop.permute.xlu0 %2163
        %v2166 = vsel %vm1193, %v2112, 0
        %v2169 = vsel %vm1245, %v2164, 0
        %2171 = vmatprep.subr.bf16.mxu0 0
        %2172 = vmatpush1.bf16.msra.mxu0 %v2169
        %2173 = vmatprep.subr.bf16.mxu0 0
        %2174 = vmatpush1.bf16.msra.mxu0 0
        %2175 = vmatprep.subr.bf16.mxu0 0
        %2176 = vmatpush1.bf16.msra.mxu0 0
        %2177 = vmatprep.subr.bf16.mxu0 0
        %2178 = vmatpush1.bf16.msra.mxu0 0
        %2179 = vmatprep.subr.bf16.mxu0 0
        %2180 = vmatpush1.bf16.msra.mxu0 0
        %2181 = vmatprep.subr.bf16.mxu0 0
        %2182 = vmatpush1.bf16.msra.mxu0 0
        %2183 = vmatprep.subr.bf16.mxu0 0
        %2184 = vmatpush1.bf16.msra.mxu0 0
        %2185 = vmatprep.subr.bf16.mxu0 0
        %2186 = vmatpush1.bf16.msra.mxu0 0
        %2187 = vmatprep.subr.bf16.mxu0 0
        %2188 = vmatpush1.bf16.msra.mxu0 0
        %2189 = vmatprep.subr.bf16.mxu0 0
        %2190 = vmatpush1.bf16.msra.mxu0 0
        %2191 = vmatprep.subr.bf16.mxu0 0
        %2192 = vmatpush1.bf16.msra.mxu0 0
        %2193 = vmatprep.subr.bf16.mxu0 0
        %2194 = vmatpush1.bf16.msra.mxu0 0
        %2195 = vmatprep.subr.bf16.mxu0 0
        %2196 = vmatpush1.bf16.msra.mxu0 0
        %2197 = vmatprep.subr.bf16.mxu0 0
        %2198 = vmatpush1.bf16.msra.mxu0 0
        %2199 = vmatprep.subr.bf16.mxu0 0
        %2200 = vmatpush1.bf16.msra.mxu0 0
        %2201 = vmatprep.subr.bf16.mxu0 0
        %2202 = vmatpush1.bf16.msra.mxu0 0
        %2203 = vmatprep.mubr.bf16.mxu0 0
        %2204 = vmatmul.mubr.bf16.gmra.mrb[0].mxu0 %v2166
        %v2205 = vpop.f32.mrb[0].mxu0
        %v2206 = vadd.f32 0.0, %v2205
        %v2207 = vpop.f32.mrb[0].mxu0
        %v2208 = vpop.f32.mrb[0].mxu0
        %v2209 = vpop.f32.mrb[0].mxu0
        %2210 = vdwg.mxu0
        %2211 = vrot.lane.b32.xlu0 %v1006, 64
        %v2212 = vpop.permute.xlu0 %2211
        %v2214 = vsel %vm1193, %v2113, 0
        %v2217 = vsel %vm1245, %v2212, 0
        %2219 = vmatprep.subr.bf16.mxu0 0
        %2220 = vmatpush1.bf16.msra.mxu0 %v2217
        %2221 = vmatprep.subr.bf16.mxu0 0
        %2222 = vmatpush1.bf16.msra.mxu0 0
        %2223 = vmatprep.subr.bf16.mxu0 0
        %2224 = vmatpush1.bf16.msra.mxu0 0
        %2225 = vmatprep.subr.bf16.mxu0 0
        %2226 = vmatpush1.bf16.msra.mxu0 0
        %2227 = vmatprep.subr.bf16.mxu0 0
        %2228 = vmatpush1.bf16.msra.mxu0 0
        %2229 = vmatprep.subr.bf16.mxu0 0
        %2230 = vmatpush1.bf16.msra.mxu0 0
        %2231 = vmatprep.subr.bf16.mxu0 0
        %2232 = vmatpush1.bf16.msra.mxu0 0
        %2233 = vmatprep.subr.bf16.mxu0 0
        %2234 = vmatpush1.bf16.msra.mxu0 0
        %2235 = vmatprep.subr.bf16.mxu0 0
        %2236 = vmatpush1.bf16.msra.mxu0 0
        %2237 = vmatprep.subr.bf16.mxu0 0
        %2238 = vmatpush1.bf16.msra.mxu0 0
        %2239 = vmatprep.subr.bf16.mxu0 0
        %2240 = vmatpush1.bf16.msra.mxu0 0
        %2241 = vmatprep.subr.bf16.mxu0 0
        %2242 = vmatpush1.bf16.msra.mxu0 0
        %2243 = vmatprep.subr.bf16.mxu0 0
        %2244 = vmatpush1.bf16.msra.mxu0 0
        %2245 = vmatprep.subr.bf16.mxu0 0
        %2246 = vmatpush1.bf16.msra.mxu0 0
        %2247 = vmatprep.subr.bf16.mxu0 0
        %2248 = vmatpush1.bf16.msra.mxu0 0
        %2249 = vmatprep.subr.bf16.mxu0 0
        %2250 = vmatpush1.bf16.msra.mxu0 0
        %2251 = vmatprep.mubr.bf16.mxu0 0
        %2252 = vmatmul.mubr.bf16.gmra.mrb[0].mxu0 %v2214
        %v2253 = vpop.f32.mrb[0].mxu0
        %v2254 = vadd.f32 0.0, %v2253
        %v2255 = vpop.f32.mrb[0].mxu0
        %v2256 = vpop.f32.mrb[0].mxu0
        %v2257 = vpop.f32.mrb[0].mxu0
        %2258 = vdwg.mxu0
        %2259 = vrot.lane.b32.xlu0 %v1007, 64
        %v2260 = vpop.permute.xlu0 %2259
        %v2262 = vsel %vm1193, %v2114, 0
        %v2265 = vsel %vm1245, %v2260, 0
        %2267 = vmatprep.subr.bf16.mxu0 0
        %2268 = vmatpush1.bf16.msra.mxu0 %v2265
        %2269 = vmatprep.subr.bf16.mxu0 0
        %2270 = vmatpush1.bf16.msra.mxu0 0
        %2271 = vmatprep.subr.bf16.mxu0 0
        %2272 = vmatpush1.bf16.msra.mxu0 0
        %2273 = vmatprep.subr.bf16.mxu0 0
        %2274 = vmatpush1.bf16.msra.mxu0 0
        %2275 = vmatprep.subr.bf16.mxu0 0
        %2276 = vmatpush1.bf16.msra.mxu0 0
        %2277 = vmatprep.subr.bf16.mxu0 0
        %2278 = vmatpush1.bf16.msra.mxu0 0
        %2279 = vmatprep.subr.bf16.mxu0 0
        %2280 = vmatpush1.bf16.msra.mxu0 0
        %2281 = vmatprep.subr.bf16.mxu0 0
        %2282 = vmatpush1.bf16.msra.mxu0 0
        %2283 = vmatprep.subr.bf16.mxu0 0
        %2284 = vmatpush1.bf16.msra.mxu0 0
        %2285 = vmatprep.subr.bf16.mxu0 0
        %2286 = vmatpush1.bf16.msra.mxu0 0
        %2287 = vmatprep.subr.bf16.mxu0 0
        %2288 = vmatpush1.bf16.msra.mxu0 0
        %2289 = vmatprep.subr.bf16.mxu0 0
        %2290 = vmatpush1.bf16.msra.mxu0 0
        %2291 = vmatprep.subr.bf16.mxu0 0
        %2292 = vmatpush1.bf16.msra.mxu0 0
        %2293 = vmatprep.subr.bf16.mxu0 0
        %2294 = vmatpush1.bf16.msra.mxu0 0
        %2295 = vmatprep.subr.bf16.mxu0 0
        %2296 = vmatpush1.bf16.msra.mxu0 0
        %2297 = vmatprep.subr.bf16.mxu0 0
        %2298 = vmatpush1.bf16.msra.mxu0 0
        %2299 = vmatprep.mubr.bf16.mxu0 0
        %2300 = vmatmul.mubr.bf16.gmra.mrb[0].mxu0 %v2262
        %v2301 = vpop.f32.mrb[0].mxu0
        %v2302 = vadd.f32 0.0, %v2301
        %v2303 = vpop.f32.mrb[0].mxu0
        %v2304 = vpop.f32.mrb[0].mxu0
        %v2305 = vpop.f32.mrb[0].mxu0
        %2306 = vdwg.mxu0
        %2307 = vrot.lane.b32.xlu0 %v984, 32
        %v2308 = vpop.permute.xlu0 %2307
        %2309 = vrot.lane.b32.xlu0 %v994, 32
        %v2310 = vpop.permute.xlu0 %2309
        %v2312 = vsel %vm1008, %v2308, 0
        %v2315 = vsel %vm1008, %v2310, 0
        %2317 = vmatprep.subr.bf16.mxu0 0
        %2318 = vmatpush1.bf16.xpose.msra.mxu0 %v2315
        %2319 = vmatprep.subr.bf16.mxu0 0
        %2320 = vmatpush1.bf16.xpose.msra.mxu0 0
        %2321 = vmatprep.subr.bf16.mxu0 0
        %2322 = vmatpush1.bf16.xpose.msra.mxu0 0
        %2323 = vmatprep.subr.bf16.mxu0 0
        %2324 = vmatpush1.bf16.xpose.msra.mxu0 0
        %2325 = vmatprep.subr.bf16.mxu0 0
        %2326 = vmatpush1.bf16.xpose.msra.mxu0 0
        %2327 = vmatprep.subr.bf16.mxu0 0
        %2328 = vmatpush1.bf16.xpose.msra.mxu0 0
        %2329 = vmatprep.subr.bf16.mxu0 0
        %2330 = vmatpush1.bf16.xpose.msra.mxu0 0
        %2331 = vmatprep.subr.bf16.mxu0 0
        %2332 = vmatpush1.bf16.xpose.msra.mxu0 0
        %2333 = vmatprep.subr.bf16.mxu0 0
        %2334 = vmatpush1.bf16.xpose.msra.mxu0 0
        %2335 = vmatprep.subr.bf16.mxu0 0
        %2336 = vmatpush1.bf16.xpose.msra.mxu0 0
        %2337 = vmatprep.subr.bf16.mxu0 0
        %2338 = vmatpush1.bf16.xpose.msra.mxu0 0
        %2339 = vmatprep.subr.bf16.mxu0 0
        %2340 = vmatpush1.bf16.xpose.msra.mxu0 0
        %2341 = vmatprep.subr.bf16.mxu0 0
        %2342 = vmatpush1.bf16.xpose.msra.mxu0 0
        %2343 = vmatprep.subr.bf16.mxu0 0
        %2344 = vmatpush1.bf16.xpose.msra.mxu0 0
        %2345 = vmatprep.subr.bf16.mxu0 0
        %2346 = vmatpush1.bf16.xpose.msra.mxu0 0
        %2347 = vmatprep.subr.bf16.mxu0 0
        %2348 = vmatpush1.bf16.xpose.msra.mxu0 0
        %2349 = vmatprep.mubr.bf16.mxu0 0
        %2350 = vmatmul.mubr.bf16.gmra.mrb[0].mxu0 %v2312
        %v2351 = vpop.f32.mrb[0].mxu0
        %v2352 = vadd.f32 0.0, %v2351
        %v2353 = vpop.f32.mrb[0].mxu0
        %v2354 = vpop.f32.mrb[0].mxu0
        %v2355 = vpop.f32.mrb[0].mxu0
        %2356 = vdwg.mxu0
        %2357 = vrot.lane.b32.xlu0 %v985, 32
        %v2358 = vpop.permute.xlu0 %2357
        %2359 = vrot.lane.b32.xlu0 %v995, 32
        %v2360 = vpop.permute.xlu0 %2359
        %v2362 = vsel %vm1008, %v2358, 0
        %v2365 = vsel %vm1008, %v2360, 0
        %2367 = vmatprep.subr.bf16.mxu0 0
        %2368 = vmatpush1.bf16.xpose.msra.mxu0 %v2365
        %2369 = vmatprep.subr.bf16.mxu0 0
        %2370 = vmatpush1.bf16.xpose.msra.mxu0 0
        %2371 = vmatprep.subr.bf16.mxu0 0
        %2372 = vmatpush1.bf16.xpose.msra.mxu0 0
        %2373 = vmatprep.subr.bf16.mxu0 0
        %2374 = vmatpush1.bf16.xpose.msra.mxu0 0
        %2375 = vmatprep.subr.bf16.mxu0 0
        %2376 = vmatpush1.bf16.xpose.msra.mxu0 0
        %2377 = vmatprep.subr.bf16.mxu0 0
        %2378 = vmatpush1.bf16.xpose.msra.mxu0 0
        %2379 = vmatprep.subr.bf16.mxu0 0
        %2380 = vmatpush1.bf16.xpose.msra.mxu0 0
        %2381 = vmatprep.subr.bf16.mxu0 0
        %2382 = vmatpush1.bf16.xpose.msra.mxu0 0
        %2383 = vmatprep.subr.bf16.mxu0 0
        %2384 = vmatpush1.bf16.xpose.msra.mxu0 0
        %2385 = vmatprep.subr.bf16.mxu0 0
        %2386 = vmatpush1.bf16.xpose.msra.mxu0 0
        %2387 = vmatprep.subr.bf16.mxu0 0
        %2388 = vmatpush1.bf16.xpose.msra.mxu0 0
        %2389 = vmatprep.subr.bf16.mxu0 0
        %2390 = vmatpush1.bf16.xpose.msra.mxu0 0
        %2391 = vmatprep.subr.bf16.mxu0 0
        %2392 = vmatpush1.bf16.xpose.msra.mxu0 0
        %2393 = vmatprep.subr.bf16.mxu0 0
        %2394 = vmatpush1.bf16.xpose.msra.mxu0 0
        %2395 = vmatprep.subr.bf16.mxu0 0
        %2396 = vmatpush1.bf16.xpose.msra.mxu0 0
        %2397 = vmatprep.subr.bf16.mxu0 0
        %2398 = vmatpush1.bf16.xpose.msra.mxu0 0
        %2399 = vmatprep.mubr.bf16.mxu0 0
        %2400 = vmatmul.mubr.bf16.gmra.mrb[0].mxu0 %v2362
        %v2401 = vpop.f32.mrb[0].mxu0
        %v2402 = vadd.f32 0.0, %v2401
        %v2403 = vpop.f32.mrb[0].mxu0
        %v2404 = vpop.f32.mrb[0].mxu0
        %v2405 = vpop.f32.mrb[0].mxu0
        %2406 = vdwg.mxu0
        %2407 = vrot.lane.b32.xlu0 %v986, 32
        %v2408 = vpop.permute.xlu0 %2407
        %2409 = vrot.lane.b32.xlu0 %v996, 32
        %v2410 = vpop.permute.xlu0 %2409
        %v2412 = vsel %vm1008, %v2408, 0
        %v2415 = vsel %vm1008, %v2410, 0
        %2417 = vmatprep.subr.bf16.mxu0 0
        %2418 = vmatpush1.bf16.xpose.msra.mxu0 %v2415
        %2419 = vmatprep.subr.bf16.mxu0 0
        %2420 = vmatpush1.bf16.xpose.msra.mxu0 0
        %2421 = vmatprep.subr.bf16.mxu0 0
        %2422 = vmatpush1.bf16.xpose.msra.mxu0 0
        %2423 = vmatprep.subr.bf16.mxu0 0
        %2424 = vmatpush1.bf16.xpose.msra.mxu0 0
        %2425 = vmatprep.subr.bf16.mxu0 0
        %2426 = vmatpush1.bf16.xpose.msra.mxu0 0
        %2427 = vmatprep.subr.bf16.mxu0 0
        %2428 = vmatpush1.bf16.xpose.msra.mxu0 0
        %2429 = vmatprep.subr.bf16.mxu0 0
        %2430 = vmatpush1.bf16.xpose.msra.mxu0 0
        %2431 = vmatprep.subr.bf16.mxu0 0
        %2432 = vmatpush1.bf16.xpose.msra.mxu0 0
        %2433 = vmatprep.subr.bf16.mxu0 0
        %2434 = vmatpush1.bf16.xpose.msra.mxu0 0
        %2435 = vmatprep.subr.bf16.mxu0 0
        %2436 = vmatpush1.bf16.xpose.msra.mxu0 0
        %2437 = vmatprep.subr.bf16.mxu0 0
        %2438 = vmatpush1.bf16.xpose.msra.mxu0 0
        %2439 = vmatprep.subr.bf16.mxu0 0
        %2440 = vmatpush1.bf16.xpose.msra.mxu0 0
        %2441 = vmatprep.subr.bf16.mxu0 0
        %2442 = vmatpush1.bf16.xpose.msra.mxu0 0
        %2443 = vmatprep.subr.bf16.mxu0 0
        %2444 = vmatpush1.bf16.xpose.msra.mxu0 0
        %2445 = vmatprep.subr.bf16.mxu0 0
        %2446 = vmatpush1.bf16.xpose.msra.mxu0 0
        %2447 = vmatprep.subr.bf16.mxu0 0
        %2448 = vmatpush1.bf16.xpose.msra.mxu0 0
        %2449 = vmatprep.mubr.bf16.mxu0 0
        %2450 = vmatmul.mubr.bf16.gmra.mrb[0].mxu0 %v2412
        %v2451 = vpop.f32.mrb[0].mxu0
        %v2452 = vadd.f32 0.0, %v2451
        %v2453 = vpop.f32.mrb[0].mxu0
        %v2454 = vpop.f32.mrb[0].mxu0
        %v2455 = vpop.f32.mrb[0].mxu0
        %2456 = vdwg.mxu0
        %2457 = vrot.lane.b32.xlu0 %v987, 32
        %v2458 = vpop.permute.xlu0 %2457
        %2459 = vrot.lane.b32.xlu0 %v997, 32
        %v2460 = vpop.permute.xlu0 %2459
        %v2462 = vsel %vm1008, %v2458, 0
        %v2465 = vsel %vm1008, %v2460, 0
        %2467 = vmatprep.subr.bf16.mxu0 0
        %2468 = vmatpush1.bf16.xpose.msra.mxu0 %v2465
        %2469 = vmatprep.subr.bf16.mxu0 0
        %2470 = vmatpush1.bf16.xpose.msra.mxu0 0
        %2471 = vmatprep.subr.bf16.mxu0 0
        %2472 = vmatpush1.bf16.xpose.msra.mxu0 0
        %2473 = vmatprep.subr.bf16.mxu0 0
        %2474 = vmatpush1.bf16.xpose.msra.mxu0 0
        %2475 = vmatprep.subr.bf16.mxu0 0
        %2476 = vmatpush1.bf16.xpose.msra.mxu0 0
        %2477 = vmatprep.subr.bf16.mxu0 0
        %2478 = vmatpush1.bf16.xpose.msra.mxu0 0
        %2479 = vmatprep.subr.bf16.mxu0 0
        %2480 = vmatpush1.bf16.xpose.msra.mxu0 0
        %2481 = vmatprep.subr.bf16.mxu0 0
        %2482 = vmatpush1.bf16.xpose.msra.mxu0 0
        %2483 = vmatprep.subr.bf16.mxu0 0
        %2484 = vmatpush1.bf16.xpose.msra.mxu0 0
        %2485 = vmatprep.subr.bf16.mxu0 0
        %2486 = vmatpush1.bf16.xpose.msra.mxu0 0
        %2487 = vmatprep.subr.bf16.mxu0 0
        %2488 = vmatpush1.bf16.xpose.msra.mxu0 0
        %2489 = vmatprep.subr.bf16.mxu0 0
        %2490 = vmatpush1.bf16.xpose.msra.mxu0 0
        %2491 = vmatprep.subr.bf16.mxu0 0
        %2492 = vmatpush1.bf16.xpose.msra.mxu0 0
        %2493 = vmatprep.subr.bf16.mxu0 0
        %2494 = vmatpush1.bf16.xpose.msra.mxu0 0
        %2495 = vmatprep.subr.bf16.mxu0 0
        %2496 = vmatpush1.bf16.xpose.msra.mxu0 0
        %2497 = vmatprep.subr.bf16.mxu0 0
        %2498 = vmatpush1.bf16.xpose.msra.mxu0 0
        %2499 = vmatprep.mubr.bf16.mxu0 0
        %2500 = vmatmul.mubr.bf16.gmra.mrb[0].mxu0 %v2462
        %v2501 = vpop.f32.mrb[0].mxu0
        %v2502 = vadd.f32 0.0, %v2501
        %v2503 = vpop.f32.mrb[0].mxu0
        %v2504 = vpop.f32.mrb[0].mxu0
        %v2505 = vpop.f32.mrb[0].mxu0
        %2506 = vdwg.mxu0
        %v2507 = vsel %vm1193, %v2352, -inf
        %2508 = vmax.xlane.f32.xlu0 %v2507
        %v2509 = vpop.xlane.xlu0 %2508
        %v2510 = vsel %vm1193, %v2402, -inf
        %2511 = vmax.xlane.f32.xlu0 %v2510
        %v2512 = vpop.xlane.xlu0 %2511
        %v2513 = vsel %vm1193, %v2452, -inf
        %2514 = vmax.xlane.f32.xlu0 %v2513
        %v2515 = vpop.xlane.xlu0 %2514
        %v2516 = vsel %vm1193, %v2502, -inf
        %2517 = vmax.xlane.f32.xlu0 %v2516
        %v2518 = vpop.xlane.xlu0 %2517
        %v2519 = vsub.f32 %v2352, %v2509
        %v2520 = vsub.f32 %v2402, %v2512
        %v2521 = vsub.f32 %v2452, %v2515
        %v2522 = vsub.f32 %v2502, %v2518
        %v2523 = vmul.f32 %v2519, 1.442695
        %v2524 = vpow.pop %v2523
        %v2525 = vmul.f32 %v2520, 1.442695
        %v2526 = vpow.pop %v2525
        %v2527 = vmul.f32 %v2521, 1.442695
        %v2528 = vpow.pop %v2527
        %v2529 = vmul.f32 %v2522, 1.442695
        %v2530 = vpow.pop %v2529
        %v2531 = vsel %vm1193, %v2524, 0.0
        %2532 = vadd.xlane.f32.xlu0 %v2531
        %v2533 = vpop.xlane.xlu0 %2532
        %v2534 = vsel %vm1193, %v2526, 0.0
        %2535 = vadd.xlane.f32.xlu0 %v2534
        %v2536 = vpop.xlane.xlu0 %2535
        %v2537 = vsel %vm1193, %v2528, 0.0
        %2538 = vadd.xlane.f32.xlu0 %v2537
        %v2539 = vpop.xlane.xlu0 %2538
        %v2540 = vsel %vm1193, %v2530, 0.0
        %2541 = vadd.xlane.f32.xlu0 %v2540
        %v2542 = vpop.xlane.xlu0 %2541
        %v2543 = vrcp.pop %v2533
        %v2544 = vrcp.pop %v2536
        %v2545 = vrcp.pop %v2539
        %v2546 = vrcp.pop %v2542
        %v2547 = vmul.f32 %v2524, %v2543
        %v2548 = vmul.f32 %v2526, %v2544
        %v2549 = vmul.f32 %v2528, %v2545
        %v2550 = vmul.f32 %v2530, %v2546
        %v2551 = vpack.c.bf16 %v2547, %v2547
        %v2552 = vpack.c.bf16 %v2548, %v2548
        %v2553 = vpack.c.bf16 %v2549, %v2549
        %v2554 = vpack.c.bf16 %v2550, %v2550
        %2555 = vrot.lane.b32.xlu0 %v1004, 32
        %v2556 = vpop.permute.xlu0 %2555
        %v2558 = vsel %vm1193, %v2551, 0
        %v2561 = vsel %vm1245, %v2556, 0
        %2563 = vmatprep.subr.bf16.mxu0 0
        %2564 = vmatpush1.bf16.msra.mxu0 %v2561
        %2565 = vmatprep.subr.bf16.mxu0 0
        %2566 = vmatpush1.bf16.msra.mxu0 0
        %2567 = vmatprep.subr.bf16.mxu0 0
        %2568 = vmatpush1.bf16.msra.mxu0 0
        %2569 = vmatprep.subr.bf16.mxu0 0
        %2570 = vmatpush1.bf16.msra.mxu0 0
        %2571 = vmatprep.subr.bf16.mxu0 0
        %2572 = vmatpush1.bf16.msra.mxu0 0
        %2573 = vmatprep.subr.bf16.mxu0 0
        %2574 = vmatpush1.bf16.msra.mxu0 0
        %2575 = vmatprep.subr.bf16.mxu0 0
        %2576 = vmatpush1.bf16.msra.mxu0 0
        %2577 = vmatprep.subr.bf16.mxu0 0
        %2578 = vmatpush1.bf16.msra.mxu0 0
        %2579 = vmatprep.subr.bf16.mxu0 0
        %2580 = vmatpush1.bf16.msra.mxu0 0
        %2581 = vmatprep.subr.bf16.mxu0 0
        %2582 = vmatpush1.bf16.msra.mxu0 0
        %2583 = vmatprep.subr.bf16.mxu0 0
        %2584 = vmatpush1.bf16.msra.mxu0 0
        %2585 = vmatprep.subr.bf16.mxu0 0
        %2586 = vmatpush1.bf16.msra.mxu0 0
        %2587 = vmatprep.subr.bf16.mxu0 0
        %2588 = vmatpush1.bf16.msra.mxu0 0
        %2589 = vmatprep.subr.bf16.mxu0 0
        %2590 = vmatpush1.bf16.msra.mxu0 0
        %2591 = vmatprep.subr.bf16.mxu0 0
        %2592 = vmatpush1.bf16.msra.mxu0 0
        %2593 = vmatprep.subr.bf16.mxu0 0
        %2594 = vmatpush1.bf16.msra.mxu0 0
        %2595 = vmatprep.mubr.bf16.mxu0 0
        %2596 = vmatmul.mubr.bf16.gmra.mrb[0].mxu0 %v2558
        %v2597 = vpop.f32.mrb[0].mxu0
        %v2598 = vadd.f32 0.0, %v2597
        %v2599 = vpop.f32.mrb[0].mxu0
        %v2600 = vpop.f32.mrb[0].mxu0
        %v2601 = vpop.f32.mrb[0].mxu0
        %2602 = vdwg.mxu0
        %2603 = vrot.lane.b32.xlu0 %v1005, 32
        %v2604 = vpop.permute.xlu0 %2603
        %v2606 = vsel %vm1193, %v2552, 0
        %v2609 = vsel %vm1245, %v2604, 0
        %2611 = vmatprep.subr.bf16.mxu0 0
        %2612 = vmatpush1.bf16.msra.mxu0 %v2609
        %2613 = vmatprep.subr.bf16.mxu0 0
        %2614 = vmatpush1.bf16.msra.mxu0 0
        %2615 = vmatprep.subr.bf16.mxu0 0
        %2616 = vmatpush1.bf16.msra.mxu0 0
        %2617 = vmatprep.subr.bf16.mxu0 0
        %2618 = vmatpush1.bf16.msra.mxu0 0
        %2619 = vmatprep.subr.bf16.mxu0 0
        %2620 = vmatpush1.bf16.msra.mxu0 0
        %2621 = vmatprep.subr.bf16.mxu0 0
        %2622 = vmatpush1.bf16.msra.mxu0 0
        %2623 = vmatprep.subr.bf16.mxu0 0
        %2624 = vmatpush1.bf16.msra.mxu0 0
        %2625 = vmatprep.subr.bf16.mxu0 0
        %2626 = vmatpush1.bf16.msra.mxu0 0
        %2627 = vmatprep.subr.bf16.mxu0 0
        %2628 = vmatpush1.bf16.msra.mxu0 0
        %2629 = vmatprep.subr.bf16.mxu0 0
        %2630 = vmatpush1.bf16.msra.mxu0 0
        %2631 = vmatprep.subr.bf16.mxu0 0
        %2632 = vmatpush1.bf16.msra.mxu0 0
        %2633 = vmatprep.subr.bf16.mxu0 0
        %2634 = vmatpush1.bf16.msra.mxu0 0
        %2635 = vmatprep.subr.bf16.mxu0 0
        %2636 = vmatpush1.bf16.msra.mxu0 0
        %2637 = vmatprep.subr.bf16.mxu0 0
        %2638 = vmatpush1.bf16.msra.mxu0 0
        %2639 = vmatprep.subr.bf16.mxu0 0
        %2640 = vmatpush1.bf16.msra.mxu0 0
        %2641 = vmatprep.subr.bf16.mxu0 0
        %2642 = vmatpush1.bf16.msra.mxu0 0
        %2643 = vmatprep.mubr.bf16.mxu0 0
        %2644 = vmatmul.mubr.bf16.gmra.mrb[0].mxu0 %v2606
        %v2645 = vpop.f32.mrb[0].mxu0
        %v2646 = vadd.f32 0.0, %v2645
        %v2647 = vpop.f32.mrb[0].mxu0
        %v2648 = vpop.f32.mrb[0].mxu0
        %v2649 = vpop.f32.mrb[0].mxu0
        %2650 = vdwg.mxu0
        %2651 = vrot.lane.b32.xlu0 %v1006, 32
        %v2652 = vpop.permute.xlu0 %2651
        %v2654 = vsel %vm1193, %v2553, 0
        %v2657 = vsel %vm1245, %v2652, 0
        %2659 = vmatprep.subr.bf16.mxu0 0
        %2660 = vmatpush1.bf16.msra.mxu0 %v2657
        %2661 = vmatprep.subr.bf16.mxu0 0
        %2662 = vmatpush1.bf16.msra.mxu0 0
        %2663 = vmatprep.subr.bf16.mxu0 0
        %2664 = vmatpush1.bf16.msra.mxu0 0
        %2665 = vmatprep.subr.bf16.mxu0 0
        %2666 = vmatpush1.bf16.msra.mxu0 0
        %2667 = vmatprep.subr.bf16.mxu0 0
        %2668 = vmatpush1.bf16.msra.mxu0 0
        %2669 = vmatprep.subr.bf16.mxu0 0
        %2670 = vmatpush1.bf16.msra.mxu0 0
        %2671 = vmatprep.subr.bf16.mxu0 0
        %2672 = vmatpush1.bf16.msra.mxu0 0
        %2673 = vmatprep.subr.bf16.mxu0 0
        %2674 = vmatpush1.bf16.msra.mxu0 0
        %2675 = vmatprep.subr.bf16.mxu0 0
        %2676 = vmatpush1.bf16.msra.mxu0 0
        %2677 = vmatprep.subr.bf16.mxu0 0
        %2678 = vmatpush1.bf16.msra.mxu0 0
        %2679 = vmatprep.subr.bf16.mxu0 0
        %2680 = vmatpush1.bf16.msra.mxu0 0
        %2681 = vmatprep.subr.bf16.mxu0 0
        %2682 = vmatpush1.bf16.msra.mxu0 0
        %2683 = vmatprep.subr.bf16.mxu0 0
        %2684 = vmatpush1.bf16.msra.mxu0 0
        %2685 = vmatprep.subr.bf16.mxu0 0
        %2686 = vmatpush1.bf16.msra.mxu0 0
        %2687 = vmatprep.subr.bf16.mxu0 0
        %2688 = vmatpush1.bf16.msra.mxu0 0
        %2689 = vmatprep.subr.bf16.mxu0 0
        %2690 = vmatpush1.bf16.msra.mxu0 0
        %2691 = vmatprep.mubr.bf16.mxu0 0
        %2692 = vmatmul.mubr.bf16.gmra.mrb[0].mxu0 %v2654
        %v2693 = vpop.f32.mrb[0].mxu0
        %v2694 = vadd.f32 0.0, %v2693
        %v2695 = vpop.f32.mrb[0].mxu0
        %v2696 = vpop.f32.mrb[0].mxu0
        %v2697 = vpop.f32.mrb[0].mxu0
        %2698 = vdwg.mxu0
        %2699 = vrot.lane.b32.xlu0 %v1007, 32
        %v2700 = vpop.permute.xlu0 %2699
        %v2702 = vsel %vm1193, %v2554, 0
        %v2705 = vsel %vm1245, %v2700, 0
        %2707 = vmatprep.subr.bf16.mxu0 0
        %2708 = vmatpush1.bf16.msra.mxu0 %v2705
        %2709 = vmatprep.subr.bf16.mxu0 0
        %2710 = vmatpush1.bf16.msra.mxu0 0
        %2711 = vmatprep.subr.bf16.mxu0 0
        %2712 = vmatpush1.bf16.msra.mxu0 0
        %2713 = vmatprep.subr.bf16.mxu0 0
        %2714 = vmatpush1.bf16.msra.mxu0 0
        %2715 = vmatprep.subr.bf16.mxu0 0
        %2716 = vmatpush1.bf16.msra.mxu0 0
        %2717 = vmatprep.subr.bf16.mxu0 0
        %2718 = vmatpush1.bf16.msra.mxu0 0
        %2719 = vmatprep.subr.bf16.mxu0 0
        %2720 = vmatpush1.bf16.msra.mxu0 0
        %2721 = vmatprep.subr.bf16.mxu0 0
        %2722 = vmatpush1.bf16.msra.mxu0 0
        %2723 = vmatprep.subr.bf16.mxu0 0
        %2724 = vmatpush1.bf16.msra.mxu0 0
        %2725 = vmatprep.subr.bf16.mxu0 0
        %2726 = vmatpush1.bf16.msra.mxu0 0
        %2727 = vmatprep.subr.bf16.mxu0 0
        %2728 = vmatpush1.bf16.msra.mxu0 0
        %2729 = vmatprep.subr.bf16.mxu0 0
        %2730 = vmatpush1.bf16.msra.mxu0 0
        %2731 = vmatprep.subr.bf16.mxu0 0
        %2732 = vmatpush1.bf16.msra.mxu0 0
        %2733 = vmatprep.subr.bf16.mxu0 0
        %2734 = vmatpush1.bf16.msra.mxu0 0
        %2735 = vmatprep.subr.bf16.mxu0 0
        %2736 = vmatpush1.bf16.msra.mxu0 0
        %2737 = vmatprep.subr.bf16.mxu0 0
        %2738 = vmatpush1.bf16.msra.mxu0 0
        %2739 = vmatprep.mubr.bf16.mxu0 0
        %2740 = vmatmul.mubr.bf16.gmra.mrb[0].mxu0 %v2702
        %v2741 = vpop.f32.mrb[0].mxu0
        %v2742 = vadd.f32 0.0, %v2741
        %v2743 = vpop.f32.mrb[0].mxu0
        %v2744 = vpop.f32.mrb[0].mxu0
        %v2745 = vpop.f32.mrb[0].mxu0
        %2746 = vdwg.mxu0
        %2751 = vrot.lane.b32.xlu0 %v1718, 32
        %v2752 = vpop.permute.xlu0 %2751
        %2753 = vrot.lane.b32.xlu0 %v1766, 32
        %v2754 = vpop.permute.xlu0 %2753
        %2755 = vrot.lane.b32.xlu0 %v1814, 32
        %v2756 = vpop.permute.xlu0 %2755
        %2757 = vrot.lane.b32.xlu0 %v1862, 32
        %v2758 = vpop.permute.xlu0 %2757
        %2767 = vrot.lane.b32.xlu0 %v2158, 64
        %v2768 = vpop.permute.xlu0 %2767
        %2769 = vrot.lane.b32.xlu0 %v2206, 64
        %v2770 = vpop.permute.xlu0 %2769
        %2771 = vrot.lane.b32.xlu0 %v2254, 64
        %v2772 = vpop.permute.xlu0 %2771
        %2773 = vrot.lane.b32.xlu0 %v2302, 64
        %v2774 = vpop.permute.xlu0 %2773
        %2783 = vrot.lane.b32.xlu0 %v2598, 96
        %v2784 = vpop.permute.xlu0 %2783
        %2785 = vrot.lane.b32.xlu0 %v2646, 96
        %v2786 = vpop.permute.xlu0 %2785
        %2787 = vrot.lane.b32.xlu0 %v2694, 96
        %v2788 = vpop.permute.xlu0 %2787
        %2789 = vrot.lane.b32.xlu0 %v2742, 96
        %v2790 = vpop.permute.xlu0 %2789
        %v2795 = vsel %vm1008, %v1284, %v2752
        %v2796 = vsel %vm1008, %v1330, %v2754
        %v2797 = vsel %vm1008, %v1376, %v2756
        %v2798 = vsel %vm1008, %v1422, %v2758
        %vm2799 = vcmask 523264
        %v2800 = vsel %vm2799, %v2795, %v2768
        %v2801 = vsel %vm2799, %v2796, %v2770
        %v2802 = vsel %vm2799, %v2797, %v2772
        %v2803 = vsel %vm2799, %v2798, %v2774
        %vm2804 = vcmask 785408
        %v2805 = vsel %vm2804, %v2800, %v2784
        %v2806 = vsel %vm2804, %v2801, %v2786
        %v2807 = vsel %vm2804, %v2802, %v2788
        %v2808 = vsel %vm2804, %v2803, %v2790
        %v2809 = vpack.c.bf16 %v2806, %v2805
        %v2810 = vpack.c.bf16 %v2808, %v2807
        %v2811 = vld [vmem:[#allocation11] sm:$0xf]
        %v2812 = vld [vmem:[#allocation11 + $0x4] sm:$0xf]
        %v2813 = vld [vmem:[#allocation11 + $0x8] sm:$0xf]
        %v2814 = vld [vmem:[#allocation11 + $0xc] sm:$0xf]
        %v2815 = vld [vmem:[#allocation11 + $0x10] sm:$0xf]
        %v2816 = vld [vmem:[#allocation11 + $0x14] sm:$0xf]
        %v2817 = vld [vmem:[#allocation11 + $0x18] sm:$0xf]
        %v2818 = vld [vmem:[#allocation11 + $0x1c] sm:$0xf]
        %v2819 = vld [vmem:[#allocation11 + $0x20] sm:$0xf]
        %v2820 = vld [vmem:[#allocation11 + $0x24] sm:$0xf]
        %v2821 = vld [vmem:[#allocation11 + $0x28] sm:$0xf]
        %v2822 = vld [vmem:[#allocation11 + $0x2c] sm:$0xf]
        %v2823 = vld [vmem:[#allocation11 + $0x30] sm:$0xf]
        %v2824 = vld [vmem:[#allocation11 + $0x34] sm:$0xf]
        %v2825 = vld [vmem:[#allocation11 + $0x38] sm:$0xf]
        %v2826 = vld [vmem:[#allocation11 + $0x3c] sm:$0xf]
        %v2827 = vld [vmem:[#allocation13] sm:$0x1]
        %v2829 = vlaneseq
        %v2830 = vshrl.u32 %v2829, 7
        %v2831 = vsub.s32 0, %v2830
        %v2832 = vrot.slane %v2827, %v2831
        %v2850 = vunpack.c.l.b16 %v2811
        %v2851 = vunpack.c.l.b16 %v2812
        %v2852 = vunpack.c.l.b16 %v2813
        %v2853 = vunpack.c.l.b16 %v2814
        %v2854 = vunpack.c.l.b16 %v2815
        %v2855 = vunpack.c.l.b16 %v2816
        %v2856 = vunpack.c.l.b16 %v2817
        %v2857 = vunpack.c.l.b16 %v2818
        %v2858 = vunpack.c.l.b16 %v2819
        %v2859 = vunpack.c.l.b16 %v2820
        %v2860 = vunpack.c.l.b16 %v2821
        %v2861 = vunpack.c.l.b16 %v2822
        %v2862 = vunpack.c.l.b16 %v2823
        %v2863 = vunpack.c.l.b16 %v2824
        %v2864 = vunpack.c.l.b16 %v2825
        %v2865 = vunpack.c.l.b16 %v2826
        %v2866 = vpack.c.b16 %v2851, %v2850
        %v2867 = vpack.c.b16 %v2853, %v2852
        %v2868 = vpack.c.b16 %v2855, %v2854
        %v2869 = vpack.c.b16 %v2857, %v2856
        %v2870 = vpack.c.b16 %v2859, %v2858
        %v2871 = vpack.c.b16 %v2861, %v2860
        %v2872 = vpack.c.b16 %v2863, %v2862
        %v2873 = vpack.c.b16 %v2865, %v2864
        %2882 = vmatprep.subr.bf16.mxu0 0
        %2883 = vmatpush1.bf16.msra.mxu0 %v2866
        %2884 = vmatprep.subr.bf16.mxu0 0
        %2885 = vmatpush1.bf16.msra.mxu0 %v2867
        %2886 = vmatprep.subr.bf16.mxu0 0
        %2887 = vmatpush1.bf16.msra.mxu0 %v2868
        %2888 = vmatprep.subr.bf16.mxu0 0
        %2889 = vmatpush1.bf16.msra.mxu0 %v2869
        %2890 = vmatprep.subr.bf16.mxu0 0
        %2891 = vmatpush1.bf16.msra.mxu0 %v2870
        %2892 = vmatprep.subr.bf16.mxu0 0
        %2893 = vmatpush1.bf16.msra.mxu0 %v2871
        %2894 = vmatprep.subr.bf16.mxu0 0
        %2895 = vmatpush1.bf16.msra.mxu0 %v2872
        %2896 = vmatprep.subr.bf16.mxu0 0
        %2897 = vmatpush1.bf16.msra.mxu0 %v2873
        %2898 = vmatprep.subr.bf16.mxu0 0
        %2899 = vmatpush1.bf16.msra.mxu0 0
        %2900 = vmatprep.subr.bf16.mxu0 0
        %2901 = vmatpush1.bf16.msra.mxu0 0
        %2902 = vmatprep.subr.bf16.mxu0 0
        %2903 = vmatpush1.bf16.msra.mxu0 0
        %2904 = vmatprep.subr.bf16.mxu0 0
        %2905 = vmatpush1.bf16.msra.mxu0 0
        %2906 = vmatprep.subr.bf16.mxu0 0
        %2907 = vmatpush1.bf16.msra.mxu0 0
        %2908 = vmatprep.subr.bf16.mxu0 0
        %2909 = vmatpush1.bf16.msra.mxu0 0
        %2910 = vmatprep.subr.bf16.mxu0 0
        %2911 = vmatpush1.bf16.msra.mxu0 0
        %2912 = vmatprep.subr.bf16.mxu0 0
        %2913 = vmatpush1.bf16.msra.mxu0 0
        %2914 = vmatprep.mubr.bf16.mxu0 0
        %2915 = vmatmul.mubr.bf16.gmra.mrb[0].mxu0 %v2809
        %v2916 = vpop.f32.mrb[0].mxu0
        %v2917 = vadd.f32 %v2832, %v2916
        %v2918 = vpop.f32.mrb[0].mxu0
        %v2919 = vpop.f32.mrb[0].mxu0
        %v2920 = vadd.f32 %v2832, %v2919
        %v2921 = vpop.f32.mrb[0].mxu0
        %2922 = vmatprep.mubr.bf16.mxu0 0
        %2923 = vmatmul.mubr.bf16.gmra.mrb[0].mxu0 %v2810
        %v2924 = vpop.f32.mrb[0].mxu0
        %v2925 = vadd.f32 %v2832, %v2924
        %v2926 = vpop.f32.mrb[0].mxu0
        %v2927 = vpop.f32.mrb[0].mxu0
        %v2928 = vadd.f32 %v2832, %v2927
        %v2929 = vpop.f32.mrb[0].mxu0
        %2930 = vdwg.mxu0
        %v2931 = vadd.f32 %v620, %v2917
        %v2932 = vadd.f32 %v621, %v2920
        %v2933 = vadd.f32 %v622, %v2925
        %v2934 = vadd.f32 %v623, %v2928
        %v2935 = vld [vmem:[#allocation14] sm:$0x1]
        %v2936 = vld [vmem:[#allocation16] sm:$0x1]
        %2937 = vadd.xlane.f32.xlu0 %v2931
        %v2938 = vpop.xlane.xlu0 %2937
        %2939 = vadd.xlane.f32.xlu0 %v2932
        %v2940 = vpop.xlane.xlu0 %2939
        %2941 = vadd.xlane.f32.xlu0 %v2933
        %v2942 = vpop.xlane.xlu0 %2941
        %2943 = vadd.xlane.f32.xlu0 %v2934
        %v2944 = vpop.xlane.xlu0 %2943
        %v2945 = vmul.f32 %v2938, %v634
        %v2946 = vmul.f32 %v2940, %v634
        %v2947 = vmul.f32 %v2942, %v634
        %v2948 = vmul.f32 %v2944, %v634
        %v2949 = vsub.f32 %v2931, %v2945
        %v2950 = vsub.f32 %v2932, %v2946
        %v2951 = vsub.f32 %v2933, %v2947
        %v2952 = vsub.f32 %v2934, %v2948
        %v2953 = vmul.f32 %v2949, %v2949
        %v2954 = vmul.f32 %v2950, %v2950
        %v2955 = vmul.f32 %v2951, %v2951
        %v2956 = vmul.f32 %v2952, %v2952
        %2957 = vadd.xlane.f32.xlu0 %v2953
        %v2958 = vpop.xlane.xlu0 %2957
        %2959 = vadd.xlane.f32.xlu0 %v2954
        %v2960 = vpop.xlane.xlu0 %2959
        %2961 = vadd.xlane.f32.xlu0 %v2955
        %v2962 = vpop.xlane.xlu0 %2961
        %2963 = vadd.xlane.f32.xlu0 %v2956
        %v2964 = vpop.xlane.xlu0 %2963
        %v2965 = vmul.f32 %v2958, %v634
        %v2966 = vmul.f32 %v2960, %v634
        %v2967 = vmul.f32 %v2962, %v634
        %v2968 = vmul.f32 %v2964, %v634
        %v2969 = vadd.f32 %v2965, 1e-05
        %v2970 = vadd.f32 %v2966, 1e-05
        %v2971 = vadd.f32 %v2967, 1e-05
        %v2972 = vadd.f32 %v2968, 1e-05
        %v2973 = vrsqrt.pop %v2969
        %v2974 = vrsqrt.pop %v2970
        %v2975 = vrsqrt.pop %v2971
        %v2976 = vrsqrt.pop %v2972
        %v2977 = vmul.f32 %v2949, %v2973
        %v2978 = vmul.f32 %v2950, %v2974
        %v2979 = vmul.f32 %v2951, %v2975
        %v2980 = vmul.f32 %v2952, %v2976
        %v2982 = vlaneseq
        %v2983 = vshrl.u32 %v2982, 7
        %v2984 = vsub.s32 0, %v2983
        %v2985 = vrot.slane %v2935, %v2984
        %v2987 = vmul.f32 %v2977, %v2985
        %v2988 = vmul.f32 %v2978, %v2985
        %v2989 = vmul.f32 %v2979, %v2985
        %v2990 = vmul.f32 %v2980, %v2985
        %v2992 = vlaneseq
        %v2993 = vshrl.u32 %v2992, 7
        %v2994 = vsub.s32 0, %v2993
        %v2995 = vrot.slane %v2936, %v2994
        %v2997 = vadd.f32 %v2987, %v2995
        %v2998 = vadd.f32 %v2988, %v2995
        %v2999 = vadd.f32 %v2989, %v2995
        %v3000 = vadd.f32 %v2990, %v2995
        %v3001 = vpack.c.bf16 %v2998, %v2997
        %v3002 = vpack.c.bf16 %v3000, %v2999
        %v3003 = vld [vmem:[#allocation17] sm:$0xff]
        %v3004 = vld [vmem:[#allocation17 + $0x8] sm:$0xff]
        %v3005 = vld [vmem:[#allocation17 + $0x10] sm:$0xff]
        %v3006 = vld [vmem:[#allocation17 + $0x18] sm:$0xff]
        %v3007 = vld [vmem:[#allocation17 + $0x20] sm:$0xff]
        %v3008 = vld [vmem:[#allocation17 + $0x28] sm:$0xff]
        %v3009 = vld [vmem:[#allocation17 + $0x30] sm:$0xff]
        %v3010 = vld [vmem:[#allocation17 + $0x38] sm:$0xff]
        %v3011 = vld [vmem:[#allocation17 + $0x40] sm:$0xff]
        %v3012 = vld [vmem:[#allocation17 + $0x48] sm:$0xff]
        %v3013 = vld [vmem:[#allocation17 + $0x50] sm:$0xff]
        %v3014 = vld [vmem:[#allocation17 + $0x58] sm:$0xff]
        %v3015 = vld [vmem:[#allocation17 + $0x60] sm:$0xff]
        %v3016 = vld [vmem:[#allocation17 + $0x68] sm:$0xff]
        %v3017 = vld [vmem:[#allocation17 + $0x70] sm:$0xff]
        %v3018 = vld [vmem:[#allocation17 + $0x78] sm:$0xff]
        %v3019 = vld [vmem:[#allocation17 + $0x80] sm:$0xff]
        %v3020 = vld [vmem:[#allocation17 + $0x88] sm:$0xff]
        %v3021 = vld [vmem:[#allocation17 + $0x90] sm:$0xff]
        %v3022 = vld [vmem:[#allocation17 + $0x98] sm:$0xff]
        %v3023 = vld [vmem:[#allocation17 + $0xa0] sm:$0xff]
        %v3024 = vld [vmem:[#allocation17 + $0xa8] sm:$0xff]
        %v3025 = vld [vmem:[#allocation17 + $0xb0] sm:$0xff]
        %v3026 = vld [vmem:[#allocation17 + $0xb8] sm:$0xff]
        %v3027 = vld [vmem:[#allocation17 + $0xc0] sm:$0xff]
        %v3028 = vld [vmem:[#allocation17 + $0xc8] sm:$0xff]
        %v3029 = vld [vmem:[#allocation17 + $0xd0] sm:$0xff]
        %v3030 = vld [vmem:[#allocation17 + $0xd8] sm:$0xff]
        %v3031 = vld [vmem:[#allocation17 + $0xe0] sm:$0xff]
        %v3032 = vld [vmem:[#allocation17 + $0xe8] sm:$0xff]
        %v3033 = vld [vmem:[#allocation17 + $0xf0] sm:$0xff]
        %v3034 = vld [vmem:[#allocation17 + $0xf8] sm:$0xff]
        %v3035 = vld [vmem:[#allocation19] sm:$0xf]
        %v3037 = vlaneseq
        %v3038 = vshrl.u32 %v3037, 7
        %v3039 = vsub.s32 0, %v3038
        %v3040 = vrot.slane %v3035, %v3039
        %v3041 = vlaneseq
        %v3042 = vshrl.u32 %v3041, 7
        %v3043 = vsub.s32 1, %v3042
        %v3044 = vrot.slane %v3035, %v3043
        %v3045 = vlaneseq
        %v3046 = vshrl.u32 %v3045, 7
        %v3047 = vsub.s32 2, %v3046
        %v3048 = vrot.slane %v3035, %v3047
        %v3049 = vlaneseq
        %v3050 = vshrl.u32 %v3049, 7
        %v3051 = vsub.s32 3, %v3050
        %v3052 = vrot.slane %v3035, %v3051
        %v3089 = vunpack.c.l.b16 %v3003
        %v3090 = vunpack.c.h.b16 %v3003
        %v3091 = vunpack.c.l.b16 %v3004
        %v3092 = vunpack.c.h.b16 %v3004
        %v3093 = vunpack.c.l.b16 %v3005
        %v3094 = vunpack.c.h.b16 %v3005
        %v3095 = vunpack.c.l.b16 %v3006
        %v3096 = vunpack.c.h.b16 %v3006
        %v3097 = vunpack.c.l.b16 %v3007
        %v3098 = vunpack.c.h.b16 %v3007
        %v3099 = vunpack.c.l.b16 %v3008
        %v3100 = vunpack.c.h.b16 %v3008
        %v3101 = vunpack.c.l.b16 %v3009
        %v3102 = vunpack.c.h.b16 %v3009
        %v3103 = vunpack.c.l.b16 %v3010
        %v3104 = vunpack.c.h.b16 %v3010
        %v3105 = vunpack.c.l.b16 %v3011
        %v3106 = vunpack.c.h.b16 %v3011
        %v3107 = vunpack.c.l.b16 %v3012
        %v3108 = vunpack.c.h.b16 %v3012
        %v3109 = vunpack.c.l.b16 %v3013
        %v3110 = vunpack.c.h.b16 %v3013
        %v3111 = vunpack.c.l.b16 %v3014
        %v3112 = vunpack.c.h.b16 %v3014
        %v3113 = vunpack.c.l.b16 %v3015
        %v3114 = vunpack.c.h.b16 %v3015
        %v3115 = vunpack.c.l.b16 %v3016
        %v3116 = vunpack.c.h.b16 %v3016
        %v3117 = vunpack.c.l.b16 %v3017
        %v3118 = vunpack.c.h.b16 %v3017
        %v3119 = vunpack.c.l.b16 %v3018
        %v3120 = vunpack.c.h.b16 %v3018
        %v3121 = vunpack.c.l.b16 %v3019
        %v3122 = vunpack.c.h.b16 %v3019
        %v3123 = vunpack.c.l.b16 %v3020
        %v3124 = vunpack.c.h.b16 %v3020
        %v3125 = vunpack.c.l.b16 %v3021
        %v3126 = vunpack.c.h.b16 %v3021
        %v3127 = vunpack.c.l.b16 %v3022
        %v3128 = vunpack.c.h.b16 %v3022
        %v3129 = vunpack.c.l.b16 %v3023
        %v3130 = vunpack.c.h.b16 %v3023
        %v3131 = vunpack.c.l.b16 %v3024
        %v3132 = vunpack.c.h.b16 %v3024
        %v3133 = vunpack.c.l.b16 %v3025
        %v3134 = vunpack.c.h.b16 %v3025
        %v3135 = vunpack.c.l.b16 %v3026
        %v3136 = vunpack.c.h.b16 %v3026
        %v3137 = vunpack.c.l.b16 %v3027
        %v3138 = vunpack.c.h.b16 %v3027
        %v3139 = vunpack.c.l.b16 %v3028
        %v3140 = vunpack.c.h.b16 %v3028
        %v3141 = vunpack.c.l.b16 %v3029
        %v3142 = vunpack.c.h.b16 %v3029
        %v3143 = vunpack.c.l.b16 %v3030
        %v3144 = vunpack.c.h.b16 %v3030
        %v3145 = vunpack.c.l.b16 %v3031
        %v3146 = vunpack.c.h.b16 %v3031
        %v3147 = vunpack.c.l.b16 %v3032
        %v3148 = vunpack.c.h.b16 %v3032
        %v3149 = vunpack.c.l.b16 %v3033
        %v3150 = vunpack.c.h.b16 %v3033
        %v3151 = vunpack.c.l.b16 %v3034
        %v3152 = vunpack.c.h.b16 %v3034
        %v3153 = vpack.c.b16 %v3093, %v3089
        %v3154 = vpack.c.b16 %v3094, %v3090
        %v3155 = vpack.c.b16 %v3095, %v3091
        %v3156 = vpack.c.b16 %v3096, %v3092
        %v3157 = vpack.c.b16 %v3101, %v3097
        %v3158 = vpack.c.b16 %v3102, %v3098
        %v3159 = vpack.c.b16 %v3103, %v3099
        %v3160 = vpack.c.b16 %v3104, %v3100
        %v3161 = vpack.c.b16 %v3109, %v3105
        %v3162 = vpack.c.b16 %v3110, %v3106
        %v3163 = vpack.c.b16 %v3111, %v3107
        %v3164 = vpack.c.b16 %v3112, %v3108
        %v3165 = vpack.c.b16 %v3117, %v3113
        %v3166 = vpack.c.b16 %v3118, %v3114
        %v3167 = vpack.c.b16 %v3119, %v3115
        %v3168 = vpack.c.b16 %v3120, %v3116
        %v3169 = vpack.c.b16 %v3125, %v3121
        %v3170 = vpack.c.b16 %v3126, %v3122
        %v3171 = vpack.c.b16 %v3127, %v3123
        %v3172 = vpack.c.b16 %v3128, %v3124
        %v3173 = vpack.c.b16 %v3133, %v3129
        %v3174 = vpack.c.b16 %v3134, %v3130
        %v3175 = vpack.c.b16 %v3135, %v3131
        %v3176 = vpack.c.b16 %v3136, %v3132
        %v3177 = vpack.c.b16 %v3141, %v3137
        %v3178 = vpack.c.b16 %v3142, %v3138
        %v3179 = vpack.c.b16 %v3143, %v3139
        %v3180 = vpack.c.b16 %v3144, %v3140
        %v3181 = vpack.c.b16 %v3149, %v3145
        %v3182 = vpack.c.b16 %v3150, %v3146
        %v3183 = vpack.c.b16 %v3151, %v3147
        %v3184 = vpack.c.b16 %v3152, %v3148
        %3217 = vmatprep.subr.bf16.mxu0 %v3154
        %3218 = vmatpush1.bf16.msra.mxu0 %v3153
        %3219 = vmatprep.subr.bf16.mxu0 %v3158
        %3220 = vmatpush1.bf16.msra.mxu0 %v3157
        %3221 = vmatprep.subr.bf16.mxu0 %v3162
        %3222 = vmatpush1.bf16.msra.mxu0 %v3161
        %3223 = vmatprep.subr.bf16.mxu0 %v3166
        %3224 = vmatpush1.bf16.msra.mxu0 %v3165
        %3225 = vmatprep.subr.bf16.mxu0 %v3170
        %3226 = vmatpush1.bf16.msra.mxu0 %v3169
        %3227 = vmatprep.subr.bf16.mxu0 %v3174
        %3228 = vmatpush1.bf16.msra.mxu0 %v3173
        %3229 = vmatprep.subr.bf16.mxu0 %v3178
        %3230 = vmatpush1.bf16.msra.mxu0 %v3177
        %3231 = vmatprep.subr.bf16.mxu0 %v3182
        %3232 = vmatpush1.bf16.msra.mxu0 %v3181
        %3233 = vmatprep.subr.bf16.mxu0 0
        %3234 = vmatpush1.bf16.msra.mxu0 0
        %3235 = vmatprep.subr.bf16.mxu0 0
        %3236 = vmatpush1.bf16.msra.mxu0 0
        %3237 = vmatprep.subr.bf16.mxu0 0
        %3238 = vmatpush1.bf16.msra.mxu0 0
        %3239 = vmatprep.subr.bf16.mxu0 0
        %3240 = vmatpush1.bf16.msra.mxu0 0
        %3241 = vmatprep.subr.bf16.mxu0 0
        %3242 = vmatpush1.bf16.msra.mxu0 0
        %3243 = vmatprep.subr.bf16.mxu0 0
        %3244 = vmatpush1.bf16.msra.mxu0 0
        %3245 = vmatprep.subr.bf16.mxu0 0
        %3246 = vmatpush1.bf16.msra.mxu0 0
        %3247 = vmatprep.subr.bf16.mxu0 0
        %3248 = vmatpush1.bf16.msra.mxu0 0
        %3249 = vmatprep.mubr.bf16.mxu0 0
        %3250 = vmatmul.mubr.bf16.gmra.mrb[0].mxu0 %v3001
        %v3251 = vpop.f32.mrb[0].mxu0
        %v3252 = vadd.f32 %v3040, %v3251
        %v3253 = vpop.f32.mrb[0].mxu0
        %v3254 = vadd.f32 %v3044, %v3253
        %v3255 = vpop.f32.mrb[0].mxu0
        %v3256 = vadd.f32 %v3040, %v3255
        %v3257 = vpop.f32.mrb[0].mxu0
        %v3258 = vadd.f32 %v3044, %v3257
        %3259 = vmatprep.mubr.bf16.mxu0 0
        %3260 = vmatmul.mubr.bf16.gmra.mrb[0].mxu0 %v3002
        %v3261 = vpop.f32.mrb[0].mxu0
        %v3262 = vadd.f32 %v3040, %v3261
        %v3263 = vpop.f32.mrb[0].mxu0
        %v3264 = vadd.f32 %v3044, %v3263
        %v3265 = vpop.f32.mrb[0].mxu0
        %v3266 = vadd.f32 %v3040, %v3265
        %v3267 = vpop.f32.mrb[0].mxu0
        %v3268 = vadd.f32 %v3044, %v3267
        %3269 = vdwg.mxu0
        %3270 = vmatprep.subr.bf16.mxu0 %v3156
        %3271 = vmatpush1.bf16.msra.mxu0 %v3155
        %3272 = vmatprep.subr.bf16.mxu0 %v3160
        %3273 = vmatpush1.bf16.msra.mxu0 %v3159
        %3274 = vmatprep.subr.bf16.mxu0 %v3164
        %3275 = vmatpush1.bf16.msra.mxu0 %v3163
        %3276 = vmatprep.subr.bf16.mxu0 %v3168
        %3277 = vmatpush1.bf16.msra.mxu0 %v3167
        %3278 = vmatprep.subr.bf16.mxu0 %v3172
        %3279 = vmatpush1.bf16.msra.mxu0 %v3171
        %3280 = vmatprep.subr.bf16.mxu0 %v3176
        %3281 = vmatpush1.bf16.msra.mxu0 %v3175
        %3282 = vmatprep.subr.bf16.mxu0 %v3180
        %3283 = vmatpush1.bf16.msra.mxu0 %v3179
        %3284 = vmatprep.subr.bf16.mxu0 %v3184
        %3285 = vmatpush1.bf16.msra.mxu0 %v3183
        %3286 = vmatprep.subr.bf16.mxu0 0
        %3287 = vmatpush1.bf16.msra.mxu0 0
        %3288 = vmatprep.subr.bf16.mxu0 0
        %3289 = vmatpush1.bf16.msra.mxu0 0
        %3290 = vmatprep.subr.bf16.mxu0 0
        %3291 = vmatpush1.bf16.msra.mxu0 0
        %3292 = vmatprep.subr.bf16.mxu0 0
        %3293 = vmatpush1.bf16.msra.mxu0 0
        %3294 = vmatprep.subr.bf16.mxu0 0
        %3295 = vmatpush1.bf16.msra.mxu0 0
        %3296 = vmatprep.subr.bf16.mxu0 0
        %3297 = vmatpush1.bf16.msra.mxu0 0
        %3298 = vmatprep.subr.bf16.mxu0 0
        %3299 = vmatpush1.bf16.msra.mxu0 0
        %3300 = vmatprep.subr.bf16.mxu0 0
        %3301 = vmatpush1.bf16.msra.mxu0 0
        %3302 = vmatprep.mubr.bf16.mxu0 0
        %3303 = vmatmul.mubr.bf16.gmra.mrb[0].mxu0 %v3001
        %v3304 = vpop.f32.mrb[0].mxu0
        %v3305 = vadd.f32 %v3048, %v3304
        %v3306 = vpop.f32.mrb[0].mxu0
        %v3307 = vadd.f32 %v3052, %v3306
        %v3308 = vpop.f32.mrb[0].mxu0
        %v3309 = vadd.f32 %v3048, %v3308
        %v3310 = vpop.f32.mrb[0].mxu0
        %v3311 = vadd.f32 %v3052, %v3310
        %3312 = vmatprep.mubr.bf16.mxu0 0
        %3313 = vmatmul.mubr.bf16.gmra.mrb[0].mxu0 %v3002
        %v3314 = vpop.f32.mrb[0].mxu0
        %v3315 = vadd.f32 %v3048, %v3314
        %v3316 = vpop.f32.mrb[0].mxu0
        %v3317 = vadd.f32 %v3052, %v3316
        %v3318 = vpop.f32.mrb[0].mxu0
        %v3319 = vadd.f32 %v3048, %v3318
        %v3320 = vpop.f32.mrb[0].mxu0
        %v3321 = vadd.f32 %v3052, %v3320
        %3322 = vdwg.mxu0
        %v3323 = vmul.f32 %v3252, 0.5
        %v3324 = vmul.f32 %v3254, 0.5
        %v3325 = vmul.f32 %v3305, 0.5
        %v3326 = vmul.f32 %v3307, 0.5
        %v3327 = vmul.f32 %v3256, 0.5
        %v3328 = vmul.f32 %v3258, 0.5
        %v3329 = vmul.f32 %v3309, 0.5
        %v3330 = vmul.f32 %v3311, 0.5
        %v3331 = vmul.f32 %v3262, 0.5
        %v3332 = vmul.f32 %v3264, 0.5
        %v3333 = vmul.f32 %v3315, 0.5
        %v3334 = vmul.f32 %v3317, 0.5
        %v3335 = vmul.f32 %v3266, 0.5
        %v3336 = vmul.f32 %v3268, 0.5
        %v3337 = vmul.f32 %v3319, 0.5
        %v3338 = vmul.f32 %v3321, 0.5
        %v3339 = vmul.f32 %v3252, 0.70710677
        %v3340 = vmul.f32 %v3254, 0.70710677
        %v3341 = vmul.f32 %v3305, 0.70710677
        %v3342 = vmul.f32 %v3307, 0.70710677
        %v3343 = vmul.f32 %v3256, 0.70710677
        %v3344 = vmul.f32 %v3258, 0.70710677
        %v3345 = vmul.f32 %v3309, 0.70710677
        %v3346 = vmul.f32 %v3311, 0.70710677
        %v3347 = vmul.f32 %v3262, 0.70710677
        %v3348 = vmul.f32 %v3264, 0.70710677
        %v3349 = vmul.f32 %v3315, 0.70710677
        %v3350 = vmul.f32 %v3317, 0.70710677
        %v3351 = vmul.f32 %v3266, 0.70710677
        %v3352 = vmul.f32 %v3268, 0.70710677
        %v3353 = vmul.f32 %v3319, 0.70710677
        %v3354 = vmul.f32 %v3321, 0.70710677
        %vm3355 = vcmp.lt.f32.partialorder %v3339, 0.0
        %vm3356 = vcmp.lt.f32.partialorder %v3340, 0.0
        %vm3357 = vcmp.lt.f32.partialorder %v3341, 0.0
        %vm3358 = vcmp.lt.f32.partialorder %v3342, 0.0
        %vm3359 = vcmp.lt.f32.partialorder %v3343, 0.0
        %vm3360 = vcmp.lt.f32.partialorder %v3344, 0.0
        %vm3361 = vcmp.lt.f32.partialorder %v3345, 0.0
        %vm3362 = vcmp.lt.f32.partialorder %v3346, 0.0
        %vm3363 = vcmp.lt.f32.partialorder %v3347, 0.0
        %vm3364 = vcmp.lt.f32.partialorder %v3348, 0.0
        %vm3365 = vcmp.lt.f32.partialorder %v3349, 0.0
        %vm3366 = vcmp.lt.f32.partialorder %v3350, 0.0
        %vm3367 = vcmp.lt.f32.partialorder %v3351, 0.0
        %vm3368 = vcmp.lt.f32.partialorder %v3352, 0.0
        %vm3369 = vcmp.lt.f32.partialorder %v3353, 0.0
        %vm3370 = vcmp.lt.f32.partialorder %v3354, 0.0
        %v3371 = vsel %vm3355, -1.0, 1.0
        %v3372 = vsel %vm3356, -1.0, 1.0
        %v3373 = vsel %vm3357, -1.0, 1.0
        %v3374 = vsel %vm3358, -1.0, 1.0
        %v3375 = vsel %vm3359, -1.0, 1.0
        %v3376 = vsel %vm3360, -1.0, 1.0
        %v3377 = vsel %vm3361, -1.0, 1.0
        %v3378 = vsel %vm3362, -1.0, 1.0
        %v3379 = vsel %vm3363, -1.0, 1.0
        %v3380 = vsel %vm3364, -1.0, 1.0
        %v3381 = vsel %vm3365, -1.0, 1.0
        %v3382 = vsel %vm3366, -1.0, 1.0
        %v3383 = vsel %vm3367, -1.0, 1.0
        %v3384 = vsel %vm3368, -1.0, 1.0
        %v3385 = vsel %vm3369, -1.0, 1.0
        %v3386 = vsel %vm3370, -1.0, 1.0
        %v3387 = vand.u32 2147483647, %v3339
        %v3388 = vand.u32 2147483647, %v3340
        %v3389 = vand.u32 2147483647, %v3341
        %v3390 = vand.u32 2147483647, %v3342
        %v3391 = vand.u32 2147483647, %v3343
        %v3392 = vand.u32 2147483647, %v3344
        %v3393 = vand.u32 2147483647, %v3345
        %v3394 = vand.u32 2147483647, %v3346
        %v3395 = vand.u32 2147483647, %v3347
        %v3396 = vand.u32 2147483647, %v3348
        %v3397 = vand.u32 2147483647, %v3349
        %v3398 = vand.u32 2147483647, %v3350
        %v3399 = vand.u32 2147483647, %v3351
        %v3400 = vand.u32 2147483647, %v3352
        %v3401 = vand.u32 2147483647, %v3353
        %v3402 = vand.u32 2147483647, %v3354
        %v3403 = vmul.f32 %v3387, 0.3275911
        %v3404 = vmul.f32 %v3388, 0.3275911
        %v3405 = vmul.f32 %v3389, 0.3275911
        %v3406 = vmul.f32 %v3390, 0.3275911
        %v3407 = vmul.f32 %v3391, 0.3275911
        %v3408 = vmul.f32 %v3392, 0.3275911
        %v3409 = vmul.f32 %v3393, 0.3275911
        %v3410 = vmul.f32 %v3394, 0.3275911
        %v3411 = vmul.f32 %v3395, 0.3275911
        %v3412 = vmul.f32 %v3396, 0.3275911
        %v3413 = vmul.f32 %v3397, 0.3275911
        %v3414 = vmul.f32 %v3398, 0.3275911
        %v3415 = vmul.f32 %v3399, 0.3275911
        %v3416 = vmul.f32 %v3400, 0.3275911
        %v3417 = vmul.f32 %v3401, 0.3275911
        %v3418 = vmul.f32 %v3402, 0.3275911
        %v3419 = vadd.f32 %v3403, 1.0
        %v3420 = vadd.f32 %v3404, 1.0
        %v3421 = vadd.f32 %v3405, 1.0
        %v3422 = vadd.f32 %v3406, 1.0
        %v3423 = vadd.f32 %v3407, 1.0
        %v3424 = vadd.f32 %v3408, 1.0
        %v3425 = vadd.f32 %v3409, 1.0
        %v3426 = vadd.f32 %v3410, 1.0
        %v3427 = vadd.f32 %v3411, 1.0
        %v3428 = vadd.f32 %v3412, 1.0
        %v3429 = vadd.f32 %v3413, 1.0
        %v3430 = vadd.f32 %v3414, 1.0
        %v3431 = vadd.f32 %v3415, 1.0
        %v3432 = vadd.f32 %v3416, 1.0
        %v3433 = vadd.f32 %v3417, 1.0
        %v3434 = vadd.f32 %v3418, 1.0
        %v3435 = vrcp.pop %v3419
        %v3436 = vmul.f32 1.0, %v3435
        %v3437 = vrcp.pop %v3420
        %v3438 = vmul.f32 1.0, %v3437
        %v3439 = vrcp.pop %v3421
        %v3440 = vmul.f32 1.0, %v3439
        %v3441 = vrcp.pop %v3422
        %v3442 = vmul.f32 1.0, %v3441
        %v3443 = vrcp.pop %v3423
        %v3444 = vmul.f32 1.0, %v3443
        %v3445 = vrcp.pop %v3424
        %v3446 = vmul.f32 1.0, %v3445
        %v3447 = vrcp.pop %v3425
        %v3448 = vmul.f32 1.0, %v3447
        %v3449 = vrcp.pop %v3426
        %v3450 = vmul.f32 1.0, %v3449
        %v3451 = vrcp.pop %v3427
        %v3452 = vmul.f32 1.0, %v3451
        %v3453 = vrcp.pop %v3428
        %v3454 = vmul.f32 1.0, %v3453
        %v3455 = vrcp.pop %v3429
        %v3456 = vmul.f32 1.0, %v3455
        %v3457 = vrcp.pop %v3430
        %v3458 = vmul.f32 1.0, %v3457
        %v3459 = vrcp.pop %v3431
        %v3460 = vmul.f32 1.0, %v3459
        %v3461 = vrcp.pop %v3432
        %v3462 = vmul.f32 1.0, %v3461
        %v3463 = vrcp.pop %v3433
        %v3464 = vmul.f32 1.0, %v3463
        %v3465 = vrcp.pop %v3434
        %v3466 = vmul.f32 1.0, %v3465
        %v3467 = vmul.f32 %v3436, 1.0614054
        %v3468 = vmul.f32 %v3438, 1.0614054
        %v3469 = vmul.f32 %v3440, 1.0614054
        %v3470 = vmul.f32 %v3442, 1.0614054
        %v3471 = vmul.f32 %v3444, 1.0614054
        %v3472 = vmul.f32 %v3446, 1.0614054
        %v3473 = vmul.f32 %v3448, 1.0614054
        %v3474 = vmul.f32 %v3450, 1.0614054
        %v3475 = vmul.f32 %v3452, 1.0614054
        %v3476 = vmul.f32 %v3454, 1.0614054
        %v3477 = vmul.f32 %v3456, 1.0614054
        %v3478 = vmul.f32 %v3458, 1.0614054
        %v3479 = vmul.f32 %v3460, 1.0614054
        %v3480 = vmul.f32 %v3462, 1.0614054
        %v3481 = vmul.f32 %v3464, 1.0614054
        %v3482 = vmul.f32 %v3466, 1.0614054
        %v3483 = vadd.f32 %v3467, -1.4531521
        %v3484 = vadd.f32 %v3468, -1.4531521
        %v3485 = vadd.f32 %v3469, -1.4531521
        %v3486 = vadd.f32 %v3470, -1.4531521
        %v3487 = vadd.f32 %v3471, -1.4531521
        %v3488 = vadd.f32 %v3472, -1.4531521
        %v3489 = vadd.f32 %v3473, -1.4531521
        %v3490 = vadd.f32 %v3474, -1.4531521
        %v3491 = vadd.f32 %v3475, -1.4531521
        %v3492 = vadd.f32 %v3476, -1.4531521
        %v3493 = vadd.f32 %v3477, -1.4531521
        %v3494 = vadd.f32 %v3478, -1.4531521
        %v3495 = vadd.f32 %v3479, -1.4531521
        %v3496 = vadd.f32 %v3480, -1.4531521
        %v3497 = vadd.f32 %v3481, -1.4531521
        %v3498 = vadd.f32 %v3482, -1.4531521
        %v3499 = vmul.f32 %v3483, %v3436
        %v3500 = vmul.f32 %v3484, %v3438
        %v3501 = vmul.f32 %v3485, %v3440
        %v3502 = vmul.f32 %v3486, %v3442
        %v3503 = vmul.f32 %v3487, %v3444
        %v3504 = vmul.f32 %v3488, %v3446
        %v3505 = vmul.f32 %v3489, %v3448
        %v3506 = vmul.f32 %v3490, %v3450
        %v3507 = vmul.f32 %v3491, %v3452
        %v3508 = vmul.f32 %v3492, %v3454
        %v3509 = vmul.f32 %v3493, %v3456
        %v3510 = vmul.f32 %v3494, %v3458
        %v3511 = vmul.f32 %v3495, %v3460
        %v3512 = vmul.f32 %v3496, %v3462
        %v3513 = vmul.f32 %v3497, %v3464
        %v3514 = vmul.f32 %v3498, %v3466
        %v3515 = vadd.f32 %v3499, 1.4214138
        %v3516 = vadd.f32 %v3500, 1.4214138
        %v3517 = vadd.f32 %v3501, 1.4214138
        %v3518 = vadd.f32 %v3502, 1.4214138
        %v3519 = vadd.f32 %v3503, 1.4214138
        %v3520 = vadd.f32 %v3504, 1.4214138
        %v3521 = vadd.f32 %v3505, 1.4214138
        %v3522 = vadd.f32 %v3506, 1.4214138
        %v3523 = vadd.f32 %v3507, 1.4214138
        %v3524 = vadd.f32 %v3508, 1.4214138
        %v3525 = vadd.f32 %v3509, 1.4214138
        %v3526 = vadd.f32 %v3510, 1.4214138
        %v3527 = vadd.f32 %v3511, 1.4214138
        %v3528 = vadd.f32 %v3512, 1.4214138
        %v3529 = vadd.f32 %v3513, 1.4214138
        %v3530 = vadd.f32 %v3514, 1.4214138
        %v3531 = vmul.f32 %v3515, %v3436
        %v3532 = vmul.f32 %v3516, %v3438
        %v3533 = vmul.f32 %v3517, %v3440
        %v3534 = vmul.f32 %v3518, %v3442
        %v3535 = vmul.f32 %v3519, %v3444
        %v3536 = vmul.f32 %v3520, %v3446
        %v3537 = vmul.f32 %v3521, %v3448
        %v3538 = vmul.f32 %v3522, %v3450
        %v3539 = vmul.f32 %v3523, %v3452
        %v3540 = vmul.f32 %v3524, %v3454
        %v3541 = vmul.f32 %v3525, %v3456
        %v3542 = vmul.f32 %v3526, %v3458
        %v3543 = vmul.f32 %v3527, %v3460
        %v3544 = vmul.f32 %v3528, %v3462
        %v3545 = vmul.f32 %v3529, %v3464
        %v3546 = vmul.f32 %v3530, %v3466
        %v3547 = vadd.f32 %v3531, -0.28449672
        %v3548 = vadd.f32 %v3532, -0.28449672
        %v3549 = vadd.f32 %v3533, -0.28449672
        %v3550 = vadd.f32 %v3534, -0.28449672
        %v3551 = vadd.f32 %v3535, -0.28449672
        %v3552 = vadd.f32 %v3536, -0.28449672
        %v3553 = vadd.f32 %v3537, -0.28449672
        %v3554 = vadd.f32 %v3538, -0.28449672
        %v3555 = vadd.f32 %v3539, -0.28449672
        %v3556 = vadd.f32 %v3540, -0.28449672
        %v3557 = vadd.f32 %v3541, -0.28449672
        %v3558 = vadd.f32 %v3542, -0.28449672
        %v3559 = vadd.f32 %v3543, -0.28449672
        %v3560 = vadd.f32 %v3544, -0.28449672
        %v3561 = vadd.f32 %v3545, -0.28449672
        %v3562 = vadd.f32 %v3546, -0.28449672
        %v3563 = vmul.f32 %v3547, %v3436
        %v3564 = vmul.f32 %v3548, %v3438
        %v3565 = vmul.f32 %v3549, %v3440
        %v3566 = vmul.f32 %v3550, %v3442
        %v3567 = vmul.f32 %v3551, %v3444
        %v3568 = vmul.f32 %v3552, %v3446
        %v3569 = vmul.f32 %v3553, %v3448
        %v3570 = vmul.f32 %v3554, %v3450
        %v3571 = vmul.f32 %v3555, %v3452
        %v3572 = vmul.f32 %v3556, %v3454
        %v3573 = vmul.f32 %v3557, %v3456
        %v3574 = vmul.f32 %v3558, %v3458
        %v3575 = vmul.f32 %v3559, %v3460
        %v3576 = vmul.f32 %v3560, %v3462
        %v3577 = vmul.f32 %v3561, %v3464
        %v3578 = vmul.f32 %v3562, %v3466
        %v3579 = vadd.f32 %v3563, 0.2548296
        %v3580 = vadd.f32 %v3564, 0.2548296
        %v3581 = vadd.f32 %v3565, 0.2548296
        %v3582 = vadd.f32 %v3566, 0.2548296
        %v3583 = vadd.f32 %v3567, 0.2548296
        %v3584 = vadd.f32 %v3568, 0.2548296
        %v3585 = vadd.f32 %v3569, 0.2548296
        %v3586 = vadd.f32 %v3570, 0.2548296
        %v3587 = vadd.f32 %v3571, 0.2548296
        %v3588 = vadd.f32 %v3572, 0.2548296
        %v3589 = vadd.f32 %v3573, 0.2548296
        %v3590 = vadd.f32 %v3574, 0.2548296
        %v3591 = vadd.f32 %v3575, 0.2548296
        %v3592 = vadd.f32 %v3576, 0.2548296
        %v3593 = vadd.f32 %v3577, 0.2548296
        %v3594 = vadd.f32 %v3578, 0.2548296
        %v3595 = vmul.f32 %v3579, %v3436
        %v3596 = vmul.f32 %v3580, %v3438
        %v3597 = vmul.f32 %v3581, %v3440
        %v3598 = vmul.f32 %v3582, %v3442
        %v3599 = vmul.f32 %v3583, %v3444
        %v3600 = vmul.f32 %v3584, %v3446
        %v3601 = vmul.f32 %v3585, %v3448
        %v3602 = vmul.f32 %v3586, %v3450
        %v3603 = vmul.f32 %v3587, %v3452
        %v3604 = vmul.f32 %v3588, %v3454
        %v3605 = vmul.f32 %v3589, %v3456
        %v3606 = vmul.f32 %v3590, %v3458
        %v3607 = vmul.f32 %v3591, %v3460
        %v3608 = vmul.f32 %v3592, %v3462
        %v3609 = vmul.f32 %v3593, %v3464
        %v3610 = vmul.f32 %v3594, %v3466
        %v3611 = vsub.f32 0.0, %v3387
        %v3612 = vsub.f32 0.0, %v3388
        %v3613 = vsub.f32 0.0, %v3389
        %v3614 = vsub.f32 0.0, %v3390
        %v3615 = vsub.f32 0.0, %v3391
        %v3616 = vsub.f32 0.0, %v3392
        %v3617 = vsub.f32 0.0, %v3393
        %v3618 = vsub.f32 0.0, %v3394
        %v3619 = vsub.f32 0.0, %v3395
        %v3620 = vsub.f32 0.0, %v3396
        %v3621 = vsub.f32 0.0, %v3397
        %v3622 = vsub.f32 0.0, %v3398
        %v3623 = vsub.f32 0.0, %v3399
        %v3624 = vsub.f32 0.0, %v3400
        %v3625 = vsub.f32 0.0, %v3401
        %v3626 = vsub.f32 0.0, %v3402
        %v3627 = vmul.f32 %v3611, %v3387
        %v3628 = vmul.f32 %v3612, %v3388
        %v3629 = vmul.f32 %v3613, %v3389
        %v3630 = vmul.f32 %v3614, %v3390
        %v3631 = vmul.f32 %v3615, %v3391
        %v3632 = vmul.f32 %v3616, %v3392
        %v3633 = vmul.f32 %v3617, %v3393
        %v3634 = vmul.f32 %v3618, %v3394
        %v3635 = vmul.f32 %v3619, %v3395
        %v3636 = vmul.f32 %v3620, %v3396
        %v3637 = vmul.f32 %v3621, %v3397
        %v3638 = vmul.f32 %v3622, %v3398
        %v3639 = vmul.f32 %v3623, %v3399
        %v3640 = vmul.f32 %v3624, %v3400
        %v3641 = vmul.f32 %v3625, %v3401
        %v3642 = vmul.f32 %v3626, %v3402
        %v3643 = vmul.f32 %v3627, 1.442695
        %v3644 = vpow.pop %v3643
        %v3645 = vmul.f32 %v3628, 1.442695
        %v3646 = vpow.pop %v3645
        %v3647 = vmul.f32 %v3629, 1.442695
        %v3648 = vpow.pop %v3647
        %v3649 = vmul.f32 %v3630, 1.442695
        %v3650 = vpow.pop %v3649
        %v3651 = vmul.f32 %v3631, 1.442695
        %v3652 = vpow.pop %v3651
        %v3653 = vmul.f32 %v3632, 1.442695
        %v3654 = vpow.pop %v3653
        %v3655 = vmul.f32 %v3633, 1.442695
        %v3656 = vpow.pop %v3655
        %v3657 = vmul.f32 %v3634, 1.442695
        %v3658 = vpow.pop %v3657
        %v3659 = vmul.f32 %v3635, 1.442695
        %v3660 = vpow.pop %v3659
        %v3661 = vmul.f32 %v3636, 1.442695
        %v3662 = vpow.pop %v3661
        %v3663 = vmul.f32 %v3637, 1.442695
        %v3664 = vpow.pop %v3663
        %v3665 = vmul.f32 %v3638, 1.442695
        %v3666 = vpow.pop %v3665
        %v3667 = vmul.f32 %v3639, 1.442695
        %v3668 = vpow.pop %v3667
        %v3669 = vmul.f32 %v3640, 1.442695
        %v3670 = vpow.pop %v3669
        %v3671 = vmul.f32 %v3641, 1.442695
        %v3672 = vpow.pop %v3671
        %v3673 = vmul.f32 %v3642, 1.442695
        %v3674 = vpow.pop %v3673
        %v3675 = vmul.f32 %v3595, %v3644
        %v3676 = vmul.f32 %v3596, %v3646
        %v3677 = vmul.f32 %v3597, %v3648
        %v3678 = vmul.f32 %v3598, %v3650
        %v3679 = vmul.f32 %v3599, %v3652
        %v3680 = vmul.f32 %v3600, %v3654
        %v3681 = vmul.f32 %v3601, %v3656
        %v3682 = vmul.f32 %v3602, %v3658
        %v3683 = vmul.f32 %v3603, %v3660
        %v3684 = vmul.f32 %v3604, %v3662
        %v3685 = vmul.f32 %v3605, %v3664
        %v3686 = vmul.f32 %v3606, %v3666
        %v3687 = vmul.f32 %v3607, %v3668
        %v3688 = vmul.f32 %v3608, %v3670
        %v3689 = vmul.f32 %v3609, %v3672
        %v3690 = vmul.f32 %v3610, %v3674
        %v3691 = vsub.f32 1.0, %v3675
        %v3692 = vsub.f32 1.0, %v3676
        %v3693 = vsub.f32 1.0, %v3677
        %v3694 = vsub.f32 1.0, %v3678
        %v3695 = vsub.f32 1.0, %v3679
        %v3696 = vsub.f32 1.0, %v3680
        %v3697 = vsub.f32 1.0, %v3681
        %v3698 = vsub.f32 1.0, %v3682
        %v3699 = vsub.f32 1.0, %v3683
        %v3700 = vsub.f32 1.0, %v3684
        %v3701 = vsub.f32 1.0, %v3685
        %v3702 = vsub.f32 1.0, %v3686
        %v3703 = vsub.f32 1.0, %v3687
        %v3704 = vsub.f32 1.0, %v3688
        %v3705 = vsub.f32 1.0, %v3689
        %v3706 = vsub.f32 1.0, %v3690
        %v3707 = vmul.f32 %v3371, %v3691
        %v3708 = vmul.f32 %v3372, %v3692
        %v3709 = vmul.f32 %v3373, %v3693
        %v3710 = vmul.f32 %v3374, %v3694
        %v3711 = vmul.f32 %v3375, %v3695
        %v3712 = vmul.f32 %v3376, %v3696
        %v3713 = vmul.f32 %v3377, %v3697
        %v3714 = vmul.f32 %v3378, %v3698
        %v3715 = vmul.f32 %v3379, %v3699
        %v3716 = vmul.f32 %v3380, %v3700
        %v3717 = vmul.f32 %v3381, %v3701
        %v3718 = vmul.f32 %v3382, %v3702
        %v3719 = vmul.f32 %v3383, %v3703
        %v3720 = vmul.f32 %v3384, %v3704
        %v3721 = vmul.f32 %v3385, %v3705
        %v3722 = vmul.f32 %v3386, %v3706
        %v3723 = vadd.f32 %v3707, 1.0
        %v3724 = vadd.f32 %v3708, 1.0
        %v3725 = vadd.f32 %v3709, 1.0
        %v3726 = vadd.f32 %v3710, 1.0
        %v3727 = vadd.f32 %v3711, 1.0
        %v3728 = vadd.f32 %v3712, 1.0
        %v3729 = vadd.f32 %v3713, 1.0
        %v3730 = vadd.f32 %v3714, 1.0
        %v3731 = vadd.f32 %v3715, 1.0
        %v3732 = vadd.f32 %v3716, 1.0
        %v3733 = vadd.f32 %v3717, 1.0
        %v3734 = vadd.f32 %v3718, 1.0
        %v3735 = vadd.f32 %v3719, 1.0
        %v3736 = vadd.f32 %v3720, 1.0
        %v3737 = vadd.f32 %v3721, 1.0
        %v3738 = vadd.f32 %v3722, 1.0
        %v3739 = vmul.f32 %v3323, %v3723
        %v3740 = vmul.f32 %v3324, %v3724
        %v3741 = vmul.f32 %v3325, %v3725
        %v3742 = vmul.f32 %v3326, %v3726
        %v3743 = vmul.f32 %v3327, %v3727
        %v3744 = vmul.f32 %v3328, %v3728
        %v3745 = vmul.f32 %v3329, %v3729
        %v3746 = vmul.f32 %v3330, %v3730
        %v3747 = vmul.f32 %v3331, %v3731
        %v3748 = vmul.f32 %v3332, %v3732
        %v3749 = vmul.f32 %v3333, %v3733
        %v3750 = vmul.f32 %v3334, %v3734
        %v3751 = vmul.f32 %v3335, %v3735
        %v3752 = vmul.f32 %v3336, %v3736
        %v3753 = vmul.f32 %v3337, %v3737
        %v3754 = vmul.f32 %v3338, %v3738
        %v3755 = vpack.c.bf16 %v3743, %v3739
        %v3756 = vpack.c.bf16 %v3744, %v3740
        %v3757 = vpack.c.bf16 %v3745, %v3741
        %v3758 = vpack.c.bf16 %v3746, %v3742
        %v3759 = vpack.c.bf16 %v3751, %v3747
        %v3760 = vpack.c.bf16 %v3752, %v3748
        %v3761 = vpack.c.bf16 %v3753, %v3749
        %v3762 = vpack.c.bf16 %v3754, %v3750
        %v3763 = vld [vmem:[#allocation20] sm:$0xf]
        %v3764 = vld [vmem:[#allocation20 + $0x4] sm:$0xf]
        %v3765 = vld [vmem:[#allocation20 + $0x8] sm:$0xf]
        %v3766 = vld [vmem:[#allocation20 + $0xc] sm:$0xf]
        %v3767 = vld [vmem:[#allocation20 + $0x10] sm:$0xf]
        %v3768 = vld [vmem:[#allocation20 + $0x14] sm:$0xf]
        %v3769 = vld [vmem:[#allocation20 + $0x18] sm:$0xf]
        %v3770 = vld [vmem:[#allocation20 + $0x1c] sm:$0xf]
        %v3771 = vld [vmem:[#allocation20 + $0x20] sm:$0xf]
        %v3772 = vld [vmem:[#allocation20 + $0x24] sm:$0xf]
        %v3773 = vld [vmem:[#allocation20 + $0x28] sm:$0xf]
        %v3774 = vld [vmem:[#allocation20 + $0x2c] sm:$0xf]
        %v3775 = vld [vmem:[#allocation20 + $0x30] sm:$0xf]
        %v3776 = vld [vmem:[#allocation20 + $0x34] sm:$0xf]
        %v3777 = vld [vmem:[#allocation20 + $0x38] sm:$0xf]
        %v3778 = vld [vmem:[#allocation20 + $0x3c] sm:$0xf]
        %v3779 = vld [vmem:[#allocation20 + $0x40] sm:$0xf]
        %v3780 = vld [vmem:[#allocation20 + $0x44] sm:$0xf]
        %v3781 = vld [vmem:[#allocation20 + $0x48] sm:$0xf]
        %v3782 = vld [vmem:[#allocation20 + $0x4c] sm:$0xf]
        %v3783 = vld [vmem:[#allocation20 + $0x50] sm:$0xf]
        %v3784 = vld [vmem:[#allocation20 + $0x54] sm:$0xf]
        %v3785 = vld [vmem:[#allocation20 + $0x58] sm:$0xf]
        %v3786 = vld [vmem:[#allocation20 + $0x5c] sm:$0xf]
        %v3787 = vld [vmem:[#allocation20 + $0x60] sm:$0xf]
        %v3788 = vld [vmem:[#allocation20 + $0x64] sm:$0xf]
        %v3789 = vld [vmem:[#allocation20 + $0x68] sm:$0xf]
        %v3790 = vld [vmem:[#allocation20 + $0x6c] sm:$0xf]
        %v3791 = vld [vmem:[#allocation20 + $0x70] sm:$0xf]
        %v3792 = vld [vmem:[#allocation20 + $0x74] sm:$0xf]
        %v3793 = vld [vmem:[#allocation20 + $0x78] sm:$0xf]
        %v3794 = vld [vmem:[#allocation20 + $0x7c] sm:$0xf]
        %v3795 = vld [vmem:[#allocation20 + $0x80] sm:$0xf]
        %v3796 = vld [vmem:[#allocation20 + $0x84] sm:$0xf]
        %v3797 = vld [vmem:[#allocation20 + $0x88] sm:$0xf]
        %v3798 = vld [vmem:[#allocation20 + $0x8c] sm:$0xf]
        %v3799 = vld [vmem:[#allocation20 + $0x90] sm:$0xf]
        %v3800 = vld [vmem:[#allocation20 + $0x94] sm:$0xf]
        %v3801 = vld [vmem:[#allocation20 + $0x98] sm:$0xf]
        %v3802 = vld [vmem:[#allocation20 + $0x9c] sm:$0xf]
        %v3803 = vld [vmem:[#allocation20 + $0xa0] sm:$0xf]
        %v3804 = vld [vmem:[#allocation20 + $0xa4] sm:$0xf]
        %v3805 = vld [vmem:[#allocation20 + $0xa8] sm:$0xf]
        %v3806 = vld [vmem:[#allocation20 + $0xac] sm:$0xf]
        %v3807 = vld [vmem:[#allocation20 + $0xb0] sm:$0xf]
        %v3808 = vld [vmem:[#allocation20 + $0xb4] sm:$0xf]
        %v3809 = vld [vmem:[#allocation20 + $0xb8] sm:$0xf]
        %v3810 = vld [vmem:[#allocation20 + $0xbc] sm:$0xf]
        %v3811 = vld [vmem:[#allocation20 + $0xc0] sm:$0xf]
        %v3812 = vld [vmem:[#allocation20 + $0xc4] sm:$0xf]
        %v3813 = vld [vmem:[#allocation20 + $0xc8] sm:$0xf]
        %v3814 = vld [vmem:[#allocation20 + $0xcc] sm:$0xf]
        %v3815 = vld [vmem:[#allocation20 + $0xd0] sm:$0xf]
        %v3816 = vld [vmem:[#allocation20 + $0xd4] sm:$0xf]
        %v3817 = vld [vmem:[#allocation20 + $0xd8] sm:$0xf]
        %v3818 = vld [vmem:[#allocation20 + $0xdc] sm:$0xf]
        %v3819 = vld [vmem:[#allocation20 + $0xe0] sm:$0xf]
        %v3820 = vld [vmem:[#allocation20 + $0xe4] sm:$0xf]
        %v3821 = vld [vmem:[#allocation20 + $0xe8] sm:$0xf]
        %v3822 = vld [vmem:[#allocation20 + $0xec] sm:$0xf]
        %v3823 = vld [vmem:[#allocation20 + $0xf0] sm:$0xf]
        %v3824 = vld [vmem:[#allocation20 + $0xf4] sm:$0xf]
        %v3825 = vld [vmem:[#allocation20 + $0xf8] sm:$0xf]
        %v3826 = vld [vmem:[#allocation20 + $0xfc] sm:$0xf]
        %v3891 = vunpack.c.l.b16 %v3763
        %v3892 = vunpack.c.l.b16 %v3764
        %v3893 = vunpack.c.l.b16 %v3765
        %v3894 = vunpack.c.l.b16 %v3766
        %v3895 = vunpack.c.l.b16 %v3767
        %v3896 = vunpack.c.l.b16 %v3768
        %v3897 = vunpack.c.l.b16 %v3769
        %v3898 = vunpack.c.l.b16 %v3770
        %v3899 = vunpack.c.l.b16 %v3771
        %v3900 = vunpack.c.l.b16 %v3772
        %v3901 = vunpack.c.l.b16 %v3773
        %v3902 = vunpack.c.l.b16 %v3774
        %v3903 = vunpack.c.l.b16 %v3775
        %v3904 = vunpack.c.l.b16 %v3776
        %v3905 = vunpack.c.l.b16 %v3777
        %v3906 = vunpack.c.l.b16 %v3778
        %v3907 = vunpack.c.l.b16 %v3779
        %v3908 = vunpack.c.l.b16 %v3780
        %v3909 = vunpack.c.l.b16 %v3781
        %v3910 = vunpack.c.l.b16 %v3782
        %v3911 = vunpack.c.l.b16 %v3783
        %v3912 = vunpack.c.l.b16 %v3784
        %v3913 = vunpack.c.l.b16 %v3785
        %v3914 = vunpack.c.l.b16 %v3786
        %v3915 = vunpack.c.l.b16 %v3787
        %v3916 = vunpack.c.l.b16 %v3788
        %v3917 = vunpack.c.l.b16 %v3789
        %v3918 = vunpack.c.l.b16 %v3790
        %v3919 = vunpack.c.l.b16 %v3791
        %v3920 = vunpack.c.l.b16 %v3792
        %v3921 = vunpack.c.l.b16 %v3793
        %v3922 = vunpack.c.l.b16 %v3794
        %v3923 = vunpack.c.l.b16 %v3795
        %v3924 = vunpack.c.l.b16 %v3796
        %v3925 = vunpack.c.l.b16 %v3797
        %v3926 = vunpack.c.l.b16 %v3798
        %v3927 = vunpack.c.l.b16 %v3799
        %v3928 = vunpack.c.l.b16 %v3800
        %v3929 = vunpack.c.l.b16 %v3801
        %v3930 = vunpack.c.l.b16 %v3802
        %v3931 = vunpack.c.l.b16 %v3803
        %v3932 = vunpack.c.l.b16 %v3804
        %v3933 = vunpack.c.l.b16 %v3805
        %v3934 = vunpack.c.l.b16 %v3806
        %v3935 = vunpack.c.l.b16 %v3807
        %v3936 = vunpack.c.l.b16 %v3808
        %v3937 = vunpack.c.l.b16 %v3809
        %v3938 = vunpack.c.l.b16 %v3810
        %v3939 = vunpack.c.l.b16 %v3811
        %v3940 = vunpack.c.l.b16 %v3812
        %v3941 = vunpack.c.l.b16 %v3813
        %v3942 = vunpack.c.l.b16 %v3814
        %v3943 = vunpack.c.l.b16 %v3815
        %v3944 = vunpack.c.l.b16 %v3816
        %v3945 = vunpack.c.l.b16 %v3817
        %v3946 = vunpack.c.l.b16 %v3818
        %v3947 = vunpack.c.l.b16 %v3819
        %v3948 = vunpack.c.l.b16 %v3820
        %v3949 = vunpack.c.l.b16 %v3821
        %v3950 = vunpack.c.l.b16 %v3822
        %v3951 = vunpack.c.l.b16 %v3823
        %v3952 = vunpack.c.l.b16 %v3824
        %v3953 = vunpack.c.l.b16 %v3825
        %v3954 = vunpack.c.l.b16 %v3826
        %v3955 = vpack.c.b16 %v3892, %v3891
        %v3956 = vpack.c.b16 %v3894, %v3893
        %v3957 = vpack.c.b16 %v3896, %v3895
        %v3958 = vpack.c.b16 %v3898, %v3897
        %v3959 = vpack.c.b16 %v3900, %v3899
        %v3960 = vpack.c.b16 %v3902, %v3901
        %v3961 = vpack.c.b16 %v3904, %v3903
        %v3962 = vpack.c.b16 %v3906, %v3905
        %v3963 = vpack.c.b16 %v3908, %v3907
        %v3964 = vpack.c.b16 %v3910, %v3909
        %v3965 = vpack.c.b16 %v3912, %v3911
        %v3966 = vpack.c.b16 %v3914, %v3913
        %v3967 = vpack.c.b16 %v3916, %v3915
        %v3968 = vpack.c.b16 %v3918, %v3917
        %v3969 = vpack.c.b16 %v3920, %v3919
        %v3970 = vpack.c.b16 %v3922, %v3921
        %v3971 = vpack.c.b16 %v3924, %v3923
        %v3972 = vpack.c.b16 %v3926, %v3925
        %v3973 = vpack.c.b16 %v3928, %v3927
        %v3974 = vpack.c.b16 %v3930, %v3929
        %v3975 = vpack.c.b16 %v3932, %v3931
        %v3976 = vpack.c.b16 %v3934, %v3933
        %v3977 = vpack.c.b16 %v3936, %v3935
        %v3978 = vpack.c.b16 %v3938, %v3937
        %v3979 = vpack.c.b16 %v3940, %v3939
        %v3980 = vpack.c.b16 %v3942, %v3941
        %v3981 = vpack.c.b16 %v3944, %v3943
        %v3982 = vpack.c.b16 %v3946, %v3945
        %v3983 = vpack.c.b16 %v3948, %v3947
        %v3984 = vpack.c.b16 %v3950, %v3949
        %v3985 = vpack.c.b16 %v3952, %v3951
        %v3986 = vpack.c.b16 %v3954, %v3953
        %4019 = vmatprep.subr.bf16.mxu0 0
        %4020 = vmatpush1.bf16.msra.mxu0 %v3955
        %4021 = vmatprep.subr.bf16.mxu0 0
        %4022 = vmatpush1.bf16.msra.mxu0 %v3956
        %4023 = vmatprep.subr.bf16.mxu0 0
        %4024 = vmatpush1.bf16.msra.mxu0 %v3957
        %4025 = vmatprep.subr.bf16.mxu0 0
        %4026 = vmatpush1.bf16.msra.mxu0 %v3958
        %4027 = vmatprep.subr.bf16.mxu0 0
        %4028 = vmatpush1.bf16.msra.mxu0 %v3959
        %4029 = vmatprep.subr.bf16.mxu0 0
        %4030 = vmatpush1.bf16.msra.mxu0 %v3960
        %4031 = vmatprep.subr.bf16.mxu0 0
        %4032 = vmatpush1.bf16.msra.mxu0 %v3961
        %4033 = vmatprep.subr.bf16.mxu0 0
        %4034 = vmatpush1.bf16.msra.mxu0 %v3962
        %4035 = vmatprep.subr.bf16.mxu0 0
        %4036 = vmatpush1.bf16.msra.mxu0 %v3963
        %4037 = vmatprep.subr.bf16.mxu0 0
        %4038 = vmatpush1.bf16.msra.mxu0 %v3964
        %4039 = vmatprep.subr.bf16.mxu0 0
        %4040 = vmatpush1.bf16.msra.mxu0 %v3965
        %4041 = vmatprep.subr.bf16.mxu0 0
        %4042 = vmatpush1.bf16.msra.mxu0 %v3966
        %4043 = vmatprep.subr.bf16.mxu0 0
        %4044 = vmatpush1.bf16.msra.mxu0 %v3967
        %4045 = vmatprep.subr.bf16.mxu0 0
        %4046 = vmatpush1.bf16.msra.mxu0 %v3968
        %4047 = vmatprep.subr.bf16.mxu0 0
        %4048 = vmatpush1.bf16.msra.mxu0 %v3969
        %4049 = vmatprep.subr.bf16.mxu0 0
        %4050 = vmatpush1.bf16.msra.mxu0 %v3970
        %4051 = vmatprep.mubr.bf16.mxu0 %v3756
        %4052 = vmatmul.mubr.bf16.gmra.mrb[0].mxu0 %v3755
        %v4053 = vpop.f32.mrb[0].mxu0
        %v4054 = vadd.f32 0.0, %v4053
        %v4055 = vpop.f32.mrb[0].mxu0
        %v4056 = vpop.f32.mrb[0].mxu0
        %v4057 = vadd.f32 0.0, %v4056
        %v4058 = vpop.f32.mrb[0].mxu0
        %4059 = vmatprep.mubr.bf16.mxu0 %v3760
        %4060 = vmatmul.mubr.bf16.gmra.mrb[0].mxu0 %v3759
        %v4061 = vpop.f32.mrb[0].mxu0
        %v4062 = vadd.f32 0.0, %v4061
        %v4063 = vpop.f32.mrb[0].mxu0
        %v4064 = vpop.f32.mrb[0].mxu0
        %v4065 = vadd.f32 0.0, %v4064
        %v4066 = vpop.f32.mrb[0].mxu0
        %4067 = vdwg.mxu0
        %4068 = vmatprep.subr.bf16.mxu0 0
        %4069 = vmatpush1.bf16.msra.mxu0 %v3971
        %4070 = vmatprep.subr.bf16.mxu0 0
        %4071 = vmatpush1.bf16.msra.mxu0 %v3972
        %4072 = vmatprep.subr.bf16.mxu0 0
        %4073 = vmatpush1.bf16.msra.mxu0 %v3973
        %4074 = vmatprep.subr.bf16.mxu0 0
        %4075 = vmatpush1.bf16.msra.mxu0 %v3974
        %4076 = vmatprep.subr.bf16.mxu0 0
        %4077 = vmatpush1.bf16.msra.mxu0 %v3975
        %4078 = vmatprep.subr.bf16.mxu0 0
        %4079 = vmatpush1.bf16.msra.mxu0 %v3976
        %4080 = vmatprep.subr.bf16.mxu0 0
        %4081 = vmatpush1.bf16.msra.mxu0 %v3977
        %4082 = vmatprep.subr.bf16.mxu0 0
        %4083 = vmatpush1.bf16.msra.mxu0 %v3978
        %4084 = vmatprep.subr.bf16.mxu0 0
        %4085 = vmatpush1.bf16.msra.mxu0 %v3979
        %4086 = vmatprep.subr.bf16.mxu0 0
        %4087 = vmatpush1.bf16.msra.mxu0 %v3980
        %4088 = vmatprep.subr.bf16.mxu0 0
        %4089 = vmatpush1.bf16.msra.mxu0 %v3981
        %4090 = vmatprep.subr.bf16.mxu0 0
        %4091 = vmatpush1.bf16.msra.mxu0 %v3982
        %4092 = vmatprep.subr.bf16.mxu0 0
        %4093 = vmatpush1.bf16.msra.mxu0 %v3983
        %4094 = vmatprep.subr.bf16.mxu0 0
        %4095 = vmatpush1.bf16.msra.mxu0 %v3984
        %4096 = vmatprep.subr.bf16.mxu0 0
        %4097 = vmatpush1.bf16.msra.mxu0 %v3985
        %4098 = vmatprep.subr.bf16.mxu0 0
        %4099 = vmatpush1.bf16.msra.mxu0 %v3986
        %4100 = vmatprep.mubr.bf16.mxu0 %v3758
        %4101 = vmatmul.mubr.bf16.gmra.mrb[0].mxu0 %v3757
        %v4102 = vpop.f32.mrb[0].mxu0
        %v4103 = vadd.f32 %v4054, %v4102
        %v4104 = vpop.f32.mrb[0].mxu0
        %v4105 = vpop.f32.mrb[0].mxu0
        %v4106 = vadd.f32 %v4057, %v4105
        %v4107 = vpop.f32.mrb[0].mxu0
        %4108 = vmatprep.mubr.bf16.mxu0 %v3762
        %4109 = vmatmul.mubr.bf16.gmra.mrb[0].mxu0 %v3761
        %v4110 = vpop.f32.mrb[0].mxu0
        %v4111 = vadd.f32 %v4062, %v4110
        %v4112 = vpop.f32.mrb[0].mxu0
        %v4113 = vpop.f32.mrb[0].mxu0
        %v4114 = vadd.f32 %v4065, %v4113
        %v4115 = vpop.f32.mrb[0].mxu0
        %4116 = vdwg.mxu0
        %v4117 = vadd.f32 %v2931, %v4103
        %v4118 = vadd.f32 %v2932, %v4106
        %v4119 = vadd.f32 %v2933, %v4111
        %v4120 = vadd.f32 %v2934, %v4114
        %v4121 = vld [vmem:[#allocation22] sm:$0x1]
        %v4123 = vlaneseq
        %v4124 = vshrl.u32 %v4123, 7
        %v4125 = vsub.s32 0, %v4124
        %v4126 = vrot.slane %v4121, %v4125
        %v4128 = vadd.f32 %v4117, %v4126
        %v4129 = vadd.f32 %v4118, %v4126
        %v4130 = vadd.f32 %v4119, %v4126
        %v4131 = vadd.f32 %v4120, %v4126
        %4132 = vst [vmem:[%s616] sm:$0xff] %v4128
        %4133 = vst [vmem:[%s616 + $0x8] sm:$0xff] %v4129
        %4134 = vst [vmem:[%s616 + $0x10] sm:$0xff] %v4130
        %4135 = vst [vmem:[%s616 + $0x18] sm:$0xff] %v4131
        %s4136 = sand.u32 %s322, 1
        %s4137 = scalar_lea.sflag [#allocation4], %s4136
        %s4138 = sand.u32 %s322, 1
        %s4139 = smul.addr %s4138, 32
        %s4140 = scalar_lea.vmem [#allocation23], %s4139
        // Predicated region
        $region125: #{tpu_custom_call.1} parent=71 // pred_check
          %p4141 = pneg %p332
        $region126: #{tpu_custom_call.1} parent=71 // pred_check_branch
          %4143 = sbr.rel (%p4141) target = $region128
        $region127: #{tpu_custom_call.1} parent=71 // pred_region
          %s4144 = smul.u32 4, %s36
          %s4146 = ssub.s32 512, 512
          %4147 = vsyncadd %s4137, %s4146
          %s4148 = smul.addr %s4144, 128
          %s4149 = scalar_lea.hbm %s13, %s4148
          %s4150 = sshll.u32 %s4140, 4
          %s4151 = int_to_ptr.vmem [resolvable:$true] %s4150
          %4156 = dma.vmem_to_hbm [thread:$0]  %s4151, 512, %s4149, %s4137, 128, 128, 8
        $region128: #{tpu_custom_call.1} parent=71 // pred_fallthru
          _
      $region72: #{tpu_custom_call.1} parent=5 // pred_fallthru
        _
      %p4157 = scmp.le.s32.totalorder 2, %s31
      // Predicated region
      $region129: #{tpu_custom_call.1} parent=5 // pred_check
        %p4158 = pneg %p4157
      $region130: #{tpu_custom_call.1} parent=5 // pred_check_branch
        %4160 = sbr.rel (%p4158) target = $region132
      $region131: #{tpu_custom_call.1} parent=5 // pred_region
        %s4161 = ssub.s32 %s31, 2
        // Predicated region
        $region133: #{tpu_custom_call.1} parent=131 // pred_check
          %p4162 = pneg %p338
        $region134: #{tpu_custom_call.1} parent=131 // pred_check_branch
          %4164 = sbr.rel (%p4162) target = $region136
        $region135: #{tpu_custom_call.1} parent=131 // pred_region
          %s4165 = sand.u32 %s323, 1
          %s4166 = scalar_lea.sflag [#allocation4], %s4165
          %s4167 = sand.u32 %s323, 1
          %s4168 = smul.addr %s4167, 32
          %s4169 = scalar_lea.vmem [#allocation23], %s4168
          %4170 = dma.done %s4166, 512
        $region136: #{tpu_custom_call.1} parent=131 // pred_fallthru
          _
      $region132: #{tpu_custom_call.1} parent=5 // pred_fallthru
        _
    $region6: #{tpu_custom_call.1} parent=1 // loop_footer
      %s35 = sadd.s32 1, %s31
    $region7: #{tpu_custom_call.1} parent=1 // loop_footer_branch
      %30 = sbr.rel target = $region3
    $region8: #{tpu_custom_call.1} parent=1 // loop_exit
      _
    %4171 = vsyncpa [#allocation3], 1
    %s4172 = scalar_lea.sflag [#allocation3], 1
    %4173 = vsyncpa %s4172, 1
    %4174 = vsyncpa [#allocation6], 1
    %4175 = vsyncpa [#allocation9], 1
    %4176 = vsyncpa [#allocation12], 1
    %4177 = vsyncpa [#allocation15], 1
    %4178 = vsyncpa [#allocation18], 1
    %4179 = vsyncpa [#allocation21], 1
    %4180 = vsyncpa [#allocation4], 1
    %s4181 = scalar_lea.sflag [#allocation4], 1
    %4182 = vsyncpa %s4181, 1

// kernel: tpu_custom_call.1
$region0: #{tpu_custom_call.1}
  #allocation0 [shape = 'u32[]', space=smem, size = 0x4, offset = 0x4, fixed_abs, tag = 'smem constant byte address 0x4 - core index']
  #allocation1 [shape = 'u32[144,128]{1,0:T(1,128)}', space=vmem, size = 0x12000, scoped, tag = 'internal scratch']
  %s0 = inlined_call_operand.hbm [shape: f32[128,128], index: 0, kind: input, shape index: {}]
  %s1 = inlined_call_operand.hbm [shape: f32[1,128], index: 1, kind: input, shape index: {}]
  %s2 = inlined_call_operand.hbm [shape: f32[1,128], index: 2, kind: input, shape index: {}]
  %s3 = inlined_call_operand.hbm [shape: bf16[128,384], index: 3, kind: input, shape index: {}]
  %s4 = inlined_call_operand.hbm [shape: f32[1,384], index: 4, kind: input, shape index: {}]
  %s5 = inlined_call_operand.hbm [shape: bf16[128,128], index: 5, kind: input, shape index: {}]
  %s6 = inlined_call_operand.hbm [shape: f32[1,128], index: 6, kind: input, shape index: {}]
  %s7 = inlined_call_operand.hbm [shape: f32[1,128], index: 7, kind: input, shape index: {}]
  %s8 = inlined_call_operand.hbm [shape: f32[1,128], index: 8, kind: input, shape index: {}]
  %s9 = inlined_call_operand.hbm [shape: bf16[128,512], index: 9, kind: input, shape index: {}]
  %s10 = inlined_call_operand.hbm [shape: f32[1,512], index: 10, kind: input, shape index: {}]
  %s11 = inlined_call_operand.hbm [shape: bf16[512,128], index: 11, kind: input, shape index: {}]
  %s12 = inlined_call_operand.hbm [shape: f32[1,128], index: 12, kind: input, shape index: {}]
  %s13 = inlined_call_operand.hbm [shape: f32[128,128], index: 13, kind: output, shape index: {}]
  %s14 = sld [smem:[#allocation0]]
  $region137: #{tpu_custom_call.1} parent=0
    _
  %s16 = ssub.s32 1, %s14
  %s17 = scalar_select 0, %s16, %s14
  $region1: #{tpu_custom_call.1} parent=0
    #allocation2 [shape = 'u8[32768]{0}', space=vmem, size = 0x8000, scoped, tag = 'input window, operand 0']
    #allocation3 [shape = 's32[2]{0}', space=sflag, size = 0x8, scoped, tag = 'scoped memory for tpu_custom_call.1']
    #allocation4 [shape = 's32[2]{0}', space=sflag, size = 0x8, scoped, tag = 'scoped memory for tpu_custom_call.1']
    #allocation5 [shape = 'u8[512]{0}', space=vmem, size = 0x400, scoped, tag = 'input window, operand 1, single buffered']
    #allocation6 [shape = 's32[1]{0}', space=sflag, size = 0x4, scoped, tag = 'scoped memory for tpu_custom_call.1']
    #allocation7 [shape = 'u8[512]{0}', space=vmem, size = 0x400, scoped, tag = 'input window, operand 2, single buffered']
    #allocation8 [shape = 'u8[98304]{0}', space=vmem, size = 0x18000, scoped, tag = 'input window, operand 3, single buffered']
    #allocation9 [shape = 's32[1]{0}', space=sflag, size = 0x4, scoped, tag = 'scoped memory for tpu_custom_call.1']
    #allocation10 [shape = 'u8[1536]{0}', space=vmem, size = 0x800, scoped, tag = 'input window, operand 4, single buffered']
    #allocation11 [shape = 'u8[32768]{0}', space=vmem, size = 0x8000, scoped, tag = 'input window, operand 5, single buffered']
    #allocation12 [shape = 's32[1]{0}', space=sflag, size = 0x4, scoped, tag = 'scoped memory for tpu_custom_call.1']
    #allocation13 [shape = 'u8[512]{0}', space=vmem, size = 0x400, scoped, tag = 'input window, operand 6, single buffered']
    #allocation14 [shape = 'u8[512]{0}', space=vmem, size = 0x400, scoped, tag = 'input window, operand 7, single buffered']
    #allocation15 [shape = 's32[1]{0}', space=sflag, size = 0x4, scoped, tag = 'scoped memory for tpu_custom_call.1']
    #allocation16 [shape = 'u8[512]{0}', space=vmem, size = 0x400, scoped, tag = 'input window, operand 8, single buffered']
    #allocation17 [shape = 'u8[131072]{0}', space=vmem, size = 0x20000, scoped, tag = 'input window, operand 9, single buffered']
    #allocation18 [shape = 's32[1]{0}', space=sflag, size = 0x4, scoped, tag = 'scoped memory for tpu_custom_call.1']
    #allocation19 [shape = 'u8[2048]{0}', space=vmem, size = 0x800, scoped, tag = 'input window, operand 10, single buffered']
    #allocation20 [shape = 'u8[131072]{0}', space=vmem, size = 0x20000, scoped, tag = 'input window, operand 11, single buffered']
    #allocation21 [shape = 's32[1]{0}', space=sflag, size = 0x4, scoped, tag = 'scoped memory for tpu_custom_call.1']
    #allocation22 [shape = 'u8[512]{0}', space=vmem, size = 0x400, scoped, tag = 'input window, operand 12, single buffered']
    #allocation23 [shape = 'u8[32768]{0}', space=vmem, size = 0x8000, scoped, tag = 'output window, operand 0']
    %18 = vsyncpa [#allocation3], 0
    %s19 = scalar_lea.sflag [#allocation3], 1
    %20 = vsyncpa %s19, 0
    %21 = vsyncpa [#allocation6], 0
    %22 = vsyncpa [#allocation9], 0
    %23 = vsyncpa [#allocation12], 0
    %24 = vsyncpa [#allocation15], 0
    %25 = vsyncpa [#allocation18], 0
    %26 = vsyncpa [#allocation21], 0
    %27 = vsyncpa [#allocation4], 0
    %s28 = scalar_lea.sflag [#allocation4], 1
    %29 = vsyncpa %s28, 0
    loop: start=0, step=1, limit=6
    $region2: #{tpu_custom_call.1} parent=1 // loop_pre_header
      _
    $region3: #{tpu_custom_call.1} parent=1 // loop_header
      %s31 = sphi 0, %s35
      %p32 = scmp.ge.s32.totalorder %s31, 6
      %s41 = sphi 0, %s43
      %s44 = sphi 0, %s41
      %s45 = sphi 0, %s44
      %s61 = sphi 0, %s45
      %s65 = sphi 0, %s65
      %s67 = sphi 0, %s65
      %s68 = sphi 0, %s67
      %s82 = sphi 0, %s68
      %s86 = sphi 0, %s86
      %s88 = sphi 0, %s86
      %s89 = sphi 0, %s88
      %s103 = sphi 0, %s89
      %s107 = sphi 0, %s107
      %s109 = sphi 0, %s107
      %s110 = sphi 0, %s109
      %s124 = sphi 0, %s110
      %s128 = sphi 0, %s128
      %s130 = sphi 0, %s128
      %s131 = sphi 0, %s130
      %s145 = sphi 0, %s131
      %s149 = sphi 0, %s149
      %s151 = sphi 0, %s149
      %s152 = sphi 0, %s151
      %s166 = sphi 0, %s152
      %s170 = sphi 0, %s170
      %s172 = sphi 0, %s170
      %s173 = sphi 0, %s172
      %s187 = sphi 0, %s173
      %s191 = sphi 0, %s191
      %s193 = sphi 0, %s191
      %s194 = sphi 0, %s193
      %s208 = sphi 0, %s194
      %s212 = sphi 0, %s212
      %s214 = sphi 0, %s212
      %s215 = sphi 0, %s214
      %s229 = sphi 0, %s215
      %s233 = sphi 0, %s233
      %s235 = sphi 0, %s233
      %s236 = sphi 0, %s235
      %s250 = sphi 0, %s236
      %s254 = sphi 0, %s254
      %s256 = sphi 0, %s254
      %s257 = sphi 0, %s256
      %s271 = sphi 0, %s257
      %s275 = sphi 0, %s275
      %s277 = sphi 0, %s275
      %s278 = sphi 0, %s277
      %s292 = sphi 0, %s278
      %s296 = sphi 0, %s296
      %s298 = sphi 0, %s296
      %s299 = sphi 0, %s298
      %s313 = sphi 0, %s299
      %s319 = sphi 0, %s321
      %s322 = sphi 0, %s319
      %s323 = sphi 0, %s322
      %s339 = sphi 0, %s323
    $region4: #{tpu_custom_call.1} parent=1 // loop_header_branch
      %34 = sbr.rel (%p32) target = $region8
    $region5: #{tpu_custom_call.1} parent=1 // loop_body
      %s36 = ssub.s32 %s31, 1
      %s37 = ssub.s32 %s31, 2
      %s38 = sadd.s32 %s31, 1
      %s39 = ssub.s32 %s31, %s38
      %p40 = scmp.eq.s32.totalorder %s39, 0
      %s42 = sadd.s32 %s41, 1
      %s43 = scalar_select %p40, %s41, %s42
      %p46 = pneg %p40
      %p47 = scmp.eq.s32.totalorder %s31, 3
      %p48 = por %p46, %p47
      %p49 = scmp.ne.s32.totalorder %s41, %s44
      %p50 = scmp.eq.s32.totalorder %s31, 0
      %p51 = por %p49, %p50
      %p52 = scmp.ne.s32.totalorder %s41, %s44
      %p53 = scmp.eq.s32.totalorder %s36, 3
      %p54 = por %p52, %p53
      %p55 = scmp.ne.s32.totalorder %s44, %s45
      %p56 = scmp.eq.s32.totalorder %s36, 0
      %p57 = por %p55, %p56
      %p58 = scmp.ne.s32.totalorder %s44, %s45
      %p59 = scmp.eq.s32.totalorder %s37, 3
      %p60 = por %p58, %p59
      %p62 = scmp.ne.s32.totalorder %s45, %s61
      %p63 = scmp.eq.s32.totalorder %s37, 0
      %p64 = por %p62, %p63
      %s66 = sadd.s32 %s65, 1
      %p69 = scmp.eq.s32.totalorder %s31, 3
      %p70 = scmp.ne.s32.totalorder %s65, %s67
      %p71 = scmp.eq.s32.totalorder %s31, 0
      %p72 = por %p70, %p71
      %p73 = scmp.ne.s32.totalorder %s65, %s67
      %p74 = scmp.eq.s32.totalorder %s36, 3
      %p75 = por %p73, %p74
      %p76 = scmp.ne.s32.totalorder %s67, %s68
      %p77 = scmp.eq.s32.totalorder %s36, 0
      %p78 = por %p76, %p77
      %p79 = scmp.ne.s32.totalorder %s67, %s68
      %p80 = scmp.eq.s32.totalorder %s37, 3
      %p81 = por %p79, %p80
      %p83 = scmp.ne.s32.totalorder %s68, %s82
      %p84 = scmp.eq.s32.totalorder %s37, 0
      %p85 = por %p83, %p84
      %s87 = sadd.s32 %s86, 1
      %p90 = scmp.eq.s32.totalorder %s31, 3
      %p91 = scmp.ne.s32.totalorder %s86, %s88
      %p92 = scmp.eq.s32.totalorder %s31, 0
      %p93 = por %p91, %p92
      %p94 = scmp.ne.s32.totalorder %s86, %s88
      %p95 = scmp.eq.s32.totalorder %s36, 3
      %p96 = por %p94, %p95
      %p97 = scmp.ne.s32.totalorder %s88, %s89
      %p98 = scmp.eq.s32.totalorder %s36, 0
      %p99 = por %p97, %p98
      %p100 = scmp.ne.s32.totalorder %s88, %s89
      %p101 = scmp.eq.s32.totalorder %s37, 3
      %p102 = por %p100, %p101
      %p104 = scmp.ne.s32.totalorder %s89, %s103
      %p105 = scmp.eq.s32.totalorder %s37, 0
      %p106 = por %p104, %p105
      %s108 = sadd.s32 %s107, 1
      %p111 = scmp.eq.s32.totalorder %s31, 3
      %p112 = scmp.ne.s32.totalorder %s107, %s109
      %p113 = scmp.eq.s32.totalorder %s31, 0
      %p114 = por %p112, %p113
      %p115 = scmp.ne.s32.totalorder %s107, %s109
      %p116 = scmp.eq.s32.totalorder %s36, 3
      %p117 = por %p115, %p116
      %p118 = scmp.ne.s32.totalorder %s109, %s110
      %p119 = scmp.eq.s32.totalorder %s36, 0
      %p120 = por %p118, %p119
      %p121 = scmp.ne.s32.totalorder %s109, %s110
      %p122 = scmp.eq.s32.totalorder %s37, 3
      %p123 = por %p121, %p122
      %p125 = scmp.ne.s32.totalorder %s110, %s124
      %p126 = scmp.eq.s32.totalorder %s37, 0
      %p127 = por %p125, %p126
      %s129 = sadd.s32 %s128, 1
      %p132 = scmp.eq.s32.totalorder %s31, 3
      %p133 = scmp.ne.s32.totalorder %s128, %s130
      %p134 = scmp.eq.s32.totalorder %s31, 0
      %p135 = por %p133, %p134
      %p136 = scmp.ne.s32.totalorder %s128, %s130
      %p137 = scmp.eq.s32.totalorder %s36, 3
      %p138 = por %p136, %p137
      %p139 = scmp.ne.s32.totalorder %s130, %s131
      %p140 = scmp.eq.s32.totalorder %s36, 0
      %p141 = por %p139, %p140
      %p142 = scmp.ne.s32.totalorder %s130, %s131
      %p143 = scmp.eq.s32.totalorder %s37, 3
      %p144 = por %p142, %p143
      %p146 = scmp.ne.s32.totalorder %s131, %s145
      %p147 = scmp.eq.s32.totalorder %s37, 0
      %p148 = por %p146, %p147
      %s150 = sadd.s32 %s149, 1
      %p153 = scmp.eq.s32.totalorder %s31, 3
      %p154 = scmp.ne.s32.totalorder %s149, %s151
      %p155 = scmp.eq.s32.totalorder %s31, 0
      %p156 = por %p154, %p155
      %p157 = scmp.ne.s32.totalorder %s149, %s151
      %p158 = scmp.eq.s32.totalorder %s36, 3
      %p159 = por %p157, %p158
      %p160 = scmp.ne.s32.totalorder %s151, %s152
      %p161 = scmp.eq.s32.totalorder %s36, 0
      %p162 = por %p160, %p161
      %p163 = scmp.ne.s32.totalorder %s151, %s152
      %p164 = scmp.eq.s32.totalorder %s37, 3
      %p165 = por %p163, %p164
      %p167 = scmp.ne.s32.totalorder %s152, %s166
      %p168 = scmp.eq.s32.totalorder %s37, 0
      %p169 = por %p167, %p168
      %s171 = sadd.s32 %s170, 1
      %p174 = scmp.eq.s32.totalorder %s31, 3
      %p175 = scmp.ne.s32.totalorder %s170, %s172
      %p176 = scmp.eq.s32.totalorder %s31, 0
      %p177 = por %p175, %p176
      %p178 = scmp.ne.s32.totalorder %s170, %s172
      %p179 = scmp.eq.s32.totalorder %s36, 3
      %p180 = por %p178, %p179
      %p181 = scmp.ne.s32.totalorder %s172, %s173
      %p182 = scmp.eq.s32.totalorder %s36, 0
      %p183 = por %p181, %p182
      %p184 = scmp.ne.s32.totalorder %s172, %s173
      %p185 = scmp.eq.s32.totalorder %s37, 3
      %p186 = por %p184, %p185
      %p188 = scmp.ne.s32.totalorder %s173, %s187
      %p189 = scmp.eq.s32.totalorder %s37, 0
      %p190 = por %p188, %p189
      %s192 = sadd.s32 %s191, 1
      %p195 = scmp.eq.s32.totalorder %s31, 3
      %p196 = scmp.ne.s32.totalorder %s191, %s193
      %p197 = scmp.eq.s32.totalorder %s31, 0
      %p198 = por %p196, %p197
      %p199 = scmp.ne.s32.totalorder %s191, %s193
      %p200 = scmp.eq.s32.totalorder %s36, 3
      %p201 = por %p199, %p200
      %p202 = scmp.ne.s32.totalorder %s193, %s194
      %p203 = scmp.eq.s32.totalorder %s36, 0
      %p204 = por %p202, %p203
      %p205 = scmp.ne.s32.totalorder %s193, %s194
      %p206 = scmp.eq.s32.totalorder %s37, 3
      %p207 = por %p205, %p206
      %p209 = scmp.ne.s32.totalorder %s194, %s208
      %p210 = scmp.eq.s32.totalorder %s37, 0
      %p211 = por %p209, %p210
      %s213 = sadd.s32 %s212, 1
      %p216 = scmp.eq.s32.totalorder %s31, 3
      %p217 = scmp.ne.s32.totalorder %s212, %s214
      %p218 = scmp.eq.s32.totalorder %s31, 0
      %p219 = por %p217, %p218
      %p220 = scmp.ne.s32.totalorder %s212, %s214
      %p221 = scmp.eq.s32.totalorder %s36, 3
      %p222 = por %p220, %p221
      %p223 = scmp.ne.s32.totalorder %s214, %s215
      %p224 = scmp.eq.s32.totalorder %s36, 0
      %p225 = por %p223, %p224
      %p226 = scmp.ne.s32.totalorder %s214, %s215
      %p227 = scmp.eq.s32.totalorder %s37, 3
      %p228 = por %p226, %p227
      %p230 = scmp.ne.s32.totalorder %s215, %s229
      %p231 = scmp.eq.s32.totalorder %s37, 0
      %p232 = por %p230, %p231
      %s234 = sadd.s32 %s233, 1
      %p237 = scmp.eq.s32.totalorder %s31, 3
      %p238 = scmp.ne.s32.totalorder %s233, %s235
      %p239 = scmp.eq.s32.totalorder %s31, 0
      %p240 = por %p238, %p239
      %p241 = scmp.ne.s32.totalorder %s233, %s235
      %p242 = scmp.eq.s32.totalorder %s36, 3
      %p243 = por %p241, %p242
      %p244 = scmp.ne.s32.totalorder %s235, %s236
      %p245 = scmp.eq.s32.totalorder %s36, 0
      %p246 = por %p244, %p245
      %p247 = scmp.ne.s32.totalorder %s235, %s236
      %p248 = scmp.eq.s32.totalorder %s37, 3
      %p249 = por %p247, %p248
      %p251 = scmp.ne.s32.totalorder %s236, %s250
      %p252 = scmp.eq.s32.totalorder %s37, 0
      %p253 = por %p251, %p252
      %s255 = sadd.s32 %s254, 1
      %p258 = scmp.eq.s32.totalorder %s31, 3
      %p259 = scmp.ne.s32.totalorder %s254, %s256
      %p260 = scmp.eq.s32.totalorder %s31, 0
      %p261 = por %p259, %p260
      %p262 = scmp.ne.s32.totalorder %s254, %s256
      %p263 = scmp.eq.s32.totalorder %s36, 3
      %p264 = por %p262, %p263
      %p265 = scmp.ne.s32.totalorder %s256, %s257
      %p266 = scmp.eq.s32.totalorder %s36, 0
      %p267 = por %p265, %p266
      %p268 = scmp.ne.s32.totalorder %s256, %s257
      %p269 = scmp.eq.s32.totalorder %s37, 3
      %p270 = por %p268, %p269
      %p272 = scmp.ne.s32.totalorder %s257, %s271
      %p273 = scmp.eq.s32.totalorder %s37, 0
      %p274 = por %p272, %p273
      %s276 = sadd.s32 %s275, 1
      %p279 = scmp.eq.s32.totalorder %s31, 3
      %p280 = scmp.ne.s32.totalorder %s275, %s277
      %p281 = scmp.eq.s32.totalorder %s31, 0
      %p282 = por %p280, %p281
      %p283 = scmp.ne.s32.totalorder %s275, %s277
      %p284 = scmp.eq.s32.totalorder %s36, 3
      %p285 = por %p283, %p284
      %p286 = scmp.ne.s32.totalorder %s277, %s278
      %p287 = scmp.eq.s32.totalorder %s36, 0
      %p288 = por %p286, %p287
      %p289 = scmp.ne.s32.totalorder %s277, %s278
      %p290 = scmp.eq.s32.totalorder %s37, 3
      %p291 = por %p289, %p290
      %p293 = scmp.ne.s32.totalorder %s278, %s292
      %p294 = scmp.eq.s32.totalorder %s37, 0
      %p295 = por %p293, %p294
      %s297 = sadd.s32 %s296, 1
      %p300 = scmp.eq.s32.totalorder %s31, 3
      %p301 = scmp.ne.s32.totalorder %s296, %s298
      %p302 = scmp.eq.s32.totalorder %s31, 0
      %p303 = por %p301, %p302
      %p304 = scmp.ne.s32.totalorder %s296, %s298
      %p305 = scmp.eq.s32.totalorder %s36, 3
      %p306 = por %p304, %p305
      %p307 = scmp.ne.s32.totalorder %s298, %s299
      %p308 = scmp.eq.s32.totalorder %s36, 0
      %p309 = por %p307, %p308
      %p310 = scmp.ne.s32.totalorder %s298, %s299
      %p311 = scmp.eq.s32.totalorder %s37, 3
      %p312 = por %p310, %p311
      %p314 = scmp.ne.s32.totalorder %s299, %s313
      %p315 = scmp.eq.s32.totalorder %s37, 0
      %p316 = por %p314, %p315
      %s317 = ssub.s32 %s31, %s38
      %p318 = scmp.eq.s32.totalorder %s317, 0
      %s320 = sadd.s32 %s319, 1
      %s321 = scalar_select %p318, %s319, %s320
      %p324 = pneg %p318
      %p325 = scmp.eq.s32.totalorder %s31, 3
      %p326 = por %p324, %p325
      %p327 = scmp.ne.s32.totalorder %s319, %s322
      %p328 = scmp.eq.s32.totalorder %s31, 0
      %p329 = por %p327, %p328
      %p330 = scmp.ne.s32.totalorder %s319, %s322
      %p331 = scmp.eq.s32.totalorder %s36, 3
      %p332 = por %p330, %p331
      %p333 = scmp.ne.s32.totalorder %s322, %s323
      %p334 = scmp.eq.s32.totalorder %s36, 0
      %p335 = por %p333, %p334
      %p336 = scmp.ne.s32.totalorder %s322, %s323
      %p337 = scmp.eq.s32.totalorder %s37, 3
      %p338 = por %p336, %p337
      %p340 = scmp.ne.s32.totalorder %s323, %s339
      %p341 = scmp.eq.s32.totalorder %s37, 0
      %p342 = por %p340, %p341
      %p343 = scmp.le.s32.totalorder 1, %s31
      %p344 = scmp.lt.s32.totalorder %s31, 5
      %p345 = pnand %p343, %p344
      %p346 = pneg %p345
      // Predicated region
      $region9: #{tpu_custom_call.1} parent=5 // pred_check
        _
      $region10: #{tpu_custom_call.1} parent=5 // pred_check_branch
        %348 = sbr.rel (%p345) target = $region12
      $region11: #{tpu_custom_call.1} parent=5 // pred_region
        %s349 = ssub.s32 %s31, 1
        // Predicated region
        $region13: #{tpu_custom_call.1} parent=11 // pred_check
          %p350 = pneg %p78
        $region14: #{tpu_custom_call.1} parent=11 // pred_check_branch
          %352 = sbr.rel (%p350) target = $region16
        $region15: #{tpu_custom_call.1} parent=11 // pred_region
          %s354 = ssub.s32 16, 16
          %355 = vsyncadd [#allocation6], %s354
          %s357 = sshll.u32 [#allocation5], 4
          %s358 = int_to_ptr.vmem [resolvable:$true] %s357
          %360 = dma.hbm_to_vmem [thread:$0]  %s1, 16, %s358, [#allocation6]
        $region16: #{tpu_custom_call.1} parent=11 // pred_fallthru
          _
        // Predicated region
        $region17: #{tpu_custom_call.1} parent=11 // pred_check
          %p361 = pneg %p99
        $region18: #{tpu_custom_call.1} parent=11 // pred_check_branch
          %363 = sbr.rel (%p361) target = $region20
        $region19: #{tpu_custom_call.1} parent=11 // pred_region
          %s365 = ssub.s32 16, 16
          %366 = vsyncadd [#allocation6], %s365
          %s368 = sshll.u32 [#allocation7], 4
          %s369 = int_to_ptr.vmem [resolvable:$true] %s368
          %371 = dma.hbm_to_vmem [thread:$0]  %s2, 16, %s369, [#allocation6]
        $region20: #{tpu_custom_call.1} parent=11 // pred_fallthru
          _
        // Predicated region
        $region21: #{tpu_custom_call.1} parent=11 // pred_check
          %p372 = pneg %p120
        $region22: #{tpu_custom_call.1} parent=11 // pred_check_branch
          %374 = sbr.rel (%p372) target = $region24
        $region23: #{tpu_custom_call.1} parent=11 // pred_region
          %s376 = ssub.s32 3072, 3072
          %377 = vsyncadd [#allocation9], %s376
          %s378 = sshll.u32 [#allocation8], 4
          %s379 = int_to_ptr.vmem [resolvable:$true] %s378
          %384 = dma.hbm_to_vmem [thread:$0]  %s3, 3072, %s379, [#allocation9], 192, 192, 12
        $region24: #{tpu_custom_call.1} parent=11 // pred_fallthru
          _
        // Predicated region
        $region25: #{tpu_custom_call.1} parent=11 // pred_check
          %p385 = pneg %p141
        $region26: #{tpu_custom_call.1} parent=11 // pred_check_branch
          %387 = sbr.rel (%p385) target = $region28
        $region27: #{tpu_custom_call.1} parent=11 // pred_region
          %s389 = ssub.s32 48, 48
          %390 = vsyncadd [#allocation9], %s389
          %s392 = sshll.u32 [#allocation10], 4
          %s393 = int_to_ptr.vmem [resolvable:$true] %s392
          %395 = dma.hbm_to_vmem [thread:$0]  %s4, 48, %s393, [#allocation9]
        $region28: #{tpu_custom_call.1} parent=11 // pred_fallthru
          _
        // Predicated region
        $region29: #{tpu_custom_call.1} parent=11 // pred_check
          %p396 = pneg %p162
        $region30: #{tpu_custom_call.1} parent=11 // pred_check_branch
          %398 = sbr.rel (%p396) target = $region32
        $region31: #{tpu_custom_call.1} parent=11 // pred_region
          %s400 = ssub.s32 1024, 1024
          %401 = vsyncadd [#allocation12], %s400
          %s402 = sshll.u32 [#allocation11], 4
          %s403 = int_to_ptr.vmem [resolvable:$true] %s402
          %408 = dma.hbm_to_vmem [thread:$0]  %s5, 1024, %s403, [#allocation12], 64, 64, 4
        $region32: #{tpu_custom_call.1} parent=11 // pred_fallthru
          _
        // Predicated region
        $region33: #{tpu_custom_call.1} parent=11 // pred_check
          %p409 = pneg %p183
        $region34: #{tpu_custom_call.1} parent=11 // pred_check_branch
          %411 = sbr.rel (%p409) target = $region36
        $region35: #{tpu_custom_call.1} parent=11 // pred_region
          %s413 = ssub.s32 16, 16
          %414 = vsyncadd [#allocation12], %s413
          %s416 = sshll.u32 [#allocation13], 4
          %s417 = int_to_ptr.vmem [resolvable:$true] %s416
          %419 = dma.hbm_to_vmem [thread:$0]  %s6, 16, %s417, [#allocation12]
        $region36: #{tpu_custom_call.1} parent=11 // pred_fallthru
          _
        // Predicated region
        $region37: #{tpu_custom_call.1} parent=11 // pred_check
          %p420 = pneg %p204
        $region38: #{tpu_custom_call.1} parent=11 // pred_check_branch
          %422 = sbr.rel (%p420) target = $region40
        $region39: #{tpu_custom_call.1} parent=11 // pred_region
          %s424 = ssub.s32 16, 16
          %425 = vsyncadd [#allocation15], %s424
          %s427 = sshll.u32 [#allocation14], 4
          %s428 = int_to_ptr.vmem [resolvable:$true] %s427
          %430 = dma.hbm_to_vmem [thread:$0]  %s7, 16, %s428, [#allocation15]
        $region40: #{tpu_custom_call.1} parent=11 // pred_fallthru
          _
        // Predicated region
        $region41: #{tpu_custom_call.1} parent=11 // pred_check
          %p431 = pneg %p225
        $region42: #{tpu_custom_call.1} parent=11 // pred_check_branch
          %433 = sbr.rel (%p431) target = $region44
        $region43: #{tpu_custom_call.1} parent=11 // pred_region
          %s435 = ssub.s32 16, 16
          %436 = vsyncadd [#allocation15], %s435
          %s438 = sshll.u32 [#allocation16], 4
          %s439 = int_to_ptr.vmem [resolvable:$true] %s438
          %441 = dma.hbm_to_vmem [thread:$0]  %s8, 16, %s439, [#allocation15]
        $region44: #{tpu_custom_call.1} parent=11 // pred_fallthru
          _
        // Predicated region
        $region45: #{tpu_custom_call.1} parent=11 // pred_check
          %p442 = pneg %p246
        $region46: #{tpu_custom_call.1} parent=11 // pred_check_branch
          %444 = sbr.rel (%p442) target = $region48
        $region47: #{tpu_custom_call.1} parent=11 // pred_region
          %s446 = ssub.s32 4096, 4096
          %447 = vsyncadd [#allocation18], %s446
          %s448 = sshll.u32 [#allocation17], 4
          %s449 = int_to_ptr.vmem [resolvable:$true] %s448
          %454 = dma.hbm_to_vmem [thread:$0]  %s9, 4096, %s449, [#allocation18], 256, 256, 16
        $region48: #{tpu_custom_call.1} parent=11 // pred_fallthru
          _
        // Predicated region
        $region49: #{tpu_custom_call.1} parent=11 // pred_check
          %p455 = pneg %p267
        $region50: #{tpu_custom_call.1} parent=11 // pred_check_branch
          %457 = sbr.rel (%p455) target = $region52
        $region51: #{tpu_custom_call.1} parent=11 // pred_region
          %s459 = ssub.s32 64, 64
          %460 = vsyncadd [#allocation18], %s459
          %s462 = sshll.u32 [#allocation19], 4
          %s463 = int_to_ptr.vmem [resolvable:$true] %s462
          %465 = dma.hbm_to_vmem [thread:$0]  %s10, 64, %s463, [#allocation18]
        $region52: #{tpu_custom_call.1} parent=11 // pred_fallthru
          _
        // Predicated region
        $region53: #{tpu_custom_call.1} parent=11 // pred_check
          %p466 = pneg %p288
        $region54: #{tpu_custom_call.1} parent=11 // pred_check_branch
          %468 = sbr.rel (%p466) target = $region56
        $region55: #{tpu_custom_call.1} parent=11 // pred_region
          %s470 = ssub.s32 4096, 4096
          %471 = vsyncadd [#allocation21], %s470
          %s472 = sshll.u32 [#allocation20], 4
          %s473 = int_to_ptr.vmem [resolvable:$true] %s472
          %478 = dma.hbm_to_vmem [thread:$0]  %s11, 4096, %s473, [#allocation21], 64, 64, 4
        $region56: #{tpu_custom_call.1} parent=11 // pred_fallthru
          _
        // Predicated region
        $region57: #{tpu_custom_call.1} parent=11 // pred_check
          %p479 = pneg %p309
        $region58: #{tpu_custom_call.1} parent=11 // pred_check_branch
          %481 = sbr.rel (%p479) target = $region60
        $region59: #{tpu_custom_call.1} parent=11 // pred_region
          %s483 = ssub.s32 16, 16
          %484 = vsyncadd [#allocation21], %s483
          %s486 = sshll.u32 [#allocation22], 4
          %s487 = int_to_ptr.vmem [resolvable:$true] %s486
          %489 = dma.hbm_to_vmem [thread:$0]  %s12, 16, %s487, [#allocation21]
        $region60: #{tpu_custom_call.1} parent=11 // pred_fallthru
          _
      $region12: #{tpu_custom_call.1} parent=5 // pred_fallthru
        _
      %p490 = scmp.lt.s32.totalorder %s31, 4
      // Predicated region
      $region61: #{tpu_custom_call.1} parent=5 // pred_check
        %p491 = pneg %p490
      $region62: #{tpu_custom_call.1} parent=5 // pred_check_branch
        %493 = sbr.rel (%p491) target = $region64
      $region63: #{tpu_custom_call.1} parent=5 // pred_region
        // Predicated region
        $region65: #{tpu_custom_call.1} parent=63 // pred_check
          %p494 = pneg %p51
        $region66: #{tpu_custom_call.1} parent=63 // pred_check_branch
          %496 = sbr.rel (%p494) target = $region68
        $region67: #{tpu_custom_call.1} parent=63 // pred_region
          %s497 = sand.u32 %s41, 1
          %s498 = scalar_lea.sflag [#allocation3], %s497
          %s499 = sand.u32 %s41, 1
          %s500 = smul.addr %s499, 32
          %s501 = scalar_lea.vmem [#allocation2], %s500
          %s502 = smul.u32 4, %s31
          %s504 = ssub.s32 512, 512
          %505 = vsyncadd %s498, %s504
          %s506 = smul.addr %s502, 128
          %s507 = scalar_lea.hbm %s0, %s506
          %s508 = sshll.u32 %s501, 4
          %s509 = int_to_ptr.vmem [resolvable:$true] %s508
          %514 = dma.hbm_to_vmem [thread:$0]  %s507, 512, %s509, %s498, 128, 128, 8
        $region68: #{tpu_custom_call.1} parent=63 // pred_fallthru
          _
      $region64: #{tpu_custom_call.1} parent=5 // pred_fallthru
        _
      %p515 = scmp.le.s32.totalorder 1, %s31
      %p516 = scmp.lt.s32.totalorder %s31, 5
      %p517 = pnand %p515, %p516
      %p518 = pneg %p517
      // Predicated region
      $region69: #{tpu_custom_call.1} parent=5 // pred_check
        _
      $region70: #{tpu_custom_call.1} parent=5 // pred_check_branch
        %520 = sbr.rel (%p517) target = $region72
      $region71: #{tpu_custom_call.1} parent=5 // pred_region
        %s521 = ssub.s32 %s31, 1
        %s522 = sand.u32 %s44, 1
        %s523 = scalar_lea.sflag [#allocation3], %s522
        %s524 = sand.u32 %s44, 1
        %s525 = smul.addr %s524, 32
        %s526 = scalar_lea.vmem [#allocation2], %s525
        // Predicated region
        $region73: #{tpu_custom_call.1} parent=71 // pred_check
          %p527 = pneg %p57
        $region74: #{tpu_custom_call.1} parent=71 // pred_check_branch
          %529 = sbr.rel (%p527) target = $region76
        $region75: #{tpu_custom_call.1} parent=71 // pred_region
          %530 = dma.done %s523, 512
        $region76: #{tpu_custom_call.1} parent=71 // pred_fallthru
          _
        // Predicated region
        $region77: #{tpu_custom_call.1} parent=71 // pred_check
          %p531 = pneg %p78
        $region78: #{tpu_custom_call.1} parent=71 // pred_check_branch
          %533 = sbr.rel (%p531) target = $region80
        $region79: #{tpu_custom_call.1} parent=71 // pred_region
          %534 = dma.done [#allocation6], 16
        $region80: #{tpu_custom_call.1} parent=71 // pred_fallthru
          _
        // Predicated region
        $region81: #{tpu_custom_call.1} parent=71 // pred_check
          %p535 = pneg %p99
        $region82: #{tpu_custom_call.1} parent=71 // pred_check_branch
          %537 = sbr.rel (%p535) target = $region84
        $region83: #{tpu_custom_call.1} parent=71 // pred_region
          %538 = dma.done [#allocation6], 16
        $region84: #{tpu_custom_call.1} parent=71 // pred_fallthru
          _
        // Predicated region
        $region85: #{tpu_custom_call.1} parent=71 // pred_check
          %p539 = pneg %p120
        $region86: #{tpu_custom_call.1} parent=71 // pred_check_branch
          %541 = sbr.rel (%p539) target = $region88
        $region87: #{tpu_custom_call.1} parent=71 // pred_region
          %542 = dma.done [#allocation9], 3072
        $region88: #{tpu_custom_call.1} parent=71 // pred_fallthru
          _
        // Predicated region
        $region89: #{tpu_custom_call.1} parent=71 // pred_check
          %p543 = pneg %p141
        $region90: #{tpu_custom_call.1} parent=71 // pred_check_branch
          %545 = sbr.rel (%p543) target = $region92
        $region91: #{tpu_custom_call.1} parent=71 // pred_region
          %546 = dma.done [#allocation9], 48
        $region92: #{tpu_custom_call.1} parent=71 // pred_fallthru
          _
        // Predicated region
        $region93: #{tpu_custom_call.1} parent=71 // pred_check
          %p547 = pneg %p162
        $region94: #{tpu_custom_call.1} parent=71 // pred_check_branch
          %549 = sbr.rel (%p547) target = $region96
        $region95: #{tpu_custom_call.1} parent=71 // pred_region
          %550 = dma.done [#allocation12], 1024
        $region96: #{tpu_custom_call.1} parent=71 // pred_fallthru
          _
        // Predicated region
        $region97: #{tpu_custom_call.1} parent=71 // pred_check
          %p551 = pneg %p183
        $region98: #{tpu_custom_call.1} parent=71 // pred_check_branch
          %553 = sbr.rel (%p551) target = $region100
        $region99: #{tpu_custom_call.1} parent=71 // pred_region
          %554 = dma.done [#allocation12], 16
        $region100: #{tpu_custom_call.1} parent=71 // pred_fallthru
          _
        // Predicated region
        $region101: #{tpu_custom_call.1} parent=71 // pred_check
          %p555 = pneg %p204
        $region102: #{tpu_custom_call.1} parent=71 // pred_check_branch
          %557 = sbr.rel (%p555) target = $region104
        $region103: #{tpu_custom_call.1} parent=71 // pred_region
          %558 = dma.done [#allocation15], 16
        $region104: #{tpu_custom_call.1} parent=71 // pred_fallthru
          _
        // Predicated region
        $region105: #{tpu_custom_call.1} parent=71 // pred_check
          %p559 = pneg %p225
        $region106: #{tpu_custom_call.1} parent=71 // pred_check_branch
          %561 = sbr.rel (%p559) target = $region108
        $region107: #{tpu_custom_call.1} parent=71 // pred_region
          %562 = dma.done [#allocation15], 16
        $region108: #{tpu_custom_call.1} parent=71 // pred_fallthru
          _
        // Predicated region
        $region109: #{tpu_custom_call.1} parent=71 // pred_check
          %p563 = pneg %p246
        $region110: #{tpu_custom_call.1} parent=71 // pred_check_branch
          %565 = sbr.rel (%p563) target = $region112
        $region111: #{tpu_custom_call.1} parent=71 // pred_region
          %566 = dma.done [#allocation18], 4096
        $region112: #{tpu_custom_call.1} parent=71 // pred_fallthru
          _
        // Predicated region
        $region113: #{tpu_custom_call.1} parent=71 // pred_check
          %p567 = pneg %p267
        $region114: #{tpu_custom_call.1} parent=71 // pred_check_branch
          %569 = sbr.rel (%p567) target = $region116
        $region115: #{tpu_custom_call.1} parent=71 // pred_region
          %570 = dma.done [#allocation18], 64
        $region116: #{tpu_custom_call.1} parent=71 // pred_fallthru
          _
        // Predicated region
        $region117: #{tpu_custom_call.1} parent=71 // pred_check
          %p571 = pneg %p288
        $region118: #{tpu_custom_call.1} parent=71 // pred_check_branch
          %573 = sbr.rel (%p571) target = $region120
        $region119: #{tpu_custom_call.1} parent=71 // pred_region
          %574 = dma.done [#allocation21], 4096
        $region120: #{tpu_custom_call.1} parent=71 // pred_fallthru
          _
        // Predicated region
        $region121: #{tpu_custom_call.1} parent=71 // pred_check
          %p575 = pneg %p309
        $region122: #{tpu_custom_call.1} parent=71 // pred_check_branch
          %577 = sbr.rel (%p575) target = $region124
        $region123: #{tpu_custom_call.1} parent=71 // pred_region
          %578 = dma.done [#allocation21], 16
        $region124: #{tpu_custom_call.1} parent=71 // pred_fallthru
          _
        %s579 = sand.u32 %s44, 1
        %s580 = scalar_lea.sflag [#allocation3], %s579
        %s581 = sand.u32 %s44, 1
        %s582 = smul.addr %s581, 32
        %s583 = scalar_lea.vmem [#allocation2], %s582
        %p584 = pneg %p57
        %p585 = pneg %p54
        %p586 = pneg %p78
        %p587 = pneg %p75
        %p588 = pneg %p99
        %p589 = pneg %p96
        %p590 = pneg %p120
        %p591 = pneg %p117
        %p592 = pneg %p141
        %p593 = pneg %p138
        %p594 = pneg %p162
        %p595 = pneg %p159
        %p596 = pneg %p183
        %p597 = pneg %p180
        %p598 = pneg %p204
        %p599 = pneg %p201
        %p600 = pneg %p225
        %p601 = pneg %p222
        %p602 = pneg %p246
        %p603 = pneg %p243
        %p604 = pneg %p267
        %p605 = pneg %p264
        %p606 = pneg %p288
        %p607 = pneg %p285
        %p608 = pneg %p309
        %p609 = pneg %p306
        %p610 = pneg %p335
        %p611 = pneg %p332
        %s612 = sand.u32 %s322, 1
        %s613 = scalar_lea.sflag [#allocation4], %s612
        %s614 = sand.u32 %s322, 1
        %s615 = smul.addr %s614, 32
        %s616 = scalar_lea.vmem [#allocation23], %s615
        %s617 = smul.u32 4, %s36
        %s618 = smul.u32 4, %s36
        %v620 = vld [vmem:[%s526] sm:$0xff]
        %v621 = vld [vmem:[%s526 + $0x8] sm:$0xff]
        %v622 = vld [vmem:[%s526 + $0x10] sm:$0xff]
        %v623 = vld [vmem:[%s526 + $0x18] sm:$0xff]
        %v624 = vld [vmem:[#allocation5] sm:$0x1]
        %v625 = vld [vmem:[#allocation7] sm:$0x1]
        %626 = vadd.xlane.f32.xlu0 %v620
        %v627 = vpop.xlane.xlu0 %626
        %628 = vadd.xlane.f32.xlu0 %v621
        %v629 = vpop.xlane.xlu0 %628
        %630 = vadd.xlane.f32.xlu0 %v622
        %v631 = vpop.xlane.xlu0 %630
        %632 = vadd.xlane.f32.xlu0 %v623
        %v633 = vpop.xlane.xlu0 %632
        %v634 = vrcp.pop 128.0
        %v635 = vmul.f32 %v627, %v634
        %v636 = vmul.f32 %v629, %v634
        %v637 = vmul.f32 %v631, %v634
        %v638 = vmul.f32 %v633, %v634
        %v639 = vsub.f32 %v620, %v635
        %v640 = vsub.f32 %v621, %v636
        %v641 = vsub.f32 %v622, %v637
        %v642 = vsub.f32 %v623, %v638
        %v643 = vmul.f32 %v639, %v639
        %v644 = vmul.f32 %v640, %v640
        %v645 = vmul.f32 %v641, %v641
        %v646 = vmul.f32 %v642, %v642
        %647 = vadd.xlane.f32.xlu0 %v643
        %v648 = vpop.xlane.xlu0 %647
        %649 = vadd.xlane.f32.xlu0 %v644
        %v650 = vpop.xlane.xlu0 %649
        %651 = vadd.xlane.f32.xlu0 %v645
        %v652 = vpop.xlane.xlu0 %651
        %653 = vadd.xlane.f32.xlu0 %v646
        %v654 = vpop.xlane.xlu0 %653
        %v655 = vmul.f32 %v648, %v634
        %v656 = vmul.f32 %v650, %v634
        %v657 = vmul.f32 %v652, %v634
        %v658 = vmul.f32 %v654, %v634
        %v659 = vadd.f32 %v655, 1e-05
        %v660 = vadd.f32 %v656, 1e-05
        %v661 = vadd.f32 %v657, 1e-05
        %v662 = vadd.f32 %v658, 1e-05
        %v663 = vrsqrt.pop %v659
        %v664 = vrsqrt.pop %v660
        %v665 = vrsqrt.pop %v661
        %v666 = vrsqrt.pop %v662
        %v667 = vmul.f32 %v639, %v663
        %v668 = vmul.f32 %v640, %v664
        %v669 = vmul.f32 %v641, %v665
        %v670 = vmul.f32 %v642, %v666
        %v672 = vlaneseq
        %v673 = vshrl.u32 %v672, 7
        %v674 = vsub.s32 0, %v673
        %v675 = vrot.slane %v624, %v674
        %v677 = vmul.f32 %v667, %v675
        %v678 = vmul.f32 %v668, %v675
        %v679 = vmul.f32 %v669, %v675
        %v680 = vmul.f32 %v670, %v675
        %v682 = vlaneseq
        %v683 = vshrl.u32 %v682, 7
        %v684 = vsub.s32 0, %v683
        %v685 = vrot.slane %v625, %v684
        %v687 = vadd.f32 %v677, %v685
        %v688 = vadd.f32 %v678, %v685
        %v689 = vadd.f32 %v679, %v685
        %v690 = vadd.f32 %v680, %v685
        %v691 = vpack.c.bf16 %v688, %v687
        %v692 = vpack.c.bf16 %v690, %v689
        %v693 = vld [vmem:[#allocation8] sm:$0xff]
        %v694 = vld [vmem:[#allocation8 + $0x8] sm:$0xf]
        %v695 = vld [vmem:[#allocation8 + $0xc] sm:$0xff]
        %v696 = vld [vmem:[#allocation8 + $0x14] sm:$0xf]
        %v697 = vld [vmem:[#allocation8 + $0x18] sm:$0xff]
        %v698 = vld [vmem:[#allocation8 + $0x20] sm:$0xf]
        %v699 = vld [vmem:[#allocation8 + $0x24] sm:$0xff]
        %v700 = vld [vmem:[#allocation8 + $0x2c] sm:$0xf]
        %v701 = vld [vmem:[#allocation8 + $0x30] sm:$0xff]
        %v702 = vld [vmem:[#allocation8 + $0x38] sm:$0xf]
        %v703 = vld [vmem:[#allocation8 + $0x3c] sm:$0xff]
        %v704 = vld [vmem:[#allocation8 + $0x44] sm:$0xf]
        %v705 = vld [vmem:[#allocation8 + $0x48] sm:$0xff]
        %v706 = vld [vmem:[#allocation8 + $0x50] sm:$0xf]
        %v707 = vld [vmem:[#allocation8 + $0x54] sm:$0xff]
        %v708 = vld [vmem:[#allocation8 + $0x5c] sm:$0xf]
        %v709 = vld [vmem:[#allocation8 + $0x60] sm:$0xff]
        %v710 = vld [vmem:[#allocation8 + $0x68] sm:$0xf]
        %v711 = vld [vmem:[#allocation8 + $0x6c] sm:$0xff]
        %v712 = vld [vmem:[#allocation8 + $0x74] sm:$0xf]
        %v713 = vld [vmem:[#allocation8 + $0x78] sm:$0xff]
        %v714 = vld [vmem:[#allocation8 + $0x80] sm:$0xf]
        %v715 = vld [vmem:[#allocation8 + $0x84] sm:$0xff]
        %v716 = vld [vmem:[#allocation8 + $0x8c] sm:$0xf]
        %v717 = vld [vmem:[#allocation8 + $0x90] sm:$0xff]
        %v718 = vld [vmem:[#allocation8 + $0x98] sm:$0xf]
        %v719 = vld [vmem:[#allocation8 + $0x9c] sm:$0xff]
        %v720 = vld [vmem:[#allocation8 + $0xa4] sm:$0xf]
        %v721 = vld [vmem:[#allocation8 + $0xa8] sm:$0xff]
        %v722 = vld [vmem:[#allocation8 + $0xb0] sm:$0xf]
        %v723 = vld [vmem:[#allocation8 + $0xb4] sm:$0xff]
        %v724 = vld [vmem:[#allocation8 + $0xbc] sm:$0xf]
        %v725 = vld [vmem:[#allocation10] sm:$0x7]
        %v727 = vlaneseq
        %v728 = vshrl.u32 %v727, 7
        %v729 = vsub.s32 0, %v728
        %v730 = vrot.slane %v725, %v729
        %v731 = vlaneseq
        %v732 = vshrl.u32 %v731, 7
        %v733 = vsub.s32 1, %v732
        %v734 = vrot.slane %v725, %v733
        %v735 = vlaneseq
        %v736 = vshrl.u32 %v735, 7
        %v737 = vsub.s32 2, %v736
        %v738 = vrot.slane %v725, %v737
        %v774 = vunpack.c.l.b16 %v693
        %v775 = vunpack.c.h.b16 %v693
        %v776 = vunpack.c.l.b16 %v694
        %v777 = vunpack.c.l.b16 %v695
        %v778 = vunpack.c.h.b16 %v695
        %v779 = vunpack.c.l.b16 %v696
        %v780 = vunpack.c.l.b16 %v697
        %v781 = vunpack.c.h.b16 %v697
        %v782 = vunpack.c.l.b16 %v698
        %v783 = vunpack.c.l.b16 %v699
        %v784 = vunpack.c.h.b16 %v699
        %v785 = vunpack.c.l.b16 %v700
        %v786 = vunpack.c.l.b16 %v701
        %v787 = vunpack.c.h.b16 %v701
        %v788 = vunpack.c.l.b16 %v702
        %v789 = vunpack.c.l.b16 %v703
        %v790 = vunpack.c.h.b16 %v703
        %v791 = vunpack.c.l.b16 %v704
        %v792 = vunpack.c.l.b16 %v705
        %v793 = vunpack.c.h.b16 %v705
        %v794 = vunpack.c.l.b16 %v706
        %v795 = vunpack.c.l.b16 %v707
        %v796 = vunpack.c.h.b16 %v707
        %v797 = vunpack.c.l.b16 %v708
        %v798 = vunpack.c.l.b16 %v709
        %v799 = vunpack.c.h.b16 %v709
        %v800 = vunpack.c.l.b16 %v710
        %v801 = vunpack.c.l.b16 %v711
        %v802 = vunpack.c.h.b16 %v711
        %v803 = vunpack.c.l.b16 %v712
        %v804 = vunpack.c.l.b16 %v713
        %v805 = vunpack.c.h.b16 %v713
        %v806 = vunpack.c.l.b16 %v714
        %v807 = vunpack.c.l.b16 %v715
        %v808 = vunpack.c.h.b16 %v715
        %v809 = vunpack.c.l.b16 %v716
        %v810 = vunpack.c.l.b16 %v717
        %v811 = vunpack.c.h.b16 %v717
        %v812 = vunpack.c.l.b16 %v718
        %v813 = vunpack.c.l.b16 %v719
        %v814 = vunpack.c.h.b16 %v719
        %v815 = vunpack.c.l.b16 %v720
        %v816 = vunpack.c.l.b16 %v721
        %v817 = vunpack.c.h.b16 %v721
        %v818 = vunpack.c.l.b16 %v722
        %v819 = vunpack.c.l.b16 %v723
        %v820 = vunpack.c.h.b16 %v723
        %v821 = vunpack.c.l.b16 %v724
        %v822 = vpack.c.b16 %v777, %v774
        %v823 = vpack.c.b16 %v778, %v775
        %v824 = vpack.c.b16 %v779, %v776
        %v825 = vpack.c.b16 %v783, %v780
        %v826 = vpack.c.b16 %v784, %v781
        %v827 = vpack.c.b16 %v785, %v782
        %v828 = vpack.c.b16 %v789, %v786
        %v829 = vpack.c.b16 %v790, %v787
        %v830 = vpack.c.b16 %v791, %v788
        %v831 = vpack.c.b16 %v795, %v792
        %v832 = vpack.c.b16 %v796, %v793
        %v833 = vpack.c.b16 %v797, %v794
        %v834 = vpack.c.b16 %v801, %v798
        %v835 = vpack.c.b16 %v802, %v799
        %v836 = vpack.c.b16 %v803, %v800
        %v837 = vpack.c.b16 %v807, %v804
        %v838 = vpack.c.b16 %v808, %v805
        %v839 = vpack.c.b16 %v809, %v806
        %v840 = vpack.c.b16 %v813, %v810
        %v841 = vpack.c.b16 %v814, %v811
        %v842 = vpack.c.b16 %v815, %v812
        %v843 = vpack.c.b16 %v819, %v816
        %v844 = vpack.c.b16 %v820, %v817
        %v845 = vpack.c.b16 %v821, %v818
        %870 = vmatprep.subr.bf16.mxu0 %v823
        %871 = vmatpush1.bf16.msra.mxu0 %v822
        %872 = vmatprep.subr.bf16.mxu0 %v826
        %873 = vmatpush1.bf16.msra.mxu0 %v825
        %874 = vmatprep.subr.bf16.mxu0 %v829
        %875 = vmatpush1.bf16.msra.mxu0 %v828
        %876 = vmatprep.subr.bf16.mxu0 %v832
        %877 = vmatpush1.bf16.msra.mxu0 %v831
        %878 = vmatprep.subr.bf16.mxu0 %v835
        %879 = vmatpush1.bf16.msra.mxu0 %v834
        %880 = vmatprep.subr.bf16.mxu0 %v838
        %881 = vmatpush1.bf16.msra.mxu0 %v837
        %882 = vmatprep.subr.bf16.mxu0 %v841
        %883 = vmatpush1.bf16.msra.mxu0 %v840
        %884 = vmatprep.subr.bf16.mxu0 %v844
        %885 = vmatpush1.bf16.msra.mxu0 %v843
        %886 = vmatprep.subr.bf16.mxu0 0
        %887 = vmatpush1.bf16.msra.mxu0 0
        %888 = vmatprep.subr.bf16.mxu0 0
        %889 = vmatpush1.bf16.msra.mxu0 0
        %890 = vmatprep.subr.bf16.mxu0 0
        %891 = vmatpush1.bf16.msra.mxu0 0
        %892 = vmatprep.subr.bf16.mxu0 0
        %893 = vmatpush1.bf16.msra.mxu0 0
        %894 = vmatprep.subr.bf16.mxu0 0
        %895 = vmatpush1.bf16.msra.mxu0 0
        %896 = vmatprep.subr.bf16.mxu0 0
        %897 = vmatpush1.bf16.msra.mxu0 0
        %898 = vmatprep.subr.bf16.mxu0 0
        %899 = vmatpush1.bf16.msra.mxu0 0
        %900 = vmatprep.subr.bf16.mxu0 0
        %901 = vmatpush1.bf16.msra.mxu0 0
        %902 = vmatprep.mubr.bf16.mxu0 0
        %903 = vmatmul.mubr.bf16.gmra.mrb[0].mxu0 %v691
        %v904 = vpop.f32.mrb[0].mxu0
        %v905 = vadd.f32 %v730, %v904
        %v906 = vpop.f32.mrb[0].mxu0
        %v907 = vadd.f32 %v734, %v906
        %v908 = vpop.f32.mrb[0].mxu0
        %v909 = vadd.f32 %v730, %v908
        %v910 = vpop.f32.mrb[0].mxu0
        %v911 = vadd.f32 %v734, %v910
        %912 = vmatprep.mubr.bf16.mxu0 0
        %913 = vmatmul.mubr.bf16.gmra.mrb[0].mxu0 %v692
        %v914 = vpop.f32.mrb[0].mxu0
        %v915 = vadd.f32 %v730, %v914
        %v916 = vpop.f32.mrb[0].mxu0
        %v917 = vadd.f32 %v734, %v916
        %v918 = vpop.f32.mrb[0].mxu0
        %v919 = vadd.f32 %v730, %v918
        %v920 = vpop.f32.mrb[0].mxu0
        %v921 = vadd.f32 %v734, %v920
        %922 = vdwg.mxu0
        %923 = vmatprep.subr.bf16.mxu0 0
        %924 = vmatpush1.bf16.msra.mxu0 %v824
        %925 = vmatprep.subr.bf16.mxu0 0
        %926 = vmatpush1.bf16.msra.mxu0 %v827
        %927 = vmatprep.subr.bf16.mxu0 0
        %928 = vmatpush1.bf16.msra.mxu0 %v830
        %929 = vmatprep.subr.bf16.mxu0 0
        %930 = vmatpush1.bf16.msra.mxu0 %v833
        %931 = vmatprep.subr.bf16.mxu0 0
        %932 = vmatpush1.bf16.msra.mxu0 %v836
        %933 = vmatprep.subr.bf16.mxu0 0
        %934 = vmatpush1.bf16.msra.mxu0 %v839
        %935 = vmatprep.subr.bf16.mxu0 0
        %936 = vmatpush1.bf16.msra.mxu0 %v842
        %937 = vmatprep.subr.bf16.mxu0 0
        %938 = vmatpush1.bf16.msra.mxu0 %v845
        %939 = vmatprep.subr.bf16.mxu0 0
        %940 = vmatpush1.bf16.msra.mxu0 0
        %941 = vmatprep.subr.bf16.mxu0 0
        %942 = vmatpush1.bf16.msra.mxu0 0
        %943 = vmatprep.subr.bf16.mxu0 0
        %944 = vmatpush1.bf16.msra.mxu0 0
        %945 = vmatprep.subr.bf16.mxu0 0
        %946 = vmatpush1.bf16.msra.mxu0 0
        %947 = vmatprep.subr.bf16.mxu0 0
        %948 = vmatpush1.bf16.msra.mxu0 0
        %949 = vmatprep.subr.bf16.mxu0 0
        %950 = vmatpush1.bf16.msra.mxu0 0
        %951 = vmatprep.subr.bf16.mxu0 0
        %952 = vmatpush1.bf16.msra.mxu0 0
        %953 = vmatprep.subr.bf16.mxu0 0
        %954 = vmatpush1.bf16.msra.mxu0 0
        %955 = vmatprep.mubr.bf16.mxu0 0
        %956 = vmatmul.mubr.bf16.gmra.mrb[0].mxu0 %v691
        %v957 = vpop.f32.mrb[0].mxu0
        %v958 = vadd.f32 %v738, %v957
        %v959 = vpop.f32.mrb[0].mxu0
        %v960 = vpop.f32.mrb[0].mxu0
        %v961 = vadd.f32 %v738, %v960
        %v962 = vpop.f32.mrb[0].mxu0
        %963 = vmatprep.mubr.bf16.mxu0 0
        %964 = vmatmul.mubr.bf16.gmra.mrb[0].mxu0 %v692
        %v965 = vpop.f32.mrb[0].mxu0
        %v966 = vadd.f32 %v738, %v965
        %v967 = vpop.f32.mrb[0].mxu0
        %v968 = vpop.f32.mrb[0].mxu0
        %v969 = vadd.f32 %v738, %v968
        %v970 = vpop.f32.mrb[0].mxu0
        %971 = vdwg.mxu0
        %v972 = vpack.c.bf16 %v909, %v905
        %v973 = vpack.c.bf16 %v911, %v907
        %v974 = vpack.c.bf16 %v961, %v958
        %v975 = vpack.c.bf16 %v919, %v915
        %v976 = vpack.c.bf16 %v921, %v917
        %v977 = vpack.c.bf16 %v969, %v966
        %v980 = vunpack.c.l.b16 %v972
        %v981 = vunpack.c.h.b16 %v972
        %v982 = vunpack.c.l.b16 %v975
        %v983 = vunpack.c.h.b16 %v975
        %v984 = vpack.c.b16 %v980, %v980
        %v985 = vpack.c.b16 %v981, %v981
        %v986 = vpack.c.b16 %v982, %v982
        %v987 = vpack.c.b16 %v983, %v983
        %v990 = vunpack.c.l.b16 %v973
        %v991 = vunpack.c.h.b16 %v973
        %v992 = vunpack.c.l.b16 %v976
        %v993 = vunpack.c.h.b16 %v976
        %v994 = vpack.c.b16 %v990, %v990
        %v995 = vpack.c.b16 %v991, %v991
        %v996 = vpack.c.b16 %v992, %v992
        %v997 = vpack.c.b16 %v993, %v993
        %v1000 = vunpack.c.l.b16 %v974
        %v1001 = vunpack.c.h.b16 %v974
        %v1002 = vunpack.c.l.b16 %v977
        %v1003 = vunpack.c.h.b16 %v977
        %v1004 = vpack.c.b16 %v1000, %v1000
        %v1005 = vpack.c.b16 %v1001, %v1001
        %v1006 = vpack.c.b16 %v1002, %v1002
        %v1007 = vpack.c.b16 %v1003, %v1003
        %vm1008 = vcmask 261120
        %v1010 = vsel %vm1008, %v984, 0
        %v1013 = vsel %vm1008, %v994, 0
        %1015 = vmatprep.subr.bf16.mxu0 0
        %1016 = vmatpush1.bf16.xpose.msra.mxu0 %v1013
        %1017 = vmatprep.subr.bf16.mxu0 0
        %1018 = vmatpush1.bf16.xpose.msra.mxu0 0
        %1019 = vmatprep.subr.bf16.mxu0 0
        %1020 = vmatpush1.bf16.xpose.msra.mxu0 0
        %1021 = vmatprep.subr.bf16.mxu0 0
        %1022 = vmatpush1.bf16.xpose.msra.mxu0 0
        %1023 = vmatprep.subr.bf16.mxu0 0
        %1024 = vmatpush1.bf16.xpose.msra.mxu0 0
        %1025 = vmatprep.subr.bf16.mxu0 0
        %1026 = vmatpush1.bf16.xpose.msra.mxu0 0
        %1027 = vmatprep.subr.bf16.mxu0 0
        %1028 = vmatpush1.bf16.xpose.msra.mxu0 0
        %1029 = vmatprep.subr.bf16.mxu0 0
        %1030 = vmatpush1.bf16.xpose.msra.mxu0 0
        %1031 = vmatprep.subr.bf16.mxu0 0
        %1032 = vmatpush1.bf16.xpose.msra.mxu0 0
        %1033 = vmatprep.subr.bf16.mxu0 0
        %1034 = vmatpush1.bf16.xpose.msra.mxu0 0
        %1035 = vmatprep.subr.bf16.mxu0 0
        %1036 = vmatpush1.bf16.xpose.msra.mxu0 0
        %1037 = vmatprep.subr.bf16.mxu0 0
        %1038 = vmatpush1.bf16.xpose.msra.mxu0 0
        %1039 = vmatprep.subr.bf16.mxu0 0
        %1040 = vmatpush1.bf16.xpose.msra.mxu0 0
        %1041 = vmatprep.subr.bf16.mxu0 0
        %1042 = vmatpush1.bf16.xpose.msra.mxu0 0
        %1043 = vmatprep.subr.bf16.mxu0 0
        %1044 = vmatpush1.bf16.xpose.msra.mxu0 0
        %1045 = vmatprep.subr.bf16.mxu0 0
        %1046 = vmatpush1.bf16.xpose.msra.mxu0 0
        %1047 = vmatprep.mubr.bf16.mxu0 0
        %1048 = vmatmul.mubr.bf16.gmra.mrb[0].mxu0 %v1010
        %v1049 = vpop.f32.mrb[0].mxu0
        %v1050 = vadd.f32 0.0, %v1049
        %v1051 = vpop.f32.mrb[0].mxu0
        %v1052 = vpop.f32.mrb[0].mxu0
        %v1053 = vpop.f32.mrb[0].mxu0
        %1054 = vdwg.mxu0
        %v1056 = vsel %vm1008, %v985, 0
        %v1059 = vsel %vm1008, %v995, 0
        %1061 = vmatprep.subr.bf16.mxu0 0
        %1062 = vmatpush1.bf16.xpose.msra.mxu0 %v1059
        %1063 = vmatprep.subr.bf16.mxu0 0
        %1064 = vmatpush1.bf16.xpose.msra.mxu0 0
        %1065 = vmatprep.subr.bf16.mxu0 0
        %1066 = vmatpush1.bf16.xpose.msra.mxu0 0
        %1067 = vmatprep.subr.bf16.mxu0 0
        %1068 = vmatpush1.bf16.xpose.msra.mxu0 0
        %1069 = vmatprep.subr.bf16.mxu0 0
        %1070 = vmatpush1.bf16.xpose.msra.mxu0 0
        %1071 = vmatprep.subr.bf16.mxu0 0
        %1072 = vmatpush1.bf16.xpose.msra.mxu0 0
        %1073 = vmatprep.subr.bf16.mxu0 0
        %1074 = vmatpush1.bf16.xpose.msra.mxu0 0
        %1075 = vmatprep.subr.bf16.mxu0 0
        %1076 = vmatpush1.bf16.xpose.msra.mxu0 0
        %1077 = vmatprep.subr.bf16.mxu0 0
        %1078 = vmatpush1.bf16.xpose.msra.mxu0 0
        %1079 = vmatprep.subr.bf16.mxu0 0
        %1080 = vmatpush1.bf16.xpose.msra.mxu0 0
        %1081 = vmatprep.subr.bf16.mxu0 0
        %1082 = vmatpush1.bf16.xpose.msra.mxu0 0
        %1083 = vmatprep.subr.bf16.mxu0 0
        %1084 = vmatpush1.bf16.xpose.msra.mxu0 0
        %1085 = vmatprep.subr.bf16.mxu0 0
        %1086 = vmatpush1.bf16.xpose.msra.mxu0 0
        %1087 = vmatprep.subr.bf16.mxu0 0
        %1088 = vmatpush1.bf16.xpose.msra.mxu0 0
        %1089 = vmatprep.subr.bf16.mxu0 0
        %1090 = vmatpush1.bf16.xpose.msra.mxu0 0
        %1091 = vmatprep.subr.bf16.mxu0 0
        %1092 = vmatpush1.bf16.xpose.msra.mxu0 0
        %1093 = vmatprep.mubr.bf16.mxu0 0
        %1094 = vmatmul.mubr.bf16.gmra.mrb[0].mxu0 %v1056
        %v1095 = vpop.f32.mrb[0].mxu0
        %v1096 = vadd.f32 0.0, %v1095
        %v1097 = vpop.f32.mrb[0].mxu0
        %v1098 = vpop.f32.mrb[0].mxu0
        %v1099 = vpop.f32.mrb[0].mxu0
        %1100 = vdwg.mxu0
        %v1102 = vsel %vm1008, %v986, 0
        %v1105 = vsel %vm1008, %v996, 0
        %1107 = vmatprep.subr.bf16.mxu0 0
        %1108 = vmatpush1.bf16.xpose.msra.mxu0 %v1105
        %1109 = vmatprep.subr.bf16.mxu0 0
        %1110 = vmatpush1.bf16.xpose.msra.mxu0 0
        %1111 = vmatprep.subr.bf16.mxu0 0
        %1112 = vmatpush1.bf16.xpose.msra.mxu0 0
        %1113 = vmatprep.subr.bf16.mxu0 0
        %1114 = vmatpush1.bf16.xpose.msra.mxu0 0
        %1115 = vmatprep.subr.bf16.mxu0 0
        %1116 = vmatpush1.bf16.xpose.msra.mxu0 0
        %1117 = vmatprep.subr.bf16.mxu0 0
        %1118 = vmatpush1.bf16.xpose.msra.mxu0 0
        %1119 = vmatprep.subr.bf16.mxu0 0
        %1120 = vmatpush1.bf16.xpose.msra.mxu0 0
        %1121 = vmatprep.subr.bf16.mxu0 0
        %1122 = vmatpush1.bf16.xpose.msra.mxu0 0
        %1123 = vmatprep.subr.bf16.mxu0 0
        %1124 = vmatpush1.bf16.xpose.msra.mxu0 0
        %1125 = vmatprep.subr.bf16.mxu0 0
        %1126 = vmatpush1.bf16.xpose.msra.mxu0 0
        %1127 = vmatprep.subr.bf16.mxu0 0
        %1128 = vmatpush1.bf16.xpose.msra.mxu0 0
        %1129 = vmatprep.subr.bf16.mxu0 0
        %1130 = vmatpush1.bf16.xpose.msra.mxu0 0
        %1131 = vmatprep.subr.bf16.mxu0 0
        %1132 = vmatpush1.bf16.xpose.msra.mxu0 0
        %1133 = vmatprep.subr.bf16.mxu0 0
        %1134 = vmatpush1.bf16.xpose.msra.mxu0 0
        %1135 = vmatprep.subr.bf16.mxu0 0
        %1136 = vmatpush1.bf16.xpose.msra.mxu0 0
        %1137 = vmatprep.subr.bf16.mxu0 0
        %1138 = vmatpush1.bf16.xpose.msra.mxu0 0
        %1139 = vmatprep.mubr.bf16.mxu0 0
        %1140 = vmatmul.mubr.bf16.gmra.mrb[0].mxu0 %v1102
        %v1141 = vpop.f32.mrb[0].mxu0
        %v1142 = vadd.f32 0.0, %v1141
        %v1143 = vpop.f32.mrb[0].mxu0
        %v1144 = vpop.f32.mrb[0].mxu0
        %v1145 = vpop.f32.mrb[0].mxu0
        %1146 = vdwg.mxu0
        %v1148 = vsel %vm1008, %v987, 0
        %v1151 = vsel %vm1008, %v997, 0
        %1153 = vmatprep.subr.bf16.mxu0 0
        %1154 = vmatpush1.bf16.xpose.msra.mxu0 %v1151
        %1155 = vmatprep.subr.bf16.mxu0 0
        %1156 = vmatpush1.bf16.xpose.msra.mxu0 0
        %1157 = vmatprep.subr.bf16.mxu0 0
        %1158 = vmatpush1.bf16.xpose.msra.mxu0 0
        %1159 = vmatprep.subr.bf16.mxu0 0
        %1160 = vmatpush1.bf16.xpose.msra.mxu0 0
        %1161 = vmatprep.subr.bf16.mxu0 0
        %1162 = vmatpush1.bf16.xpose.msra.mxu0 0
        %1163 = vmatprep.subr.bf16.mxu0 0
        %1164 = vmatpush1.bf16.xpose.msra.mxu0 0
        %1165 = vmatprep.subr.bf16.mxu0 0
        %1166 = vmatpush1.bf16.xpose.msra.mxu0 0
        %1167 = vmatprep.subr.bf16.mxu0 0
        %1168 = vmatpush1.bf16.xpose.msra.mxu0 0
        %1169 = vmatprep.subr.bf16.mxu0 0
        %1170 = vmatpush1.bf16.xpose.msra.mxu0 0
        %1171 = vmatprep.subr.bf16.mxu0 0
        %1172 = vmatpush1.bf16.xpose.msra.mxu0 0
        %1173 = vmatprep.subr.bf16.mxu0 0
        %1174 = vmatpush1.bf16.xpose.msra.mxu0 0
        %1175 = vmatprep.subr.bf16.mxu0 0
        %1176 = vmatpush1.bf16.xpose.msra.mxu0 0
        %1177 = vmatprep.subr.bf16.mxu0 0
        %1178 = vmatpush1.bf16.xpose.msra.mxu0 0
        %1179 = vmatprep.subr.bf16.mxu0 0
        %1180 = vmatpush1.bf16.xpose.msra.mxu0 0
        %1181 = vmatprep.subr.bf16.mxu0 0
        %1182 = vmatpush1.bf16.xpose.msra.mxu0 0
        %1183 = vmatprep.subr.bf16.mxu0 0
        %1184 = vmatpush1.bf16.xpose.msra.mxu0 0
        %1185 = vmatprep.mubr.bf16.mxu0 0
        %1186 = vmatmul.mubr.bf16.gmra.mrb[0].mxu0 %v1148
        %v1187 = vpop.f32.mrb[0].mxu0
        %v1188 = vadd.f32 0.0, %v1187
        %v1189 = vpop.f32.mrb[0].mxu0
        %v1190 = vpop.f32.mrb[0].mxu0
        %v1191 = vpop.f32.mrb[0].mxu0
        %1192 = vdwg.mxu0
        %vm1193 = vcmask 64512
        %v1194 = vsel %vm1193, %v1050, -inf
        %1195 = vmax.xlane.f32.xlu0 %v1194
        %v1196 = vpop.xlane.xlu0 %1195
        %v1197 = vsel %vm1193, %v1096, -inf
        %1198 = vmax.xlane.f32.xlu0 %v1197
        %v1199 = vpop.xlane.xlu0 %1198
        %v1200 = vsel %vm1193, %v1142, -inf
        %1201 = vmax.xlane.f32.xlu0 %v1200
        %v1202 = vpop.xlane.xlu0 %1201
        %v1203 = vsel %vm1193, %v1188, -inf
        %1204 = vmax.xlane.f32.xlu0 %v1203
        %v1205 = vpop.xlane.xlu0 %1204
        %v1206 = vsub.f32 %v1050, %v1196
        %v1207 = vsub.f32 %v1096, %v1199
        %v1208 = vsub.f32 %v1142, %v1202
        %v1209 = vsub.f32 %v1188, %v1205
        %v1210 = vmul.f32 %v1206, 1.442695
        %v1211 = vpow.pop %v1210
        %v1212 = vmul.f32 %v1207, 1.442695
        %v1213 = vpow.pop %v1212
        %v1214 = vmul.f32 %v1208, 1.442695
        %v1215 = vpow.pop %v1214
        %v1216 = vmul.f32 %v1209, 1.442695
        %v1217 = vpow.pop %v1216
        %v1218 = vsel %vm1193, %v1211, 0.0
        %1219 = vadd.xlane.f32.xlu0 %v1218
        %v1220 = vpop.xlane.xlu0 %1219
        %v1221 = vsel %vm1193, %v1213, 0.0
        %1222 = vadd.xlane.f32.xlu0 %v1221
        %v1223 = vpop.xlane.xlu0 %1222
        %v1224 = vsel %vm1193, %v1215, 0.0
        %1225 = vadd.xlane.f32.xlu0 %v1224
        %v1226 = vpop.xlane.xlu0 %1225
        %v1227 = vsel %vm1193, %v1217, 0.0
        %1228 = vadd.xlane.f32.xlu0 %v1227
        %v1229 = vpop.xlane.xlu0 %1228
        %v1230 = vrcp.pop %v1220
        %v1231 = vrcp.pop %v1223
        %v1232 = vrcp.pop %v1226
        %v1233 = vrcp.pop %v1229
        %v1234 = vmul.f32 %v1211, %v1230
        %v1235 = vmul.f32 %v1213, %v1231
        %v1236 = vmul.f32 %v1215, %v1232
        %v1237 = vmul.f32 %v1217, %v1233
        %v1238 = vpack.c.bf16 %v1234, %v1234
        %v1239 = vpack.c.bf16 %v1235, %v1235
        %v1240 = vpack.c.bf16 %v1236, %v1236
        %v1241 = vpack.c.bf16 %v1237, %v1237
        %v1243 = vsel %vm1193, %v1238, 0
        %vm1245 = vcmask 1043456
        %v1247 = vsel %vm1245, %v1004, 0
        %1249 = vmatprep.subr.bf16.mxu0 0
        %1250 = vmatpush1.bf16.msra.mxu0 %v1247
        %1251 = vmatprep.subr.bf16.mxu0 0
        %1252 = vmatpush1.bf16.msra.mxu0 0
        %1253 = vmatprep.subr.bf16.mxu0 0
        %1254 = vmatpush1.bf16.msra.mxu0 0
        %1255 = vmatprep.subr.bf16.mxu0 0
        %1256 = vmatpush1.bf16.msra.mxu0 0
        %1257 = vmatprep.subr.bf16.mxu0 0
        %1258 = vmatpush1.bf16.msra.mxu0 0
        %1259 = vmatprep.subr.bf16.mxu0 0
        %1260 = vmatpush1.bf16.msra.mxu0 0
        %1261 = vmatprep.subr.bf16.mxu0 0
        %1262 = vmatpush1.bf16.msra.mxu0 0
        %1263 = vmatprep.subr.bf16.mxu0 0
        %1264 = vmatpush1.bf16.msra.mxu0 0
        %1265 = vmatprep.subr.bf16.mxu0 0
        %1266 = vmatpush1.bf16.msra.mxu0 0
        %1267 = vmatprep.subr.bf16.mxu0 0
        %1268 = vmatpush1.bf16.msra.mxu0 0
        %1269 = vmatprep.subr.bf16.mxu0 0
        %1270 = vmatpush1.bf16.msra.mxu0 0
        %1271 = vmatprep.subr.bf16.mxu0 0
        %1272 = vmatpush1.bf16.msra.mxu0 0
        %1273 = vmatprep.subr.bf16.mxu0 0
        %1274 = vmatpush1.bf16.msra.mxu0 0
        %1275 = vmatprep.subr.bf16.mxu0 0
        %1276 = vmatpush1.bf16.msra.mxu0 0
        %1277 = vmatprep.subr.bf16.mxu0 0
        %1278 = vmatpush1.bf16.msra.mxu0 0
        %1279 = vmatprep.subr.bf16.mxu0 0
        %1280 = vmatpush1.bf16.msra.mxu0 0
        %1281 = vmatprep.mubr.bf16.mxu0 0
        %1282 = vmatmul.mubr.bf16.gmra.mrb[0].mxu0 %v1243
        %v1283 = vpop.f32.mrb[0].mxu0
        %v1284 = vadd.f32 0.0, %v1283
        %v1285 = vpop.f32.mrb[0].mxu0
        %v1286 = vpop.f32.mrb[0].mxu0
        %v1287 = vpop.f32.mrb[0].mxu0
        %1288 = vdwg.mxu0
        %v1290 = vsel %vm1193, %v1239, 0
        %v1293 = vsel %vm1245, %v1005, 0
        %1295 = vmatprep.subr.bf16.mxu0 0
        %1296 = vmatpush1.bf16.msra.mxu0 %v1293
        %1297 = vmatprep.subr.bf16.mxu0 0
        %1298 = vmatpush1.bf16.msra.mxu0 0
        %1299 = vmatprep.subr.bf16.mxu0 0
        %1300 = vmatpush1.bf16.msra.mxu0 0
        %1301 = vmatprep.subr.bf16.mxu0 0
        %1302 = vmatpush1.bf16.msra.mxu0 0
        %1303 = vmatprep.subr.bf16.mxu0 0
        %1304 = vmatpush1.bf16.msra.mxu0 0
        %1305 = vmatprep.subr.bf16.mxu0 0
        %1306 = vmatpush1.bf16.msra.mxu0 0
        %1307 = vmatprep.subr.bf16.mxu0 0
        %1308 = vmatpush1.bf16.msra.mxu0 0
        %1309 = vmatprep.subr.bf16.mxu0 0
        %1310 = vmatpush1.bf16.msra.mxu0 0
        %1311 = vmatprep.subr.bf16.mxu0 0
        %1312 = vmatpush1.bf16.msra.mxu0 0
        %1313 = vmatprep.subr.bf16.mxu0 0
        %1314 = vmatpush1.bf16.msra.mxu0 0
        %1315 = vmatprep.subr.bf16.mxu0 0
        %1316 = vmatpush1.bf16.msra.mxu0 0
        %1317 = vmatprep.subr.bf16.mxu0 0
        %1318 = vmatpush1.bf16.msra.mxu0 0
        %1319 = vmatprep.subr.bf16.mxu0 0
        %1320 = vmatpush1.bf16.msra.mxu0 0
        %1321 = vmatprep.subr.bf16.mxu0 0
        %1322 = vmatpush1.bf16.msra.mxu0 0
        %1323 = vmatprep.subr.bf16.mxu0 0
        %1324 = vmatpush1.bf16.msra.mxu0 0
        %1325 = vmatprep.subr.bf16.mxu0 0
        %1326 = vmatpush1.bf16.msra.mxu0 0
        %1327 = vmatprep.mubr.bf16.mxu0 0
        %1328 = vmatmul.mubr.bf16.gmra.mrb[0].mxu0 %v1290
        %v1329 = vpop.f32.mrb[0].mxu0
        %v1330 = vadd.f32 0.0, %v1329
        %v1331 = vpop.f32.mrb[0].mxu0
        %v1332 = vpop.f32.mrb[0].mxu0
        %v1333 = vpop.f32.mrb[0].mxu0
        %1334 = vdwg.mxu0
        %v1336 = vsel %vm1193, %v1240, 0
        %v1339 = vsel %vm1245, %v1006, 0
        %1341 = vmatprep.subr.bf16.mxu0 0
        %1342 = vmatpush1.bf16.msra.mxu0 %v1339
        %1343 = vmatprep.subr.bf16.mxu0 0
        %1344 = vmatpush1.bf16.msra.mxu0 0
        %1345 = vmatprep.subr.bf16.mxu0 0
        %1346 = vmatpush1.bf16.msra.mxu0 0
        %1347 = vmatprep.subr.bf16.mxu0 0
        %1348 = vmatpush1.bf16.msra.mxu0 0
        %1349 = vmatprep.subr.bf16.mxu0 0
        %1350 = vmatpush1.bf16.msra.mxu0 0
        %1351 = vmatprep.subr.bf16.mxu0 0
        %1352 = vmatpush1.bf16.msra.mxu0 0
        %1353 = vmatprep.subr.bf16.mxu0 0
        %1354 = vmatpush1.bf16.msra.mxu0 0
        %1355 = vmatprep.subr.bf16.mxu0 0
        %1356 = vmatpush1.bf16.msra.mxu0 0
        %1357 = vmatprep.subr.bf16.mxu0 0
        %1358 = vmatpush1.bf16.msra.mxu0 0
        %1359 = vmatprep.subr.bf16.mxu0 0
        %1360 = vmatpush1.bf16.msra.mxu0 0
        %1361 = vmatprep.subr.bf16.mxu0 0
        %1362 = vmatpush1.bf16.msra.mxu0 0
        %1363 = vmatprep.subr.bf16.mxu0 0
        %1364 = vmatpush1.bf16.msra.mxu0 0
        %1365 = vmatprep.subr.bf16.mxu0 0
        %1366 = vmatpush1.bf16.msra.mxu0 0
        %1367 = vmatprep.subr.bf16.mxu0 0
        %1368 = vmatpush1.bf16.msra.mxu0 0
        %1369 = vmatprep.subr.bf16.mxu0 0
        %1370 = vmatpush1.bf16.msra.mxu0 0
        %1371 = vmatprep.subr.bf16.mxu0 0
        %1372 = vmatpush1.bf16.msra.mxu0 0
        %1373 = vmatprep.mubr.bf16.mxu0 0
        %1374 = vmatmul.mubr.bf16.gmra.mrb[0].mxu0 %v1336
        %v1375 = vpop.f32.mrb[0].mxu0
        %v1376 = vadd.f32 0.0, %v1375
        %v1377 = vpop.f32.mrb[0].mxu0
        %v1378 = vpop.f32.mrb[0].mxu0
        %v1379 = vpop.f32.mrb[0].mxu0
        %1380 = vdwg.mxu0
        %v1382 = vsel %vm1193, %v1241, 0
        %v1385 = vsel %vm1245, %v1007, 0
        %1387 = vmatprep.subr.bf16.mxu0 0
        %1388 = vmatpush1.bf16.msra.mxu0 %v1385
        %1389 = vmatprep.subr.bf16.mxu0 0
        %1390 = vmatpush1.bf16.msra.mxu0 0
        %1391 = vmatprep.subr.bf16.mxu0 0
        %1392 = vmatpush1.bf16.msra.mxu0 0
        %1393 = vmatprep.subr.bf16.mxu0 0
        %1394 = vmatpush1.bf16.msra.mxu0 0
        %1395 = vmatprep.subr.bf16.mxu0 0
        %1396 = vmatpush1.bf16.msra.mxu0 0
        %1397 = vmatprep.subr.bf16.mxu0 0
        %1398 = vmatpush1.bf16.msra.mxu0 0
        %1399 = vmatprep.subr.bf16.mxu0 0
        %1400 = vmatpush1.bf16.msra.mxu0 0
        %1401 = vmatprep.subr.bf16.mxu0 0
        %1402 = vmatpush1.bf16.msra.mxu0 0
        %1403 = vmatprep.subr.bf16.mxu0 0
        %1404 = vmatpush1.bf16.msra.mxu0 0
        %1405 = vmatprep.subr.bf16.mxu0 0
        %1406 = vmatpush1.bf16.msra.mxu0 0
        %1407 = vmatprep.subr.bf16.mxu0 0
        %1408 = vmatpush1.bf16.msra.mxu0 0
        %1409 = vmatprep.subr.bf16.mxu0 0
        %1410 = vmatpush1.bf16.msra.mxu0 0
        %1411 = vmatprep.subr.bf16.mxu0 0
        %1412 = vmatpush1.bf16.msra.mxu0 0
        %1413 = vmatprep.subr.bf16.mxu0 0
        %1414 = vmatpush1.bf16.msra.mxu0 0
        %1415 = vmatprep.subr.bf16.mxu0 0
        %1416 = vmatpush1.bf16.msra.mxu0 0
        %1417 = vmatprep.subr.bf16.mxu0 0
        %1418 = vmatpush1.bf16.msra.mxu0 0
        %1419 = vmatprep.mubr.bf16.mxu0 0
        %1420 = vmatmul.mubr.bf16.gmra.mrb[0].mxu0 %v1382
        %v1421 = vpop.f32.mrb[0].mxu0
        %v1422 = vadd.f32 0.0, %v1421
        %v1423 = vpop.f32.mrb[0].mxu0
        %v1424 = vpop.f32.mrb[0].mxu0
        %v1425 = vpop.f32.mrb[0].mxu0
        %1426 = vdwg.mxu0
        %1427 = vrot.lane.b32.xlu0 %v984, 96
        %v1428 = vpop.permute.xlu0 %1427
        %1429 = vrot.lane.b32.xlu0 %v994, 96
        %v1430 = vpop.permute.xlu0 %1429
        %v1432 = vsel %vm1008, %v1428, 0
        %v1435 = vsel %vm1008, %v1430, 0
        %1437 = vmatprep.subr.bf16.mxu0 0
        %1438 = vmatpush1.bf16.xpose.msra.mxu0 %v1435
        %1439 = vmatprep.subr.bf16.mxu0 0
        %1440 = vmatpush1.bf16.xpose.msra.mxu0 0
        %1441 = vmatprep.subr.bf16.mxu0 0
        %1442 = vmatpush1.bf16.xpose.msra.mxu0 0
        %1443 = vmatprep.subr.bf16.mxu0 0
        %1444 = vmatpush1.bf16.xpose.msra.mxu0 0
        %1445 = vmatprep.subr.bf16.mxu0 0
        %1446 = vmatpush1.bf16.xpose.msra.mxu0 0
        %1447 = vmatprep.subr.bf16.mxu0 0
        %1448 = vmatpush1.bf16.xpose.msra.mxu0 0
        %1449 = vmatprep.subr.bf16.mxu0 0
        %1450 = vmatpush1.bf16.xpose.msra.mxu0 0
        %1451 = vmatprep.subr.bf16.mxu0 0
        %1452 = vmatpush1.bf16.xpose.msra.mxu0 0
        %1453 = vmatprep.subr.bf16.mxu0 0
        %1454 = vmatpush1.bf16.xpose.msra.mxu0 0
        %1455 = vmatprep.subr.bf16.mxu0 0
        %1456 = vmatpush1.bf16.xpose.msra.mxu0 0
        %1457 = vmatprep.subr.bf16.mxu0 0
        %1458 = vmatpush1.bf16.xpose.msra.mxu0 0
        %1459 = vmatprep.subr.bf16.mxu0 0
        %1460 = vmatpush1.bf16.xpose.msra.mxu0 0
        %1461 = vmatprep.subr.bf16.mxu0 0
        %1462 = vmatpush1.bf16.xpose.msra.mxu0 0
        %1463 = vmatprep.subr.bf16.mxu0 0
        %1464 = vmatpush1.bf16.xpose.msra.mxu0 0
        %1465 = vmatprep.subr.bf16.mxu0 0
        %1466 = vmatpush1.bf16.xpose.msra.mxu0 0
        %1467 = vmatprep.subr.bf16.mxu0 0
        %1468 = vmatpush1.bf16.xpose.msra.mxu0 0
        %1469 = vmatprep.mubr.bf16.mxu0 0
        %1470 = vmatmul.mubr.bf16.gmra.mrb[0].mxu0 %v1432
        %v1471 = vpop.f32.mrb[0].mxu0
        %v1472 = vadd.f32 0.0, %v1471
        %v1473 = vpop.f32.mrb[0].mxu0
        %v1474 = vpop.f32.mrb[0].mxu0
        %v1475 = vpop.f32.mrb[0].mxu0
        %1476 = vdwg.mxu0
        %1477 = vrot.lane.b32.xlu0 %v985, 96
        %v1478 = vpop.permute.xlu0 %1477
        %1479 = vrot.lane.b32.xlu0 %v995, 96
        %v1480 = vpop.permute.xlu0 %1479
        %v1482 = vsel %vm1008, %v1478, 0
        %v1485 = vsel %vm1008, %v1480, 0
        %1487 = vmatprep.subr.bf16.mxu0 0
        %1488 = vmatpush1.bf16.xpose.msra.mxu0 %v1485
        %1489 = vmatprep.subr.bf16.mxu0 0
        %1490 = vmatpush1.bf16.xpose.msra.mxu0 0
        %1491 = vmatprep.subr.bf16.mxu0 0
        %1492 = vmatpush1.bf16.xpose.msra.mxu0 0
        %1493 = vmatprep.subr.bf16.mxu0 0
        %1494 = vmatpush1.bf16.xpose.msra.mxu0 0
        %1495 = vmatprep.subr.bf16.mxu0 0
        %1496 = vmatpush1.bf16.xpose.msra.mxu0 0
        %1497 = vmatprep.subr.bf16.mxu0 0
        %1498 = vmatpush1.bf16.xpose.msra.mxu0 0
        %1499 = vmatprep.subr.bf16.mxu0 0
        %1500 = vmatpush1.bf16.xpose.msra.mxu0 0
        %1501 = vmatprep.subr.bf16.mxu0 0
        %1502 = vmatpush1.bf16.xpose.msra.mxu0 0
        %1503 = vmatprep.subr.bf16.mxu0 0
        %1504 = vmatpush1.bf16.xpose.msra.mxu0 0
        %1505 = vmatprep.subr.bf16.mxu0 0
        %1506 = vmatpush1.bf16.xpose.msra.mxu0 0
        %1507 = vmatprep.subr.bf16.mxu0 0
        %1508 = vmatpush1.bf16.xpose.msra.mxu0 0
        %1509 = vmatprep.subr.bf16.mxu0 0
        %1510 = vmatpush1.bf16.xpose.msra.mxu0 0
        %1511 = vmatprep.subr.bf16.mxu0 0
        %1512 = vmatpush1.bf16.xpose.msra.mxu0 0
        %1513 = vmatprep.subr.bf16.mxu0 0
        %1514 = vmatpush1.bf16.xpose.msra.mxu0 0
        %1515 = vmatprep.subr.bf16.mxu0 0
        %1516 = vmatpush1.bf16.xpose.msra.mxu0 0
        %1517 = vmatprep.subr.bf16.mxu0 0
        %1518 = vmatpush1.bf16.xpose.msra.mxu0 0
        %1519 = vmatprep.mubr.bf16.mxu0 0
        %1520 = vmatmul.mubr.bf16.gmra.mrb[0].mxu0 %v1482
        %v1521 = vpop.f32.mrb[0].mxu0
        %v1522 = vadd.f32 0.0, %v1521
        %v1523 = vpop.f32.mrb[0].mxu0
        %v1524 = vpop.f32.mrb[0].mxu0
        %v1525 = vpop.f32.mrb[0].mxu0
        %1526 = vdwg.mxu0
        %1527 = vrot.lane.b32.xlu0 %v986, 96
        %v1528 = vpop.permute.xlu0 %1527
        %1529 = vrot.lane.b32.xlu0 %v996, 96
        %v1530 = vpop.permute.xlu0 %1529
        %v1532 = vsel %vm1008, %v1528, 0
        %v1535 = vsel %vm1008, %v1530, 0
        %1537 = vmatprep.subr.bf16.mxu0 0
        %1538 = vmatpush1.bf16.xpose.msra.mxu0 %v1535
        %1539 = vmatprep.subr.bf16.mxu0 0
        %1540 = vmatpush1.bf16.xpose.msra.mxu0 0
        %1541 = vmatprep.subr.bf16.mxu0 0
        %1542 = vmatpush1.bf16.xpose.msra.mxu0 0
        %1543 = vmatprep.subr.bf16.mxu0 0
        %1544 = vmatpush1.bf16.xpose.msra.mxu0 0
        %1545 = vmatprep.subr.bf16.mxu0 0
        %1546 = vmatpush1.bf16.xpose.msra.mxu0 0
        %1547 = vmatprep.subr.bf16.mxu0 0
        %1548 = vmatpush1.bf16.xpose.msra.mxu0 0
        %1549 = vmatprep.subr.bf16.mxu0 0
        %1550 = vmatpush1.bf16.xpose.msra.mxu0 0
        %1551 = vmatprep.subr.bf16.mxu0 0
        %1552 = vmatpush1.bf16.xpose.msra.mxu0 0
        %1553 = vmatprep.subr.bf16.mxu0 0
        %1554 = vmatpush1.bf16.xpose.msra.mxu0 0
        %1555 = vmatprep.subr.bf16.mxu0 0
        %1556 = vmatpush1.bf16.xpose.msra.mxu0 0
        %1557 = vmatprep.subr.bf16.mxu0 0
        %1558 = vmatpush1.bf16.xpose.msra.mxu0 0
        %1559 = vmatprep.subr.bf16.mxu0 0
        %1560 = vmatpush1.bf16.xpose.msra.mxu0 0
        %1561 = vmatprep.subr.bf16.mxu0 0
        %1562 = vmatpush1.bf16.xpose.msra.mxu0 0
        %1563 = vmatprep.subr.bf16.mxu0 0
        %1564 = vmatpush1.bf16.xpose.msra.mxu0 0
        %1565 = vmatprep.subr.bf16.mxu0 0
        %1566 = vmatpush1.bf16.xpose.msra.mxu0 0
        %1567 = vmatprep.subr.bf16.mxu0 0
        %1568 = vmatpush1.bf16.xpose.msra.mxu0 0
        %1569 = vmatprep.mubr.bf16.mxu0 0
        %1570 = vmatmul.mubr.bf16.gmra.mrb[0].mxu0 %v1532
        %v1571 = vpop.f32.mrb[0].mxu0
        %v1572 = vadd.f32 0.0, %v1571
        %v1573 = vpop.f32.mrb[0].mxu0
        %v1574 = vpop.f32.mrb[0].mxu0
        %v1575 = vpop.f32.mrb[0].mxu0
        %1576 = vdwg.mxu0
        %1577 = vrot.lane.b32.xlu0 %v987, 96
        %v1578 = vpop.permute.xlu0 %1577
        %1579 = vrot.lane.b32.xlu0 %v997, 96
        %v1580 = vpop.permute.xlu0 %1579
        %v1582 = vsel %vm1008, %v1578, 0
        %v1585 = vsel %vm1008, %v1580, 0
        %1587 = vmatprep.subr.bf16.mxu0 0
        %1588 = vmatpush1.bf16.xpose.msra.mxu0 %v1585
        %1589 = vmatprep.subr.bf16.mxu0 0
        %1590 = vmatpush1.bf16.xpose.msra.mxu0 0
        %1591 = vmatprep.subr.bf16.mxu0 0
        %1592 = vmatpush1.bf16.xpose.msra.mxu0 0
        %1593 = vmatprep.subr.bf16.mxu0 0
        %1594 = vmatpush1.bf16.xpose.msra.mxu0 0
        %1595 = vmatprep.subr.bf16.mxu0 0
        %1596 = vmatpush1.bf16.xpose.msra.mxu0 0
        %1597 = vmatprep.subr.bf16.mxu0 0
        %1598 = vmatpush1.bf16.xpose.msra.mxu0 0
        %1599 = vmatprep.subr.bf16.mxu0 0
        %1600 = vmatpush1.bf16.xpose.msra.mxu0 0
        %1601 = vmatprep.subr.bf16.mxu0 0
        %1602 = vmatpush1.bf16.xpose.msra.mxu0 0
        %1603 = vmatprep.subr.bf16.mxu0 0
        %1604 = vmatpush1.bf16.xpose.msra.mxu0 0
        %1605 = vmatprep.subr.bf16.mxu0 0
        %1606 = vmatpush1.bf16.xpose.msra.mxu0 0
        %1607 = vmatprep.subr.bf16.mxu0 0
        %1608 = vmatpush1.bf16.xpose.msra.mxu0 0
        %1609 = vmatprep.subr.bf16.mxu0 0
        %1610 = vmatpush1.bf16.xpose.msra.mxu0 0
        %1611 = vmatprep.subr.bf16.mxu0 0
        %1612 = vmatpush1.bf16.xpose.msra.mxu0 0
        %1613 = vmatprep.subr.bf16.mxu0 0
        %1614 = vmatpush1.bf16.xpose.msra.mxu0 0
        %1615 = vmatprep.subr.bf16.mxu0 0
        %1616 = vmatpush1.bf16.xpose.msra.mxu0 0
        %1617 = vmatprep.subr.bf16.mxu0 0
        %1618 = vmatpush1.bf16.xpose.msra.mxu0 0
        %1619 = vmatprep.mubr.bf16.mxu0 0
        %1620 = vmatmul.mubr.bf16.gmra.mrb[0].mxu0 %v1582
        %v1621 = vpop.f32.mrb[0].mxu0
        %v1622 = vadd.f32 0.0, %v1621
        %v1623 = vpop.f32.mrb[0].mxu0
        %v1624 = vpop.f32.mrb[0].mxu0
        %v1625 = vpop.f32.mrb[0].mxu0
        %1626 = vdwg.mxu0
        %v1627 = vsel %vm1193, %v1472, -inf
        %1628 = vmax.xlane.f32.xlu0 %v1627
        %v1629 = vpop.xlane.xlu0 %1628
        %v1630 = vsel %vm1193, %v1522, -inf
        %1631 = vmax.xlane.f32.xlu0 %v1630
        %v1632 = vpop.xlane.xlu0 %1631
        %v1633 = vsel %vm1193, %v1572, -inf
        %1634 = vmax.xlane.f32.xlu0 %v1633
        %v1635 = vpop.xlane.xlu0 %1634
        %v1636 = vsel %vm1193, %v1622, -inf
        %1637 = vmax.xlane.f32.xlu0 %v1636
        %v1638 = vpop.xlane.xlu0 %1637
        %v1639 = vsub.f32 %v1472, %v1629
        %v1640 = vsub.f32 %v1522, %v1632
        %v1641 = vsub.f32 %v1572, %v1635
        %v1642 = vsub.f32 %v1622, %v1638
        %v1643 = vmul.f32 %v1639, 1.442695
        %v1644 = vpow.pop %v1643
        %v1645 = vmul.f32 %v1640, 1.442695
        %v1646 = vpow.pop %v1645
        %v1647 = vmul.f32 %v1641, 1.442695
        %v1648 = vpow.pop %v1647
        %v1649 = vmul.f32 %v1642, 1.442695
        %v1650 = vpow.pop %v1649
        %v1651 = vsel %vm1193, %v1644, 0.0
        %1652 = vadd.xlane.f32.xlu0 %v1651
        %v1653 = vpop.xlane.xlu0 %1652
        %v1654 = vsel %vm1193, %v1646, 0.0
        %1655 = vadd.xlane.f32.xlu0 %v1654
        %v1656 = vpop.xlane.xlu0 %1655
        %v1657 = vsel %vm1193, %v1648, 0.0
        %1658 = vadd.xlane.f32.xlu0 %v1657
        %v1659 = vpop.xlane.xlu0 %1658
        %v1660 = vsel %vm1193, %v1650, 0.0
        %1661 = vadd.xlane.f32.xlu0 %v1660
        %v1662 = vpop.xlane.xlu0 %1661
        %v1663 = vrcp.pop %v1653
        %v1664 = vrcp.pop %v1656
        %v1665 = vrcp.pop %v1659
        %v1666 = vrcp.pop %v1662
        %v1667 = vmul.f32 %v1644, %v1663
        %v1668 = vmul.f32 %v1646, %v1664
        %v1669 = vmul.f32 %v1648, %v1665
        %v1670 = vmul.f32 %v1650, %v1666
        %v1671 = vpack.c.bf16 %v1667, %v1667
        %v1672 = vpack.c.bf16 %v1668, %v1668
        %v1673 = vpack.c.bf16 %v1669, %v1669
        %v1674 = vpack.c.bf16 %v1670, %v1670
        %1675 = vrot.lane.b32.xlu0 %v1004, 96
        %v1676 = vpop.permute.xlu0 %1675
        %v1678 = vsel %vm1193, %v1671, 0
        %v1681 = vsel %vm1245, %v1676, 0
        %1683 = vmatprep.subr.bf16.mxu0 0
        %1684 = vmatpush1.bf16.msra.mxu0 %v1681
        %1685 = vmatprep.subr.bf16.mxu0 0
        %1686 = vmatpush1.bf16.msra.mxu0 0
        %1687 = vmatprep.subr.bf16.mxu0 0
        %1688 = vmatpush1.bf16.msra.mxu0 0
        %1689 = vmatprep.subr.bf16.mxu0 0
        %1690 = vmatpush1.bf16.msra.mxu0 0
        %1691 = vmatprep.subr.bf16.mxu0 0
        %1692 = vmatpush1.bf16.msra.mxu0 0
        %1693 = vmatprep.subr.bf16.mxu0 0
        %1694 = vmatpush1.bf16.msra.mxu0 0
        %1695 = vmatprep.subr.bf16.mxu0 0
        %1696 = vmatpush1.bf16.msra.mxu0 0
        %1697 = vmatprep.subr.bf16.mxu0 0
        %1698 = vmatpush1.bf16.msra.mxu0 0
        %1699 = vmatprep.subr.bf16.mxu0 0
        %1700 = vmatpush1.bf16.msra.mxu0 0
        %1701 = vmatprep.subr.bf16.mxu0 0
        %1702 = vmatpush1.bf16.msra.mxu0 0
        %1703 = vmatprep.subr.bf16.mxu0 0
        %1704 = vmatpush1.bf16.msra.mxu0 0
        %1705 = vmatprep.subr.bf16.mxu0 0
        %1706 = vmatpush1.bf16.msra.mxu0 0
        %1707 = vmatprep.subr.bf16.mxu0 0
        %1708 = vmatpush1.bf16.msra.mxu0 0
        %1709 = vmatprep.subr.bf16.mxu0 0
        %1710 = vmatpush1.bf16.msra.mxu0 0
        %1711 = vmatprep.subr.bf16.mxu0 0
        %1712 = vmatpush1.bf16.msra.mxu0 0
        %1713 = vmatprep.subr.bf16.mxu0 0
        %1714 = vmatpush1.bf16.msra.mxu0 0
        %1715 = vmatprep.mubr.bf16.mxu0 0
        %1716 = vmatmul.mubr.bf16.gmra.mrb[0].mxu0 %v1678
        %v1717 = vpop.f32.mrb[0].mxu0
        %v1718 = vadd.f32 0.0, %v1717
        %v1719 = vpop.f32.mrb[0].mxu0
        %v1720 = vpop.f32.mrb[0].mxu0
        %v1721 = vpop.f32.mrb[0].mxu0
        %1722 = vdwg.mxu0
        %1723 = vrot.lane.b32.xlu0 %v1005, 96
        %v1724 = vpop.permute.xlu0 %1723
        %v1726 = vsel %vm1193, %v1672, 0
        %v1729 = vsel %vm1245, %v1724, 0
        %1731 = vmatprep.subr.bf16.mxu0 0
        %1732 = vmatpush1.bf16.msra.mxu0 %v1729
        %1733 = vmatprep.subr.bf16.mxu0 0
        %1734 = vmatpush1.bf16.msra.mxu0 0
        %1735 = vmatprep.subr.bf16.mxu0 0
        %1736 = vmatpush1.bf16.msra.mxu0 0
        %1737 = vmatprep.subr.bf16.mxu0 0
        %1738 = vmatpush1.bf16.msra.mxu0 0
        %1739 = vmatprep.subr.bf16.mxu0 0
        %1740 = vmatpush1.bf16.msra.mxu0 0
        %1741 = vmatprep.subr.bf16.mxu0 0
        %1742 = vmatpush1.bf16.msra.mxu0 0
        %1743 = vmatprep.subr.bf16.mxu0 0
        %1744 = vmatpush1.bf16.msra.mxu0 0
        %1745 = vmatprep.subr.bf16.mxu0 0
        %1746 = vmatpush1.bf16.msra.mxu0 0
        %1747 = vmatprep.subr.bf16.mxu0 0
        %1748 = vmatpush1.bf16.msra.mxu0 0
        %1749 = vmatprep.subr.bf16.mxu0 0
        %1750 = vmatpush1.bf16.msra.mxu0 0
        %1751 = vmatprep.subr.bf16.mxu0 0
        %1752 = vmatpush1.bf16.msra.mxu0 0
        %1753 = vmatprep.subr.bf16.mxu0 0
        %1754 = vmatpush1.bf16.msra.mxu0 0
        %1755 = vmatprep.subr.bf16.mxu0 0
        %1756 = vmatpush1.bf16.msra.mxu0 0
        %1757 = vmatprep.subr.bf16.mxu0 0
        %1758 = vmatpush1.bf16.msra.mxu0 0
        %1759 = vmatprep.subr.bf16.mxu0 0
        %1760 = vmatpush1.bf16.msra.mxu0 0
        %1761 = vmatprep.subr.bf16.mxu0 0
        %1762 = vmatpush1.bf16.msra.mxu0 0
        %1763 = vmatprep.mubr.bf16.mxu0 0
        %1764 = vmatmul.mubr.bf16.gmra.mrb[0].mxu0 %v1726
        %v1765 = vpop.f32.mrb[0].mxu0
        %v1766 = vadd.f32 0.0, %v1765
        %v1767 = vpop.f32.mrb[0].mxu0
        %v1768 = vpop.f32.mrb[0].mxu0
        %v1769 = vpop.f32.mrb[0].mxu0
        %1770 = vdwg.mxu0
        %1771 = vrot.lane.b32.xlu0 %v1006, 96
        %v1772 = vpop.permute.xlu0 %1771
        %v1774 = vsel %vm1193, %v1673, 0
        %v1777 = vsel %vm1245, %v1772, 0
        %1779 = vmatprep.subr.bf16.mxu0 0
        %1780 = vmatpush1.bf16.msra.mxu0 %v1777
        %1781 = vmatprep.subr.bf16.mxu0 0
        %1782 = vmatpush1.bf16.msra.mxu0 0
        %1783 = vmatprep.subr.bf16.mxu0 0
        %1784 = vmatpush1.bf16.msra.mxu0 0
        %1785 = vmatprep.subr.bf16.mxu0 0
        %1786 = vmatpush1.bf16.msra.mxu0 0
        %1787 = vmatprep.subr.bf16.mxu0 0
        %1788 = vmatpush1.bf16.msra.mxu0 0
        %1789 = vmatprep.subr.bf16.mxu0 0
        %1790 = vmatpush1.bf16.msra.mxu0 0
        %1791 = vmatprep.subr.bf16.mxu0 0
        %1792 = vmatpush1.bf16.msra.mxu0 0
        %1793 = vmatprep.subr.bf16.mxu0 0
        %1794 = vmatpush1.bf16.msra.mxu0 0
        %1795 = vmatprep.subr.bf16.mxu0 0
        %1796 = vmatpush1.bf16.msra.mxu0 0
        %1797 = vmatprep.subr.bf16.mxu0 0
        %1798 = vmatpush1.bf16.msra.mxu0 0
        %1799 = vmatprep.subr.bf16.mxu0 0
        %1800 = vmatpush1.bf16.msra.mxu0 0
        %1801 = vmatprep.subr.bf16.mxu0 0
        %1802 = vmatpush1.bf16.msra.mxu0 0
        %1803 = vmatprep.subr.bf16.mxu0 0
        %1804 = vmatpush1.bf16.msra.mxu0 0
        %1805 = vmatprep.subr.bf16.mxu0 0
        %1806 = vmatpush1.bf16.msra.mxu0 0
        %1807 = vmatprep.subr.bf16.mxu0 0
        %1808 = vmatpush1.bf16.msra.mxu0 0
        %1809 = vmatprep.subr.bf16.mxu0 0
        %1810 = vmatpush1.bf16.msra.mxu0 0
        %1811 = vmatprep.mubr.bf16.mxu0 0
        %1812 = vmatmul.mubr.bf16.gmra.mrb[0].mxu0 %v1774
        %v1813 = vpop.f32.mrb[0].mxu0
        %v1814 = vadd.f32 0.0, %v1813
        %v1815 = vpop.f32.mrb[0].mxu0
        %v1816 = vpop.f32.mrb[0].mxu0
        %v1817 = vpop.f32.mrb[0].mxu0
        %1818 = vdwg.mxu0
        %1819 = vrot.lane.b32.xlu0 %v1007, 96
        %v1820 = vpop.permute.xlu0 %1819
        %v1822 = vsel %vm1193, %v1674, 0
        %v1825 = vsel %vm1245, %v1820, 0
        %1827 = vmatprep.subr.bf16.mxu0 0
        %1828 = vmatpush1.bf16.msra.mxu0 %v1825
        %1829 = vmatprep.subr.bf16.mxu0 0
        %1830 = vmatpush1.bf16.msra.mxu0 0
        %1831 = vmatprep.subr.bf16.mxu0 0
        %1832 = vmatpush1.bf16.msra.mxu0 0
        %1833 = vmatprep.subr.bf16.mxu0 0
        %1834 = vmatpush1.bf16.msra.mxu0 0
        %1835 = vmatprep.subr.bf16.mxu0 0
        %1836 = vmatpush1.bf16.msra.mxu0 0
        %1837 = vmatprep.subr.bf16.mxu0 0
        %1838 = vmatpush1.bf16.msra.mxu0 0
        %1839 = vmatprep.subr.bf16.mxu0 0
        %1840 = vmatpush1.bf16.msra.mxu0 0
        %1841 = vmatprep.subr.bf16.mxu0 0
        %1842 = vmatpush1.bf16.msra.mxu0 0
        %1843 = vmatprep.subr.bf16.mxu0 0
        %1844 = vmatpush1.bf16.msra.mxu0 0
        %1845 = vmatprep.subr.bf16.mxu0 0
        %1846 = vmatpush1.bf16.msra.mxu0 0
        %1847 = vmatprep.subr.bf16.mxu0 0
        %1848 = vmatpush1.bf16.msra.mxu0 0
        %1849 = vmatprep.subr.bf16.mxu0 0
        %1850 = vmatpush1.bf16.msra.mxu0 0
        %1851 = vmatprep.subr.bf16.mxu0 0
        %1852 = vmatpush1.bf16.msra.mxu0 0
        %1853 = vmatprep.subr.bf16.mxu0 0
        %1854 = vmatpush1.bf16.msra.mxu0 0
        %1855 = vmatprep.subr.bf16.mxu0 0
        %1856 = vmatpush1.bf16.msra.mxu0 0
        %1857 = vmatprep.subr.bf16.mxu0 0
        %1858 = vmatpush1.bf16.msra.mxu0 0
        %1859 = vmatprep.mubr.bf16.mxu0 0
        %1860 = vmatmul.mubr.bf16.gmra.mrb[0].mxu0 %v1822
        %v1861 = vpop.f32.mrb[0].mxu0
        %v1862 = vadd.f32 0.0, %v1861
        %v1863 = vpop.f32.mrb[0].mxu0
        %v1864 = vpop.f32.mrb[0].mxu0
        %v1865 = vpop.f32.mrb[0].mxu0
        %1866 = vdwg.mxu0
        %1867 = vrot.lane.b32.xlu0 %v984, 64
        %v1868 = vpop.permute.xlu0 %1867
        %1869 = vrot.lane.b32.xlu0 %v994, 64
        %v1870 = vpop.permute.xlu0 %1869
        %v1872 = vsel %vm1008, %v1868, 0
        %v1875 = vsel %vm1008, %v1870, 0
        %1877 = vmatprep.subr.bf16.mxu0 0
        %1878 = vmatpush1.bf16.xpose.msra.mxu0 %v1875
        %1879 = vmatprep.subr.bf16.mxu0 0
        %1880 = vmatpush1.bf16.xpose.msra.mxu0 0
        %1881 = vmatprep.subr.bf16.mxu0 0
        %1882 = vmatpush1.bf16.xpose.msra.mxu0 0
        %1883 = vmatprep.subr.bf16.mxu0 0
        %1884 = vmatpush1.bf16.xpose.msra.mxu0 0
        %1885 = vmatprep.subr.bf16.mxu0 0
        %1886 = vmatpush1.bf16.xpose.msra.mxu0 0
        %1887 = vmatprep.subr.bf16.mxu0 0
        %1888 = vmatpush1.bf16.xpose.msra.mxu0 0
        %1889 = vmatprep.subr.bf16.mxu0 0
        %1890 = vmatpush1.bf16.xpose.msra.mxu0 0
        %1891 = vmatprep.subr.bf16.mxu0 0
        %1892 = vmatpush1.bf16.xpose.msra.mxu0 0
        %1893 = vmatprep.subr.bf16.mxu0 0
        %1894 = vmatpush1.bf16.xpose.msra.mxu0 0
        %1895 = vmatprep.subr.bf16.mxu0 0
        %1896 = vmatpush1.bf16.xpose.msra.mxu0 0
        %1897 = vmatprep.subr.bf16.mxu0 0
        %1898 = vmatpush1.bf16.xpose.msra.mxu0 0
        %1899 = vmatprep.subr.bf16.mxu0 0
        %1900 = vmatpush1.bf16.xpose.msra.mxu0 0
        %1901 = vmatprep.subr.bf16.mxu0 0
        %1902 = vmatpush1.bf16.xpose.msra.mxu0 0
        %1903 = vmatprep.subr.bf16.mxu0 0
        %1904 = vmatpush1.bf16.xpose.msra.mxu0 0
        %1905 = vmatprep.subr.bf16.mxu0 0
        %1906 = vmatpush1.bf16.xpose.msra.mxu0 0
        %1907 = vmatprep.subr.bf16.mxu0 0
        %1908 = vmatpush1.bf16.xpose.msra.mxu0 0
        %1909 = vmatprep.mubr.bf16.mxu0 0
        %1910 = vmatmul.mubr.bf16.gmra.mrb[0].mxu0 %v1872
        %v1911 = vpop.f32.mrb[0].mxu0
        %v1912 = vadd.f32 0.0, %v1911
        %v1913 = vpop.f32.mrb[0].mxu0
        %v1914 = vpop.f32.mrb[0].mxu0
        %v1915 = vpop.f32.mrb[0].mxu0
        %1916 = vdwg.mxu0
        %1917 = vrot.lane.b32.xlu0 %v985, 64
        %v1918 = vpop.permute.xlu0 %1917
        %1919 = vrot.lane.b32.xlu0 %v995, 64
        %v1920 = vpop.permute.xlu0 %1919
        %v1922 = vsel %vm1008, %v1918, 0
        %v1925 = vsel %vm1008, %v1920, 0
        %1927 = vmatprep.subr.bf16.mxu0 0
        %1928 = vmatpush1.bf16.xpose.msra.mxu0 %v1925
        %1929 = vmatprep.subr.bf16.mxu0 0
        %1930 = vmatpush1.bf16.xpose.msra.mxu0 0
        %1931 = vmatprep.subr.bf16.mxu0 0
        %1932 = vmatpush1.bf16.xpose.msra.mxu0 0
        %1933 = vmatprep.subr.bf16.mxu0 0
        %1934 = vmatpush1.bf16.xpose.msra.mxu0 0
        %1935 = vmatprep.subr.bf16.mxu0 0
        %1936 = vmatpush1.bf16.xpose.msra.mxu0 0
        %1937 = vmatprep.subr.bf16.mxu0 0
        %1938 = vmatpush1.bf16.xpose.msra.mxu0 0
        %1939 = vmatprep.subr.bf16.mxu0 0
        %1940 = vmatpush1.bf16.xpose.msra.mxu0 0
        %1941 = vmatprep.subr.bf16.mxu0 0
        %1942 = vmatpush1.bf16.xpose.msra.mxu0 0
        %1943 = vmatprep.subr.bf16.mxu0 0
        %1944 = vmatpush1.bf16.xpose.msra.mxu0 0
        %1945 = vmatprep.subr.bf16.mxu0 0
        %1946 = vmatpush1.bf16.xpose.msra.mxu0 0
        %1947 = vmatprep.subr.bf16.mxu0 0
        %1948 = vmatpush1.bf16.xpose.msra.mxu0 0
        %1949 = vmatprep.subr.bf16.mxu0 0
        %1950 = vmatpush1.bf16.xpose.msra.mxu0 0
        %1951 = vmatprep.subr.bf16.mxu0 0
        %1952 = vmatpush1.bf16.xpose.msra.mxu0 0
        %1953 = vmatprep.subr.bf16.mxu0 0
        %1954 = vmatpush1.bf16.xpose.msra.mxu0 0
        %1955 = vmatprep.subr.bf16.mxu0 0
        %1956 = vmatpush1.bf16.xpose.msra.mxu0 0
        %1957 = vmatprep.subr.bf16.mxu0 0
        %1958 = vmatpush1.bf16.xpose.msra.mxu0 0
        %1959 = vmatprep.mubr.bf16.mxu0 0
        %1960 = vmatmul.mubr.bf16.gmra.mrb[0].mxu0 %v1922
        %v1961 = vpop.f32.mrb[0].mxu0
        %v1962 = vadd.f32 0.0, %v1961
        %v1963 = vpop.f32.mrb[0].mxu0
        %v1964 = vpop.f32.mrb[0].mxu0
        %v1965 = vpop.f32.mrb[0].mxu0
        %1966 = vdwg.mxu0
        %1967 = vrot.lane.b32.xlu0 %v986, 64
        %v1968 = vpop.permute.xlu0 %1967
        %1969 = vrot.lane.b32.xlu0 %v996, 64
        %v1970 = vpop.permute.xlu0 %1969
        %v1972 = vsel %vm1008, %v1968, 0
        %v1975 = vsel %vm1008, %v1970, 0
        %1977 = vmatprep.subr.bf16.mxu0 0
        %1978 = vmatpush1.bf16.xpose.msra.mxu0 %v1975
        %1979 = vmatprep.subr.bf16.mxu0 0
        %1980 = vmatpush1.bf16.xpose.msra.mxu0 0
        %1981 = vmatprep.subr.bf16.mxu0 0
        %1982 = vmatpush1.bf16.xpose.msra.mxu0 0
        %1983 = vmatprep.subr.bf16.mxu0 0
        %1984 = vmatpush1.bf16.xpose.msra.mxu0 0
        %1985 = vmatprep.subr.bf16.mxu0 0
        %1986 = vmatpush1.bf16.xpose.msra.mxu0 0
        %1987 = vmatprep.subr.bf16.mxu0 0
        %1988 = vmatpush1.bf16.xpose.msra.mxu0 0
        %1989 = vmatprep.subr.bf16.mxu0 0
        %1990 = vmatpush1.bf16.xpose.msra.mxu0 0
        %1991 = vmatprep.subr.bf16.mxu0 0
        %1992 = vmatpush1.bf16.xpose.msra.mxu0 0
        %1993 = vmatprep.subr.bf16.mxu0 0
        %1994 = vmatpush1.bf16.xpose.msra.mxu0 0
        %1995 = vmatprep.subr.bf16.mxu0 0
        %1996 = vmatpush1.bf16.xpose.msra.mxu0 0
        %1997 = vmatprep.subr.bf16.mxu0 0
        %1998 = vmatpush1.bf16.xpose.msra.mxu0 0
        %1999 = vmatprep.subr.bf16.mxu0 0
        %2000 = vmatpush1.bf16.xpose.msra.mxu0 0
        %2001 = vmatprep.subr.bf16.mxu0 0
        %2002 = vmatpush1.bf16.xpose.msra.mxu0 0
        %2003 = vmatprep.subr.bf16.mxu0 0
        %2004 = vmatpush1.bf16.xpose.msra.mxu0 0
        %2005 = vmatprep.subr.bf16.mxu0 0
        %2006 = vmatpush1.bf16.xpose.msra.mxu0 0
        %2007 = vmatprep.subr.bf16.mxu0 0
        %2008 = vmatpush1.bf16.xpose.msra.mxu0 0
        %2009 = vmatprep.mubr.bf16.mxu0 0
        %2010 = vmatmul.mubr.bf16.gmra.mrb[0].mxu0 %v1972
        %v2011 = vpop.f32.mrb[0].mxu0
        %v2012 = vadd.f32 0.0, %v2011
        %v2013 = vpop.f32.mrb[0].mxu0
        %v2014 = vpop.f32.mrb[0].mxu0
        %v2015 = vpop.f32.mrb[0].mxu0
        %2016 = vdwg.mxu0
        %2017 = vrot.lane.b32.xlu0 %v987, 64
        %v2018 = vpop.permute.xlu0 %2017
        %2019 = vrot.lane.b32.xlu0 %v997, 64
        %v2020 = vpop.permute.xlu0 %2019
        %v2022 = vsel %vm1008, %v2018, 0
        %v2025 = vsel %vm1008, %v2020, 0
        %2027 = vmatprep.subr.bf16.mxu0 0
        %2028 = vmatpush1.bf16.xpose.msra.mxu0 %v2025
        %2029 = vmatprep.subr.bf16.mxu0 0
        %2030 = vmatpush1.bf16.xpose.msra.mxu0 0
        %2031 = vmatprep.subr.bf16.mxu0 0
        %2032 = vmatpush1.bf16.xpose.msra.mxu0 0
        %2033 = vmatprep.subr.bf16.mxu0 0
        %2034 = vmatpush1.bf16.xpose.msra.mxu0 0
        %2035 = vmatprep.subr.bf16.mxu0 0
        %2036 = vmatpush1.bf16.xpose.msra.mxu0 0
        %2037 = vmatprep.subr.bf16.mxu0 0
        %2038 = vmatpush1.bf16.xpose.msra.mxu0 0
        %2039 = vmatprep.subr.bf16.mxu0 0
        %2040 = vmatpush1.bf16.xpose.msra.mxu0 0
        %2041 = vmatprep.subr.bf16.mxu0 0
        %2042 = vmatpush1.bf16.xpose.msra.mxu0 0
        %2043 = vmatprep.subr.bf16.mxu0 0
        %2044 = vmatpush1.bf16.xpose.msra.mxu0 0
        %2045 = vmatprep.subr.bf16.mxu0 0
        %2046 = vmatpush1.bf16.xpose.msra.mxu0 0
        %2047 = vmatprep.subr.bf16.mxu0 0
        %2048 = vmatpush1.bf16.xpose.msra.mxu0 0
        %2049 = vmatprep.subr.bf16.mxu0 0
        %2050 = vmatpush1.bf16.xpose.msra.mxu0 0
        %2051 = vmatprep.subr.bf16.mxu0 0
        %2052 = vmatpush1.bf16.xpose.msra.mxu0 0
        %2053 = vmatprep.subr.bf16.mxu0 0
        %2054 = vmatpush1.bf16.xpose.msra.mxu0 0
        %2055 = vmatprep.subr.bf16.mxu0 0
        %2056 = vmatpush1.bf16.xpose.msra.mxu0 0
        %2057 = vmatprep.subr.bf16.mxu0 0
        %2058 = vmatpush1.bf16.xpose.msra.mxu0 0
        %2059 = vmatprep.mubr.bf16.mxu0 0
        %2060 = vmatmul.mubr.bf16.gmra.mrb[0].mxu0 %v2022
        %v2061 = vpop.f32.mrb[0].mxu0
        %v2062 = vadd.f32 0.0, %v2061
        %v2063 = vpop.f32.mrb[0].mxu0
        %v2064 = vpop.f32.mrb[0].mxu0
        %v2065 = vpop.f32.mrb[0].mxu0
        %2066 = vdwg.mxu0
        %v2067 = vsel %vm1193, %v1912, -inf
        %2068 = vmax.xlane.f32.xlu0 %v2067
        %v2069 = vpop.xlane.xlu0 %2068
        %v2070 = vsel %vm1193, %v1962, -inf
        %2071 = vmax.xlane.f32.xlu0 %v2070
        %v2072 = vpop.xlane.xlu0 %2071
        %v2073 = vsel %vm1193, %v2012, -inf
        %2074 = vmax.xlane.f32.xlu0 %v2073
        %v2075 = vpop.xlane.xlu0 %2074
        %v2076 = vsel %vm1193, %v2062, -inf
        %2077 = vmax.xlane.f32.xlu0 %v2076
        %v2078 = vpop.xlane.xlu0 %2077
        %v2079 = vsub.f32 %v1912, %v2069
        %v2080 = vsub.f32 %v1962, %v2072
        %v2081 = vsub.f32 %v2012, %v2075
        %v2082 = vsub.f32 %v2062, %v2078
        %v2083 = vmul.f32 %v2079, 1.442695
        %v2084 = vpow.pop %v2083
        %v2085 = vmul.f32 %v2080, 1.442695
        %v2086 = vpow.pop %v2085
        %v2087 = vmul.f32 %v2081, 1.442695
        %v2088 = vpow.pop %v2087
        %v2089 = vmul.f32 %v2082, 1.442695
        %v2090 = vpow.pop %v2089
        %v2091 = vsel %vm1193, %v2084, 0.0
        %2092 = vadd.xlane.f32.xlu0 %v2091
        %v2093 = vpop.xlane.xlu0 %2092
        %v2094 = vsel %vm1193, %v2086, 0.0
        %2095 = vadd.xlane.f32.xlu0 %v2094
        %v2096 = vpop.xlane.xlu0 %2095
        %v2097 = vsel %vm1193, %v2088, 0.0
        %2098 = vadd.xlane.f32.xlu0 %v2097
        %v2099 = vpop.xlane.xlu0 %2098
        %v2100 = vsel %vm1193, %v2090, 0.0
        %2101 = vadd.xlane.f32.xlu0 %v2100
        %v2102 = vpop.xlane.xlu0 %2101
        %v2103 = vrcp.pop %v2093
        %v2104 = vrcp.pop %v2096
        %v2105 = vrcp.pop %v2099
        %v2106 = vrcp.pop %v2102
        %v2107 = vmul.f32 %v2084, %v2103
        %v2108 = vmul.f32 %v2086, %v2104
        %v2109 = vmul.f32 %v2088, %v2105
        %v2110 = vmul.f32 %v2090, %v2106
        %v2111 = vpack.c.bf16 %v2107, %v2107
        %v2112 = vpack.c.bf16 %v2108, %v2108
        %v2113 = vpack.c.bf16 %v2109, %v2109
        %v2114 = vpack.c.bf16 %v2110, %v2110
        %2115 = vrot.lane.b32.xlu0 %v1004, 64
        %v2116 = vpop.permute.xlu0 %2115
        %v2118 = vsel %vm1193, %v2111, 0
        %v2121 = vsel %vm1245, %v2116, 0
        %2123 = vmatprep.subr.bf16.mxu0 0
        %2124 = vmatpush1.bf16.msra.mxu0 %v2121
        %2125 = vmatprep.subr.bf16.mxu0 0
        %2126 = vmatpush1.bf16.msra.mxu0 0
        %2127 = vmatprep.subr.bf16.mxu0 0
        %2128 = vmatpush1.bf16.msra.mxu0 0
        %2129 = vmatprep.subr.bf16.mxu0 0
        %2130 = vmatpush1.bf16.msra.mxu0 0
        %2131 = vmatprep.subr.bf16.mxu0 0
        %2132 = vmatpush1.bf16.msra.mxu0 0
        %2133 = vmatprep.subr.bf16.mxu0 0
        %2134 = vmatpush1.bf16.msra.mxu0 0
        %2135 = vmatprep.subr.bf16.mxu0 0
        %2136 = vmatpush1.bf16.msra.mxu0 0
        %2137 = vmatprep.subr.bf16.mxu0 0
        %2138 = vmatpush1.bf16.msra.mxu0 0
        %2139 = vmatprep.subr.bf16.mxu0 0
        %2140 = vmatpush1.bf16.msra.mxu0 0
        %2141 = vmatprep.subr.bf16.mxu0 0
        %2142 = vmatpush1.bf16.msra.mxu0 0
        %2143 = vmatprep.subr.bf16.mxu0 0
        %2144 = vmatpush1.bf16.msra.mxu0 0
        %2145 = vmatprep.subr.bf16.mxu0 0
        %2146 = vmatpush1.bf16.msra.mxu0 0
        %2147 = vmatprep.subr.bf16.mxu0 0
        %2148 = vmatpush1.bf16.msra.mxu0 0
        %2149 = vmatprep.subr.bf16.mxu0 0
        %2150 = vmatpush1.bf16.msra.mxu0 0
        %2151 = vmatprep.subr.bf16.mxu0 0
        %2152 = vmatpush1.bf16.msra.mxu0 0
        %2153 = vmatprep.subr.bf16.mxu0 0
        %2154 = vmatpush1.bf16.msra.mxu0 0
        %2155 = vmatprep.mubr.bf16.mxu0 0
        %2156 = vmatmul.mubr.bf16.gmra.mrb[0].mxu0 %v2118
        %v2157 = vpop.f32.mrb[0].mxu0
        %v2158 = vadd.f32 0.0, %v2157
        %v2159 = vpop.f32.mrb[0].mxu0
        %v2160 = vpop.f32.mrb[0].mxu0
        %v2161 = vpop.f32.mrb[0].mxu0
        %2162 = vdwg.mxu0
        %2163 = vrot.lane.b32.xlu0 %v1005, 64
        %v2164 = vpop.permute.xlu0 %2163
        %v2166 = vsel %vm1193, %v2112, 0
        %v2169 = vsel %vm1245, %v2164, 0
        %2171 = vmatprep.subr.bf16.mxu0 0
        %2172 = vmatpush1.bf16.msra.mxu0 %v2169
        %2173 = vmatprep.subr.bf16.mxu0 0
        %2174 = vmatpush1.bf16.msra.mxu0 0
        %2175 = vmatprep.subr.bf16.mxu0 0
        %2176 = vmatpush1.bf16.msra.mxu0 0
        %2177 = vmatprep.subr.bf16.mxu0 0
        %2178 = vmatpush1.bf16.msra.mxu0 0
        %2179 = vmatprep.subr.bf16.mxu0 0
        %2180 = vmatpush1.bf16.msra.mxu0 0
        %2181 = vmatprep.subr.bf16.mxu0 0
        %2182 = vmatpush1.bf16.msra.mxu0 0
        %2183 = vmatprep.subr.bf16.mxu0 0
        %2184 = vmatpush1.bf16.msra.mxu0 0
        %2185 = vmatprep.subr.bf16.mxu0 0
        %2186 = vmatpush1.bf16.msra.mxu0 0
        %2187 = vmatprep.subr.bf16.mxu0 0
        %2188 = vmatpush1.bf16.msra.mxu0 0
        %2189 = vmatprep.subr.bf16.mxu0 0
        %2190 = vmatpush1.bf16.msra.mxu0 0
        %2191 = vmatprep.subr.bf16.mxu0 0
        %2192 = vmatpush1.bf16.msra.mxu0 0
        %2193 = vmatprep.subr.bf16.mxu0 0
        %2194 = vmatpush1.bf16.msra.mxu0 0
        %2195 = vmatprep.subr.bf16.mxu0 0
        %2196 = vmatpush1.bf16.msra.mxu0 0
        %2197 = vmatprep.subr.bf16.mxu0 0
        %2198 = vmatpush1.bf16.msra.mxu0 0
        %2199 = vmatprep.subr.bf16.mxu0 0
        %2200 = vmatpush1.bf16.msra.mxu0 0
        %2201 = vmatprep.subr.bf16.mxu0 0
        %2202 = vmatpush1.bf16.msra.mxu0 0
        %2203 = vmatprep.mubr.bf16.mxu0 0
        %2204 = vmatmul.mubr.bf16.gmra.mrb[0].mxu0 %v2166
        %v2205 = vpop.f32.mrb[0].mxu0
        %v2206 = vadd.f32 0.0, %v2205
        %v2207 = vpop.f32.mrb[0].mxu0
        %v2208 = vpop.f32.mrb[0].mxu0
        %v2209 = vpop.f32.mrb[0].mxu0
        %2210 = vdwg.mxu0
        %2211 = vrot.lane.b32.xlu0 %v1006, 64
        %v2212 = vpop.permute.xlu0 %2211
        %v2214 = vsel %vm1193, %v2113, 0
        %v2217 = vsel %vm1245, %v2212, 0
        %2219 = vmatprep.subr.bf16.mxu0 0
        %2220 = vmatpush1.bf16.msra.mxu0 %v2217
        %2221 = vmatprep.subr.bf16.mxu0 0
        %2222 = vmatpush1.bf16.msra.mxu0 0
        %2223 = vmatprep.subr.bf16.mxu0 0
        %2224 = vmatpush1.bf16.msra.mxu0 0
        %2225 = vmatprep.subr.bf16.mxu0 0
        %2226 = vmatpush1.bf16.msra.mxu0 0
        %2227 = vmatprep.subr.bf16.mxu0 0
        %2228 = vmatpush1.bf16.msra.mxu0 0
        %2229 = vmatprep.subr.bf16.mxu0 0
        %2230 = vmatpush1.bf16.msra.mxu0 0
        %2231 = vmatprep.subr.bf16.mxu0 0
        %2232 = vmatpush1.bf16.msra.mxu0 0
        %2233 = vmatprep.subr.bf16.mxu0 0
        %2234 = vmatpush1.bf16.msra.mxu0 0
        %2235 = vmatprep.subr.bf16.mxu0 0
        %2236 = vmatpush1.bf16.msra.mxu0 0
        %2237 = vmatprep.subr.bf16.mxu0 0
        %2238 = vmatpush1.bf16.msra.mxu0 0
        %2239 = vmatprep.subr.bf16.mxu0 0
        %2240 = vmatpush1.bf16.msra.mxu0 0
        %2241 = vmatprep.subr.bf16.mxu0 0
        %2242 = vmatpush1.bf16.msra.mxu0 0
        %2243 = vmatprep.subr.bf16.mxu0 0
        %2244 = vmatpush1.bf16.msra.mxu0 0
        %2245 = vmatprep.subr.bf16.mxu0 0
        %2246 = vmatpush1.bf16.msra.mxu0 0
        %2247 = vmatprep.subr.bf16.mxu0 0
        %2248 = vmatpush1.bf16.msra.mxu0 0
        %2249 = vmatprep.subr.bf16.mxu0 0
        %2250 = vmatpush1.bf16.msra.mxu0 0
        %2251 = vmatprep.mubr.bf16.mxu0 0
        %2252 = vmatmul.mubr.bf16.gmra.mrb[0].mxu0 %v2214
        %v2253 = vpop.f32.mrb[0].mxu0
        %v2254 = vadd.f32 0.0, %v2253
        %v2255 = vpop.f32.mrb[0].mxu0
        %v2256 = vpop.f32.mrb[0].mxu0
        %v2257 = vpop.f32.mrb[0].mxu0
        %2258 = vdwg.mxu0
        %2259 = vrot.lane.b32.xlu0 %v1007, 64
        %v2260 = vpop.permute.xlu0 %2259
        %v2262 = vsel %vm1193, %v2114, 0
        %v2265 = vsel %vm1245, %v2260, 0
        %2267 = vmatprep.subr.bf16.mxu0 0
        %2268 = vmatpush1.bf16.msra.mxu0 %v2265
        %2269 = vmatprep.subr.bf16.mxu0 0
        %2270 = vmatpush1.bf16.msra.mxu0 0
        %2271 = vmatprep.subr.bf16.mxu0 0
        %2272 = vmatpush1.bf16.msra.mxu0 0
        %2273 = vmatprep.subr.bf16.mxu0 0
        %2274 = vmatpush1.bf16.msra.mxu0 0
        %2275 = vmatprep.subr.bf16.mxu0 0
        %2276 = vmatpush1.bf16.msra.mxu0 0
        %2277 = vmatprep.subr.bf16.mxu0 0
        %2278 = vmatpush1.bf16.msra.mxu0 0
        %2279 = vmatprep.subr.bf16.mxu0 0
        %2280 = vmatpush1.bf16.msra.mxu0 0
        %2281 = vmatprep.subr.bf16.mxu0 0
        %2282 = vmatpush1.bf16.msra.mxu0 0
        %2283 = vmatprep.subr.bf16.mxu0 0
        %2284 = vmatpush1.bf16.msra.mxu0 0
        %2285 = vmatprep.subr.bf16.mxu0 0
        %2286 = vmatpush1.bf16.msra.mxu0 0
        %2287 = vmatprep.subr.bf16.mxu0 0
        %2288 = vmatpush1.bf16.msra.mxu0 0
        %2289 = vmatprep.subr.bf16.mxu0 0
        %2290 = vmatpush1.bf16.msra.mxu0 0
        %2291 = vmatprep.subr.bf16.mxu0 0
        %2292 = vmatpush1.bf16.msra.mxu0 0
        %2293 = vmatprep.subr.bf16.mxu0 0
        %2294 = vmatpush1.bf16.msra.mxu0 0
        %2295 = vmatprep.subr.bf16.mxu0 0
        %2296 = vmatpush1.bf16.msra.mxu0 0
        %2297 = vmatprep.subr.bf16.mxu0 0
        %2298 = vmatpush1.bf16.msra.mxu0 0
        %2299 = vmatprep.mubr.bf16.mxu0 0
        %2300 = vmatmul.mubr.bf16.gmra.mrb[0].mxu0 %v2262
        %v2301 = vpop.f32.mrb[0].mxu0
        %v2302 = vadd.f32 0.0, %v2301
        %v2303 = vpop.f32.mrb[0].mxu0
        %v2304 = vpop.f32.mrb[0].mxu0
        %v2305 = vpop.f32.mrb[0].mxu0
        %2306 = vdwg.mxu0
        %2307 = vrot.lane.b32.xlu0 %v984, 32
        %v2308 = vpop.permute.xlu0 %2307
        %2309 = vrot.lane.b32.xlu0 %v994, 32
        %v2310 = vpop.permute.xlu0 %2309
        %v2312 = vsel %vm1008, %v2308, 0
        %v2315 = vsel %vm1008, %v2310, 0
        %2317 = vmatprep.subr.bf16.mxu0 0
        %2318 = vmatpush1.bf16.xpose.msra.mxu0 %v2315
        %2319 = vmatprep.subr.bf16.mxu0 0
        %2320 = vmatpush1.bf16.xpose.msra.mxu0 0
        %2321 = vmatprep.subr.bf16.mxu0 0
        %2322 = vmatpush1.bf16.xpose.msra.mxu0 0
        %2323 = vmatprep.subr.bf16.mxu0 0
        %2324 = vmatpush1.bf16.xpose.msra.mxu0 0
        %2325 = vmatprep.subr.bf16.mxu0 0
        %2326 = vmatpush1.bf16.xpose.msra.mxu0 0
        %2327 = vmatprep.subr.bf16.mxu0 0
        %2328 = vmatpush1.bf16.xpose.msra.mxu0 0
        %2329 = vmatprep.subr.bf16.mxu0 0
        %2330 = vmatpush1.bf16.xpose.msra.mxu0 0
        %2331 = vmatprep.subr.bf16.mxu0 0
        %2332 = vmatpush1.bf16.xpose.msra.mxu0 0
        %2333 = vmatprep.subr.bf16.mxu0 0
        %2334 = vmatpush1.bf16.xpose.msra.mxu0 0
        %2335 = vmatprep.subr.bf16.mxu0 0
        %2336 = vmatpush1.bf16.xpose.msra.mxu0 0
        %2337 = vmatprep.subr.bf16.mxu0 0
        %2338 = vmatpush1.bf16.xpose.msra.mxu0 0
        %2339 = vmatprep.subr.bf16.mxu0 0
        %2340 = vmatpush1.bf16.xpose.msra.mxu0 0
        %2341 = vmatprep.subr.bf16.mxu0 0
        %2342 = vmatpush1.bf16.xpose.msra.mxu0 0
        %2343 = vmatprep.subr.bf16.mxu0 0
        %2344 = vmatpush1.bf16.xpose.msra.mxu0 0
        %2345 = vmatprep.subr.bf16.mxu0 0
        %2346 = vmatpush1.bf16.xpose.msra.mxu0 0
        %2347 = vmatprep.subr.bf16.mxu0 0
        %2348 = vmatpush1.bf16.xpose.msra.mxu0 0
        %2349 = vmatprep.mubr.bf16.mxu0 0
        %2350 = vmatmul.mubr.bf16.gmra.mrb[0].mxu0 %v2312
        %v2351 = vpop.f32.mrb[0].mxu0
        %v2352 = vadd.f32 0.0, %v2351
        %v2353 = vpop.f32.mrb[0].mxu0
        %v2354 = vpop.f32.mrb[0].mxu0
        %v2355 = vpop.f32.mrb[0].mxu0
        %2356 = vdwg.mxu0
        %2357 = vrot.lane.b32.xlu0 %v985, 32
        %v2358 = vpop.permute.xlu0 %2357
        %2359 = vrot.lane.b32.xlu0 %v995, 32
        %v2360 = vpop.permute.xlu0 %2359
        %v2362 = vsel %vm1008, %v2358, 0
        %v2365 = vsel %vm1008, %v2360, 0
        %2367 = vmatprep.subr.bf16.mxu0 0
        %2368 = vmatpush1.bf16.xpose.msra.mxu0 %v2365
        %2369 = vmatprep.subr.bf16.mxu0 0
        %2370 = vmatpush1.bf16.xpose.msra.mxu0 0
        %2371 = vmatprep.subr.bf16.mxu0 0
        %2372 = vmatpush1.bf16.xpose.msra.mxu0 0
        %2373 = vmatprep.subr.bf16.mxu0 0
        %2374 = vmatpush1.bf16.xpose.msra.mxu0 0
        %2375 = vmatprep.subr.bf16.mxu0 0
        %2376 = vmatpush1.bf16.xpose.msra.mxu0 0
        %2377 = vmatprep.subr.bf16.mxu0 0
        %2378 = vmatpush1.bf16.xpose.msra.mxu0 0
        %2379 = vmatprep.subr.bf16.mxu0 0
        %2380 = vmatpush1.bf16.xpose.msra.mxu0 0
        %2381 = vmatprep.subr.bf16.mxu0 0
        %2382 = vmatpush1.bf16.xpose.msra.mxu0 0
        %2383 = vmatprep.subr.bf16.mxu0 0
        %2384 = vmatpush1.bf16.xpose.msra.mxu0 0
        %2385 = vmatprep.subr.bf16.mxu0 0
        %2386 = vmatpush1.bf16.xpose.msra.mxu0 0
        %2387 = vmatprep.subr.bf16.mxu0 0
        %2388 = vmatpush1.bf16.xpose.msra.mxu0 0
        %2389 = vmatprep.subr.bf16.mxu0 0
        %2390 = vmatpush1.bf16.xpose.msra.mxu0 0
        %2391 = vmatprep.subr.bf16.mxu0 0
        %2392 = vmatpush1.bf16.xpose.msra.mxu0 0
        %2393 = vmatprep.subr.bf16.mxu0 0
        %2394 = vmatpush1.bf16.xpose.msra.mxu0 0
        %2395 = vmatprep.subr.bf16.mxu0 0
        %2396 = vmatpush1.bf16.xpose.msra.mxu0 0
        %2397 = vmatprep.subr.bf16.mxu0 0
        %2398 = vmatpush1.bf16.xpose.msra.mxu0 0
        %2399 = vmatprep.mubr.bf16.mxu0 0
        %2400 = vmatmul.mubr.bf16.gmra.mrb[0].mxu0 %v2362
        %v2401 = vpop.f32.mrb[0].mxu0
        %v2402 = vadd.f32 0.0, %v2401
        %v2403 = vpop.f32.mrb[0].mxu0
        %v2404 = vpop.f32.mrb[0].mxu0
        %v2405 = vpop.f32.mrb[0].mxu0
        %2406 = vdwg.mxu0
        %2407 = vrot.lane.b32.xlu0 %v986, 32
        %v2408 = vpop.permute.xlu0 %2407
        %2409 = vrot.lane.b32.xlu0 %v996, 32
        %v2410 = vpop.permute.xlu0 %2409
        %v2412 = vsel %vm1008, %v2408, 0
        %v2415 = vsel %vm1008, %v2410, 0
        %2417 = vmatprep.subr.bf16.mxu0 0
        %2418 = vmatpush1.bf16.xpose.msra.mxu0 %v2415
        %2419 = vmatprep.subr.bf16.mxu0 0
        %2420 = vmatpush1.bf16.xpose.msra.mxu0 0
        %2421 = vmatprep.subr.bf16.mxu0 0
        %2422 = vmatpush1.bf16.xpose.msra.mxu0 0
        %2423 = vmatprep.subr.bf16.mxu0 0
        %2424 = vmatpush1.bf16.xpose.msra.mxu0 0
        %2425 = vmatprep.subr.bf16.mxu0 0
        %2426 = vmatpush1.bf16.xpose.msra.mxu0 0
        %2427 = vmatprep.subr.bf16.mxu0 0
        %2428 = vmatpush1.bf16.xpose.msra.mxu0 0
        %2429 = vmatprep.subr.bf16.mxu0 0
        %2430 = vmatpush1.bf16.xpose.msra.mxu0 0
        %2431 = vmatprep.subr.bf16.mxu0 0
        %2432 = vmatpush1.bf16.xpose.msra.mxu0 0
        %2433 = vmatprep.subr.bf16.mxu0 0
        %2434 = vmatpush1.bf16.xpose.msra.mxu0 0
        %2435 = vmatprep.subr.bf16.mxu0 0
        %2436 = vmatpush1.bf16.xpose.msra.mxu0 0
        %2437 = vmatprep.subr.bf16.mxu0 0
        %2438 = vmatpush1.bf16.xpose.msra.mxu0 0
        %2439 = vmatprep.subr.bf16.mxu0 0
        %2440 = vmatpush1.bf16.xpose.msra.mxu0 0
        %2441 = vmatprep.subr.bf16.mxu0 0
        %2442 = vmatpush1.bf16.xpose.msra.mxu0 0
        %2443 = vmatprep.subr.bf16.mxu0 0
        %2444 = vmatpush1.bf16.xpose.msra.mxu0 0
        %2445 = vmatprep.subr.bf16.mxu0 0
        %2446 = vmatpush1.bf16.xpose.msra.mxu0 0
        %2447 = vmatprep.subr.bf16.mxu0 0
        %2448 = vmatpush1.bf16.xpose.msra.mxu0 0
        %2449 = vmatprep.mubr.bf16.mxu0 0
        %2450 = vmatmul.mubr.bf16.gmra.mrb[0].mxu0 %v2412
        %v2451 = vpop.f32.mrb[0].mxu0
        %v2452 = vadd.f32 0.0, %v2451
        %v2453 = vpop.f32.mrb[0].mxu0
        %v2454 = vpop.f32.mrb[0].mxu0
        %v2455 = vpop.f32.mrb[0].mxu0
        %2456 = vdwg.mxu0
        %2457 = vrot.lane.b32.xlu0 %v987, 32
        %v2458 = vpop.permute.xlu0 %2457
        %2459 = vrot.lane.b32.xlu0 %v997, 32
        %v2460 = vpop.permute.xlu0 %2459
        %v2462 = vsel %vm1008, %v2458, 0
        %v2465 = vsel %vm1008, %v2460, 0
        %2467 = vmatprep.subr.bf16.mxu0 0
        %2468 = vmatpush1.bf16.xpose.msra.mxu0 %v2465
        %2469 = vmatprep.subr.bf16.mxu0 0
        %2470 = vmatpush1.bf16.xpose.msra.mxu0 0
        %2471 = vmatprep.subr.bf16.mxu0 0
        %2472 = vmatpush1.bf16.xpose.msra.mxu0 0
        %2473 = vmatprep.subr.bf16.mxu0 0
        %2474 = vmatpush1.bf16.xpose.msra.mxu0 0
        %2475 = vmatprep.subr.bf16.mxu0 0
        %2476 = vmatpush1.bf16.xpose.msra.mxu0 0
        %2477 = vmatprep.subr.bf16.mxu0 0
        %2478 = vmatpush1.bf16.xpose.msra.mxu0 0
        %2479 = vmatprep.subr.bf16.mxu0 0
        %2480 = vmatpush1.bf16.xpose.msra.mxu0 0
        %2481 = vmatprep.subr.bf16.mxu0 0
        %2482 = vmatpush1.bf16.xpose.msra.mxu0 0
        %2483 = vmatprep.subr.bf16.mxu0 0
        %2484 = vmatpush1.bf16.xpose.msra.mxu0 0
        %2485 = vmatprep.subr.bf16.mxu0 0
        %2486 = vmatpush1.bf16.xpose.msra.mxu0 0
        %2487 = vmatprep.subr.bf16.mxu0 0
        %2488 = vmatpush1.bf16.xpose.msra.mxu0 0
        %2489 = vmatprep.subr.bf16.mxu0 0
        %2490 = vmatpush1.bf16.xpose.msra.mxu0 0
        %2491 = vmatprep.subr.bf16.mxu0 0
        %2492 = vmatpush1.bf16.xpose.msra.mxu0 0
        %2493 = vmatprep.subr.bf16.mxu0 0
        %2494 = vmatpush1.bf16.xpose.msra.mxu0 0
        %2495 = vmatprep.subr.bf16.mxu0 0
        %2496 = vmatpush1.bf16.xpose.msra.mxu0 0
        %2497 = vmatprep.subr.bf16.mxu0 0
        %2498 = vmatpush1.bf16.xpose.msra.mxu0 0
        %2499 = vmatprep.mubr.bf16.mxu0 0
        %2500 = vmatmul.mubr.bf16.gmra.mrb[0].mxu0 %v2462
        %v2501 = vpop.f32.mrb[0].mxu0
        %v2502 = vadd.f32 0.0, %v2501
        %v2503 = vpop.f32.mrb[0].mxu0
        %v2504 = vpop.f32.mrb[0].mxu0
        %v2505 = vpop.f32.mrb[0].mxu0
        %2506 = vdwg.mxu0
        %v2507 = vsel %vm1193, %v2352, -inf
        %2508 = vmax.xlane.f32.xlu0 %v2507
        %v2509 = vpop.xlane.xlu0 %2508
        %v2510 = vsel %vm1193, %v2402, -inf
        %2511 = vmax.xlane.f32.xlu0 %v2510
        %v2512 = vpop.xlane.xlu0 %2511
        %v2513 = vsel %vm1193, %v2452, -inf
        %2514 = vmax.xlane.f32.xlu0 %v2513
        %v2515 = vpop.xlane.xlu0 %2514
        %v2516 = vsel %vm1193, %v2502, -inf
        %2517 = vmax.xlane.f32.xlu0 %v2516
        %v2518 = vpop.xlane.xlu0 %2517
        %v2519 = vsub.f32 %v2352, %v2509
        %v2520 = vsub.f32 %v2402, %v2512
        %v2521 = vsub.f32 %v2452, %v2515
        %v2522 = vsub.f32 %v2502, %v2518
        %v2523 = vmul.f32 %v2519, 1.442695
        %v2524 = vpow.pop %v2523
        %v2525 = vmul.f32 %v2520, 1.442695
        %v2526 = vpow.pop %v2525
        %v2527 = vmul.f32 %v2521, 1.442695
        %v2528 = vpow.pop %v2527
        %v2529 = vmul.f32 %v2522, 1.442695
        %v2530 = vpow.pop %v2529
        %v2531 = vsel %vm1193, %v2524, 0.0
        %2532 = vadd.xlane.f32.xlu0 %v2531
        %v2533 = vpop.xlane.xlu0 %2532
        %v2534 = vsel %vm1193, %v2526, 0.0
        %2535 = vadd.xlane.f32.xlu0 %v2534
        %v2536 = vpop.xlane.xlu0 %2535
        %v2537 = vsel %vm1193, %v2528, 0.0
        %2538 = vadd.xlane.f32.xlu0 %v2537
        %v2539 = vpop.xlane.xlu0 %2538
        %v2540 = vsel %vm1193, %v2530, 0.0
        %2541 = vadd.xlane.f32.xlu0 %v2540
        %v2542 = vpop.xlane.xlu0 %2541
        %v2543 = vrcp.pop %v2533
        %v2544 = vrcp.pop %v2536
        %v2545 = vrcp.pop %v2539
        %v2546 = vrcp.pop %v2542
        %v2547 = vmul.f32 %v2524, %v2543
        %v2548 = vmul.f32 %v2526, %v2544
        %v2549 = vmul.f32 %v2528, %v2545
        %v2550 = vmul.f32 %v2530, %v2546
        %v2551 = vpack.c.bf16 %v2547, %v2547
        %v2552 = vpack.c.bf16 %v2548, %v2548
        %v2553 = vpack.c.bf16 %v2549, %v2549
        %v2554 = vpack.c.bf16 %v2550, %v2550
        %2555 = vrot.lane.b32.xlu0 %v1004, 32
        %v2556 = vpop.permute.xlu0 %2555
        %v2558 = vsel %vm1193, %v2551, 0
        %v2561 = vsel %vm1245, %v2556, 0
        %2563 = vmatprep.subr.bf16.mxu0 0
        %2564 = vmatpush1.bf16.msra.mxu0 %v2561
        %2565 = vmatprep.subr.bf16.mxu0 0
        %2566 = vmatpush1.bf16.msra.mxu0 0
        %2567 = vmatprep.subr.bf16.mxu0 0
        %2568 = vmatpush1.bf16.msra.mxu0 0
        %2569 = vmatprep.subr.bf16.mxu0 0
        %2570 = vmatpush1.bf16.msra.mxu0 0
        %2571 = vmatprep.subr.bf16.mxu0 0
        %2572 = vmatpush1.bf16.msra.mxu0 0
        %2573 = vmatprep.subr.bf16.mxu0 0
        %2574 = vmatpush1.bf16.msra.mxu0 0
        %2575 = vmatprep.subr.bf16.mxu0 0
        %2576 = vmatpush1.bf16.msra.mxu0 0
        %2577 = vmatprep.subr.bf16.mxu0 0
        %2578 = vmatpush1.bf16.msra.mxu0 0
        %2579 = vmatprep.subr.bf16.mxu0 0
        %2580 = vmatpush1.bf16.msra.mxu0 0
        %2581 = vmatprep.subr.bf16.mxu0 0
        %2582 = vmatpush1.bf16.msra.mxu0 0
        %2583 = vmatprep.subr.bf16.mxu0 0
        %2584 = vmatpush1.bf16.msra.mxu0 0
        %2585 = vmatprep.subr.bf16.mxu0 0
        %2586 = vmatpush1.bf16.msra.mxu0 0
        %2587 = vmatprep.subr.bf16.mxu0 0
        %2588 = vmatpush1.bf16.msra.mxu0 0
        %2589 = vmatprep.subr.bf16.mxu0 0
        %2590 = vmatpush1.bf16.msra.mxu0 0
        %2591 = vmatprep.subr.bf16.mxu0 0
        %2592 = vmatpush1.bf16.msra.mxu0 0
        %2593 = vmatprep.subr.bf16.mxu0 0
        %2594 = vmatpush1.bf16.msra.mxu0 0
        %2595 = vmatprep.mubr.bf16.mxu0 0
        %2596 = vmatmul.mubr.bf16.gmra.mrb[0].mxu0 %v2558
        %v2597 = vpop.f32.mrb[0].mxu0
        %v2598 = vadd.f32 0.0, %v2597
        %v2599 = vpop.f32.mrb[0].mxu0
        %v2600 = vpop.f32.mrb[0].mxu0
        %v2601 = vpop.f32.mrb[0].mxu0
        %2602 = vdwg.mxu0
        %2603 = vrot.lane.b32.xlu0 %v1005, 32
        %v2604 = vpop.permute.xlu0 %2603
        %v2606 = vsel %vm1193, %v2552, 0
        %v2609 = vsel %vm1245, %v2604, 0
        %2611 = vmatprep.subr.bf16.mxu0 0
        %2612 = vmatpush1.bf16.msra.mxu0 %v2609
        %2613 = vmatprep.subr.bf16.mxu0 0
        %2614 = vmatpush1.bf16.msra.mxu0 0
        %2615 = vmatprep.subr.bf16.mxu0 0
        %2616 = vmatpush1.bf16.msra.mxu0 0
        %2617 = vmatprep.subr.bf16.mxu0 0
        %2618 = vmatpush1.bf16.msra.mxu0 0
        %2619 = vmatprep.subr.bf16.mxu0 0
        %2620 = vmatpush1.bf16.msra.mxu0 0
        %2621 = vmatprep.subr.bf16.mxu0 0
        %2622 = vmatpush1.bf16.msra.mxu0 0
        %2623 = vmatprep.subr.bf16.mxu0 0
        %2624 = vmatpush1.bf16.msra.mxu0 0
        %2625 = vmatprep.subr.bf16.mxu0 0
        %2626 = vmatpush1.bf16.msra.mxu0 0
        %2627 = vmatprep.subr.bf16.mxu0 0
        %2628 = vmatpush1.bf16.msra.mxu0 0
        %2629 = vmatprep.subr.bf16.mxu0 0
        %2630 = vmatpush1.bf16.msra.mxu0 0
        %2631 = vmatprep.subr.bf16.mxu0 0
        %2632 = vmatpush1.bf16.msra.mxu0 0
        %2633 = vmatprep.subr.bf16.mxu0 0
        %2634 = vmatpush1.bf16.msra.mxu0 0
        %2635 = vmatprep.subr.bf16.mxu0 0
        %2636 = vmatpush1.bf16.msra.mxu0 0
        %2637 = vmatprep.subr.bf16.mxu0 0
        %2638 = vmatpush1.bf16.msra.mxu0 0
        %2639 = vmatprep.subr.bf16.mxu0 0
        %2640 = vmatpush1.bf16.msra.mxu0 0
        %2641 = vmatprep.subr.bf16.mxu0 0
        %2642 = vmatpush1.bf16.msra.mxu0 0
        %2643 = vmatprep.mubr.bf16.mxu0 0
        %2644 = vmatmul.mubr.bf16.gmra.mrb[0].mxu0 %v2606
        %v2645 = vpop.f32.mrb[0].mxu0
        %v2646 = vadd.f32 0.0, %v2645
        %v2647 = vpop.f32.mrb[0].mxu0
        %v2648 = vpop.f32.mrb[0].mxu0
        %v2649 = vpop.f32.mrb[0].mxu0
        %2650 = vdwg.mxu0
        %2651 = vrot.lane.b32.xlu0 %v1006, 32
        %v2652 = vpop.permute.xlu0 %2651
        %v2654 = vsel %vm1193, %v2553, 0
        %v2657 = vsel %vm1245, %v2652, 0
        %2659 = vmatprep.subr.bf16.mxu0 0
        %2660 = vmatpush1.bf16.msra.mxu0 %v2657
        %2661 = vmatprep.subr.bf16.mxu0 0
        %2662 = vmatpush1.bf16.msra.mxu0 0
        %2663 = vmatprep.subr.bf16.mxu0 0
        %2664 = vmatpush1.bf16.msra.mxu0 0
        %2665 = vmatprep.subr.bf16.mxu0 0
        %2666 = vmatpush1.bf16.msra.mxu0 0
        %2667 = vmatprep.subr.bf16.mxu0 0
        %2668 = vmatpush1.bf16.msra.mxu0 0
        %2669 = vmatprep.subr.bf16.mxu0 0
        %2670 = vmatpush1.bf16.msra.mxu0 0
        %2671 = vmatprep.subr.bf16.mxu0 0
        %2672 = vmatpush1.bf16.msra.mxu0 0
        %2673 = vmatprep.subr.bf16.mxu0 0
        %2674 = vmatpush1.bf16.msra.mxu0 0
        %2675 = vmatprep.subr.bf16.mxu0 0
        %2676 = vmatpush1.bf16.msra.mxu0 0
        %2677 = vmatprep.subr.bf16.mxu0 0
        %2678 = vmatpush1.bf16.msra.mxu0 0
        %2679 = vmatprep.subr.bf16.mxu0 0
        %2680 = vmatpush1.bf16.msra.mxu0 0
        %2681 = vmatprep.subr.bf16.mxu0 0
        %2682 = vmatpush1.bf16.msra.mxu0 0
        %2683 = vmatprep.subr.bf16.mxu0 0
        %2684 = vmatpush1.bf16.msra.mxu0 0
        %2685 = vmatprep.subr.bf16.mxu0 0
        %2686 = vmatpush1.bf16.msra.mxu0 0
        %2687 = vmatprep.subr.bf16.mxu0 0
        %2688 = vmatpush1.bf16.msra.mxu0 0
        %2689 = vmatprep.subr.bf16.mxu0 0
        %2690 = vmatpush1.bf16.msra.mxu0 0
        %2691 = vmatprep.mubr.bf16.mxu0 0
        %2692 = vmatmul.mubr.bf16.gmra.mrb[0].mxu0 %v2654
        %v2693 = vpop.f32.mrb[0].mxu0
        %v2694 = vadd.f32 0.0, %v2693
        %v2695 = vpop.f32.mrb[0].mxu0
        %v2696 = vpop.f32.mrb[0].mxu0
        %v2697 = vpop.f32.mrb[0].mxu0
        %2698 = vdwg.mxu0
        %2699 = vrot.lane.b32.xlu0 %v1007, 32
        %v2700 = vpop.permute.xlu0 %2699
        %v2702 = vsel %vm1193, %v2554, 0
        %v2705 = vsel %vm1245, %v2700, 0
        %2707 = vmatprep.subr.bf16.mxu0 0
        %2708 = vmatpush1.bf16.msra.mxu0 %v2705
        %2709 = vmatprep.subr.bf16.mxu0 0
        %2710 = vmatpush1.bf16.msra.mxu0 0
        %2711 = vmatprep.subr.bf16.mxu0 0
        %2712 = vmatpush1.bf16.msra.mxu0 0
        %2713 = vmatprep.subr.bf16.mxu0 0
        %2714 = vmatpush1.bf16.msra.mxu0 0
        %2715 = vmatprep.subr.bf16.mxu0 0
        %2716 = vmatpush1.bf16.msra.mxu0 0
        %2717 = vmatprep.subr.bf16.mxu0 0
        %2718 = vmatpush1.bf16.msra.mxu0 0
        %2719 = vmatprep.subr.bf16.mxu0 0
        %2720 = vmatpush1.bf16.msra.mxu0 0
        %2721 = vmatprep.subr.bf16.mxu0 0
        %2722 = vmatpush1.bf16.msra.mxu0 0
        %2723 = vmatprep.subr.bf16.mxu0 0
        %2724 = vmatpush1.bf16.msra.mxu0 0
        %2725 = vmatprep.subr.bf16.mxu0 0
        %2726 = vmatpush1.bf16.msra.mxu0 0
        %2727 = vmatprep.subr.bf16.mxu0 0
        %2728 = vmatpush1.bf16.msra.mxu0 0
        %2729 = vmatprep.subr.bf16.mxu0 0
        %2730 = vmatpush1.bf16.msra.mxu0 0
        %2731 = vmatprep.subr.bf16.mxu0 0
        %2732 = vmatpush1.bf16.msra.mxu0 0
        %2733 = vmatprep.subr.bf16.mxu0 0
        %2734 = vmatpush1.bf16.msra.mxu0 0
        %2735 = vmatprep.subr.bf16.mxu0 0
        %2736 = vmatpush1.bf16.msra.mxu0 0
        %2737 = vmatprep.subr.bf16.mxu0 0
        %2738 = vmatpush1.bf16.msra.mxu0 0
        %2739 = vmatprep.mubr.bf16.mxu0 0
        %2740 = vmatmul.mubr.bf16.gmra.mrb[0].mxu0 %v2702
        %v2741 = vpop.f32.mrb[0].mxu0
        %v2742 = vadd.f32 0.0, %v2741
        %v2743 = vpop.f32.mrb[0].mxu0
        %v2744 = vpop.f32.mrb[0].mxu0
        %v2745 = vpop.f32.mrb[0].mxu0
        %2746 = vdwg.mxu0
        %2751 = vrot.lane.b32.xlu0 %v1718, 32
        %v2752 = vpop.permute.xlu0 %2751
        %2753 = vrot.lane.b32.xlu0 %v1766, 32
        %v2754 = vpop.permute.xlu0 %2753
        %2755 = vrot.lane.b32.xlu0 %v1814, 32
        %v2756 = vpop.permute.xlu0 %2755
        %2757 = vrot.lane.b32.xlu0 %v1862, 32
        %v2758 = vpop.permute.xlu0 %2757
        %2767 = vrot.lane.b32.xlu0 %v2158, 64
        %v2768 = vpop.permute.xlu0 %2767
        %2769 = vrot.lane.b32.xlu0 %v2206, 64
        %v2770 = vpop.permute.xlu0 %2769
        %2771 = vrot.lane.b32.xlu0 %v2254, 64
        %v2772 = vpop.permute.xlu0 %2771
        %2773 = vrot.lane.b32.xlu0 %v2302, 64
        %v2774 = vpop.permute.xlu0 %2773
        %2783 = vrot.lane.b32.xlu0 %v2598, 96
        %v2784 = vpop.permute.xlu0 %2783
        %2785 = vrot.lane.b32.xlu0 %v2646, 96
        %v2786 = vpop.permute.xlu0 %2785
        %2787 = vrot.lane.b32.xlu0 %v2694, 96
        %v2788 = vpop.permute.xlu0 %2787
        %2789 = vrot.lane.b32.xlu0 %v2742, 96
        %v2790 = vpop.permute.xlu0 %2789
        %v2795 = vsel %vm1008, %v1284, %v2752
        %v2796 = vsel %vm1008, %v1330, %v2754
        %v2797 = vsel %vm1008, %v1376, %v2756
        %v2798 = vsel %vm1008, %v1422, %v2758
        %vm2799 = vcmask 523264
        %v2800 = vsel %vm2799, %v2795, %v2768
        %v2801 = vsel %vm2799, %v2796, %v2770
        %v2802 = vsel %vm2799, %v2797, %v2772
        %v2803 = vsel %vm2799, %v2798, %v2774
        %vm2804 = vcmask 785408
        %v2805 = vsel %vm2804, %v2800, %v2784
        %v2806 = vsel %vm2804, %v2801, %v2786
        %v2807 = vsel %vm2804, %v2802, %v2788
        %v2808 = vsel %vm2804, %v2803, %v2790
        %v2809 = vpack.c.bf16 %v2806, %v2805
        %v2810 = vpack.c.bf16 %v2808, %v2807
        %v2811 = vld [vmem:[#allocation11] sm:$0xf]
        %v2812 = vld [vmem:[#allocation11 + $0x4] sm:$0xf]
        %v2813 = vld [vmem:[#allocation11 + $0x8] sm:$0xf]
        %v2814 = vld [vmem:[#allocation11 + $0xc] sm:$0xf]
        %v2815 = vld [vmem:[#allocation11 + $0x10] sm:$0xf]
        %v2816 = vld [vmem:[#allocation11 + $0x14] sm:$0xf]
        %v2817 = vld [vmem:[#allocation11 + $0x18] sm:$0xf]
        %v2818 = vld [vmem:[#allocation11 + $0x1c] sm:$0xf]
        %v2819 = vld [vmem:[#allocation11 + $0x20] sm:$0xf]
        %v2820 = vld [vmem:[#allocation11 + $0x24] sm:$0xf]
        %v2821 = vld [vmem:[#allocation11 + $0x28] sm:$0xf]
        %v2822 = vld [vmem:[#allocation11 + $0x2c] sm:$0xf]
        %v2823 = vld [vmem:[#allocation11 + $0x30] sm:$0xf]
        %v2824 = vld [vmem:[#allocation11 + $0x34] sm:$0xf]
        %v2825 = vld [vmem:[#allocation11 + $0x38] sm:$0xf]
        %v2826 = vld [vmem:[#allocation11 + $0x3c] sm:$0xf]
        %v2827 = vld [vmem:[#allocation13] sm:$0x1]
        %v2829 = vlaneseq
        %v2830 = vshrl.u32 %v2829, 7
        %v2831 = vsub.s32 0, %v2830
        %v2832 = vrot.slane %v2827, %v2831
        %v2850 = vunpack.c.l.b16 %v2811
        %v2851 = vunpack.c.l.b16 %v2812
        %v2852 = vunpack.c.l.b16 %v2813
        %v2853 = vunpack.c.l.b16 %v2814
        %v2854 = vunpack.c.l.b16 %v2815
        %v2855 = vunpack.c.l.b16 %v2816
        %v2856 = vunpack.c.l.b16 %v2817
        %v2857 = vunpack.c.l.b16 %v2818
        %v2858 = vunpack.c.l.b16 %v2819
        %v2859 = vunpack.c.l.b16 %v2820
        %v2860 = vunpack.c.l.b16 %v2821
        %v2861 = vunpack.c.l.b16 %v2822
        %v2862 = vunpack.c.l.b16 %v2823
        %v2863 = vunpack.c.l.b16 %v2824
        %v2864 = vunpack.c.l.b16 %v2825
        %v2865 = vunpack.c.l.b16 %v2826
        %v2866 = vpack.c.b16 %v2851, %v2850
        %v2867 = vpack.c.b16 %v2853, %v2852
        %v2868 = vpack.c.b16 %v2855, %v2854
        %v2869 = vpack.c.b16 %v2857, %v2856
        %v2870 = vpack.c.b16 %v2859, %v2858
        %v2871 = vpack.c.b16 %v2861, %v2860
        %v2872 = vpack.c.b16 %v2863, %v2862
        %v2873 = vpack.c.b16 %v2865, %v2864
        %2882 = vmatprep.subr.bf16.mxu0 0
        %2883 = vmatpush1.bf16.msra.mxu0 %v2866
        %2884 = vmatprep.subr.bf16.mxu0 0
        %2885 = vmatpush1.bf16.msra.mxu0 %v2867
        %2886 = vmatprep.subr.bf16.mxu0 0
        %2887 = vmatpush1.bf16.msra.mxu0 %v2868
        %2888 = vmatprep.subr.bf16.mxu0 0
        %2889 = vmatpush1.bf16.msra.mxu0 %v2869
        %2890 = vmatprep.subr.bf16.mxu0 0
        %2891 = vmatpush1.bf16.msra.mxu0 %v2870
        %2892 = vmatprep.subr.bf16.mxu0 0
        %2893 = vmatpush1.bf16.msra.mxu0 %v2871
        %2894 = vmatprep.subr.bf16.mxu0 0
        %2895 = vmatpush1.bf16.msra.mxu0 %v2872
        %2896 = vmatprep.subr.bf16.mxu0 0
        %2897 = vmatpush1.bf16.msra.mxu0 %v2873
        %2898 = vmatprep.subr.bf16.mxu0 0
        %2899 = vmatpush1.bf16.msra.mxu0 0
        %2900 = vmatprep.subr.bf16.mxu0 0
        %2901 = vmatpush1.bf16.msra.mxu0 0
        %2902 = vmatprep.subr.bf16.mxu0 0
        %2903 = vmatpush1.bf16.msra.mxu0 0
        %2904 = vmatprep.subr.bf16.mxu0 0
        %2905 = vmatpush1.bf16.msra.mxu0 0
        %2906 = vmatprep.subr.bf16.mxu0 0
        %2907 = vmatpush1.bf16.msra.mxu0 0
        %2908 = vmatprep.subr.bf16.mxu0 0
        %2909 = vmatpush1.bf16.msra.mxu0 0
        %2910 = vmatprep.subr.bf16.mxu0 0
        %2911 = vmatpush1.bf16.msra.mxu0 0
        %2912 = vmatprep.subr.bf16.mxu0 0
        %2913 = vmatpush1.bf16.msra.mxu0 0
        %2914 = vmatprep.mubr.bf16.mxu0 0
        %2915 = vmatmul.mubr.bf16.gmra.mrb[0].mxu0 %v2809
        %v2916 = vpop.f32.mrb[0].mxu0
        %v2917 = vadd.f32 %v2832, %v2916
        %v2918 = vpop.f32.mrb[0].mxu0
        %v2919 = vpop.f32.mrb[0].mxu0
        %v2920 = vadd.f32 %v2832, %v2919
        %v2921 = vpop.f32.mrb[0].mxu0
        %2922 = vmatprep.mubr.bf16.mxu0 0
        %2923 = vmatmul.mubr.bf16.gmra.mrb[0].mxu0 %v2810
        %v2924 = vpop.f32.mrb[0].mxu0
        %v2925 = vadd.f32 %v2832, %v2924
        %v2926 = vpop.f32.mrb[0].mxu0
        %v2927 = vpop.f32.mrb[0].mxu0
        %v2928 = vadd.f32 %v2832, %v2927
        %v2929 = vpop.f32.mrb[0].mxu0
        %2930 = vdwg.mxu0
        %v2931 = vadd.f32 %v620, %v2917
        %v2932 = vadd.f32 %v621, %v2920
        %v2933 = vadd.f32 %v622, %v2925
        %v2934 = vadd.f32 %v623, %v2928
        %v2935 = vld [vmem:[#allocation14] sm:$0x1]
        %v2936 = vld [vmem:[#allocation16] sm:$0x1]
        %2937 = vadd.xlane.f32.xlu0 %v2931
        %v2938 = vpop.xlane.xlu0 %2937
        %2939 = vadd.xlane.f32.xlu0 %v2932
        %v2940 = vpop.xlane.xlu0 %2939
        %2941 = vadd.xlane.f32.xlu0 %v2933
        %v2942 = vpop.xlane.xlu0 %2941
        %2943 = vadd.xlane.f32.xlu0 %v2934
        %v2944 = vpop.xlane.xlu0 %2943
        %v2945 = vmul.f32 %v2938, %v634
        %v2946 = vmul.f32 %v2940, %v634
        %v2947 = vmul.f32 %v2942, %v634
        %v2948 = vmul.f32 %v2944, %v634
        %v2949 = vsub.f32 %v2931, %v2945
        %v2950 = vsub.f32 %v2932, %v2946
        %v2951 = vsub.f32 %v2933, %v2947
        %v2952 = vsub.f32 %v2934, %v2948
        %v2953 = vmul.f32 %v2949, %v2949
        %v2954 = vmul.f32 %v2950, %v2950
        %v2955 = vmul.f32 %v2951, %v2951
        %v2956 = vmul.f32 %v2952, %v2952
        %2957 = vadd.xlane.f32.xlu0 %v2953
        %v2958 = vpop.xlane.xlu0 %2957
        %2959 = vadd.xlane.f32.xlu0 %v2954
        %v2960 = vpop.xlane.xlu0 %2959
        %2961 = vadd.xlane.f32.xlu0 %v2955
        %v2962 = vpop.xlane.xlu0 %2961
        %2963 = vadd.xlane.f32.xlu0 %v2956
        %v2964 = vpop.xlane.xlu0 %2963
        %v2965 = vmul.f32 %v2958, %v634
        %v2966 = vmul.f32 %v2960, %v634
        %v2967 = vmul.f32 %v2962, %v634
        %v2968 = vmul.f32 %v2964, %v634
        %v2969 = vadd.f32 %v2965, 1e-05
        %v2970 = vadd.f32 %v2966, 1e-05
        %v2971 = vadd.f32 %v2967, 1e-05
        %v2972 = vadd.f32 %v2968, 1e-05
        %v2973 = vrsqrt.pop %v2969
        %v2974 = vrsqrt.pop %v2970
        %v2975 = vrsqrt.pop %v2971
        %v2976 = vrsqrt.pop %v2972
        %v2977 = vmul.f32 %v2949, %v2973
        %v2978 = vmul.f32 %v2950, %v2974
        %v2979 = vmul.f32 %v2951, %v2975
        %v2980 = vmul.f32 %v2952, %v2976
        %v2982 = vlaneseq
        %v2983 = vshrl.u32 %v2982, 7
        %v2984 = vsub.s32 0, %v2983
        %v2985 = vrot.slane %v2935, %v2984
        %v2987 = vmul.f32 %v2977, %v2985
        %v2988 = vmul.f32 %v2978, %v2985
        %v2989 = vmul.f32 %v2979, %v2985
        %v2990 = vmul.f32 %v2980, %v2985
        %v2992 = vlaneseq
        %v2993 = vshrl.u32 %v2992, 7
        %v2994 = vsub.s32 0, %v2993
        %v2995 = vrot.slane %v2936, %v2994
        %v2997 = vadd.f32 %v2987, %v2995
        %v2998 = vadd.f32 %v2988, %v2995
        %v2999 = vadd.f32 %v2989, %v2995
        %v3000 = vadd.f32 %v2990, %v2995
        %v3001 = vpack.c.bf16 %v2998, %v2997
        %v3002 = vpack.c.bf16 %v3000, %v2999
        %v3003 = vld [vmem:[#allocation17] sm:$0xff]
        %v3004 = vld [vmem:[#allocation17 + $0x8] sm:$0xff]
        %v3005 = vld [vmem:[#allocation17 + $0x10] sm:$0xff]
        %v3006 = vld [vmem:[#allocation17 + $0x18] sm:$0xff]
        %v3007 = vld [vmem:[#allocation17 + $0x20] sm:$0xff]
        %v3008 = vld [vmem:[#allocation17 + $0x28] sm:$0xff]
        %v3009 = vld [vmem:[#allocation17 + $0x30] sm:$0xff]
        %v3010 = vld [vmem:[#allocation17 + $0x38] sm:$0xff]
        %v3011 = vld [vmem:[#allocation17 + $0x40] sm:$0xff]
        %v3012 = vld [vmem:[#allocation17 + $0x48] sm:$0xff]
        %v3013 = vld [vmem:[#allocation17 + $0x50] sm:$0xff]
        %v3014 = vld [vmem:[#allocation17 + $0x58] sm:$0xff]
        %v3015 = vld [vmem:[#allocation17 + $0x60] sm:$0xff]
        %v3016 = vld [vmem:[#allocation17 + $0x68] sm:$0xff]
        %v3017 = vld [vmem:[#allocation17 + $0x70] sm:$0xff]
        %v3018 = vld [vmem:[#allocation17 + $0x78] sm:$0xff]
        %v3019 = vld [vmem:[#allocation17 + $0x80] sm:$0xff]
        %v3020 = vld [vmem:[#allocation17 + $0x88] sm:$0xff]
        %v3021 = vld [vmem:[#allocation17 + $0x90] sm:$0xff]
        %v3022 = vld [vmem:[#allocation17 + $0x98] sm:$0xff]
        %v3023 = vld [vmem:[#allocation17 + $0xa0] sm:$0xff]
        %v3024 = vld [vmem:[#allocation17 + $0xa8] sm:$0xff]
        %v3025 = vld [vmem:[#allocation17 + $0xb0] sm:$0xff]
        %v3026 = vld [vmem:[#allocation17 + $0xb8] sm:$0xff]
        %v3027 = vld [vmem:[#allocation17 + $0xc0] sm:$0xff]
        %v3028 = vld [vmem:[#allocation17 + $0xc8] sm:$0xff]
        %v3029 = vld [vmem:[#allocation17 + $0xd0] sm:$0xff]
        %v3030 = vld [vmem:[#allocation17 + $0xd8] sm:$0xff]
        %v3031 = vld [vmem:[#allocation17 + $0xe0] sm:$0xff]
        %v3032 = vld [vmem:[#allocation17 + $0xe8] sm:$0xff]
        %v3033 = vld [vmem:[#allocation17 + $0xf0] sm:$0xff]
        %v3034 = vld [vmem:[#allocation17 + $0xf8] sm:$0xff]
        %v3035 = vld [vmem:[#allocation19] sm:$0xf]
        %v3037 = vlaneseq
        %v3038 = vshrl.u32 %v3037, 7
        %v3039 = vsub.s32 0, %v3038
        %v3040 = vrot.slane %v3035, %v3039
        %v3041 = vlaneseq
        %v3042 = vshrl.u32 %v3041, 7
        %v3043 = vsub.s32 1, %v3042
        %v3044 = vrot.slane %v3035, %v3043
        %v3045 = vlaneseq
        %v3046 = vshrl.u32 %v3045, 7
        %v3047 = vsub.s32 2, %v3046
        %v3048 = vrot.slane %v3035, %v3047
        %v3049 = vlaneseq
        %v3050 = vshrl.u32 %v3049, 7
        %v3051 = vsub.s32 3, %v3050
        %v3052 = vrot.slane %v3035, %v3051
        %v3089 = vunpack.c.l.b16 %v3003
        %v3090 = vunpack.c.h.b16 %v3003
        %v3091 = vunpack.c.l.b16 %v3004
        %v3092 = vunpack.c.h.b16 %v3004
        %v3093 = vunpack.c.l.b16 %v3005
        %v3094 = vunpack.c.h.b16 %v3005
        %v3095 = vunpack.c.l.b16 %v3006
        %v3096 = vunpack.c.h.b16 %v3006
        %v3097 = vunpack.c.l.b16 %v3007
        %v3098 = vunpack.c.h.b16 %v3007
        %v3099 = vunpack.c.l.b16 %v3008
        %v3100 = vunpack.c.h.b16 %v3008
        %v3101 = vunpack.c.l.b16 %v3009
        %v3102 = vunpack.c.h.b16 %v3009
        %v3103 = vunpack.c.l.b16 %v3010
        %v3104 = vunpack.c.h.b16 %v3010
        %v3105 = vunpack.c.l.b16 %v3011
        %v3106 = vunpack.c.h.b16 %v3011
        %v3107 = vunpack.c.l.b16 %v3012
        %v3108 = vunpack.c.h.b16 %v3012
        %v3109 = vunpack.c.l.b16 %v3013
        %v3110 = vunpack.c.h.b16 %v3013
        %v3111 = vunpack.c.l.b16 %v3014
        %v3112 = vunpack.c.h.b16 %v3014
        %v3113 = vunpack.c.l.b16 %v3015
        %v3114 = vunpack.c.h.b16 %v3015
        %v3115 = vunpack.c.l.b16 %v3016
        %v3116 = vunpack.c.h.b16 %v3016
        %v3117 = vunpack.c.l.b16 %v3017
        %v3118 = vunpack.c.h.b16 %v3017
        %v3119 = vunpack.c.l.b16 %v3018
        %v3120 = vunpack.c.h.b16 %v3018
        %v3121 = vunpack.c.l.b16 %v3019
        %v3122 = vunpack.c.h.b16 %v3019
        %v3123 = vunpack.c.l.b16 %v3020
        %v3124 = vunpack.c.h.b16 %v3020
        %v3125 = vunpack.c.l.b16 %v3021
        %v3126 = vunpack.c.h.b16 %v3021
        %v3127 = vunpack.c.l.b16 %v3022
        %v3128 = vunpack.c.h.b16 %v3022
        %v3129 = vunpack.c.l.b16 %v3023
        %v3130 = vunpack.c.h.b16 %v3023
        %v3131 = vunpack.c.l.b16 %v3024
        %v3132 = vunpack.c.h.b16 %v3024
        %v3133 = vunpack.c.l.b16 %v3025
        %v3134 = vunpack.c.h.b16 %v3025
        %v3135 = vunpack.c.l.b16 %v3026
        %v3136 = vunpack.c.h.b16 %v3026
        %v3137 = vunpack.c.l.b16 %v3027
        %v3138 = vunpack.c.h.b16 %v3027
        %v3139 = vunpack.c.l.b16 %v3028
        %v3140 = vunpack.c.h.b16 %v3028
        %v3141 = vunpack.c.l.b16 %v3029
        %v3142 = vunpack.c.h.b16 %v3029
        %v3143 = vunpack.c.l.b16 %v3030
        %v3144 = vunpack.c.h.b16 %v3030
        %v3145 = vunpack.c.l.b16 %v3031
        %v3146 = vunpack.c.h.b16 %v3031
        %v3147 = vunpack.c.l.b16 %v3032
        %v3148 = vunpack.c.h.b16 %v3032
        %v3149 = vunpack.c.l.b16 %v3033
        %v3150 = vunpack.c.h.b16 %v3033
        %v3151 = vunpack.c.l.b16 %v3034
        %v3152 = vunpack.c.h.b16 %v3034
        %v3153 = vpack.c.b16 %v3093, %v3089
        %v3154 = vpack.c.b16 %v3094, %v3090
        %v3155 = vpack.c.b16 %v3095, %v3091
        %v3156 = vpack.c.b16 %v3096, %v3092
        %v3157 = vpack.c.b16 %v3101, %v3097
        %v3158 = vpack.c.b16 %v3102, %v3098
        %v3159 = vpack.c.b16 %v3103, %v3099
        %v3160 = vpack.c.b16 %v3104, %v3100
        %v3161 = vpack.c.b16 %v3109, %v3105
        %v3162 = vpack.c.b16 %v3110, %v3106
        %v3163 = vpack.c.b16 %v3111, %v3107
        %v3164 = vpack.c.b16 %v3112, %v3108
        %v3165 = vpack.c.b16 %v3117, %v3113
        %v3166 = vpack.c.b16 %v3118, %v3114
        %v3167 = vpack.c.b16 %v3119, %v3115
        %v3168 = vpack.c.b16 %v3120, %v3116
        %v3169 = vpack.c.b16 %v3125, %v3121
        %v3170 = vpack.c.b16 %v3126, %v3122
        %v3171 = vpack.c.b16 %v3127, %v3123
        %v3172 = vpack.c.b16 %v3128, %v3124
        %v3173 = vpack.c.b16 %v3133, %v3129
        %v3174 = vpack.c.b16 %v3134, %v3130
        %v3175 = vpack.c.b16 %v3135, %v3131
        %v3176 = vpack.c.b16 %v3136, %v3132
        %v3177 = vpack.c.b16 %v3141, %v3137
        %v3178 = vpack.c.b16 %v3142, %v3138
        %v3179 = vpack.c.b16 %v3143, %v3139
        %v3180 = vpack.c.b16 %v3144, %v3140
        %v3181 = vpack.c.b16 %v3149, %v3145
        %v3182 = vpack.c.b16 %v3150, %v3146
        %v3183 = vpack.c.b16 %v3151, %v3147
        %v3184 = vpack.c.b16 %v3152, %v3148
        %3217 = vmatprep.subr.bf16.mxu0 %v3154
        %3218 = vmatpush1.bf16.msra.mxu0 %v3153
        %3219 = vmatprep.subr.bf16.mxu0 %v3158
        %3220 = vmatpush1.bf16.msra.mxu0 %v3157
        %3221 = vmatprep.subr.bf16.mxu0 %v3162
        %3222 = vmatpush1.bf16.msra.mxu0 %v3161
        %3223 = vmatprep.subr.bf16.mxu0 %v3166
        %3224 = vmatpush1.bf16.msra.mxu0 %v3165
        %3225 = vmatprep.subr.bf16.mxu0 %v3170
        %3226 = vmatpush1.bf16.msra.mxu0 %v3169
        %3227 = vmatprep.subr.bf16.mxu0 %v3174
        %3228 = vmatpush1.bf16.msra.mxu0 %v3173
        %3229 = vmatprep.subr.bf16.mxu0 %v3178
        %3230 = vmatpush1.bf16.msra.mxu0 %v3177
        %3231 = vmatprep.subr.bf16.mxu0 %v3182
        %3232 = vmatpush1.bf16.msra.mxu0 %v3181
        %3233 = vmatprep.subr.bf16.mxu0 0
        %3234 = vmatpush1.bf16.msra.mxu0 0
        %3235 = vmatprep.subr.bf16.mxu0 0
        %3236 = vmatpush1.bf16.msra.mxu0 0
        %3237 = vmatprep.subr.bf16.mxu0 0
        %3238 = vmatpush1.bf16.msra.mxu0 0
        %3239 = vmatprep.subr.bf16.mxu0 0
        %3240 = vmatpush1.bf16.msra.mxu0 0
        %3241 = vmatprep.subr.bf16.mxu0 0
        %3242 = vmatpush1.bf16.msra.mxu0 0
        %3243 = vmatprep.subr.bf16.mxu0 0
        %3244 = vmatpush1.bf16.msra.mxu0 0
        %3245 = vmatprep.subr.bf16.mxu0 0
        %3246 = vmatpush1.bf16.msra.mxu0 0
        %3247 = vmatprep.subr.bf16.mxu0 0
        %3248 = vmatpush1.bf16.msra.mxu0 0
        %3249 = vmatprep.mubr.bf16.mxu0 0
        %3250 = vmatmul.mubr.bf16.gmra.mrb[0].mxu0 %v3001
        %v3251 = vpop.f32.mrb[0].mxu0
        %v3252 = vadd.f32 %v3040, %v3251
        %v3253 = vpop.f32.mrb[0].mxu0
        %v3254 = vadd.f32 %v3044, %v3253
        %v3255 = vpop.f32.mrb[0].mxu0
        %v3256 = vadd.f32 %v3040, %v3255
        %v3257 = vpop.f32.mrb[0].mxu0
        %v3258 = vadd.f32 %v3044, %v3257
        %3259 = vmatprep.mubr.bf16.mxu0 0
        %3260 = vmatmul.mubr.bf16.gmra.mrb[0].mxu0 %v3002
        %v3261 = vpop.f32.mrb[0].mxu0
        %v3262 = vadd.f32 %v3040, %v3261
        %v3263 = vpop.f32.mrb[0].mxu0
        %v3264 = vadd.f32 %v3044, %v3263
        %v3265 = vpop.f32.mrb[0].mxu0
        %v3266 = vadd.f32 %v3040, %v3265
        %v3267 = vpop.f32.mrb[0].mxu0
        %v3268 = vadd.f32 %v3044, %v3267
        %3269 = vdwg.mxu0
        %3270 = vmatprep.subr.bf16.mxu0 %v3156
        %3271 = vmatpush1.bf16.msra.mxu0 %v3155
        %3272 = vmatprep.subr.bf16.mxu0 %v3160
        %3273 = vmatpush1.bf16.msra.mxu0 %v3159
        %3274 = vmatprep.subr.bf16.mxu0 %v3164
        %3275 = vmatpush1.bf16.msra.mxu0 %v3163
        %3276 = vmatprep.subr.bf16.mxu0 %v3168
        %3277 = vmatpush1.bf16.msra.mxu0 %v3167
        %3278 = vmatprep.subr.bf16.mxu0 %v3172
        %3279 = vmatpush1.bf16.msra.mxu0 %v3171
        %3280 = vmatprep.subr.bf16.mxu0 %v3176
        %3281 = vmatpush1.bf16.msra.mxu0 %v3175
        %3282 = vmatprep.subr.bf16.mxu0 %v3180
        %3283 = vmatpush1.bf16.msra.mxu0 %v3179
        %3284 = vmatprep.subr.bf16.mxu0 %v3184
        %3285 = vmatpush1.bf16.msra.mxu0 %v3183
        %3286 = vmatprep.subr.bf16.mxu0 0
        %3287 = vmatpush1.bf16.msra.mxu0 0
        %3288 = vmatprep.subr.bf16.mxu0 0
        %3289 = vmatpush1.bf16.msra.mxu0 0
        %3290 = vmatprep.subr.bf16.mxu0 0
        %3291 = vmatpush1.bf16.msra.mxu0 0
        %3292 = vmatprep.subr.bf16.mxu0 0
        %3293 = vmatpush1.bf16.msra.mxu0 0
        %3294 = vmatprep.subr.bf16.mxu0 0
        %3295 = vmatpush1.bf16.msra.mxu0 0
        %3296 = vmatprep.subr.bf16.mxu0 0
        %3297 = vmatpush1.bf16.msra.mxu0 0
        %3298 = vmatprep.subr.bf16.mxu0 0
        %3299 = vmatpush1.bf16.msra.mxu0 0
        %3300 = vmatprep.subr.bf16.mxu0 0
        %3301 = vmatpush1.bf16.msra.mxu0 0
        %3302 = vmatprep.mubr.bf16.mxu0 0
        %3303 = vmatmul.mubr.bf16.gmra.mrb[0].mxu0 %v3001
        %v3304 = vpop.f32.mrb[0].mxu0
        %v3305 = vadd.f32 %v3048, %v3304
        %v3306 = vpop.f32.mrb[0].mxu0
        %v3307 = vadd.f32 %v3052, %v3306
        %v3308 = vpop.f32.mrb[0].mxu0
        %v3309 = vadd.f32 %v3048, %v3308
        %v3310 = vpop.f32.mrb[0].mxu0
        %v3311 = vadd.f32 %v3052, %v3310
        %3312 = vmatprep.mubr.bf16.mxu0 0
        %3313 = vmatmul.mubr.bf16.gmra.mrb[0].mxu0 %v3002
        %v3314 = vpop.f32.mrb[0].mxu0
        %v3315 = vadd.f32 %v3048, %v3314
        %v3316 = vpop.f32.mrb[0].mxu0
        %v3317 = vadd.f32 %v3052, %v3316
        %v3318 = vpop.f32.mrb[0].mxu0
        %v3319 = vadd.f32 %v3048, %v3318
        %v3320 = vpop.f32.mrb[0].mxu0
        %v3321 = vadd.f32 %v3052, %v3320
        %3322 = vdwg.mxu0
        %v3323 = vmul.f32 %v3252, 0.5
        %v3324 = vmul.f32 %v3254, 0.5
        %v3325 = vmul.f32 %v3305, 0.5
        %v3326 = vmul.f32 %v3307, 0.5
        %v3327 = vmul.f32 %v3256, 0.5
        %v3328 = vmul.f32 %v3258, 0.5
        %v3329 = vmul.f32 %v3309, 0.5
        %v3330 = vmul.f32 %v3311, 0.5
        %v3331 = vmul.f32 %v3262, 0.5
        %v3332 = vmul.f32 %v3264, 0.5
        %v3333 = vmul.f32 %v3315, 0.5
        %v3334 = vmul.f32 %v3317, 0.5
        %v3335 = vmul.f32 %v3266, 0.5
        %v3336 = vmul.f32 %v3268, 0.5
        %v3337 = vmul.f32 %v3319, 0.5
        %v3338 = vmul.f32 %v3321, 0.5
        %v3339 = vmul.f32 %v3252, 0.70710677
        %v3340 = vmul.f32 %v3254, 0.70710677
        %v3341 = vmul.f32 %v3305, 0.70710677
        %v3342 = vmul.f32 %v3307, 0.70710677
        %v3343 = vmul.f32 %v3256, 0.70710677
        %v3344 = vmul.f32 %v3258, 0.70710677
        %v3345 = vmul.f32 %v3309, 0.70710677
        %v3346 = vmul.f32 %v3311, 0.70710677
        %v3347 = vmul.f32 %v3262, 0.70710677
        %v3348 = vmul.f32 %v3264, 0.70710677
        %v3349 = vmul.f32 %v3315, 0.70710677
        %v3350 = vmul.f32 %v3317, 0.70710677
        %v3351 = vmul.f32 %v3266, 0.70710677
        %v3352 = vmul.f32 %v3268, 0.70710677
        %v3353 = vmul.f32 %v3319, 0.70710677
        %v3354 = vmul.f32 %v3321, 0.70710677
        %vm3355 = vcmp.lt.f32.partialorder %v3339, 0.0
        %vm3356 = vcmp.lt.f32.partialorder %v3340, 0.0
        %vm3357 = vcmp.lt.f32.partialorder %v3341, 0.0
        %vm3358 = vcmp.lt.f32.partialorder %v3342, 0.0
        %vm3359 = vcmp.lt.f32.partialorder %v3343, 0.0
        %vm3360 = vcmp.lt.f32.partialorder %v3344, 0.0
        %vm3361 = vcmp.lt.f32.partialorder %v3345, 0.0
        %vm3362 = vcmp.lt.f32.partialorder %v3346, 0.0
        %vm3363 = vcmp.lt.f32.partialorder %v3347, 0.0
        %vm3364 = vcmp.lt.f32.partialorder %v3348, 0.0
        %vm3365 = vcmp.lt.f32.partialorder %v3349, 0.0
        %vm3366 = vcmp.lt.f32.partialorder %v3350, 0.0
        %vm3367 = vcmp.lt.f32.partialorder %v3351, 0.0
        %vm3368 = vcmp.lt.f32.partialorder %v3352, 0.0
        %vm3369 = vcmp.lt.f32.partialorder %v3353, 0.0
        %vm3370 = vcmp.lt.f32.partialorder %v3354, 0.0
        %v3371 = vsel %vm3355, -1.0, 1.0
        %v3372 = vsel %vm3356, -1.0, 1.0
        %v3373 = vsel %vm3357, -1.0, 1.0
        %v3374 = vsel %vm3358, -1.0, 1.0
        %v3375 = vsel %vm3359, -1.0, 1.0
        %v3376 = vsel %vm3360, -1.0, 1.0
        %v3377 = vsel %vm3361, -1.0, 1.0
        %v3378 = vsel %vm3362, -1.0, 1.0
        %v3379 = vsel %vm3363, -1.0, 1.0
        %v3380 = vsel %vm3364, -1.0, 1.0
        %v3381 = vsel %vm3365, -1.0, 1.0
        %v3382 = vsel %vm3366, -1.0, 1.0
        %v3383 = vsel %vm3367, -1.0, 1.0
        %v3384 = vsel %vm3368, -1.0, 1.0
        %v3385 = vsel %vm3369, -1.0, 1.0
        %v3386 = vsel %vm3370, -1.0, 1.0
        %v3387 = vand.u32 2147483647, %v3339
        %v3388 = vand.u32 2147483647, %v3340
        %v3389 = vand.u32 2147483647, %v3341
        %v3390 = vand.u32 2147483647, %v3342
        %v3391 = vand.u32 2147483647, %v3343
        %v3392 = vand.u32 2147483647, %v3344
        %v3393 = vand.u32 2147483647, %v3345
        %v3394 = vand.u32 2147483647, %v3346
        %v3395 = vand.u32 2147483647, %v3347
        %v3396 = vand.u32 2147483647, %v3348
        %v3397 = vand.u32 2147483647, %v3349
        %v3398 = vand.u32 2147483647, %v3350
        %v3399 = vand.u32 2147483647, %v3351
        %v3400 = vand.u32 2147483647, %v3352
        %v3401 = vand.u32 2147483647, %v3353
        %v3402 = vand.u32 2147483647, %v3354
        %v3403 = vmul.f32 %v3387, 0.3275911
        %v3404 = vmul.f32 %v3388, 0.3275911
        %v3405 = vmul.f32 %v3389, 0.3275911
        %v3406 = vmul.f32 %v3390, 0.3275911
        %v3407 = vmul.f32 %v3391, 0.3275911
        %v3408 = vmul.f32 %v3392, 0.3275911
        %v3409 = vmul.f32 %v3393, 0.3275911
        %v3410 = vmul.f32 %v3394, 0.3275911
        %v3411 = vmul.f32 %v3395, 0.3275911
        %v3412 = vmul.f32 %v3396, 0.3275911
        %v3413 = vmul.f32 %v3397, 0.3275911
        %v3414 = vmul.f32 %v3398, 0.3275911
        %v3415 = vmul.f32 %v3399, 0.3275911
        %v3416 = vmul.f32 %v3400, 0.3275911
        %v3417 = vmul.f32 %v3401, 0.3275911
        %v3418 = vmul.f32 %v3402, 0.3275911
        %v3419 = vadd.f32 %v3403, 1.0
        %v3420 = vadd.f32 %v3404, 1.0
        %v3421 = vadd.f32 %v3405, 1.0
        %v3422 = vadd.f32 %v3406, 1.0
        %v3423 = vadd.f32 %v3407, 1.0
        %v3424 = vadd.f32 %v3408, 1.0
        %v3425 = vadd.f32 %v3409, 1.0
        %v3426 = vadd.f32 %v3410, 1.0
        %v3427 = vadd.f32 %v3411, 1.0
        %v3428 = vadd.f32 %v3412, 1.0
        %v3429 = vadd.f32 %v3413, 1.0
        %v3430 = vadd.f32 %v3414, 1.0
        %v3431 = vadd.f32 %v3415, 1.0
        %v3432 = vadd.f32 %v3416, 1.0
        %v3433 = vadd.f32 %v3417, 1.0
        %v3434 = vadd.f32 %v3418, 1.0
        %v3435 = vrcp.pop %v3419
        %v3436 = vmul.f32 1.0, %v3435
        %v3437 = vrcp.pop %v3420
        %v3438 = vmul.f32 1.0, %v3437
        %v3439 = vrcp.pop %v3421
        %v3440 = vmul.f32 1.0, %v3439
        %v3441 = vrcp.pop %v3422
        %v3442 = vmul.f32 1.0, %v3441
        %v3443 = vrcp.pop %v3423
        %v3444 = vmul.f32 1.0, %v3443
        %v3445 = vrcp.pop %v3424
        %v3446 = vmul.f32 1.0, %v3445
        %v3447 = vrcp.pop %v3425
        %v3448 = vmul.f32 1.0, %v3447
        %v3449 = vrcp.pop %v3426
        %v3450 = vmul.f32 1.0, %v3449
        %v3451 = vrcp.pop %v3427
        %v3452 = vmul.f32 1.0, %v3451
        %v3453 = vrcp.pop %v3428
        %v3454 = vmul.f32 1.0, %v3453
        %v3455 = vrcp.pop %v3429
        %v3456 = vmul.f32 1.0, %v3455
        %v3457 = vrcp.pop %v3430
        %v3458 = vmul.f32 1.0, %v3457
        %v3459 = vrcp.pop %v3431
        %v3460 = vmul.f32 1.0, %v3459
        %v3461 = vrcp.pop %v3432
        %v3462 = vmul.f32 1.0, %v3461
        %v3463 = vrcp.pop %v3433
        %v3464 = vmul.f32 1.0, %v3463
        %v3465 = vrcp.pop %v3434
        %v3466 = vmul.f32 1.0, %v3465
        %v3467 = vmul.f32 %v3436, 1.0614054
        %v3468 = vmul.f32 %v3438, 1.0614054
        %v3469 = vmul.f32 %v3440, 1.0614054
        %v3470 = vmul.f32 %v3442, 1.0614054
        %v3471 = vmul.f32 %v3444, 1.0614054
        %v3472 = vmul.f32 %v3446, 1.0614054
        %v3473 = vmul.f32 %v3448, 1.0614054
        %v3474 = vmul.f32 %v3450, 1.0614054
        %v3475 = vmul.f32 %v3452, 1.0614054
        %v3476 = vmul.f32 %v3454, 1.0614054
        %v3477 = vmul.f32 %v3456, 1.0614054
        %v3478 = vmul.f32 %v3458, 1.0614054
        %v3479 = vmul.f32 %v3460, 1.0614054
        %v3480 = vmul.f32 %v3462, 1.0614054
        %v3481 = vmul.f32 %v3464, 1.0614054
        %v3482 = vmul.f32 %v3466, 1.0614054
        %v3483 = vadd.f32 %v3467, -1.4531521
        %v3484 = vadd.f32 %v3468, -1.4531521
        %v3485 = vadd.f32 %v3469, -1.4531521
        %v3486 = vadd.f32 %v3470, -1.4531521
        %v3487 = vadd.f32 %v3471, -1.4531521
        %v3488 = vadd.f32 %v3472, -1.4531521
        %v3489 = vadd.f32 %v3473, -1.4531521
        %v3490 = vadd.f32 %v3474, -1.4531521
        %v3491 = vadd.f32 %v3475, -1.4531521
        %v3492 = vadd.f32 %v3476, -1.4531521
        %v3493 = vadd.f32 %v3477, -1.4531521
        %v3494 = vadd.f32 %v3478, -1.4531521
        %v3495 = vadd.f32 %v3479, -1.4531521
        %v3496 = vadd.f32 %v3480, -1.4531521
        %v3497 = vadd.f32 %v3481, -1.4531521
        %v3498 = vadd.f32 %v3482, -1.4531521
        %v3499 = vmul.f32 %v3483, %v3436
        %v3500 = vmul.f32 %v3484, %v3438
        %v3501 = vmul.f32 %v3485, %v3440
        %v3502 = vmul.f32 %v3486, %v3442
        %v3503 = vmul.f32 %v3487, %v3444
        %v3504 = vmul.f32 %v3488, %v3446
        %v3505 = vmul.f32 %v3489, %v3448
        %v3506 = vmul.f32 %v3490, %v3450
        %v3507 = vmul.f32 %v3491, %v3452
        %v3508 = vmul.f32 %v3492, %v3454
        %v3509 = vmul.f32 %v3493, %v3456
        %v3510 = vmul.f32 %v3494, %v3458
        %v3511 = vmul.f32 %v3495, %v3460
        %v3512 = vmul.f32 %v3496, %v3462
        %v3513 = vmul.f32 %v3497, %v3464
        %v3514 = vmul.f32 %v3498, %v3466
        %v3515 = vadd.f32 %v3499, 1.4214138
        %v3516 = vadd.f32 %v3500, 1.4214138
        %v3517 = vadd.f32 %v3501, 1.4214138
        %v3518 = vadd.f32 %v3502, 1.4214138
        %v3519 = vadd.f32 %v3503, 1.4214138
        %v3520 = vadd.f32 %v3504, 1.4214138
        %v3521 = vadd.f32 %v3505, 1.4214138
        %v3522 = vadd.f32 %v3506, 1.4214138
        %v3523 = vadd.f32 %v3507, 1.4214138
        %v3524 = vadd.f32 %v3508, 1.4214138
        %v3525 = vadd.f32 %v3509, 1.4214138
        %v3526 = vadd.f32 %v3510, 1.4214138
        %v3527 = vadd.f32 %v3511, 1.4214138
        %v3528 = vadd.f32 %v3512, 1.4214138
        %v3529 = vadd.f32 %v3513, 1.4214138
        %v3530 = vadd.f32 %v3514, 1.4214138
        %v3531 = vmul.f32 %v3515, %v3436
        %v3532 = vmul.f32 %v3516, %v3438
        %v3533 = vmul.f32 %v3517, %v3440
        %v3534 = vmul.f32 %v3518, %v3442
        %v3535 = vmul.f32 %v3519, %v3444
        %v3536 = vmul.f32 %v3520, %v3446
        %v3537 = vmul.f32 %v3521, %v3448
        %v3538 = vmul.f32 %v3522, %v3450
        %v3539 = vmul.f32 %v3523, %v3452
        %v3540 = vmul.f32 %v3524, %v3454
        %v3541 = vmul.f32 %v3525, %v3456
        %v3542 = vmul.f32 %v3526, %v3458
        %v3543 = vmul.f32 %v3527, %v3460
        %v3544 = vmul.f32 %v3528, %v3462
        %v3545 = vmul.f32 %v3529, %v3464
        %v3546 = vmul.f32 %v3530, %v3466
        %v3547 = vadd.f32 %v3531, -0.28449672
        %v3548 = vadd.f32 %v3532, -0.28449672
        %v3549 = vadd.f32 %v3533, -0.28449672
        %v3550 = vadd.f32 %v3534, -0.28449672
        %v3551 = vadd.f32 %v3535, -0.28449672
        %v3552 = vadd.f32 %v3536, -0.28449672
        %v3553 = vadd.f32 %v3537, -0.28449672
        %v3554 = vadd.f32 %v3538, -0.28449672
        %v3555 = vadd.f32 %v3539, -0.28449672
        %v3556 = vadd.f32 %v3540, -0.28449672
        %v3557 = vadd.f32 %v3541, -0.28449672
        %v3558 = vadd.f32 %v3542, -0.28449672
        %v3559 = vadd.f32 %v3543, -0.28449672
        %v3560 = vadd.f32 %v3544, -0.28449672
        %v3561 = vadd.f32 %v3545, -0.28449672
        %v3562 = vadd.f32 %v3546, -0.28449672
        %v3563 = vmul.f32 %v3547, %v3436
        %v3564 = vmul.f32 %v3548, %v3438
        %v3565 = vmul.f32 %v3549, %v3440
        %v3566 = vmul.f32 %v3550, %v3442
        %v3567 = vmul.f32 %v3551, %v3444
        %v3568 = vmul.f32 %v3552, %v3446
        %v3569 = vmul.f32 %v3553, %v3448
        %v3570 = vmul.f32 %v3554, %v3450
        %v3571 = vmul.f32 %v3555, %v3452
        %v3572 = vmul.f32 %v3556, %v3454
        %v3573 = vmul.f32 %v3557, %v3456
        %v3574 = vmul.f32 %v3558, %v3458
        %v3575 = vmul.f32 %v3559, %v3460
        %v3576 = vmul.f32 %v3560, %v3462
        %v3577 = vmul.f32 %v3561, %v3464
        %v3578 = vmul.f32 %v3562, %v3466
        %v3579 = vadd.f32 %v3563, 0.2548296
        %v3580 = vadd.f32 %v3564, 0.2548296
        %v3581 = vadd.f32 %v3565, 0.2548296
        %v3582 = vadd.f32 %v3566, 0.2548296
        %v3583 = vadd.f32 %v3567, 0.2548296
        %v3584 = vadd.f32 %v3568, 0.2548296
        %v3585 = vadd.f32 %v3569, 0.2548296
        %v3586 = vadd.f32 %v3570, 0.2548296
        %v3587 = vadd.f32 %v3571, 0.2548296
        %v3588 = vadd.f32 %v3572, 0.2548296
        %v3589 = vadd.f32 %v3573, 0.2548296
        %v3590 = vadd.f32 %v3574, 0.2548296
        %v3591 = vadd.f32 %v3575, 0.2548296
        %v3592 = vadd.f32 %v3576, 0.2548296
        %v3593 = vadd.f32 %v3577, 0.2548296
        %v3594 = vadd.f32 %v3578, 0.2548296
        %v3595 = vmul.f32 %v3579, %v3436
        %v3596 = vmul.f32 %v3580, %v3438
        %v3597 = vmul.f32 %v3581, %v3440
        %v3598 = vmul.f32 %v3582, %v3442
        %v3599 = vmul.f32 %v3583, %v3444
        %v3600 = vmul.f32 %v3584, %v3446
        %v3601 = vmul.f32 %v3585, %v3448
        %v3602 = vmul.f32 %v3586, %v3450
        %v3603 = vmul.f32 %v3587, %v3452
        %v3604 = vmul.f32 %v3588, %v3454
        %v3605 = vmul.f32 %v3589, %v3456
        %v3606 = vmul.f32 %v3590, %v3458
        %v3607 = vmul.f32 %v3591, %v3460
        %v3608 = vmul.f32 %v3592, %v3462
        %v3609 = vmul.f32 %v3593, %v3464
        %v3610 = vmul.f32 %v3594, %v3466
        %v3611 = vsub.f32 0.0, %v3387
        %v3612 = vsub.f32 0.0, %v3388
        %v3613 = vsub.f32 0.0, %v3389
        %v3614 = vsub.f32 0.0, %v3390
        %v3615 = vsub.f32 0.0, %v3391
        %v3616 = vsub.f32 0.0, %v3392
        %v3617 = vsub.f32 0.0, %v3393
        %v3618 = vsub.f32 0.0, %v3394
        %v3619 = vsub.f32 0.0, %v3395
        %v3620 = vsub.f32 0.0, %v3396
        %v3621 = vsub.f32 0.0, %v3397
        %v3622 = vsub.f32 0.0, %v3398
        %v3623 = vsub.f32 0.0, %v3399
        %v3624 = vsub.f32 0.0, %v3400
        %v3625 = vsub.f32 0.0, %v3401
        %v3626 = vsub.f32 0.0, %v3402
        %v3627 = vmul.f32 %v3611, %v3387
        %v3628 = vmul.f32 %v3612, %v3388
        %v3629 = vmul.f32 %v3613, %v3389
        %v3630 = vmul.f32 %v3614, %v3390
        %v3631 = vmul.f32 %v3615, %v3391
        %v3632 = vmul.f32 %v3616, %v3392
        %v3633 = vmul.f32 %v3617, %v3393
        %v3634 = vmul.f32 %v3618, %v3394
        %v3635 = vmul.f32 %v3619, %v3395
        %v3636 = vmul.f32 %v3620, %v3396
        %v3637 = vmul.f32 %v3621, %v3397
        %v3638 = vmul.f32 %v3622, %v3398
        %v3639 = vmul.f32 %v3623, %v3399
        %v3640 = vmul.f32 %v3624, %v3400
        %v3641 = vmul.f32 %v3625, %v3401
        %v3642 = vmul.f32 %v3626, %v3402
        %v3643 = vmul.f32 %v3627, 1.442695
        %v3644 = vpow.pop %v3643
        %v3645 = vmul.f32 %v3628, 1.442695
        %v3646 = vpow.pop %v3645
        %v3647 = vmul.f32 %v3629, 1.442695
        %v3648 = vpow.pop %v3647
        %v3649 = vmul.f32 %v3630, 1.442695
        %v3650 = vpow.pop %v3649
        %v3651 = vmul.f32 %v3631, 1.442695
        %v3652 = vpow.pop %v3651
        %v3653 = vmul.f32 %v3632, 1.442695
        %v3654 = vpow.pop %v3653
        %v3655 = vmul.f32 %v3633, 1.442695
        %v3656 = vpow.pop %v3655
        %v3657 = vmul.f32 %v3634, 1.442695
        %v3658 = vpow.pop %v3657
        %v3659 = vmul.f32 %v3635, 1.442695
        %v3660 = vpow.pop %v3659
        %v3661 = vmul.f32 %v3636, 1.442695
        %v3662 = vpow.pop %v3661
        %v3663 = vmul.f32 %v3637, 1.442695
        %v3664 = vpow.pop %v3663
        %v3665 = vmul.f32 %v3638, 1.442695
        %v3666 = vpow.pop %v3665
        %v3667 = vmul.f32 %v3639, 1.442695
        %v3668 = vpow.pop %v3667
        %v3669 = vmul.f32 %v3640, 1.442695
        %v3670 = vpow.pop %v3669
        %v3671 = vmul.f32 %v3641, 1.442695
        %v3672 = vpow.pop %v3671
        %v3673 = vmul.f32 %v3642, 1.442695
        %v3674 = vpow.pop %v3673
        %v3675 = vmul.f32 %v3595, %v3644
        %v3676 = vmul.f32 %v3596, %v3646
        %v3677 = vmul.f32 %v3597, %v3648
        %v3678 = vmul.f32 %v3598, %v3650
        %v3679 = vmul.f32 %v3599, %v3652
        %v3680 = vmul.f32 %v3600, %v3654
        %v3681 = vmul.f32 %v3601, %v3656
        %v3682 = vmul.f32 %v3602, %v3658
        %v3683 = vmul.f32 %v3603, %v3660
        %v3684 = vmul.f32 %v3604, %v3662
        %v3685 = vmul.f32 %v3605, %v3664
        %v3686 = vmul.f32 %v3606, %v3666
        %v3687 = vmul.f32 %v3607, %v3668
        %v3688 = vmul.f32 %v3608, %v3670
        %v3689 = vmul.f32 %v3609, %v3672
        %v3690 = vmul.f32 %v3610, %v3674
        %v3691 = vsub.f32 1.0, %v3675
        %v3692 = vsub.f32 1.0, %v3676
        %v3693 = vsub.f32 1.0, %v3677
        %v3694 = vsub.f32 1.0, %v3678
        %v3695 = vsub.f32 1.0, %v3679
        %v3696 = vsub.f32 1.0, %v3680
        %v3697 = vsub.f32 1.0, %v3681
        %v3698 = vsub.f32 1.0, %v3682
        %v3699 = vsub.f32 1.0, %v3683
        %v3700 = vsub.f32 1.0, %v3684
        %v3701 = vsub.f32 1.0, %v3685
        %v3702 = vsub.f32 1.0, %v3686
        %v3703 = vsub.f32 1.0, %v3687
        %v3704 = vsub.f32 1.0, %v3688
        %v3705 = vsub.f32 1.0, %v3689
        %v3706 = vsub.f32 1.0, %v3690
        %v3707 = vmul.f32 %v3371, %v3691
        %v3708 = vmul.f32 %v3372, %v3692
        %v3709 = vmul.f32 %v3373, %v3693
        %v3710 = vmul.f32 %v3374, %v3694
        %v3711 = vmul.f32 %v3375, %v3695
        %v3712 = vmul.f32 %v3376, %v3696
        %v3713 = vmul.f32 %v3377, %v3697
        %v3714 = vmul.f32 %v3378, %v3698
        %v3715 = vmul.f32 %v3379, %v3699
        %v3716 = vmul.f32 %v3380, %v3700
        %v3717 = vmul.f32 %v3381, %v3701
        %v3718 = vmul.f32 %v3382, %v3702
        %v3719 = vmul.f32 %v3383, %v3703
        %v3720 = vmul.f32 %v3384, %v3704
        %v3721 = vmul.f32 %v3385, %v3705
        %v3722 = vmul.f32 %v3386, %v3706
        %v3723 = vadd.f32 %v3707, 1.0
        %v3724 = vadd.f32 %v3708, 1.0
        %v3725 = vadd.f32 %v3709, 1.0
        %v3726 = vadd.f32 %v3710, 1.0
        %v3727 = vadd.f32 %v3711, 1.0
        %v3728 = vadd.f32 %v3712, 1.0
        %v3729 = vadd.f32 %v3713, 1.0
        %v3730 = vadd.f32 %v3714, 1.0
        %v3731 = vadd.f32 %v3715, 1.0
        %v3732 = vadd.f32 %v3716, 1.0
        %v3733 = vadd.f32 %v3717, 1.0
        %v3734 = vadd.f32 %v3718, 1.0
        %v3735 = vadd.f32 %v3719, 1.0
        %v3736 = vadd.f32 %v3720, 1.0
        %v3737 = vadd.f32 %v3721, 1.0
        %v3738 = vadd.f32 %v3722, 1.0
        %v3739 = vmul.f32 %v3323, %v3723
        %v3740 = vmul.f32 %v3324, %v3724
        %v3741 = vmul.f32 %v3325, %v3725
        %v3742 = vmul.f32 %v3326, %v3726
        %v3743 = vmul.f32 %v3327, %v3727
        %v3744 = vmul.f32 %v3328, %v3728
        %v3745 = vmul.f32 %v3329, %v3729
        %v3746 = vmul.f32 %v3330, %v3730
        %v3747 = vmul.f32 %v3331, %v3731
        %v3748 = vmul.f32 %v3332, %v3732
        %v3749 = vmul.f32 %v3333, %v3733
        %v3750 = vmul.f32 %v3334, %v3734
        %v3751 = vmul.f32 %v3335, %v3735
        %v3752 = vmul.f32 %v3336, %v3736
        %v3753 = vmul.f32 %v3337, %v3737
        %v3754 = vmul.f32 %v3338, %v3738
        %v3755 = vpack.c.bf16 %v3743, %v3739
        %v3756 = vpack.c.bf16 %v3744, %v3740
        %v3757 = vpack.c.bf16 %v3745, %v3741
        %v3758 = vpack.c.bf16 %v3746, %v3742
        %v3759 = vpack.c.bf16 %v3751, %v3747
        %v3760 = vpack.c.bf16 %v3752, %v3748
        %v3761 = vpack.c.bf16 %v3753, %v3749
        %v3762 = vpack.c.bf16 %v3754, %v3750
        %v3763 = vld [vmem:[#allocation20] sm:$0xf]
        %v3764 = vld [vmem:[#allocation20 + $0x4] sm:$0xf]
        %v3765 = vld [vmem:[#allocation20 + $0x8] sm:$0xf]
        %v3766 = vld [vmem:[#allocation20 + $0xc] sm:$0xf]
        %v3767 = vld [vmem:[#allocation20 + $0x10] sm:$0xf]
        %v3768 = vld [vmem:[#allocation20 + $0x14] sm:$0xf]
        %v3769 = vld [vmem:[#allocation20 + $0x18] sm:$0xf]
        %v3770 = vld [vmem:[#allocation20 + $0x1c] sm:$0xf]
        %v3771 = vld [vmem:[#allocation20 + $0x20] sm:$0xf]
        %v3772 = vld [vmem:[#allocation20 + $0x24] sm:$0xf]
        %v3773 = vld [vmem:[#allocation20 + $0x28] sm:$0xf]
        %v3774 = vld [vmem:[#allocation20 + $0x2c] sm:$0xf]
        %v3775 = vld [vmem:[#allocation20 + $0x30] sm:$0xf]
        %v3776 = vld [vmem:[#allocation20 + $0x34] sm:$0xf]
        %v3777 = vld [vmem:[#allocation20 + $0x38] sm:$0xf]
        %v3778 = vld [vmem:[#allocation20 + $0x3c] sm:$0xf]
        %v3779 = vld [vmem:[#allocation20 + $0x40] sm:$0xf]
        %v3780 = vld [vmem:[#allocation20 + $0x44] sm:$0xf]
        %v3781 = vld [vmem:[#allocation20 + $0x48] sm:$0xf]
        %v3782 = vld [vmem:[#allocation20 + $0x4c] sm:$0xf]
        %v3783 = vld [vmem:[#allocation20 + $0x50] sm:$0xf]
        %v3784 = vld [vmem:[#allocation20 + $0x54] sm:$0xf]
        %v3785 = vld [vmem:[#allocation20 + $0x58] sm:$0xf]
        %v3786 = vld [vmem:[#allocation20 + $0x5c] sm:$0xf]
        %v3787 = vld [vmem:[#allocation20 + $0x60] sm:$0xf]
        %v3788 = vld [vmem:[#allocation20 + $0x64] sm:$0xf]
        %v3789 = vld [vmem:[#allocation20 + $0x68] sm:$0xf]
        %v3790 = vld [vmem:[#allocation20 + $0x6c] sm:$0xf]
        %v3791 = vld [vmem:[#allocation20 + $0x70] sm:$0xf]
        %v3792 = vld [vmem:[#allocation20 + $0x74] sm:$0xf]
        %v3793 = vld [vmem:[#allocation20 + $0x78] sm:$0xf]
        %v3794 = vld [vmem:[#allocation20 + $0x7c] sm:$0xf]
        %v3795 = vld [vmem:[#allocation20 + $0x80] sm:$0xf]
        %v3796 = vld [vmem:[#allocation20 + $0x84] sm:$0xf]
        %v3797 = vld [vmem:[#allocation20 + $0x88] sm:$0xf]
        %v3798 = vld [vmem:[#allocation20 + $0x8c] sm:$0xf]
        %v3799 = vld [vmem:[#allocation20 + $0x90] sm:$0xf]
        %v3800 = vld [vmem:[#allocation20 + $0x94] sm:$0xf]
        %v3801 = vld [vmem:[#allocation20 + $0x98] sm:$0xf]
        %v3802 = vld [vmem:[#allocation20 + $0x9c] sm:$0xf]
        %v3803 = vld [vmem:[#allocation20 + $0xa0] sm:$0xf]
        %v3804 = vld [vmem:[#allocation20 + $0xa4] sm:$0xf]
        %v3805 = vld [vmem:[#allocation20 + $0xa8] sm:$0xf]
        %v3806 = vld [vmem:[#allocation20 + $0xac] sm:$0xf]
        %v3807 = vld [vmem:[#allocation20 + $0xb0] sm:$0xf]
        %v3808 = vld [vmem:[#allocation20 + $0xb4] sm:$0xf]
        %v3809 = vld [vmem:[#allocation20 + $0xb8] sm:$0xf]
        %v3810 = vld [vmem:[#allocation20 + $0xbc] sm:$0xf]
        %v3811 = vld [vmem:[#allocation20 + $0xc0] sm:$0xf]
        %v3812 = vld [vmem:[#allocation20 + $0xc4] sm:$0xf]
        %v3813 = vld [vmem:[#allocation20 + $0xc8] sm:$0xf]
        %v3814 = vld [vmem:[#allocation20 + $0xcc] sm:$0xf]
        %v3815 = vld [vmem:[#allocation20 + $0xd0] sm:$0xf]
        %v3816 = vld [vmem:[#allocation20 + $0xd4] sm:$0xf]
        %v3817 = vld [vmem:[#allocation20 + $0xd8] sm:$0xf]
        %v3818 = vld [vmem:[#allocation20 + $0xdc] sm:$0xf]
        %v3819 = vld [vmem:[#allocation20 + $0xe0] sm:$0xf]
        %v3820 = vld [vmem:[#allocation20 + $0xe4] sm:$0xf]
        %v3821 = vld [vmem:[#allocation20 + $0xe8] sm:$0xf]
        %v3822 = vld [vmem:[#allocation20 + $0xec] sm:$0xf]
        %v3823 = vld [vmem:[#allocation20 + $0xf0] sm:$0xf]
        %v3824 = vld [vmem:[#allocation20 + $0xf4] sm:$0xf]
        %v3825 = vld [vmem:[#allocation20 + $0xf8] sm:$0xf]
        %v3826 = vld [vmem:[#allocation20 + $0xfc] sm:$0xf]
        %v3891 = vunpack.c.l.b16 %v3763
        %v3892 = vunpack.c.l.b16 %v3764
        %v3893 = vunpack.c.l.b16 %v3765
        %v3894 = vunpack.c.l.b16 %v3766
        %v3895 = vunpack.c.l.b16 %v3767
        %v3896 = vunpack.c.l.b16 %v3768
        %v3897 = vunpack.c.l.b16 %v3769
        %v3898 = vunpack.c.l.b16 %v3770
        %v3899 = vunpack.c.l.b16 %v3771
        %v3900 = vunpack.c.l.b16 %v3772
        %v3901 = vunpack.c.l.b16 %v3773
        %v3902 = vunpack.c.l.b16 %v3774
        %v3903 = vunpack.c.l.b16 %v3775
        %v3904 = vunpack.c.l.b16 %v3776
        %v3905 = vunpack.c.l.b16 %v3777
        %v3906 = vunpack.c.l.b16 %v3778
        %v3907 = vunpack.c.l.b16 %v3779
        %v3908 = vunpack.c.l.b16 %v3780
        %v3909 = vunpack.c.l.b16 %v3781
        %v3910 = vunpack.c.l.b16 %v3782
        %v3911 = vunpack.c.l.b16 %v3783
        %v3912 = vunpack.c.l.b16 %v3784
        %v3913 = vunpack.c.l.b16 %v3785
        %v3914 = vunpack.c.l.b16 %v3786
        %v3915 = vunpack.c.l.b16 %v3787
        %v3916 = vunpack.c.l.b16 %v3788
        %v3917 = vunpack.c.l.b16 %v3789
        %v3918 = vunpack.c.l.b16 %v3790
        %v3919 = vunpack.c.l.b16 %v3791
        %v3920 = vunpack.c.l.b16 %v3792
        %v3921 = vunpack.c.l.b16 %v3793
        %v3922 = vunpack.c.l.b16 %v3794
        %v3923 = vunpack.c.l.b16 %v3795
        %v3924 = vunpack.c.l.b16 %v3796
        %v3925 = vunpack.c.l.b16 %v3797
        %v3926 = vunpack.c.l.b16 %v3798
        %v3927 = vunpack.c.l.b16 %v3799
        %v3928 = vunpack.c.l.b16 %v3800
        %v3929 = vunpack.c.l.b16 %v3801
        %v3930 = vunpack.c.l.b16 %v3802
        %v3931 = vunpack.c.l.b16 %v3803
        %v3932 = vunpack.c.l.b16 %v3804
        %v3933 = vunpack.c.l.b16 %v3805
        %v3934 = vunpack.c.l.b16 %v3806
        %v3935 = vunpack.c.l.b16 %v3807
        %v3936 = vunpack.c.l.b16 %v3808
        %v3937 = vunpack.c.l.b16 %v3809
        %v3938 = vunpack.c.l.b16 %v3810
        %v3939 = vunpack.c.l.b16 %v3811
        %v3940 = vunpack.c.l.b16 %v3812
        %v3941 = vunpack.c.l.b16 %v3813
        %v3942 = vunpack.c.l.b16 %v3814
        %v3943 = vunpack.c.l.b16 %v3815
        %v3944 = vunpack.c.l.b16 %v3816
        %v3945 = vunpack.c.l.b16 %v3817
        %v3946 = vunpack.c.l.b16 %v3818
        %v3947 = vunpack.c.l.b16 %v3819
        %v3948 = vunpack.c.l.b16 %v3820
        %v3949 = vunpack.c.l.b16 %v3821
        %v3950 = vunpack.c.l.b16 %v3822
        %v3951 = vunpack.c.l.b16 %v3823
        %v3952 = vunpack.c.l.b16 %v3824
        %v3953 = vunpack.c.l.b16 %v3825
        %v3954 = vunpack.c.l.b16 %v3826
        %v3955 = vpack.c.b16 %v3892, %v3891
        %v3956 = vpack.c.b16 %v3894, %v3893
        %v3957 = vpack.c.b16 %v3896, %v3895
        %v3958 = vpack.c.b16 %v3898, %v3897
        %v3959 = vpack.c.b16 %v3900, %v3899
        %v3960 = vpack.c.b16 %v3902, %v3901
        %v3961 = vpack.c.b16 %v3904, %v3903
        %v3962 = vpack.c.b16 %v3906, %v3905
        %v3963 = vpack.c.b16 %v3908, %v3907
        %v3964 = vpack.c.b16 %v3910, %v3909
        %v3965 = vpack.c.b16 %v3912, %v3911
        %v3966 = vpack.c.b16 %v3914, %v3913
        %v3967 = vpack.c.b16 %v3916, %v3915
        %v3968 = vpack.c.b16 %v3918, %v3917
        %v3969 = vpack.c.b16 %v3920, %v3919
        %v3970 = vpack.c.b16 %v3922, %v3921
        %v3971 = vpack.c.b16 %v3924, %v3923
        %v3972 = vpack.c.b16 %v3926, %v3925
        %v3973 = vpack.c.b16 %v3928, %v3927
        %v3974 = vpack.c.b16 %v3930, %v3929
        %v3975 = vpack.c.b16 %v3932, %v3931
        %v3976 = vpack.c.b16 %v3934, %v3933
        %v3977 = vpack.c.b16 %v3936, %v3935
        %v3978 = vpack.c.b16 %v3938, %v3937
        %v3979 = vpack.c.b16 %v3940, %v3939
        %v3980 = vpack.c.b16 %v3942, %v3941
        %v3981 = vpack.c.b16 %v3944, %v3943
        %v3982 = vpack.c.b16 %v3946, %v3945
        %v3983 = vpack.c.b16 %v3948, %v3947
        %v3984 = vpack.c.b16 %v3950, %v3949
        %v3985 = vpack.c.b16 %v3952, %v3951
        %v3986 = vpack.c.b16 %v3954, %v3953
        %4019 = vmatprep.subr.bf16.mxu0 0
        %4020 = vmatpush1.bf16.msra.mxu0 %v3955
        %4021 = vmatprep.subr.bf16.mxu0 0
        %4022 = vmatpush1.bf16.msra.mxu0 %v3956
        %4023 = vmatprep.subr.bf16.mxu0 0
        %4024 = vmatpush1.bf16.msra.mxu0 %v3957
        %4025 = vmatprep.subr.bf16.mxu0 0
        %4026 = vmatpush1.bf16.msra.mxu0 %v3958
        %4027 = vmatprep.subr.bf16.mxu0 0
        %4028 = vmatpush1.bf16.msra.mxu0 %v3959
        %4029 = vmatprep.subr.bf16.mxu0 0
        %4030 = vmatpush1.bf16.msra.mxu0 %v3960
        %4031 = vmatprep.subr.bf16.mxu0 0
        %4032 = vmatpush1.bf16.msra.mxu0 %v3961
        %4033 = vmatprep.subr.bf16.mxu0 0
        %4034 = vmatpush1.bf16.msra.mxu0 %v3962
        %4035 = vmatprep.subr.bf16.mxu0 0
        %4036 = vmatpush1.bf16.msra.mxu0 %v3963
        %4037 = vmatprep.subr.bf16.mxu0 0
        %4038 = vmatpush1.bf16.msra.mxu0 %v3964
        %4039 = vmatprep.subr.bf16.mxu0 0
        %4040 = vmatpush1.bf16.msra.mxu0 %v3965
        %4041 = vmatprep.subr.bf16.mxu0 0
        %4042 = vmatpush1.bf16.msra.mxu0 %v3966
        %4043 = vmatprep.subr.bf16.mxu0 0
        %4044 = vmatpush1.bf16.msra.mxu0 %v3967
        %4045 = vmatprep.subr.bf16.mxu0 0
        %4046 = vmatpush1.bf16.msra.mxu0 %v3968
        %4047 = vmatprep.subr.bf16.mxu0 0
        %4048 = vmatpush1.bf16.msra.mxu0 %v3969
        %4049 = vmatprep.subr.bf16.mxu0 0
        %4050 = vmatpush1.bf16.msra.mxu0 %v3970
        %4051 = vmatprep.mubr.bf16.mxu0 %v3756
        %4052 = vmatmul.mubr.bf16.gmra.mrb[0].mxu0 %v3755
        %v4053 = vpop.f32.mrb[0].mxu0
        %v4054 = vadd.f32 0.0, %v4053
        %v4055 = vpop.f32.mrb[0].mxu0
        %v4056 = vpop.f32.mrb[0].mxu0
        %v4057 = vadd.f32 0.0, %v4056
        %v4058 = vpop.f32.mrb[0].mxu0
        %4059 = vmatprep.mubr.bf16.mxu0 %v3760
        %4060 = vmatmul.mubr.bf16.gmra.mrb[0].mxu0 %v3759
        %v4061 = vpop.f32.mrb[0].mxu0
        %v4062 = vadd.f32 0.0, %v4061
        %v4063 = vpop.f32.mrb[0].mxu0
        %v4064 = vpop.f32.mrb[0].mxu0
        %v4065 = vadd.f32 0.0, %v4064
        %v4066 = vpop.f32.mrb[0].mxu0
        %4067 = vdwg.mxu0
        %4068 = vmatprep.subr.bf16.mxu0 0
        %4069 = vmatpush1.bf16.msra.mxu0 %v3971
        %4070 = vmatprep.subr.bf16.mxu0 0
        %4071 = vmatpush1.bf16.msra.mxu0 %v3972
        %4072 = vmatprep.subr.bf16.mxu0 0
        %4073 = vmatpush1.bf16.msra.mxu0 %v3973
        %4074 = vmatprep.subr.bf16.mxu0 0
        %4075 = vmatpush1.bf16.msra.mxu0 %v3974
        %4076 = vmatprep.subr.bf16.mxu0 0
        %4077 = vmatpush1.bf16.msra.mxu0 %v3975
        %4078 = vmatprep.subr.bf16.mxu0 0
        %4079 = vmatpush1.bf16.msra.mxu0 %v3976
        %4080 = vmatprep.subr.bf16.mxu0 0
        %4081 = vmatpush1.bf16.msra.mxu0 %v3977
        %4082 = vmatprep.subr.bf16.mxu0 0
        %4083 = vmatpush1.bf16.msra.mxu0 %v3978
        %4084 = vmatprep.subr.bf16.mxu0 0
        %4085 = vmatpush1.bf16.msra.mxu0 %v3979
        %4086 = vmatprep.subr.bf16.mxu0 0
        %4087 = vmatpush1.bf16.msra.mxu0 %v3980
        %4088 = vmatprep.subr.bf16.mxu0 0
        %4089 = vmatpush1.bf16.msra.mxu0 %v3981
        %4090 = vmatprep.subr.bf16.mxu0 0
        %4091 = vmatpush1.bf16.msra.mxu0 %v3982
        %4092 = vmatprep.subr.bf16.mxu0 0
        %4093 = vmatpush1.bf16.msra.mxu0 %v3983
        %4094 = vmatprep.subr.bf16.mxu0 0
        %4095 = vmatpush1.bf16.msra.mxu0 %v3984
        %4096 = vmatprep.subr.bf16.mxu0 0
        %4097 = vmatpush1.bf16.msra.mxu0 %v3985
        %4098 = vmatprep.subr.bf16.mxu0 0
        %4099 = vmatpush1.bf16.msra.mxu0 %v3986
        %4100 = vmatprep.mubr.bf16.mxu0 %v3758
        %4101 = vmatmul.mubr.bf16.gmra.mrb[0].mxu0 %v3757
        %v4102 = vpop.f32.mrb[0].mxu0
        %v4103 = vadd.f32 %v4054, %v4102
        %v4104 = vpop.f32.mrb[0].mxu0
        %v4105 = vpop.f32.mrb[0].mxu0
        %v4106 = vadd.f32 %v4057, %v4105
        %v4107 = vpop.f32.mrb[0].mxu0
        %4108 = vmatprep.mubr.bf16.mxu0 %v3762
        %4109 = vmatmul.mubr.bf16.gmra.mrb[0].mxu0 %v3761
        %v4110 = vpop.f32.mrb[0].mxu0
        %v4111 = vadd.f32 %v4062, %v4110
        %v4112 = vpop.f32.mrb[0].mxu0
        %v4113 = vpop.f32.mrb[0].mxu0
        %v4114 = vadd.f32 %v4065, %v4113
        %v4115 = vpop.f32.mrb[0].mxu0
        %4116 = vdwg.mxu0
        %v4117 = vadd.f32 %v2931, %v4103
        %v4118 = vadd.f32 %v2932, %v4106
        %v4119 = vadd.f32 %v2933, %v4111
        %v4120 = vadd.f32 %v2934, %v4114
        %v4121 = vld [vmem:[#allocation22] sm:$0x1]
        %v4123 = vlaneseq
        %v4124 = vshrl.u32 %v4123, 7
        %v4125 = vsub.s32 0, %v4124
        %v4126 = vrot.slane %v4121, %v4125
        %v4128 = vadd.f32 %v4117, %v4126
        %v4129 = vadd.f32 %v4118, %v4126
        %v4130 = vadd.f32 %v4119, %v4126
        %v4131 = vadd.f32 %v4120, %v4126
        %4132 = vst [vmem:[%s616] sm:$0xff] %v4128
        %4133 = vst [vmem:[%s616 + $0x8] sm:$0xff] %v4129
        %4134 = vst [vmem:[%s616 + $0x10] sm:$0xff] %v4130
        %4135 = vst [vmem:[%s616 + $0x18] sm:$0xff] %v4131
        %s4136 = sand.u32 %s322, 1
        %s4137 = scalar_lea.sflag [#allocation4], %s4136
        %s4138 = sand.u32 %s322, 1
        %s4139 = smul.addr %s4138, 32
        %s4140 = scalar_lea.vmem [#allocation23], %s4139
        // Predicated region
        $region125: #{tpu_custom_call.1} parent=71 // pred_check
          %p4141 = pneg %p332
        $region126: #{tpu_custom_call.1} parent=71 // pred_check_branch
          %4143 = sbr.rel (%p4141) target = $region128
        $region127: #{tpu_custom_call.1} parent=71 // pred_region
          %s4144 = smul.u32 4, %s36
          %s4146 = ssub.s32 512, 512
          %4147 = vsyncadd %s4137, %s4146
          %s4148 = smul.addr %s4144, 128
          %s4149 = scalar_lea.hbm %s13, %s4148
          %s4150 = sshll.u32 %s4140, 4
          %s4151 = int_to_ptr.vmem [resolvable:$true] %s4150
          %4156 = dma.vmem_to_hbm [thread:$0]  %s4151, 512, %s4149, %s4137, 128, 128, 8
        $region128: #{tpu_custom_call.1} parent=71 // pred_fallthru
          _
      $region72: #{tpu_custom_call.1} parent=5 // pred_fallthru
        _
      %p4157 = scmp.le.s32.totalorder 2, %s31
      // Predicated region
      $region129: #{tpu_custom_call.1} parent=5 // pred_check
        %p4158 = pneg %p4157
      $region130: #{tpu_custom_call.1} parent=5 // pred_check_branch
        %4160 = sbr.rel (%p4158) target = $region132
      $region131: #{tpu_custom_call.1} parent=5 // pred_region
        %s4161 = ssub.s32 %s31, 2
        // Predicated region
        $region133: #{tpu_custom_call.1} parent=131 // pred_check
          %p4162 = pneg %p338
        $region134: #{tpu_custom_call.1} parent=131 // pred_check_branch
          %4164 = sbr.rel (%p4162) target = $region136
        $region135: #{tpu_custom_call.1} parent=131 // pred_region
          %s4165 = sand.u32 %s323, 1
          %s4166 = scalar_lea.sflag [#allocation4], %s4165
          %s4167 = sand.u32 %s323, 1
          %s4168 = smul.addr %s4167, 32
          %s4169 = scalar_lea.vmem [#allocation23], %s4168
          %4170 = dma.done %s4166, 512
        $region136: #{tpu_custom_call.1} parent=131 // pred_fallthru
          _
      $region132: #{tpu_custom_call.1} parent=5 // pred_fallthru
        _
    $region6: #{tpu_custom_call.1} parent=1 // loop_footer
      %s35 = sadd.s32 1, %s31
    $region7: #{tpu_custom_call.1} parent=1 // loop_footer_branch
      %30 = sbr.rel target = $region3
    $region8: #{tpu_custom_call.1} parent=1 // loop_exit
      _
    %4171 = vsyncpa [#allocation3], 1
    %s4172 = scalar_lea.sflag [#allocation3], 1
    %4173 = vsyncpa %s4172, 1
    %4174 = vsyncpa [#allocation6], 1
    %4175 = vsyncpa [#allocation9], 1
    %4176 = vsyncpa [#allocation12], 1
    %4177 = vsyncpa [#allocation15], 1
    %4178 = vsyncpa [#allocation18], 1
    %4179 = vsyncpa [#allocation21], 1
    %4180 = vsyncpa [#allocation4], 1
    %s4181 = scalar_lea.sflag [#allocation4], 1
    %4182 = vsyncpa %s4181, 1

</llo_original>
